<compile_context>
chip_gen: v6e
topology: v6e:2x2x1
jax: 0.10.0
libtpu: 0.0.40
codegen_flags: <defaults>
</compile_context>

<pallas_src>
import functools
import math

import jax
import jax.numpy as jnp
from jax.experimental import pallas as pl
from jax.experimental.pallas import tpu as pltpu

# -------------------- small, module-consistent configuration --------------------
PATCH = 16                 # patch_size in the reference module (fixed)
EMBED = 128                # embed_dim (scaled down from 512)
HEADS = 4                  # num_heads (scaled down from 8)
HEAD_DIM = EMBED // HEADS
NUM_LAYERS = 2             # num_layers (scaled down from 6)
MLP_HIDDEN = 2 * EMBED     # hidden_dim = embed_dim * (mlp_dim // embed_dim)
NUM_CLASSES = 10
HEAD_PAD = 128             # classifier columns padded to a lane-dense 128
VMEM_LIMIT = 48 * 1024 * 1024   # < 64 MiB so it is valid on v7x as well
_SQRT2_INV = 1.0 / math.sqrt(2.0)


# ============================== Pallas kernels ==================================
def _linear_kernel(x_ref, w_ref, b_ref, o_ref):
    # cast the already-loaded f32 tile to bf16 in VMEM (no host-side bf16 copy)
    acc = jnp.dot(x_ref[...].astype(jnp.bfloat16), w_ref[...],
                  preferred_element_type=jnp.float32)
    o_ref[...] = (acc + b_ref[...]).astype(o_ref.dtype)


def linear(x, w_bf16, b, *, block_m=256):
    """Row-tiled y = x @ W + b. x:(M,K) f32, W:(K,N) bf16 resident, out f32."""
    M, K = x.shape
    Kw, N = w_bf16.shape
    assert K == Kw
    bm = min(block_m, M)
    Mp = pl.cdiv(M, bm) * bm
    xp = jnp.pad(x, ((0, Mp - M), (0, 0))) if Mp != M else x
    out = pl.pallas_call(
        _linear_kernel,
        out_shape=jax.ShapeDtypeStruct((Mp, N), jnp.float32),
        grid=(Mp // bm,),
        in_specs=[
            pl.BlockSpec((bm, K), lambda i: (i, 0)),
            pl.BlockSpec((K, N), lambda i: (0, 0)),
            pl.BlockSpec((1, N), lambda i: (0, 0)),
        ],
        out_specs=pl.BlockSpec((bm, N), lambda i: (i, 0)),
        compiler_params=pltpu.CompilerParams(
            dimension_semantics=("parallel",),
            vmem_limit_bytes=VMEM_LIMIT),
    )(xp, w_bf16, b.reshape(1, N).astype(jnp.float32))
    return out[:M] if Mp != M else out


def _ln(z, g, b, eps):
    mu = jnp.mean(z, axis=-1, keepdims=True)
    var = jnp.mean((z - mu) * (z - mu), axis=-1, keepdims=True)  # biased, like torch
    return (z - mu) * jax.lax.rsqrt(var + eps) * g + b


def _vit_stack_kernel(w1s_ref, w2s_ref,                       # SMEM (L,) scalars
                      x_ref, mc_ref, mr_ref, pos_ref,
                      ln1g_ref, ln1b_ref, qkvw_ref, qkvb_ref, outw_ref, outb_ref,
                      ln2g_ref, ln2b_ref, m1w_ref, m1b_ref, m2w_ref, m2b_ref,
                      ng_ref, nb_ref, hw_ref, hb_ref,
                      o_ref, *, layers, heads, head_dim, n_tok, bb, scale):
    """All transformer layers + final LN + classifier for `bb` batch elements."""
    f32, bf16 = jnp.float32, jnp.bfloat16
    E = heads * head_dim

    # tokens + positional embedding, flattened to (bb * n_tok, E) lane-dense rows
    x = (x_ref[...] + pos_ref[...]).reshape(bb * n_tok, E)

    # relevance masks (layer-independent; built once)
    mc = mc_ref[...]                                   # (bb, n_tok, 1)
    mr = mr_ref[...]                                   # (bb, 1, n_tok)
    m1c = (mc == 1.0).astype(f32)
    m2c = (mc == 2.0).astype(f32)
    m1r = (mr == 1.0).astype(f32)
    m2r = (mr == 2.0).astype(f32)

    for l in range(layers):                            # unrolled layer loop
        w1 = w1s_ref[l]
        w2 = w2s_ref[l]

        # --- LN1 + fused QKV projection on all bb*n_tok rows ---
        y = _ln(x, ln1g_ref[l], ln1b_ref[l], 1e-6)
        qkv = jnp.dot(y.astype(bf16), qkvw_ref[l],
                      preferred_element_type=f32) + qkvb_ref[l]      # (R, 3E)

        # --- relevance-biased multi-head attention (per batch element) ---
        ow = outw_ref[l]                                              # (E, E) bf16
        att_rows = []
        for b in range(bb):
            r0 = b * n_tok
            qb = qkv[r0:r0 + n_tok, 0:E]
            kb = qkv[r0:r0 + n_tok, E:2 * E]
            vb = qkv[r0:r0 + n_tok, 2 * E:3 * E]
            # bias = 50 * normalize(mw mw^T, Fro); ||mw mw^T||_F == ||mw||^2
            mwc = w1 * m1c[b] + w2 * m2c[b]                           # (N, 1)
            mwr = w1 * m1r[b] + w2 * m2r[b]                           # (1, N)
            nrm = jnp.sum(mwc * mwc)
            bias = (50.0 / jnp.maximum(nrm, 1e-12)) * (mwc * mwr)     # (N, N)
            acc = None
            for h in range(heads):
                lo = h * head_dim
                qh = qb[:, lo:lo + head_dim]
                kh = kb[:, lo:lo + head_dim]
                vh = vb[:, lo:lo + head_dim]
                s = jax.lax.dot_general(
                    qh.astype(bf16), kh.astype(bf16),
                    dimension_numbers=(((1,), (1,)), ((), ())),
                    preferred_element_type=f32) * scale + bias
                s = s - jnp.max(s, axis=-1, keepdims=True)
                p = jnp.exp(s)
                p = p / jnp.sum(p, axis=-1, keepdims=True)            # exact softmax
                ho = jnp.dot(p.astype(bf16), vh.astype(bf16),
                             preferred_element_type=f32)              # (N, hd)
                # per-head partial out-projection (row slice of resident out_w);
                # no lane-axis concatenation of head outputs
                part = jnp.dot(ho.astype(bf16), ow[lo:lo + head_dim, :],
                               preferred_element_type=f32)            # (N, E)
                acc = part if acc is None else acc + part
            att_rows.append(acc)
        att = att_rows[0] if bb == 1 else jnp.concatenate(att_rows, axis=0)
        x = x + att + outb_ref[l]                      # residual (dropout = identity)

        # --- LN2 + MLP (exact erf-GELU) + residual ---
        y2 = _ln(x, ln2g_ref[l], ln2b_ref[l], 1e-6)
        h1 = jnp.dot(y2.astype(bf16), m1w_ref[l],
                     preferred_element_type=f32) + m1b_ref[l]
        h1 = 0.5 * h1 * (1.0 + jax.lax.erf(h1 * _SQRT2_INV))
        h2 = jnp.dot(h1.astype(bf16), m2w_ref[l],
                     preferred_element_type=f32) + m2b_ref[l]
        x = x + h2

    # --- final LayerNorm (eps 1e-5, torch default) + classifier head ---
    t = _ln(x, ng_ref[...], nb_ref[...], 1e-5)
    for b in range(bb):
        acc = hb_ref[...]                              # (1, HEAD_PAD) f32
        for n in range(n_tok):
            r = b * n_tok + n
            acc = acc + jnp.dot(t[r:r + 1, :].astype(bf16), hw_ref[n],
                                preferred_element_type=f32)
        o_ref[b] = acc.astype(o_ref.dtype)


def _pick_batch_block(B, N):
    """Batch elements per grid step: enough rows (~128) to feed the MXU, but keep
    >= 2 grid steps when possible so both v7x TensorCores get work."""
    target = max(1, 128 // max(N, 1))
    cap = B if B < 2 else max(1, B // 2)
    best = 1
    for bb in range(1, B + 1):
        if B % bb == 0 and bb <= min(target, cap):
            best = bb
    return best


def vit_stack(tokens, M, pos_embed, w1s, w2s, pk):
    """tokens: (B, N, E) f32; M: (B, N, 1). One fused pallas_call -> (B, classes)."""
    B, N, E = tokens.shape
    bb = _pick_batch_block(B, N)
    mrow = jnp.transpose(M, (0, 2, 1))                 # computed once, not per layer
    L = pk["qkv_w"].shape[0]

    def resident(a):
        zeros = (0,) * a.ndim
        return pl.BlockSpec(a.shape, lambda i, z=zeros: z)

    smem = pl.BlockSpec(memory_space=pltpu.MemorySpace.SMEM)

    weights = [pk["ln1_g"], pk["ln1_b"], pk["qkv_w"], pk["qkv_b"],
               pk["out_w"], pk["out_b"], pk["ln2_g"], pk["ln2_b"],
               pk["mlp1_w"], pk["mlp1_b"], pk["mlp2_w"], pk["mlp2_b"],
               pk["norm_g"], pk["norm_b"], pk["head_w"], pk["head_b"]]

    out = pl.pallas_call(
        functools.partial(_vit_stack_kernel, layers=L, heads=HEADS,
                          head_dim=HEAD_DIM, n_tok=N, bb=bb,
                          scale=1.0 / math.sqrt(HEAD_DIM)),
        out_shape=jax.ShapeDtypeStruct((B, 1, HEAD_PAD), jnp.float32),
        grid=(B // bb,),
        in_specs=[smem, smem,
                  pl.BlockSpec((bb, N, E), lambda i: (i, 0, 0)),
                  pl.BlockSpec((bb, N, 1), lambda i: (i, 0, 0)),
                  pl.BlockSpec((bb, 1, N), lambda i: (i, 0, 0)),
                  resident(pos_embed)] + [resident(w) for w in weights],
        out_specs=pl.BlockSpec((bb, 1, HEAD_PAD), lambda i: (i, 0, 0)),
        compiler_params=pltpu.CompilerParams(
            dimension_semantics=("parallel",),
            vmem_limit_bytes=VMEM_LIMIT),
    )(w1s, w2s, tokens, M, mrow, pos_embed, *weights)
    return out[:, 0, :NUM_CLASSES]


# ============================== parameters ======================================
def init_params(key, in_features, num_tokens):
    ks = iter(jax.random.split(key, 4 + 6 * NUM_LAYERS))

    def w(shape):
        return (0.02 * jax.random.normal(next(ks), shape)).astype(jnp.float32)

    params = {
        # TODO(synk): DenseNet3D backbone definition is not provided; stand-in is a
        # deterministic linear patch embedding computed by the Pallas linear kernel.
        "patch_w": w((in_features, EMBED)),
        "patch_b": jnp.zeros((EMBED,), jnp.float32),
        "pos_w": w((3, EMBED)),
        "pos_b": jnp.zeros((EMBED,), jnp.float32),
        "norm_g": jnp.ones((EMBED,), jnp.float32),
        "norm_b": jnp.zeros((EMBED,), jnp.float32),
        # classifier padded to 128 lane-dense columns; only first NUM_CLASSES used
        "head_w": w((num_tokens * EMBED, HEAD_PAD)),
        "head_b": jnp.zeros((HEAD_PAD,), jnp.float32),
        "blocks": [],
    }
    for _ in range(NUM_LAYERS):
        params["blocks"].append({
            "ln1_g": jnp.ones((EMBED,), jnp.float32),
            "ln1_b": jnp.zeros((EMBED,), jnp.float32),
            "qkv_w": w((EMBED, 3 * EMBED)),           # in_proj_weight.T ([q;k;v] cols)
            "qkv_b": jnp.zeros((3 * EMBED,), jnp.float32),
            "out_w": w((EMBED, EMBED)),
            "out_b": jnp.zeros((EMBED,), jnp.float32),
            "ln2_g": jnp.ones((EMBED,), jnp.float32),
            "ln2_b": jnp.zeros((EMBED,), jnp.float32),
            "mlp1_w": w((EMBED, MLP_HIDDEN)),
            "mlp1_b": jnp.zeros((MLP_HIDDEN,), jnp.float32),
            "mlp2_w": w((MLP_HIDDEN, EMBED)),
            "mlp2_b": jnp.zeros((EMBED,), jnp.float32),
            "alpha": jnp.float32(0.5),                # initial_alpha
            "w2": jnp.float32(1.0),
        })
    return params


def pack_params(params, num_tokens):
    """One-time (outside jit): stack per-layer weights and cast matmul weights to
    bf16 so no per-step f32->bf16 converts or duplicate HBM copies are needed."""
    L = len(params["blocks"])
    bf16 = jnp.bfloat16
    st = lambda k: jnp.stack([blk[k] for blk in params["blocks"]])
    return {
        "patch_w": params["patch_w"].astype(bf16),
        "patch_b": params["patch_b"],
        "pos_w": params["pos_w"],
        "pos_b": params["pos_b"],
        "ln1_g": st("ln1_g").reshape(L, 1, EMBED),
        "ln1_b": st("ln1_b").reshape(L, 1, EMBED),
        "qkv_w": st("qkv_w").astype(bf16),                       # (L, E, 3E)
        "qkv_b": st("qkv_b").reshape(L, 1, 3 * EMBED),
        "out_w": st("out_w").astype(bf16),                       # (L, E, E)
        "out_b": st("out_b").reshape(L, 1, EMBED),
        "ln2_g": st("ln2_g").reshape(L, 1, EMBED),
        "ln2_b": st("ln2_b").reshape(L, 1, EMBED),
        "mlp1_w": st("mlp1_w").astype(bf16),                     # (L, E, H)
        "mlp1_b": st("mlp1_b").reshape(L, 1, MLP_HIDDEN),
        "mlp2_w": st("mlp2_w").astype(bf16),                     # (L, H, E)
        "mlp2_b": st("mlp2_b").reshape(L, 1, EMBED),
        "norm_g": params["norm_g"].reshape(1, EMBED),
        "norm_b": params["norm_b"].reshape(1, EMBED),
        "head_w": params["head_w"].reshape(num_tokens, EMBED, HEAD_PAD).astype(bf16),
        "head_b": params["head_b"].reshape(1, HEAD_PAD),
        "alpha": st("alpha"),                                    # (L,)
        "w2": st("w2"),                                          # (L,)
    }


# ============================== model (glue + kernels) ==========================
def vit_forward(x, atlas_scores, pk):
    """x, atlas_scores: (B, C, D, H, W) NCDHW, float32."""
    B, C, D, H, W = x.shape
    stride = PATCH  # overlap = 0

    # --- pad_for_overlap ---
    def calc_pad(dim):
        if dim < PATCH:
            return PATCH - dim
        n_patches = (dim - PATCH + stride - 1) // stride + 1
        total = (n_patches - 1) * stride + PATCH
        return total - dim

    pd, ph, pw = calc_pad(D), calc_pad(H), calc_pad(W)
    x = jnp.pad(x, ((0, 0), (0, 0), (0, pd), (0, ph), (0, pw)))
    atlas_scores = jnp.pad(atlas_scores, ((0, 0), (0, 0), (0, pd), (0, ph), (0, pw)))
    Dp, Hp, Wp = D + pd, H + ph, W + pw
    nD, nH, nW = Dp // PATCH, Hp // PATCH, Wp // PATCH
    num_tokens = nD * nH * nW

    # --- extract_overlapping_patches (stride == patch_size -> exact reshape) ---
    patches = x.reshape(B, C, nD, PATCH, nH, PATCH, nW, PATCH)
    patches = patches.transpose(0, 2, 4, 6, 1, 3, 5, 7)           # (B,nD,nH,nW,C,p,p,p)
    patches = patches.reshape(B * num_tokens, C * PATCH ** 3)

    # --- M = MaxPool3d(kernel=stride=16) over atlas scores -> (B, N, 1) ---
    a = atlas_scores.reshape(B, 1, nD, PATCH, nH, PATCH, nW, PATCH)
    M = jnp.max(a, axis=(3, 5, 7)).reshape(B, num_tokens, 1)

    # --- backbone token embeddings (Pallas tiled matmul; DenseNet3D stand-in) ---
    tokens = linear(patches, pk["patch_w"], pk["patch_b"])        # (B*N, E)
    tokens = tokens.reshape(B, num_tokens, EMBED)

    # --- positional embedding: tiny (N,3)@(3,E) -> plain jnp (no kernel launch) ---
    idx = jnp.arange(num_tokens, dtype=jnp.int32)
    d_i = idx // (nH * nW)
    rem = idx % (nH * nW)
    h_i = rem // nW
    w_i = rem % nW
    zeros = jnp.zeros((num_tokens,), jnp.float32)
    d_c = d_i.astype(jnp.float32) / (nD - 1) if nD > 1 else zeros
    h_c = h_i.astype(jnp.float32) / (nH - 1) if nH > 1 else zeros
    w_c = w_i.astype(jnp.float32) / (nW - 1) if nW > 1 else zeros
    coords = jnp.stack([d_c, h_c, w_c], axis=-1)                  # (N, 3)
    pos_embed = coords @ pk["pos_w"] + pk["pos_b"][None, :]       # (N, E)

    # --- relevance scalars per layer (mask/bias math happens inside the kernel) ---
    alpha_scaled = (jnp.tanh(pk["alpha"] + 1e-7) + 1.0) / 2.0
    w2s = jax.nn.softplus(pk["w2"] + 1e-7)
    w1s = alpha_scaled * w2s                                      # (L,)

    # --- fused: pos add + all blocks + final LN + classifier head ---
    return vit_stack(tokens, M, pos_embed, w1s, w2s, pk)          # (B, NUM_CLASSES)


# ===================================== main =====================================
if __name__ == "__main__":
    key = jax.random.PRNGKey(0)
    kx, ka, kp = jax.random.split(key, 3)

    # small shapes consistent with the module: (B, C, D, H, W), patch_size=16
    B, C, D, H, W = 2, 1, 32, 32, 32
    x = jax.random.normal(kx, (B, C, D, H, W), dtype=jnp.float32)

    # TODO(synk): process_batch / prepare_regions are not provided; synthesize
    # deterministic atlas relevance scores with values in {0, 1, 2}.
    atlas_scores = jax.random.randint(ka, (B, 1, D, H, W), 0, 3).astype(jnp.float32)

    num_tokens = (D // PATCH) * (H // PATCH) * (W // PATCH)
    # TODO(synk): load_huggingface_weights replaced by deterministic in-script init.
    params = init_params(kp, C * PATCH ** 3, num_tokens)
    pk = pack_params(params, num_tokens)   # one-time bf16 cast / stacking (outside jit)

    fwd = jax.jit(vit_forward)
    logits = jax.block_until_ready(fwd(x, atlas_scores, pk))
    assert logits.shape == (B, NUM_CLASSES) and logits.dtype == jnp.float32
    print("KERNEL_OK")
</pallas_src>

<mosaic_0001>
module attributes {stable_mosaic.version = 11 : i64} {
  func.func @_linear_kernel(%arg0: i32, %arg1: memref<16x4096xf32, #tpu.memory_space<vmem>>, %arg2: memref<4096x128xbf16, #tpu.memory_space<vmem>>, %arg3: memref<1x128xf32, #tpu.memory_space<vmem>>, %arg4: memref<16x128xf32, #tpu.memory_space<vmem>>) attributes {dimension_semantics = [#tpu.dimension_semantics<parallel>], iteration_bounds = array<i64: 1>, scalar_prefetch = 0 : i64, scratch_operands = 0 : i64, tpu.core_type = #tpu.core_type<tc>, window_params = [{transform_indices = @transform_0, window_bounds = array<i64: 16, 4096>}, {pipeline_mode = #tpu.pipeline_mode<synchronous>, transform_indices = @transform_1, window_bounds = array<i64: 4096, 128>}, {pipeline_mode = #tpu.pipeline_mode<synchronous>, transform_indices = @transform_2, window_bounds = array<i64: 1, 128>}, {transform_indices = @transform_3, window_bounds = array<i64: 16, 128>}]} {
    %c0 = arith.constant 0 : index
    %c0_0 = arith.constant 0 : index
    %0 = vector.load %arg1[%c0, %c0_0] : memref<16x4096xf32, #tpu.memory_space<vmem>>, vector<16x4096xf32>
    %1 = arith.truncf %0 : vector<16x4096xf32> to vector<16x4096xbf16>
    %c0_1 = arith.constant 0 : index
    %c0_2 = arith.constant 0 : index
    %2 = vector.load %arg2[%c0_1, %c0_2] : memref<4096x128xbf16, #tpu.memory_space<vmem>>, vector<4096x128xbf16>
    %cst = arith.constant dense<0.000000e+00> : vector<16x128xf32>
    %3 = tpu.matmul %1, %2, %cst {dimension_numbers = #tpu.dot_dimension_numbers<[1], [0], [0], [1], [0, 0, 1, 1], [], []>} : vector<16x4096xbf16>, vector<4096x128xbf16>, vector<16x128xf32> -> vector<16x128xf32>
    %c0_3 = arith.constant 0 : index
    %c0_4 = arith.constant 0 : index
    %4 = vector.load %arg3[%c0_3, %c0_4] : memref<1x128xf32, #tpu.memory_space<vmem>>, vector<1x128xf32>
    %5 = vector.broadcast %4 : vector<1x128xf32> to vector<16x128xf32>
    %6 = arith.addf %3, %5 : vector<16x128xf32>
    %c0_5 = arith.constant 0 : index
    %c0_6 = arith.constant 0 : index
    %7 = vector.load %arg4[%c0_5, %c0_6] : memref<16x128xf32, #tpu.memory_space<vmem>>, vector<16x128xf32>
    tpu.vector_store %arg4[%c0_5, %c0_6], %6 {strides = array<i32>} : memref<16x128xf32, #tpu.memory_space<vmem>>, vector<16x128xf32>,
    return
  }
  func.func @transform_0(%arg0: i32) -> (i32, i32) {
    %c0_i32 = arith.constant 0 : i32
    %c0_i32_0 = arith.constant 0 : i32
    return %arg0, %c0_i32 : i32, i32
  }
  func.func @transform_1(%arg0: i32) -> (i32, i32) {
    %c0_i32 = arith.constant 0 : i32
    %c0_i32_0 = arith.constant 0 : i32
    %c0_i32_1 = arith.constant 0 : i32
    return %c0_i32, %c0_i32_0 : i32, i32
  }
  func.func @transform_2(%arg0: i32) -> (i32, i32) {
    %c0_i32 = arith.constant 0 : i32
    %c0_i32_0 = arith.constant 0 : i32
    %c0_i32_1 = arith.constant 0 : i32
    return %c0_i32, %c0_i32_0 : i32, i32
  }
  func.func @transform_3(%arg0: i32) -> (i32, i32) {
    %c0_i32 = arith.constant 0 : i32
    %c0_i32_0 = arith.constant 0 : i32
    return %arg0, %c0_i32 : i32, i32
  }
}

module attributes {stable_mosaic.version = 11 : i64} {
  func.func @_vit_stack_kernel(%arg0: i32, %arg1: memref<2xf32, #tpu.memory_space<smem>>, %arg2: memref<2xf32, #tpu.memory_space<smem>>, %arg3: memref<1x8x128xf32, #tpu.memory_space<vmem>>, %arg4: memref<1x8x1xf32, #tpu.memory_space<vmem>>, %arg5: memref<1x1x8xf32, #tpu.memory_space<vmem>>, %arg6: memref<8x128xf32, #tpu.memory_space<vmem>>, %arg7: memref<2x1x128xf32, #tpu.memory_space<vmem>>, %arg8: memref<2x1x128xf32, #tpu.memory_space<vmem>>, %arg9: memref<2x128x384xbf16, #tpu.memory_space<vmem>>, %arg10: memref<2x1x384xf32, #tpu.memory_space<vmem>>, %arg11: memref<2x128x128xbf16, #tpu.memory_space<vmem>>, %arg12: memref<2x1x128xf32, #tpu.memory_space<vmem>>, %arg13: memref<2x1x128xf32, #tpu.memory_space<vmem>>, %arg14: memref<2x1x128xf32, #tpu.memory_space<vmem>>, %arg15: memref<2x128x256xbf16, #tpu.memory_space<vmem>>, %arg16: memref<2x1x256xf32, #tpu.memory_space<vmem>>, %arg17: memref<2x256x128xbf16, #tpu.memory_space<vmem>>, %arg18: memref<2x1x128xf32, #tpu.memory_space<vmem>>, %arg19: memref<1x128xf32, #tpu.memory_space<vmem>>, %arg20: memref<1x128xf32, #tpu.memory_space<vmem>>, %arg21: memref<8x128x128xbf16, #tpu.memory_space<vmem>>, %arg22: memref<1x128xf32, #tpu.memory_space<vmem>>, %arg23: memref<1x1x128xf32, #tpu.memory_space<vmem>>) attributes {dimension_semantics = [#tpu.dimension_semantics<parallel>], iteration_bounds = array<i64: 2>, scalar_prefetch = 0 : i64, scratch_operands = 0 : i64, tpu.core_type = #tpu.core_type<tc>, window_params = [{transform_indices = @transform_0, window_bounds = array<i64: 2>}, {transform_indices = @transform_1, window_bounds = array<i64: 2>}, {transform_indices = @transform_2, window_bounds = array<i64: 1, 8, 128>}, {transform_indices = @transform_3, window_bounds = array<i64: 1, 8, 1>}, {transform_indices = @transform_4, window_bounds = array<i64: 1, 1, 8>}, {pipeline_mode = #tpu.pipeline_mode<synchronous>, transform_indices = @transform_5, window_bounds = array<i64: 8, 128>}, {pipeline_mode = #tpu.pipeline_mode<synchronous>, transform_indices = @transform_6, window_bounds = array<i64: 2, 1, 128>}, {pipeline_mode = #tpu.pipeline_mode<synchronous>, transform_indices = @transform_7, window_bounds = array<i64: 2, 1, 128>}, {pipeline_mode = #tpu.pipeline_mode<synchronous>, transform_indices = @transform_8, window_bounds = array<i64: 2, 128, 384>}, {pipeline_mode = #tpu.pipeline_mode<synchronous>, transform_indices = @transform_9, window_bounds = array<i64: 2, 1, 384>}, {pipeline_mode = #tpu.pipeline_mode<synchronous>, transform_indices = @transform_10, window_bounds = array<i64: 2, 128, 128>}, {pipeline_mode = #tpu.pipeline_mode<synchronous>, transform_indices = @transform_11, window_bounds = array<i64: 2, 1, 128>}, {pipeline_mode = #tpu.pipeline_mode<synchronous>, transform_indices = @transform_12, window_bounds = array<i64: 2, 1, 128>}, {pipeline_mode = #tpu.pipeline_mode<synchronous>, transform_indices = @transform_13, window_bounds = array<i64: 2, 1, 128>}, {pipeline_mode = #tpu.pipeline_mode<synchronous>, transform_indices = @transform_14, window_bounds = array<i64: 2, 128, 256>}, {pipeline_mode = #tpu.pipeline_mode<synchronous>, transform_indices = @transform_15, window_bounds = array<i64: 2, 1, 256>}, {pipeline_mode = #tpu.pipeline_mode<synchronous>, transform_indices = @transform_16, window_bounds = array<i64: 2, 256, 128>}, {pipeline_mode = #tpu.pipeline_mode<synchronous>, transform_indices = @transform_17, window_bounds = array<i64: 2, 1, 128>}, {pipeline_mode = #tpu.pipeline_mode<synchronous>, transform_indices = @transform_18, window_bounds = array<i64: 1, 128>}, {pipeline_mode = #tpu.pipeline_mode<synchronous>, transform_indices = @transform_19, window_bounds = array<i64: 1, 128>}, {pipeline_mode = #tpu.pipeline_mode<synchronous>, transform_indices = @transform_20, window_bounds = array<i64: 8, 128, 128>}, {pipeline_mode = #tpu.pipeline_mode<synchronous>, transform_indices = @transform_21, window_bounds = array<i64: 1, 128>}, {transform_indices = @transform_22, window_bounds = array<i64: 1, 1, 128>}]} {
    %c0 = arith.constant 0 : index
    %c0_0 = arith.constant 0 : index
    %c0_1 = arith.constant 0 : index
    %0 = vector.load %arg3[%c0, %c0_0, %c0_1] : memref<1x8x128xf32, #tpu.memory_space<vmem>>, vector<1x8x128xf32>
    %c0_2 = arith.constant 0 : index
    %c0_3 = arith.constant 0 : index
    %1 = vector.load %arg6[%c0_2, %c0_3] : memref<8x128xf32, #tpu.memory_space<vmem>>, vector<8x128xf32>
    %2 = vector.shape_cast %1 : vector<8x128xf32> to vector<1x8x128xf32>
    %3 = arith.addf %0, %2 : vector<1x8x128xf32>
    %4 = vector.shape_cast %3 : vector<1x8x128xf32> to vector<8x128xf32>
    %c0_4 = arith.constant 0 : index
    %c0_5 = arith.constant 0 : index
    %c0_6 = arith.constant 0 : index
    %5 = vector.load %arg4[%c0_4, %c0_5, %c0_6] : memref<1x8x1xf32, #tpu.memory_space<vmem>>, vector<1x8x1xf32>
    %c0_7 = arith.constant 0 : index
    %c0_8 = arith.constant 0 : index
    %c0_9 = arith.constant 0 : index
    %6 = vector.load %arg5[%c0_7, %c0_8, %c0_9] : memref<1x1x8xf32, #tpu.memory_space<vmem>>, vector<1x1x8xf32>
    %cst = arith.constant 1.000000e+00 : f32
    %7 = vector.broadcast %cst : f32 to vector<1x8x1xf32>
    %8 = arith.cmpf oeq, %5, %7 : vector<1x8x1xf32>
    %9 = arith.extui %8 : vector<1x8x1xi1> to vector<1x8x1xi32>
    %10 = arith.sitofp %9 : vector<1x8x1xi32> to vector<1x8x1xf32>
    %cst_10 = arith.constant 2.000000e+00 : f32
    %11 = vector.broadcast %cst_10 : f32 to vector<1x8x1xf32>
    %12 = arith.cmpf oeq, %5, %11 : vector<1x8x1xf32>
    %13 = arith.extui %12 : vector<1x8x1xi1> to vector<1x8x1xi32>
    %14 = arith.sitofp %13 : vector<1x8x1xi32> to vector<1x8x1xf32>
    %cst_11 = arith.constant 1.000000e+00 : f32
    %15 = vector.broadcast %cst_11 : f32 to vector<1x1x8xf32>
    %16 = arith.cmpf oeq, %6, %15 : vector<1x1x8xf32>
    %17 = arith.extui %16 : vector<1x1x8xi1> to vector<1x1x8xi32>
    %18 = arith.sitofp %17 : vector<1x1x8xi32> to vector<1x1x8xf32>
    %cst_12 = arith.constant 2.000000e+00 : f32
    %19 = vector.broadcast %cst_12 : f32 to vector<1x1x8xf32>
    %20 = arith.cmpf oeq, %6, %19 : vector<1x1x8xf32>
    %21 = arith.extui %20 : vector<1x1x8xi1> to vector<1x1x8xi32>
    %22 = arith.sitofp %21 : vector<1x1x8xi32> to vector<1x1x8xf32>
    %c0_13 = arith.constant 0 : index
    %23 = memref.load %arg1[%c0_13] : memref<2xf32, #tpu.memory_space<smem>>
    %c0_14 = arith.constant 0 : index
    %24 = memref.load %arg2[%c0_14] : memref<2xf32, #tpu.memory_space<smem>>
    %c0_15 = arith.constant 0 : index
    %c0_16 = arith.constant 0 : index
    %c0_17 = arith.constant 0 : index
    %25 = vector.load %arg7[%c0_15, %c0_16, %c0_17] : memref<2x1x128xf32, #tpu.memory_space<vmem>>, vector<1x1x128xf32>
    %26 = vector.shape_cast %25 : vector<1x1x128xf32> to vector<1x128xf32>
    %c0_18 = arith.constant 0 : index
    %c0_19 = arith.constant 0 : index
    %c0_20 = arith.constant 0 : index
    %27 = vector.load %arg8[%c0_18, %c0_19, %c0_20] : memref<2x1x128xf32, #tpu.memory_space<vmem>>, vector<1x1x128xf32>
    %28 = vector.shape_cast %27 : vector<1x1x128xf32> to vector<1x128xf32>
    %cst_21 = arith.constant dense<0.000000e+00> : vector<8xf32>
    %29 = vector.multi_reduction <add>, %4, %cst_21 [1] : vector<8x128xf32> to vector<8xf32>
    %30 = vector.shape_cast %29 : vector<8xf32> to vector<8x1xf32>
    %cst_22 = arith.constant 1.280000e+02 : f32
    %31 = vector.broadcast %cst_22 : f32 to vector<8x1xf32>
    %32 = arith.divf %30, %31 : vector<8x1xf32>
    %33 = vector.broadcast %32 : vector<8x1xf32> to vector<8x128xf32>
    %34 = arith.subf %4, %33 : vector<8x128xf32>
    %35 = vector.broadcast %32 : vector<8x1xf32> to vector<8x128xf32>
    %36 = arith.subf %4, %35 : vector<8x128xf32>
    %37 = arith.mulf %34, %36 : vector<8x128xf32>
    %cst_23 = arith.constant dense<0.000000e+00> : vector<8xf32>
    %38 = vector.multi_reduction <add>, %37, %cst_23 [1] : vector<8x128xf32> to vector<8xf32>
    %39 = vector.shape_cast %38 : vector<8xf32> to vector<8x1xf32>
    %cst_24 = arith.constant 1.280000e+02 : f32
    %40 = vector.broadcast %cst_24 : f32 to vector<8x1xf32>
    %41 = arith.divf %39, %40 : vector<8x1xf32>
    %42 = vector.broadcast %32 : vector<8x1xf32> to vector<8x128xf32>
    %43 = arith.subf %4, %42 : vector<8x128xf32>
    %cst_25 = arith.constant 9.99999997E-7 : f32
    %44 = vector.broadcast %cst_25 : f32 to vector<8x1xf32>
    %45 = arith.addf %41, %44 : vector<8x1xf32>
    %46 = math.rsqrt %45 : vector<8x1xf32>
    %47 = vector.broadcast %46 : vector<8x1xf32> to vector<8x128xf32>
    %48 = arith.mulf %43, %47 : vector<8x128xf32>
    %49 = vector.broadcast %26 : vector<1x128xf32> to vector<8x128xf32>
    %50 = arith.mulf %48, %49 : vector<8x128xf32>
    %51 = vector.broadcast %28 : vector<1x128xf32> to vector<8x128xf32>
    %52 = arith.addf %50, %51 : vector<8x128xf32>
    %53 = arith.truncf %52 : vector<8x128xf32> to vector<8x128xbf16>
    %c0_26 = arith.constant 0 : index
    %c0_27 = arith.constant 0 : index
    %c0_28 = arith.constant 0 : index
    %54 = vector.load %arg9[%c0_26, %c0_27, %c0_28] : memref<2x128x384xbf16, #tpu.memory_space<vmem>>, vector<1x128x384xbf16>
    %55 = vector.shape_cast %54 : vector<1x128x384xbf16> to vector<128x384xbf16>
    %cst_29 = arith.constant dense<0.000000e+00> : vector<8x384xf32>
    %56 = tpu.matmul %53, %55, %cst_29 {dimension_numbers = #tpu.dot_dimension_numbers<[1], [0], [0], [1], [0, 0, 1, 1], [], []>} : vector<8x128xbf16>, vector<128x384xbf16>, vector<8x384xf32> -> vector<8x384xf32>
    %c0_30 = arith.constant 0 : index
    %c0_31 = arith.constant 0 : index
    %c0_32 = arith.constant 0 : index
    %57 = vector.load %arg10[%c0_30, %c0_31, %c0_32] : memref<2x1x384xf32, #tpu.memory_space<vmem>>, vector<1x1x384xf32>
    %58 = vector.shape_cast %57 : vector<1x1x384xf32> to vector<1x384xf32>
    %59 = vector.broadcast %58 : vector<1x384xf32> to vector<8x384xf32>
    %60 = arith.addf %56, %59 : vector<8x384xf32>
    %c0_33 = arith.constant 0 : index
    %c0_34 = arith.constant 0 : index
    %c0_35 = arith.constant 0 : index
    %61 = vector.load %arg11[%c0_33, %c0_34, %c0_35] : memref<2x128x128xbf16, #tpu.memory_space<vmem>>, vector<1x128x128xbf16>
    %62 = vector.shape_cast %61 : vector<1x128x128xbf16> to vector<128x128xbf16>
    %63 = vector.extract_strided_slice %60 {offsets = [0, 0], sizes = [8, 128], strides = [1, 1]} : vector<8x384xf32> to vector<8x128xf32>
    %64 = vector.extract_strided_slice %60 {offsets = [0, 128], sizes = [8, 128], strides = [1, 1]} : vector<8x384xf32> to vector<8x128xf32>
    %65 = vector.extract_strided_slice %60 {offsets = [0, 256], sizes = [8, 128], strides = [1, 1]} : vector<8x384xf32> to vector<8x128xf32>
    %66 = vector.shape_cast %10 : vector<1x8x1xf32> to vector<8x1xf32>
    %67 = vector.broadcast %23 : f32 to vector<8x1xf32>
    %68 = arith.mulf %67, %66 : vector<8x1xf32>
    %69 = vector.shape_cast %14 : vector<1x8x1xf32> to vector<8x1xf32>
    %70 = vector.broadcast %24 : f32 to vector<8x1xf32>
    %71 = arith.mulf %70, %69 : vector<8x1xf32>
    %72 = arith.addf %68, %71 : vector<8x1xf32>
    %73 = vector.shape_cast %18 : vector<1x1x8xf32> to vector<1x8xf32>
    %74 = vector.broadcast %23 : f32 to vector<1x8xf32>
    %75 = arith.mulf %74, %73 : vector<1x8xf32>
    %76 = vector.shape_cast %22 : vector<1x1x8xf32> to vector<1x8xf32>
    %77 = vector.broadcast %24 : f32 to vector<1x8xf32>
    %78 = arith.mulf %77, %76 : vector<1x8xf32>
    %79 = arith.addf %75, %78 : vector<1x8xf32>
    %80 = arith.mulf %72, %72 : vector<8x1xf32>
    %81 = vector.shape_cast %80 : vector<8x1xf32> to vector<1x8x1xf32>
    %cst_36 = arith.constant dense<0.000000e+00> : vector<1xf32>
    %82 = vector.multi_reduction <add>, %81, %cst_36 [1, 2] : vector<1x8x1xf32> to vector<1xf32>
    %83 = vector.shape_cast %82 : vector<1xf32> to vector<1x1x1xf32>
    %84 = vector.extract %83[0, 0, 0] : f32 from vector<1x1x1xf32>
    %cst_37 = arith.constant 9.99999996E-13 : f32
    %85 = arith.maximumf %84, %cst_37 : f32
    %cst_38 = arith.constant 5.000000e+01 : f32
    %86 = arith.divf %cst_38, %85 : f32
    %87 = vector.broadcast %72 : vector<8x1xf32> to vector<8x8xf32>
    %88 = vector.broadcast %79 : vector<1x8xf32> to vector<8x8xf32>
    %89 = arith.mulf %87, %88 : vector<8x8xf32>
    %90 = vector.broadcast %86 : f32 to vector<8x8xf32>
    %91 = arith.mulf %90, %89 : vector<8x8xf32>
    %92 = vector.extract_strided_slice %63 {offsets = [0, 0], sizes = [8, 32], strides = [1, 1]} : vector<8x128xf32> to vector<8x32xf32>
    %93 = vector.extract_strided_slice %64 {offsets = [0, 0], sizes = [8, 32], strides = [1, 1]} : vector<8x128xf32> to vector<8x32xf32>
    %94 = vector.extract_strided_slice %65 {offsets = [0, 0], sizes = [8, 32], strides = [1, 1]} : vector<8x128xf32> to vector<8x32xf32>
    %95 = arith.truncf %92 : vector<8x32xf32> to vector<8x32xbf16>
    %96 = arith.truncf %93 : vector<8x32xf32> to vector<8x32xbf16>
    %cst_39 = arith.constant dense<0.000000e+00> : vector<8x8xf32>
    %97 = tpu.matmul %95, %96, %cst_39 {dimension_numbers = #tpu.dot_dimension_numbers<[1], [1], [0], [0], [0, 0, 1, 0], [], []>} : vector<8x32xbf16>, vector<8x32xbf16>, vector<8x8xf32> -> vector<8x8xf32>
    %cst_40 = arith.constant 0.176776692 : f32
    %98 = vector.broadcast %cst_40 : f32 to vector<8x8xf32>
    %99 = arith.mulf %97, %98 : vector<8x8xf32>
    %100 = arith.addf %99, %91 : vector<8x8xf32>
    %cst_41 = arith.constant dense<0xFF800000> : vector<8xf32>
    %101 = vector.multi_reduction <maximumf>, %100, %cst_41 [1] : vector<8x8xf32> to vector<8xf32>
    %102 = vector.shape_cast %101 : vector<8xf32> to vector<8x1xf32>
    %103 = vector.broadcast %102 : vector<8x1xf32> to vector<8x8xf32>
    %104 = arith.subf %100, %103 : vector<8x8xf32>
    %105 = math.exp %104 : vector<8x8xf32>
    %cst_42 = arith.constant dense<0.000000e+00> : vector<8xf32>
    %106 = vector.multi_reduction <add>, %105, %cst_42 [1] : vector<8x8xf32> to vector<8xf32>
    %107 = vector.shape_cast %106 : vector<8xf32> to vector<8x1xf32>
    %108 = vector.broadcast %107 : vector<8x1xf32> to vector<8x8xf32>
    %109 = arith.divf %105, %108 : vector<8x8xf32>
    %110 = arith.truncf %109 : vector<8x8xf32> to vector<8x8xbf16>
    %111 = arith.truncf %94 : vector<8x32xf32> to vector<8x32xbf16>
    %cst_43 = arith.constant dense<0.000000e+00> : vector<8x32xf32>
    %112 = tpu.matmul %110, %111, %cst_43 {dimension_numbers = #tpu.dot_dimension_numbers<[1], [0], [0], [1], [0, 0, 1, 1], [], []>} : vector<8x8xbf16>, vector<8x32xbf16>, vector<8x32xf32> -> vector<8x32xf32>
    %113 = arith.truncf %112 : vector<8x32xf32> to vector<8x32xbf16>
    %114 = vector.extract_strided_slice %62 {offsets = [0, 0], sizes = [32, 128], strides = [1, 1]} : vector<128x128xbf16> to vector<32x128xbf16>
    %cst_44 = arith.constant dense<0.000000e+00> : vector<8x128xf32>
    %115 = tpu.matmul %113, %114, %cst_44 {dimension_numbers = #tpu.dot_dimension_numbers<[1], [0], [0], [1], [0, 0, 1, 1], [], []>} : vector<8x32xbf16>, vector<32x128xbf16>, vector<8x128xf32> -> vector<8x128xf32>
    %116 = vector.extract_strided_slice %63 {offsets = [0, 32], sizes = [8, 32], strides = [1, 1]} : vector<8x128xf32> to vector<8x32xf32>
    %117 = vector.extract_strided_slice %64 {offsets = [0, 32], sizes = [8, 32], strides = [1, 1]} : vector<8x128xf32> to vector<8x32xf32>
    %118 = vector.extract_strided_slice %65 {offsets = [0, 32], sizes = [8, 32], strides = [1, 1]} : vector<8x128xf32> to vector<8x32xf32>
    %119 = arith.truncf %116 : vector<8x32xf32> to vector<8x32xbf16>
    %120 = arith.truncf %117 : vector<8x32xf32> to vector<8x32xbf16>
    %cst_45 = arith.constant dense<0.000000e+00> : vector<8x8xf32>
    %121 = tpu.matmul %119, %120, %cst_45 {dimension_numbers = #tpu.dot_dimension_numbers<[1], [1], [0], [0], [0, 0, 1, 0], [], []>} : vector<8x32xbf16>, vector<8x32xbf16>, vector<8x8xf32> -> vector<8x8xf32>
    %cst_46 = arith.constant 0.176776692 : f32
    %122 = vector.broadcast %cst_46 : f32 to vector<8x8xf32>
    %123 = arith.mulf %121, %122 : vector<8x8xf32>
    %124 = arith.addf %123, %91 : vector<8x8xf32>
    %cst_47 = arith.constant dense<0xFF800000> : vector<8xf32>
    %125 = vector.multi_reduction <maximumf>, %124, %cst_47 [1] : vector<8x8xf32> to vector<8xf32>
    %126 = vector.shape_cast %125 : vector<8xf32> to vector<8x1xf32>
    %127 = vector.broadcast %126 : vector<8x1xf32> to vector<8x8xf32>
    %128 = arith.subf %124, %127 : vector<8x8xf32>
    %129 = math.exp %128 : vector<8x8xf32>
    %cst_48 = arith.constant dense<0.000000e+00> : vector<8xf32>
    %130 = vector.multi_reduction <add>, %129, %cst_48 [1] : vector<8x8xf32> to vector<8xf32>
    %131 = vector.shape_cast %130 : vector<8xf32> to vector<8x1xf32>
    %132 = vector.broadcast %131 : vector<8x1xf32> to vector<8x8xf32>
    %133 = arith.divf %129, %132 : vector<8x8xf32>
    %134 = arith.truncf %133 : vector<8x8xf32> to vector<8x8xbf16>
    %135 = arith.truncf %118 : vector<8x32xf32> to vector<8x32xbf16>
    %cst_49 = arith.constant dense<0.000000e+00> : vector<8x32xf32>
    %136 = tpu.matmul %134, %135, %cst_49 {dimension_numbers = #tpu.dot_dimension_numbers<[1], [0], [0], [1], [0, 0, 1, 1], [], []>} : vector<8x8xbf16>, vector<8x32xbf16>, vector<8x32xf32> -> vector<8x32xf32>
    %137 = arith.truncf %136 : vector<8x32xf32> to vector<8x32xbf16>
    %138 = vector.extract_strided_slice %62 {offsets = [32, 0], sizes = [32, 128], strides = [1, 1]} : vector<128x128xbf16> to vector<32x128xbf16>
    %cst_50 = arith.constant dense<0.000000e+00> : vector<8x128xf32>
    %139 = tpu.matmul %137, %138, %cst_50 {dimension_numbers = #tpu.dot_dimension_numbers<[1], [0], [0], [1], [0, 0, 1, 1], [], []>} : vector<8x32xbf16>, vector<32x128xbf16>, vector<8x128xf32> -> vector<8x128xf32>
    %140 = arith.addf %115, %139 : vector<8x128xf32>
    %141 = vector.extract_strided_slice %63 {offsets = [0, 64], sizes = [8, 32], strides = [1, 1]} : vector<8x128xf32> to vector<8x32xf32>
    %142 = vector.extract_strided_slice %64 {offsets = [0, 64], sizes = [8, 32], strides = [1, 1]} : vector<8x128xf32> to vector<8x32xf32>
    %143 = vector.extract_strided_slice %65 {offsets = [0, 64], sizes = [8, 32], strides = [1, 1]} : vector<8x128xf32> to vector<8x32xf32>
    %144 = arith.truncf %141 : vector<8x32xf32> to vector<8x32xbf16>
    %145 = arith.truncf %142 : vector<8x32xf32> to vector<8x32xbf16>
    %cst_51 = arith.constant dense<0.000000e+00> : vector<8x8xf32>
    %146 = tpu.matmul %144, %145, %cst_51 {dimension_numbers = #tpu.dot_dimension_numbers<[1], [1], [0], [0], [0, 0, 1, 0], [], []>} : vector<8x32xbf16>, vector<8x32xbf16>, vector<8x8xf32> -> vector<8x8xf32>
    %cst_52 = arith.constant 0.176776692 : f32
    %147 = vector.broadcast %cst_52 : f32 to vector<8x8xf32>
    %148 = arith.mulf %146, %147 : vector<8x8xf32>
    %149 = arith.addf %148, %91 : vector<8x8xf32>
    %cst_53 = arith.constant dense<0xFF800000> : vector<8xf32>
    %150 = vector.multi_reduction <maximumf>, %149, %cst_53 [1] : vector<8x8xf32> to vector<8xf32>
    %151 = vector.shape_cast %150 : vector<8xf32> to vector<8x1xf32>
    %152 = vector.broadcast %151 : vector<8x1xf32> to vector<8x8xf32>
    %153 = arith.subf %149, %152 : vector<8x8xf32>
    %154 = math.exp %153 : vector<8x8xf32>
    %cst_54 = arith.constant dense<0.000000e+00> : vector<8xf32>
    %155 = vector.multi_reduction <add>, %154, %cst_54 [1] : vector<8x8xf32> to vector<8xf32>
    %156 = vector.shape_cast %155 : vector<8xf32> to vector<8x1xf32>
    %157 = vector.broadcast %156 : vector<8x1xf32> to vector<8x8xf32>
    %158 = arith.divf %154, %157 : vector<8x8xf32>
    %159 = arith.truncf %158 : vector<8x8xf32> to vector<8x8xbf16>
    %160 = arith.truncf %143 : vector<8x32xf32> to vector<8x32xbf16>
    %cst_55 = arith.constant dense<0.000000e+00> : vector<8x32xf32>
    %161 = tpu.matmul %159, %160, %cst_55 {dimension_numbers = #tpu.dot_dimension_numbers<[1], [0], [0], [1], [0, 0, 1, 1], [], []>} : vector<8x8xbf16>, vector<8x32xbf16>, vector<8x32xf32> -> vector<8x32xf32>
    %162 = arith.truncf %161 : vector<8x32xf32> to vector<8x32xbf16>
    %163 = vector.extract_strided_slice %62 {offsets = [64, 0], sizes = [32, 128], strides = [1, 1]} : vector<128x128xbf16> to vector<32x128xbf16>
    %cst_56 = arith.constant dense<0.000000e+00> : vector<8x128xf32>
    %164 = tpu.matmul %162, %163, %cst_56 {dimension_numbers = #tpu.dot_dimension_numbers<[1], [0], [0], [1], [0, 0, 1, 1], [], []>} : vector<8x32xbf16>, vector<32x128xbf16>, vector<8x128xf32> -> vector<8x128xf32>
    %165 = arith.addf %140, %164 : vector<8x128xf32>
    %166 = vector.extract_strided_slice %63 {offsets = [0, 96], sizes = [8, 32], strides = [1, 1]} : vector<8x128xf32> to vector<8x32xf32>
    %167 = vector.extract_strided_slice %64 {offsets = [0, 96], sizes = [8, 32], strides = [1, 1]} : vector<8x128xf32> to vector<8x32xf32>
    %168 = vector.extract_strided_slice %65 {offsets = [0, 96], sizes = [8, 32], strides = [1, 1]} : vector<8x128xf32> to vector<8x32xf32>
    %169 = arith.truncf %166 : vector<8x32xf32> to vector<8x32xbf16>
    %170 = arith.truncf %167 : vector<8x32xf32> to vector<8x32xbf16>
    %cst_57 = arith.constant dense<0.000000e+00> : vector<8x8xf32>
    %171 = tpu.matmul %169, %170, %cst_57 {dimension_numbers = #tpu.dot_dimension_numbers<[1], [1], [0], [0], [0, 0, 1, 0], [], []>} : vector<8x32xbf16>, vector<8x32xbf16>, vector<8x8xf32> -> vector<8x8xf32>
    %cst_58 = arith.constant 0.176776692 : f32
    %172 = vector.broadcast %cst_58 : f32 to vector<8x8xf32>
    %173 = arith.mulf %171, %172 : vector<8x8xf32>
    %174 = arith.addf %173, %91 : vector<8x8xf32>
    %cst_59 = arith.constant dense<0xFF800000> : vector<8xf32>
    %175 = vector.multi_reduction <maximumf>, %174, %cst_59 [1] : vector<8x8xf32> to vector<8xf32>
    %176 = vector.shape_cast %175 : vector<8xf32> to vector<8x1xf32>
    %177 = vector.broadcast %176 : vector<8x1xf32> to vector<8x8xf32>
    %178 = arith.subf %174, %177 : vector<8x8xf32>
    %179 = math.exp %178 : vector<8x8xf32>
    %cst_60 = arith.constant dense<0.000000e+00> : vector<8xf32>
    %180 = vector.multi_reduction <add>, %179, %cst_60 [1] : vector<8x8xf32> to vector<8xf32>
    %181 = vector.shape_cast %180 : vector<8xf32> to vector<8x1xf32>
    %182 = vector.broadcast %181 : vector<8x1xf32> to vector<8x8xf32>
    %183 = arith.divf %179, %182 : vector<8x8xf32>
    %184 = arith.truncf %183 : vector<8x8xf32> to vector<8x8xbf16>
    %185 = arith.truncf %168 : vector<8x32xf32> to vector<8x32xbf16>
    %cst_61 = arith.constant dense<0.000000e+00> : vector<8x32xf32>
    %186 = tpu.matmul %184, %185, %cst_61 {dimension_numbers = #tpu.dot_dimension_numbers<[1], [0], [0], [1], [0, 0, 1, 1], [], []>} : vector<8x8xbf16>, vector<8x32xbf16>, vector<8x32xf32> -> vector<8x32xf32>
    %187 = arith.truncf %186 : vector<8x32xf32> to vector<8x32xbf16>
    %188 = vector.extract_strided_slice %62 {offsets = [96, 0], sizes = [32, 128], strides = [1, 1]} : vector<128x128xbf16> to vector<32x128xbf16>
    %cst_62 = arith.constant dense<0.000000e+00> : vector<8x128xf32>
    %189 = tpu.matmul %187, %188, %cst_62 {dimension_numbers = #tpu.dot_dimension_numbers<[1], [0], [0], [1], [0, 0, 1, 1], [], []>} : vector<8x32xbf16>, vector<32x128xbf16>, vector<8x128xf32> -> vector<8x128xf32>
    %190 = arith.addf %165, %189 : vector<8x128xf32>
    %191 = arith.addf %4, %190 : vector<8x128xf32>
    %c0_63 = arith.constant 0 : index
    %c0_64 = arith.constant 0 : index
    %c0_65 = arith.constant 0 : index
    %192 = vector.load %arg12[%c0_63, %c0_64, %c0_65] : memref<2x1x128xf32, #tpu.memory_space<vmem>>, vector<1x1x128xf32>
    %193 = vector.shape_cast %192 : vector<1x1x128xf32> to vector<1x128xf32>
    %194 = vector.broadcast %193 : vector<1x128xf32> to vector<8x128xf32>
    %195 = arith.addf %191, %194 : vector<8x128xf32>
    %c0_66 = arith.constant 0 : index
    %c0_67 = arith.constant 0 : index
    %c0_68 = arith.constant 0 : index
    %196 = vector.load %arg13[%c0_66, %c0_67, %c0_68] : memref<2x1x128xf32, #tpu.memory_space<vmem>>, vector<1x1x128xf32>
    %197 = vector.shape_cast %196 : vector<1x1x128xf32> to vector<1x128xf32>
    %c0_69 = arith.constant 0 : index
    %c0_70 = arith.constant 0 : index
    %c0_71 = arith.constant 0 : index
    %198 = vector.load %arg14[%c0_69, %c0_70, %c0_71] : memref<2x1x128xf32, #tpu.memory_space<vmem>>, vector<1x1x128xf32>
    %199 = vector.shape_cast %198 : vector<1x1x128xf32> to vector<1x128xf32>
    %cst_72 = arith.constant dense<0.000000e+00> : vector<8xf32>
    %200 = vector.multi_reduction <add>, %195, %cst_72 [1] : vector<8x128xf32> to vector<8xf32>
    %201 = vector.shape_cast %200 : vector<8xf32> to vector<8x1xf32>
    %cst_73 = arith.constant 1.280000e+02 : f32
    %202 = vector.broadcast %cst_73 : f32 to vector<8x1xf32>
    %203 = arith.divf %201, %202 : vector<8x1xf32>
    %204 = vector.broadcast %203 : vector<8x1xf32> to vector<8x128xf32>
    %205 = arith.subf %195, %204 : vector<8x128xf32>
    %206 = vector.broadcast %203 : vector<8x1xf32> to vector<8x128xf32>
    %207 = arith.subf %195, %206 : vector<8x128xf32>
    %208 = arith.mulf %205, %207 : vector<8x128xf32>
    %cst_74 = arith.constant dense<0.000000e+00> : vector<8xf32>
    %209 = vector.multi_reduction <add>, %208, %cst_74 [1] : vector<8x128xf32> to vector<8xf32>
    %210 = vector.shape_cast %209 : vector<8xf32> to vector<8x1xf32>
    %cst_75 = arith.constant 1.280000e+02 : f32
    %211 = vector.broadcast %cst_75 : f32 to vector<8x1xf32>
    %212 = arith.divf %210, %211 : vector<8x1xf32>
    %213 = vector.broadcast %203 : vector<8x1xf32> to vector<8x128xf32>
    %214 = arith.subf %195, %213 : vector<8x128xf32>
    %cst_76 = arith.constant 9.99999997E-7 : f32
    %215 = vector.broadcast %cst_76 : f32 to vector<8x1xf32>
    %216 = arith.addf %212, %215 : vector<8x1xf32>
    %217 = math.rsqrt %216 : vector<8x1xf32>
    %218 = vector.broadcast %217 : vector<8x1xf32> to vector<8x128xf32>
    %219 = arith.mulf %214, %218 : vector<8x128xf32>
    %220 = vector.broadcast %197 : vector<1x128xf32> to vector<8x128xf32>
    %221 = arith.mulf %219, %220 : vector<8x128xf32>
    %222 = vector.broadcast %199 : vector<1x128xf32> to vector<8x128xf32>
    %223 = arith.addf %221, %222 : vector<8x128xf32>
    %224 = arith.truncf %223 : vector<8x128xf32> to vector<8x128xbf16>
    %c0_77 = arith.constant 0 : index
    %c0_78 = arith.constant 0 : index
    %c0_79 = arith.constant 0 : index
    %225 = vector.load %arg15[%c0_77, %c0_78, %c0_79] : memref<2x128x256xbf16, #tpu.memory_space<vmem>>, vector<1x128x256xbf16>
    %226 = vector.shape_cast %225 : vector<1x128x256xbf16> to vector<128x256xbf16>
    %cst_80 = arith.constant dense<0.000000e+00> : vector<8x256xf32>
    %227 = tpu.matmul %224, %226, %cst_80 {dimension_numbers = #tpu.dot_dimension_numbers<[1], [0], [0], [1], [0, 0, 1, 1], [], []>} : vector<8x128xbf16>, vector<128x256xbf16>, vector<8x256xf32> -> vector<8x256xf32>
    %c0_81 = arith.constant 0 : index
    %c0_82 = arith.constant 0 : index
    %c0_83 = arith.constant 0 : index
    %228 = vector.load %arg16[%c0_81, %c0_82, %c0_83] : memref<2x1x256xf32, #tpu.memory_space<vmem>>, vector<1x1x256xf32>
    %229 = vector.shape_cast %228 : vector<1x1x256xf32> to vector<1x256xf32>
    %230 = vector.broadcast %229 : vector<1x256xf32> to vector<8x256xf32>
    %231 = arith.addf %227, %230 : vector<8x256xf32>
    %cst_84 = arith.constant 5.000000e-01 : f32
    %232 = vector.broadcast %cst_84 : f32 to vector<8x256xf32>
    %233 = arith.mulf %232, %231 : vector<8x256xf32>
    %cst_85 = arith.constant 0.707106769 : f32
    %234 = vector.broadcast %cst_85 : f32 to vector<8x256xf32>
    %235 = arith.mulf %231, %234 : vector<8x256xf32>
    %236 = math.erf %235 : vector<8x256xf32>
    %cst_86 = arith.constant 1.000000e+00 : f32
    %237 = vector.broadcast %cst_86 : f32 to vector<8x256xf32>
    %238 = arith.addf %237, %236 : vector<8x256xf32>
    %239 = arith.mulf %233, %238 : vector<8x256xf32>
    %240 = arith.truncf %239 : vector<8x256xf32> to vector<8x256xbf16>
    %c0_87 = arith.constant 0 : index
    %c0_88 = arith.constant 0 : index
    %c0_89 = arith.constant 0 : index
    %241 = vector.load %arg17[%c0_87, %c0_88, %c0_89] : memref<2x256x128xbf16, #tpu.memory_space<vmem>>, vector<1x256x128xbf16>
    %242 = vector.shape_cast %241 : vector<1x256x128xbf16> to vector<256x128xbf16>
    %cst_90 = arith.constant dense<0.000000e+00> : vector<8x128xf32>
    %243 = tpu.matmul %240, %242, %cst_90 {dimension_numbers = #tpu.dot_dimension_numbers<[1], [0], [0], [1], [0, 0, 1, 1], [], []>} : vector<8x256xbf16>, vector<256x128xbf16>, vector<8x128xf32> -> vector<8x128xf32>
    %c0_91 = arith.constant 0 : index
    %c0_92 = arith.constant 0 : index
    %c0_93 = arith.constant 0 : index
    %244 = vector.load %arg18[%c0_91, %c0_92, %c0_93] : memref<2x1x128xf32, #tpu.memory_space<vmem>>, vector<1x1x128xf32>
    %245 = vector.shape_cast %244 : vector<1x1x128xf32> to vector<1x128xf32>
    %246 = vector.broadcast %245 : vector<1x128xf32> to vector<8x128xf32>
    %247 = arith.addf %243, %246 : vector<8x128xf32>
    %248 = arith.addf %195, %247 : vector<8x128xf32>
    %c1 = arith.constant 1 : index
    %249 = memref.load %arg1[%c1] : memref<2xf32, #tpu.memory_space<smem>>
    %c1_94 = arith.constant 1 : index
    %250 = memref.load %arg2[%c1_94] : memref<2xf32, #tpu.memory_space<smem>>
    %c1_95 = arith.constant 1 : index
    %c0_96 = arith.constant 0 : index
    %c0_97 = arith.constant 0 : index
    %251 = vector.load %arg7[%c1_95, %c0_96, %c0_97] : memref<2x1x128xf32, #tpu.memory_space<vmem>>, vector<1x1x128xf32>
    %252 = vector.shape_cast %251 : vector<1x1x128xf32> to vector<1x128xf32>
    %c1_98 = arith.constant 1 : index
    %c0_99 = arith.constant 0 : index
    %c0_100 = arith.constant 0 : index
    %253 = vector.load %arg8[%c1_98, %c0_99, %c0_100] : memref<2x1x128xf32, #tpu.memory_space<vmem>>, vector<1x1x128xf32>
    %254 = vector.shape_cast %253 : vector<1x1x128xf32> to vector<1x128xf32>
    %cst_101 = arith.constant dense<0.000000e+00> : vector<8xf32>
    %255 = vector.multi_reduction <add>, %248, %cst_101 [1] : vector<8x128xf32> to vector<8xf32>
    %256 = vector.shape_cast %255 : vector<8xf32> to vector<8x1xf32>
    %cst_102 = arith.constant 1.280000e+02 : f32
    %257 = vector.broadcast %cst_102 : f32 to vector<8x1xf32>
    %258 = arith.divf %256, %257 : vector<8x1xf32>
    %259 = vector.broadcast %258 : vector<8x1xf32> to vector<8x128xf32>
    %260 = arith.subf %248, %259 : vector<8x128xf32>
    %261 = vector.broadcast %258 : vector<8x1xf32> to vector<8x128xf32>
    %262 = arith.subf %248, %261 : vector<8x128xf32>
    %263 = arith.mulf %260, %262 : vector<8x128xf32>
    %cst_103 = arith.constant dense<0.000000e+00> : vector<8xf32>
    %264 = vector.multi_reduction <add>, %263, %cst_103 [1] : vector<8x128xf32> to vector<8xf32>
    %265 = vector.shape_cast %264 : vector<8xf32> to vector<8x1xf32>
    %cst_104 = arith.constant 1.280000e+02 : f32
    %266 = vector.broadcast %cst_104 : f32 to vector<8x1xf32>
    %267 = arith.divf %265, %266 : vector<8x1xf32>
    %268 = vector.broadcast %258 : vector<8x1xf32> to vector<8x128xf32>
    %269 = arith.subf %248, %268 : vector<8x128xf32>
    %cst_105 = arith.constant 9.99999997E-7 : f32
    %270 = vector.broadcast %cst_105 : f32 to vector<8x1xf32>
    %271 = arith.addf %267, %270 : vector<8x1xf32>
    %272 = math.rsqrt %271 : vector<8x1xf32>
    %273 = vector.broadcast %272 : vector<8x1xf32> to vector<8x128xf32>
    %274 = arith.mulf %269, %273 : vector<8x128xf32>
    %275 = vector.broadcast %252 : vector<1x128xf32> to vector<8x128xf32>
    %276 = arith.mulf %274, %275 : vector<8x128xf32>
    %277 = vector.broadcast %254 : vector<1x128xf32> to vector<8x128xf32>
    %278 = arith.addf %276, %277 : vector<8x128xf32>
    %279 = arith.truncf %278 : vector<8x128xf32> to vector<8x128xbf16>
    %c1_106 = arith.constant 1 : index
    %c0_107 = arith.constant 0 : index
    %c0_108 = arith.constant 0 : index
    %280 = vector.load %arg9[%c1_106, %c0_107, %c0_108] : memref<2x128x384xbf16, #tpu.memory_space<vmem>>, vector<1x128x384xbf16>
    %281 = vector.shape_cast %280 : vector<1x128x384xbf16> to vector<128x384xbf16>
    %cst_109 = arith.constant dense<0.000000e+00> : vector<8x384xf32>
    %282 = tpu.matmul %279, %281, %cst_109 {dimension_numbers = #tpu.dot_dimension_numbers<[1], [0], [0], [1], [0, 0, 1, 1], [], []>} : vector<8x128xbf16>, vector<128x384xbf16>, vector<8x384xf32> -> vector<8x384xf32>
    %c1_110 = arith.constant 1 : index
    %c0_111 = arith.constant 0 : index
    %c0_112 = arith.constant 0 : index
    %283 = vector.load %arg10[%c1_110, %c0_111, %c0_112] : memref<2x1x384xf32, #tpu.memory_space<vmem>>, vector<1x1x384xf32>
    %284 = vector.shape_cast %283 : vector<1x1x384xf32> to vector<1x384xf32>
    %285 = vector.broadcast %284 : vector<1x384xf32> to vector<8x384xf32>
    %286 = arith.addf %282, %285 : vector<8x384xf32>
    %c1_113 = arith.constant 1 : index
    %c0_114 = arith.constant 0 : index
    %c0_115 = arith.constant 0 : index
    %287 = vector.load %arg11[%c1_113, %c0_114, %c0_115] : memref<2x128x128xbf16, #tpu.memory_space<vmem>>, vector<1x128x128xbf16>
    %288 = vector.shape_cast %287 : vector<1x128x128xbf16> to vector<128x128xbf16>
    %289 = vector.extract_strided_slice %286 {offsets = [0, 0], sizes = [8, 128], strides = [1, 1]} : vector<8x384xf32> to vector<8x128xf32>
    %290 = vector.extract_strided_slice %286 {offsets = [0, 128], sizes = [8, 128], strides = [1, 1]} : vector<8x384xf32> to vector<8x128xf32>
    %291 = vector.extract_strided_slice %286 {offsets = [0, 256], sizes = [8, 128], strides = [1, 1]} : vector<8x384xf32> to vector<8x128xf32>
    %292 = vector.shape_cast %10 : vector<1x8x1xf32> to vector<8x1xf32>
    %293 = vector.broadcast %249 : f32 to vector<8x1xf32>
    %294 = arith.mulf %293, %292 : vector<8x1xf32>
    %295 = vector.shape_cast %14 : vector<1x8x1xf32> to vector<8x1xf32>
    %296 = vector.broadcast %250 : f32 to vector<8x1xf32>
    %297 = arith.mulf %296, %295 : vector<8x1xf32>
    %298 = arith.addf %294, %297 : vector<8x1xf32>
    %299 = vector.shape_cast %18 : vector<1x1x8xf32> to vector<1x8xf32>
    %300 = vector.broadcast %249 : f32 to vector<1x8xf32>
    %301 = arith.mulf %300, %299 : vector<1x8xf32>
    %302 = vector.shape_cast %22 : vector<1x1x8xf32> to vector<1x8xf32>
    %303 = vector.broadcast %250 : f32 to vector<1x8xf32>
    %304 = arith.mulf %303, %302 : vector<1x8xf32>
    %305 = arith.addf %301, %304 : vector<1x8xf32>
    %306 = arith.mulf %298, %298 : vector<8x1xf32>
    %307 = vector.shape_cast %306 : vector<8x1xf32> to vector<1x8x1xf32>
    %cst_116 = arith.constant dense<0.000000e+00> : vector<1xf32>
    %308 = vector.multi_reduction <add>, %307, %cst_116 [1, 2] : vector<1x8x1xf32> to vector<1xf32>
    %309 = vector.shape_cast %308 : vector<1xf32> to vector<1x1x1xf32>
    %310 = vector.extract %309[0, 0, 0] : f32 from vector<1x1x1xf32>
    %cst_117 = arith.constant 9.99999996E-13 : f32
    %311 = arith.maximumf %310, %cst_117 : f32
    %cst_118 = arith.constant 5.000000e+01 : f32
    %312 = arith.divf %cst_118, %311 : f32
    %313 = vector.broadcast %298 : vector<8x1xf32> to vector<8x8xf32>
    %314 = vector.broadcast %305 : vector<1x8xf32> to vector<8x8xf32>
    %315 = arith.mulf %313, %314 : vector<8x8xf32>
    %316 = vector.broadcast %312 : f32 to vector<8x8xf32>
    %317 = arith.mulf %316, %315 : vector<8x8xf32>
    %318 = vector.extract_strided_slice %289 {offsets = [0, 0], sizes = [8, 32], strides = [1, 1]} : vector<8x128xf32> to vector<8x32xf32>
    %319 = vector.extract_strided_slice %290 {offsets = [0, 0], sizes = [8, 32], strides = [1, 1]} : vector<8x128xf32> to vector<8x32xf32>
    %320 = vector.extract_strided_slice %291 {offsets = [0, 0], sizes = [8, 32], strides = [1, 1]} : vector<8x128xf32> to vector<8x32xf32>
    %321 = arith.truncf %318 : vector<8x32xf32> to vector<8x32xbf16>
    %322 = arith.truncf %319 : vector<8x32xf32> to vector<8x32xbf16>
    %cst_119 = arith.constant dense<0.000000e+00> : vector<8x8xf32>
    %323 = tpu.matmul %321, %322, %cst_119 {dimension_numbers = #tpu.dot_dimension_numbers<[1], [1], [0], [0], [0, 0, 1, 0], [], []>} : vector<8x32xbf16>, vector<8x32xbf16>, vector<8x8xf32> -> vector<8x8xf32>
    %cst_120 = arith.constant 0.176776692 : f32
    %324 = vector.broadcast %cst_120 : f32 to vector<8x8xf32>
    %325 = arith.mulf %323, %324 : vector<8x8xf32>
    %326 = arith.addf %325, %317 : vector<8x8xf32>
    %cst_121 = arith.constant dense<0xFF800000> : vector<8xf32>
    %327 = vector.multi_reduction <maximumf>, %326, %cst_121 [1] : vector<8x8xf32> to vector<8xf32>
    %328 = vector.shape_cast %327 : vector<8xf32> to vector<8x1xf32>
    %329 = vector.broadcast %328 : vector<8x1xf32> to vector<8x8xf32>
    %330 = arith.subf %326, %329 : vector<8x8xf32>
    %331 = math.exp %330 : vector<8x8xf32>
    %cst_122 = arith.constant dense<0.000000e+00> : vector<8xf32>
    %332 = vector.multi_reduction <add>, %331, %cst_122 [1] : vector<8x8xf32> to vector<8xf32>
    %333 = vector.shape_cast %332 : vector<8xf32> to vector<8x1xf32>
    %334 = vector.broadcast %333 : vector<8x1xf32> to vector<8x8xf32>
    %335 = arith.divf %331, %334 : vector<8x8xf32>
    %336 = arith.truncf %335 : vector<8x8xf32> to vector<8x8xbf16>
    %337 = arith.truncf %320 : vector<8x32xf32> to vector<8x32xbf16>
    %cst_123 = arith.constant dense<0.000000e+00> : vector<8x32xf32>
    %338 = tpu.matmul %336, %337, %cst_123 {dimension_numbers = #tpu.dot_dimension_numbers<[1], [0], [0], [1], [0, 0, 1, 1], [], []>} : vector<8x8xbf16>, vector<8x32xbf16>, vector<8x32xf32> -> vector<8x32xf32>
    %339 = arith.truncf %338 : vector<8x32xf32> to vector<8x32xbf16>
    %340 = vector.extract_strided_slice %288 {offsets = [0, 0], sizes = [32, 128], strides = [1, 1]} : vector<128x128xbf16> to vector<32x128xbf16>
    %cst_124 = arith.constant dense<0.000000e+00> : vector<8x128xf32>
    %341 = tpu.matmul %339, %340, %cst_124 {dimension_numbers = #tpu.dot_dimension_numbers<[1], [0], [0], [1], [0, 0, 1, 1], [], []>} : vector<8x32xbf16>, vector<32x128xbf16>, vector<8x128xf32> -> vector<8x128xf32>
    %342 = vector.extract_strided_slice %289 {offsets = [0, 32], sizes = [8, 32], strides = [1, 1]} : vector<8x128xf32> to vector<8x32xf32>
    %343 = vector.extract_strided_slice %290 {offsets = [0, 32], sizes = [8, 32], strides = [1, 1]} : vector<8x128xf32> to vector<8x32xf32>
    %344 = vector.extract_strided_slice %291 {offsets = [0, 32], sizes = [8, 32], strides = [1, 1]} : vector<8x128xf32> to vector<8x32xf32>
    %345 = arith.truncf %342 : vector<8x32xf32> to vector<8x32xbf16>
    %346 = arith.truncf %343 : vector<8x32xf32> to vector<8x32xbf16>
    %cst_125 = arith.constant dense<0.000000e+00> : vector<8x8xf32>
    %347 = tpu.matmul %345, %346, %cst_125 {dimension_numbers = #tpu.dot_dimension_numbers<[1], [1], [0], [0], [0, 0, 1, 0], [], []>} : vector<8x32xbf16>, vector<8x32xbf16>, vector<8x8xf32> -> vector<8x8xf32>
    %cst_126 = arith.constant 0.176776692 : f32
    %348 = vector.broadcast %cst_126 : f32 to vector<8x8xf32>
    %349 = arith.mulf %347, %348 : vector<8x8xf32>
    %350 = arith.addf %349, %317 : vector<8x8xf32>
    %cst_127 = arith.constant dense<0xFF800000> : vector<8xf32>
    %351 = vector.multi_reduction <maximumf>, %350, %cst_127 [1] : vector<8x8xf32> to vector<8xf32>
    %352 = vector.shape_cast %351 : vector<8xf32> to vector<8x1xf32>
    %353 = vector.broadcast %352 : vector<8x1xf32> to vector<8x8xf32>
    %354 = arith.subf %350, %353 : vector<8x8xf32>
    %355 = math.exp %354 : vector<8x8xf32>
    %cst_128 = arith.constant dense<0.000000e+00> : vector<8xf32>
    %356 = vector.multi_reduction <add>, %355, %cst_128 [1] : vector<8x8xf32> to vector<8xf32>
    %357 = vector.shape_cast %356 : vector<8xf32> to vector<8x1xf32>
    %358 = vector.broadcast %357 : vector<8x1xf32> to vector<8x8xf32>
    %359 = arith.divf %355, %358 : vector<8x8xf32>
    %360 = arith.truncf %359 : vector<8x8xf32> to vector<8x8xbf16>
    %361 = arith.truncf %344 : vector<8x32xf32> to vector<8x32xbf16>
    %cst_129 = arith.constant dense<0.000000e+00> : vector<8x32xf32>
    %362 = tpu.matmul %360, %361, %cst_129 {dimension_numbers = #tpu.dot_dimension_numbers<[1], [0], [0], [1], [0, 0, 1, 1], [], []>} : vector<8x8xbf16>, vector<8x32xbf16>, vector<8x32xf32> -> vector<8x32xf32>
    %363 = arith.truncf %362 : vector<8x32xf32> to vector<8x32xbf16>
    %364 = vector.extract_strided_slice %288 {offsets = [32, 0], sizes = [32, 128], strides = [1, 1]} : vector<128x128xbf16> to vector<32x128xbf16>
    %cst_130 = arith.constant dense<0.000000e+00> : vector<8x128xf32>
    %365 = tpu.matmul %363, %364, %cst_130 {dimension_numbers = #tpu.dot_dimension_numbers<[1], [0], [0], [1], [0, 0, 1, 1], [], []>} : vector<8x32xbf16>, vector<32x128xbf16>, vector<8x128xf32> -> vector<8x128xf32>
    %366 = arith.addf %341, %365 : vector<8x128xf32>
    %367 = vector.extract_strided_slice %289 {offsets = [0, 64], sizes = [8, 32], strides = [1, 1]} : vector<8x128xf32> to vector<8x32xf32>
    %368 = vector.extract_strided_slice %290 {offsets = [0, 64], sizes = [8, 32], strides = [1, 1]} : vector<8x128xf32> to vector<8x32xf32>
    %369 = vector.extract_strided_slice %291 {offsets = [0, 64], sizes = [8, 32], strides = [1, 1]} : vector<8x128xf32> to vector<8x32xf32>
    %370 = arith.truncf %367 : vector<8x32xf32> to vector<8x32xbf16>
    %371 = arith.truncf %368 : vector<8x32xf32> to vector<8x32xbf16>
    %cst_131 = arith.constant dense<0.000000e+00> : vector<8x8xf32>
    %372 = tpu.matmul %370, %371, %cst_131 {dimension_numbers = #tpu.dot_dimension_numbers<[1], [1], [0], [0], [0, 0, 1, 0], [], []>} : vector<8x32xbf16>, vector<8x32xbf16>, vector<8x8xf32> -> vector<8x8xf32>
    %cst_132 = arith.constant 0.176776692 : f32
    %373 = vector.broadcast %cst_132 : f32 to vector<8x8xf32>
    %374 = arith.mulf %372, %373 : vector<8x8xf32>
    %375 = arith.addf %374, %317 : vector<8x8xf32>
    %cst_133 = arith.constant dense<0xFF800000> : vector<8xf32>
    %376 = vector.multi_reduction <maximumf>, %375, %cst_133 [1] : vector<8x8xf32> to vector<8xf32>
    %377 = vector.shape_cast %376 : vector<8xf32> to vector<8x1xf32>
    %378 = vector.broadcast %377 : vector<8x1xf32> to vector<8x8xf32>
    %379 = arith.subf %375, %378 : vector<8x8xf32>
    %380 = math.exp %379 : vector<8x8xf32>
    %cst_134 = arith.constant dense<0.000000e+00> : vector<8xf32>
    %381 = vector.multi_reduction <add>, %380, %cst_134 [1] : vector<8x8xf32> to vector<8xf32>
    %382 = vector.shape_cast %381 : vector<8xf32> to vector<8x1xf32>
    %383 = vector.broadcast %382 : vector<8x1xf32> to vector<8x8xf32>
    %384 = arith.divf %380, %383 : vector<8x8xf32>
    %385 = arith.truncf %384 : vector<8x8xf32> to vector<8x8xbf16>
    %386 = arith.truncf %369 : vector<8x32xf32> to vector<8x32xbf16>
    %cst_135 = arith.constant dense<0.000000e+00> : vector<8x32xf32>
    %387 = tpu.matmul %385, %386, %cst_135 {dimension_numbers = #tpu.dot_dimension_numbers<[1], [0], [0], [1], [0, 0, 1, 1], [], []>} : vector<8x8xbf16>, vector<8x32xbf16>, vector<8x32xf32> -> vector<8x32xf32>
    %388 = arith.truncf %387 : vector<8x32xf32> to vector<8x32xbf16>
    %389 = vector.extract_strided_slice %288 {offsets = [64, 0], sizes = [32, 128], strides = [1, 1]} : vector<128x128xbf16> to vector<32x128xbf16>
    %cst_136 = arith.constant dense<0.000000e+00> : vector<8x128xf32>
    %390 = tpu.matmul %388, %389, %cst_136 {dimension_numbers = #tpu.dot_dimension_numbers<[1], [0], [0], [1], [0, 0, 1, 1], [], []>} : vector<8x32xbf16>, vector<32x128xbf16>, vector<8x128xf32> -> vector<8x128xf32>
    %391 = arith.addf %366, %390 : vector<8x128xf32>
    %392 = vector.extract_strided_slice %289 {offsets = [0, 96], sizes = [8, 32], strides = [1, 1]} : vector<8x128xf32> to vector<8x32xf32>
    %393 = vector.extract_strided_slice %290 {offsets = [0, 96], sizes = [8, 32], strides = [1, 1]} : vector<8x128xf32> to vector<8x32xf32>
    %394 = vector.extract_strided_slice %291 {offsets = [0, 96], sizes = [8, 32], strides = [1, 1]} : vector<8x128xf32> to vector<8x32xf32>
    %395 = arith.truncf %392 : vector<8x32xf32> to vector<8x32xbf16>
    %396 = arith.truncf %393 : vector<8x32xf32> to vector<8x32xbf16>
    %cst_137 = arith.constant dense<0.000000e+00> : vector<8x8xf32>
    %397 = tpu.matmul %395, %396, %cst_137 {dimension_numbers = #tpu.dot_dimension_numbers<[1], [1], [0], [0], [0, 0, 1, 0], [], []>} : vector<8x32xbf16>, vector<8x32xbf16>, vector<8x8xf32> -> vector<8x8xf32>
    %cst_138 = arith.constant 0.176776692 : f32
    %398 = vector.broadcast %cst_138 : f32 to vector<8x8xf32>
    %399 = arith.mulf %397, %398 : vector<8x8xf32>
    %400 = arith.addf %399, %317 : vector<8x8xf32>
    %cst_139 = arith.constant dense<0xFF800000> : vector<8xf32>
    %401 = vector.multi_reduction <maximumf>, %400, %cst_139 [1] : vector<8x8xf32> to vector<8xf32>
    %402 = vector.shape_cast %401 : vector<8xf32> to vector<8x1xf32>
    %403 = vector.broadcast %402 : vector<8x1xf32> to vector<8x8xf32>
    %404 = arith.subf %400, %403 : vector<8x8xf32>
    %405 = math.exp %404 : vector<8x8xf32>
    %cst_140 = arith.constant dense<0.000000e+00> : vector<8xf32>
    %406 = vector.multi_reduction <add>, %405, %cst_140 [1] : vector<8x8xf32> to vector<8xf32>
    %407 = vector.shape_cast %406 : vector<8xf32> to vector<8x1xf32>
    %408 = vector.broadcast %407 : vector<8x1xf32> to vector<8x8xf32>
    %409 = arith.divf %405, %408 : vector<8x8xf32>
    %410 = arith.truncf %409 : vector<8x8xf32> to vector<8x8xbf16>
    %411 = arith.truncf %394 : vector<8x32xf32> to vector<8x32xbf16>
    %cst_141 = arith.constant dense<0.000000e+00> : vector<8x32xf32>
    %412 = tpu.matmul %410, %411, %cst_141 {dimension_numbers = #tpu.dot_dimension_numbers<[1], [0], [0], [1], [0, 0, 1, 1], [], []>} : vector<8x8xbf16>, vector<8x32xbf16>, vector<8x32xf32> -> vector<8x32xf32>
    %413 = arith.truncf %412 : vector<8x32xf32> to vector<8x32xbf16>
    %414 = vector.extract_strided_slice %288 {offsets = [96, 0], sizes = [32, 128], strides = [1, 1]} : vector<128x128xbf16> to vector<32x128xbf16>
    %cst_142 = arith.constant dense<0.000000e+00> : vector<8x128xf32>
    %415 = tpu.matmul %413, %414, %cst_142 {dimension_numbers = #tpu.dot_dimension_numbers<[1], [0], [0], [1], [0, 0, 1, 1], [], []>} : vector<8x32xbf16>, vector<32x128xbf16>, vector<8x128xf32> -> vector<8x128xf32>
    %416 = arith.addf %391, %415 : vector<8x128xf32>
    %417 = arith.addf %248, %416 : vector<8x128xf32>
    %c1_143 = arith.constant 1 : index
    %c0_144 = arith.constant 0 : index
    %c0_145 = arith.constant 0 : index
    %418 = vector.load %arg12[%c1_143, %c0_144, %c0_145] : memref<2x1x128xf32, #tpu.memory_space<vmem>>, vector<1x1x128xf32>
    %419 = vector.shape_cast %418 : vector<1x1x128xf32> to vector<1x128xf32>
    %420 = vector.broadcast %419 : vector<1x128xf32> to vector<8x128xf32>
    %421 = arith.addf %417, %420 : vector<8x128xf32>
    %c1_146 = arith.constant 1 : index
    %c0_147 = arith.constant 0 : index
    %c0_148 = arith.constant 0 : index
    %422 = vector.load %arg13[%c1_146, %c0_147, %c0_148] : memref<2x1x128xf32, #tpu.memory_space<vmem>>, vector<1x1x128xf32>
    %423 = vector.shape_cast %422 : vector<1x1x128xf32> to vector<1x128xf32>
    %c1_149 = arith.constant 1 : index
    %c0_150 = arith.constant 0 : index
    %c0_151 = arith.constant 0 : index
    %424 = vector.load %arg14[%c1_149, %c0_150, %c0_151] : memref<2x1x128xf32, #tpu.memory_space<vmem>>, vector<1x1x128xf32>
    %425 = vector.shape_cast %424 : vector<1x1x128xf32> to vector<1x128xf32>
    %cst_152 = arith.constant dense<0.000000e+00> : vector<8xf32>
    %426 = vector.multi_reduction <add>, %421, %cst_152 [1] : vector<8x128xf32> to vector<8xf32>
    %427 = vector.shape_cast %426 : vector<8xf32> to vector<8x1xf32>
    %cst_153 = arith.constant 1.280000e+02 : f32
    %428 = vector.broadcast %cst_153 : f32 to vector<8x1xf32>
    %429 = arith.divf %427, %428 : vector<8x1xf32>
    %430 = vector.broadcast %429 : vector<8x1xf32> to vector<8x128xf32>
    %431 = arith.subf %421, %430 : vector<8x128xf32>
    %432 = vector.broadcast %429 : vector<8x1xf32> to vector<8x128xf32>
    %433 = arith.subf %421, %432 : vector<8x128xf32>
    %434 = arith.mulf %431, %433 : vector<8x128xf32>
    %cst_154 = arith.constant dense<0.000000e+00> : vector<8xf32>
    %435 = vector.multi_reduction <add>, %434, %cst_154 [1] : vector<8x128xf32> to vector<8xf32>
    %436 = vector.shape_cast %435 : vector<8xf32> to vector<8x1xf32>
    %cst_155 = arith.constant 1.280000e+02 : f32
    %437 = vector.broadcast %cst_155 : f32 to vector<8x1xf32>
    %438 = arith.divf %436, %437 : vector<8x1xf32>
    %439 = vector.broadcast %429 : vector<8x1xf32> to vector<8x128xf32>
    %440 = arith.subf %421, %439 : vector<8x128xf32>
    %cst_156 = arith.constant 9.99999997E-7 : f32
    %441 = vector.broadcast %cst_156 : f32 to vector<8x1xf32>
    %442 = arith.addf %438, %441 : vector<8x1xf32>
    %443 = math.rsqrt %442 : vector<8x1xf32>
    %444 = vector.broadcast %443 : vector<8x1xf32> to vector<8x128xf32>
    %445 = arith.mulf %440, %444 : vector<8x128xf32>
    %446 = vector.broadcast %423 : vector<1x128xf32> to vector<8x128xf32>
    %447 = arith.mulf %445, %446 : vector<8x128xf32>
    %448 = vector.broadcast %425 : vector<1x128xf32> to vector<8x128xf32>
    %449 = arith.addf %447, %448 : vector<8x128xf32>
    %450 = arith.truncf %449 : vector<8x128xf32> to vector<8x128xbf16>
    %c1_157 = arith.constant 1 : index
    %c0_158 = arith.constant 0 : index
    %c0_159 = arith.constant 0 : index
    %451 = vector.load %arg15[%c1_157, %c0_158, %c0_159] : memref<2x128x256xbf16, #tpu.memory_space<vmem>>, vector<1x128x256xbf16>
    %452 = vector.shape_cast %451 : vector<1x128x256xbf16> to vector<128x256xbf16>
    %cst_160 = arith.constant dense<0.000000e+00> : vector<8x256xf32>
    %453 = tpu.matmul %450, %452, %cst_160 {dimension_numbers = #tpu.dot_dimension_numbers<[1], [0], [0], [1], [0, 0, 1, 1], [], []>} : vector<8x128xbf16>, vector<128x256xbf16>, vector<8x256xf32> -> vector<8x256xf32>
    %c1_161 = arith.constant 1 : index
    %c0_162 = arith.constant 0 : index
    %c0_163 = arith.constant 0 : index
    %454 = vector.load %arg16[%c1_161, %c0_162, %c0_163] : memref<2x1x256xf32, #tpu.memory_space<vmem>>, vector<1x1x256xf32>
    %455 = vector.shape_cast %454 : vector<1x1x256xf32> to vector<1x256xf32>
    %456 = vector.broadcast %455 : vector<1x256xf32> to vector<8x256xf32>
    %457 = arith.addf %453, %456 : vector<8x256xf32>
    %cst_164 = arith.constant 5.000000e-01 : f32
    %458 = vector.broadcast %cst_164 : f32 to vector<8x256xf32>
    %459 = arith.mulf %458, %457 : vector<8x256xf32>
    %cst_165 = arith.constant 0.707106769 : f32
    %460 = vector.broadcast %cst_165 : f32 to vector<8x256xf32>
    %461 = arith.mulf %457, %460 : vector<8x256xf32>
    %462 = math.erf %461 : vector<8x256xf32>
    %cst_166 = arith.constant 1.000000e+00 : f32
    %463 = vector.broadcast %cst_166 : f32 to vector<8x256xf32>
    %464 = arith.addf %463, %462 : vector<8x256xf32>
    %465 = arith.mulf %459, %464 : vector<8x256xf32>
    %466 = arith.truncf %465 : vector<8x256xf32> to vector<8x256xbf16>
    %c1_167 = arith.constant 1 : index
    %c0_168 = arith.constant 0 : index
    %c0_169 = arith.constant 0 : index
    %467 = vector.load %arg17[%c1_167, %c0_168, %c0_169] : memref<2x256x128xbf16, #tpu.memory_space<vmem>>, vector<1x256x128xbf16>
    %468 = vector.shape_cast %467 : vector<1x256x128xbf16> to vector<256x128xbf16>
    %cst_170 = arith.constant dense<0.000000e+00> : vector<8x128xf32>
    %469 = tpu.matmul %466, %468, %cst_170 {dimension_numbers = #tpu.dot_dimension_numbers<[1], [0], [0], [1], [0, 0, 1, 1], [], []>} : vector<8x256xbf16>, vector<256x128xbf16>, vector<8x128xf32> -> vector<8x128xf32>
    %c1_171 = arith.constant 1 : index
    %c0_172 = arith.constant 0 : index
    %c0_173 = arith.constant 0 : index
    %470 = vector.load %arg18[%c1_171, %c0_172, %c0_173] : memref<2x1x128xf32, #tpu.memory_space<vmem>>, vector<1x1x128xf32>
    %471 = vector.shape_cast %470 : vector<1x1x128xf32> to vector<1x128xf32>
    %472 = vector.broadcast %471 : vector<1x128xf32> to vector<8x128xf32>
    %473 = arith.addf %469, %472 : vector<8x128xf32>
    %474 = arith.addf %421, %473 : vector<8x128xf32>
    %c0_174 = arith.constant 0 : index
    %c0_175 = arith.constant 0 : index
    %475 = vector.load %arg19[%c0_174, %c0_175] : memref<1x128xf32, #tpu.memory_space<vmem>>, vector<1x128xf32>
    %c0_176 = arith.constant 0 : index
    %c0_177 = arith.constant 0 : index
    %476 = vector.load %arg20[%c0_176, %c0_177] : memref<1x128xf32, #tpu.memory_space<vmem>>, vector<1x128xf32>
    %cst_178 = arith.constant dense<0.000000e+00> : vector<8xf32>
    %477 = vector.multi_reduction <add>, %474, %cst_178 [1] : vector<8x128xf32> to vector<8xf32>
    %478 = vector.shape_cast %477 : vector<8xf32> to vector<8x1xf32>
    %cst_179 = arith.constant 1.280000e+02 : f32
    %479 = vector.broadcast %cst_179 : f32 to vector<8x1xf32>
    %480 = arith.divf %478, %479 : vector<8x1xf32>
    %481 = vector.broadcast %480 : vector<8x1xf32> to vector<8x128xf32>
    %482 = arith.subf %474, %481 : vector<8x128xf32>
    %483 = vector.broadcast %480 : vector<8x1xf32> to vector<8x128xf32>
    %484 = arith.subf %474, %483 : vector<8x128xf32>
    %485 = arith.mulf %482, %484 : vector<8x128xf32>
    %cst_180 = arith.constant dense<0.000000e+00> : vector<8xf32>
    %486 = vector.multi_reduction <add>, %485, %cst_180 [1] : vector<8x128xf32> to vector<8xf32>
    %487 = vector.shape_cast %486 : vector<8xf32> to vector<8x1xf32>
    %cst_181 = arith.constant 1.280000e+02 : f32
    %488 = vector.broadcast %cst_181 : f32 to vector<8x1xf32>
    %489 = arith.divf %487, %488 : vector<8x1xf32>
    %490 = vector.broadcast %480 : vector<8x1xf32> to vector<8x128xf32>
    %491 = arith.subf %474, %490 : vector<8x128xf32>
    %cst_182 = arith.constant 9.99999974E-6 : f32
    %492 = vector.broadcast %cst_182 : f32 to vector<8x1xf32>
    %493 = arith.addf %489, %492 : vector<8x1xf32>
    %494 = math.rsqrt %493 : vector<8x1xf32>
    %495 = vector.broadcast %494 : vector<8x1xf32> to vector<8x128xf32>
    %496 = arith.mulf %491, %495 : vector<8x128xf32>
    %497 = vector.broadcast %475 : vector<1x128xf32> to vector<8x128xf32>
    %498 = arith.mulf %496, %497 : vector<8x128xf32>
    %499 = vector.broadcast %476 : vector<1x128xf32> to vector<8x128xf32>
    %500 = arith.addf %498, %499 : vector<8x128xf32>
    %c0_183 = arith.constant 0 : index
    %c0_184 = arith.constant 0 : index
    %501 = vector.load %arg22[%c0_183, %c0_184] : memref<1x128xf32, #tpu.memory_space<vmem>>, vector<1x128xf32>
    %502 = vector.extract_strided_slice %500 {offsets = [0, 0], sizes = [1, 128], strides = [1, 1]} : vector<8x128xf32> to vector<1x128xf32>
    %503 = arith.truncf %502 : vector<1x128xf32> to vector<1x128xbf16>
    %c0_185 = arith.constant 0 : index
    %c0_186 = arith.constant 0 : index
    %c0_187 = arith.constant 0 : index
    %504 = vector.load %arg21[%c0_185, %c0_186, %c0_187] : memref<8x128x128xbf16, #tpu.memory_space<vmem>>, vector<1x128x128xbf16>
    %505 = vector.shape_cast %504 : vector<1x128x128xbf16> to vector<128x128xbf16>
    %cst_188 = arith.constant dense<0.000000e+00> : vector<1x128xf32>
    %506 = tpu.matmul %503, %505, %cst_188 {dimension_numbers = #tpu.dot_dimension_numbers<[1], [0], [0], [1], [0, 0, 1, 1], [], []>} : vector<1x128xbf16>, vector<128x128xbf16>, vector<1x128xf32> -> vector<1x128xf32>
    %507 = arith.addf %501, %506 : vector<1x128xf32>
    %508 = vector.extract_strided_slice %500 {offsets = [1, 0], sizes = [1, 128], strides = [1, 1]} : vector<8x128xf32> to vector<1x128xf32>
    %509 = arith.truncf %508 : vector<1x128xf32> to vector<1x128xbf16>
    %c1_189 = arith.constant 1 : index
    %c0_190 = arith.constant 0 : index
    %c0_191 = arith.constant 0 : index
    %510 = vector.load %arg21[%c1_189, %c0_190, %c0_191] : memref<8x128x128xbf16, #tpu.memory_space<vmem>>, vector<1x128x128xbf16>
    %511 = vector.shape_cast %510 : vector<1x128x128xbf16> to vector<128x128xbf16>
    %cst_192 = arith.constant dense<0.000000e+00> : vector<1x128xf32>
    %512 = tpu.matmul %509, %511, %cst_192 {dimension_numbers = #tpu.dot_dimension_numbers<[1], [0], [0], [1], [0, 0, 1, 1], [], []>} : vector<1x128xbf16>, vector<128x128xbf16>, vector<1x128xf32> -> vector<1x128xf32>
    %513 = arith.addf %507, %512 : vector<1x128xf32>
    %514 = vector.extract_strided_slice %500 {offsets = [2, 0], sizes = [1, 128], strides = [1, 1]} : vector<8x128xf32> to vector<1x128xf32>
    %515 = arith.truncf %514 : vector<1x128xf32> to vector<1x128xbf16>
    %c2 = arith.constant 2 : index
    %c0_193 = arith.constant 0 : index
    %c0_194 = arith.constant 0 : index
    %516 = vector.load %arg21[%c2, %c0_193, %c0_194] : memref<8x128x128xbf16, #tpu.memory_space<vmem>>, vector<1x128x128xbf16>
    %517 = vector.shape_cast %516 : vector<1x128x128xbf16> to vector<128x128xbf16>
    %cst_195 = arith.constant dense<0.000000e+00> : vector<1x128xf32>
    %518 = tpu.matmul %515, %517, %cst_195 {dimension_numbers = #tpu.dot_dimension_numbers<[1], [0], [0], [1], [0, 0, 1, 1], [], []>} : vector<1x128xbf16>, vector<128x128xbf16>, vector<1x128xf32> -> vector<1x128xf32>
    %519 = arith.addf %513, %518 : vector<1x128xf32>
    %520 = vector.extract_strided_slice %500 {offsets = [3, 0], sizes = [1, 128], strides = [1, 1]} : vector<8x128xf32> to vector<1x128xf32>
    %521 = arith.truncf %520 : vector<1x128xf32> to vector<1x128xbf16>
    %c3 = arith.constant 3 : index
    %c0_196 = arith.constant 0 : index
    %c0_197 = arith.constant 0 : index
    %522 = vector.load %arg21[%c3, %c0_196, %c0_197] : memref<8x128x128xbf16, #tpu.memory_space<vmem>>, vector<1x128x128xbf16>
    %523 = vector.shape_cast %522 : vector<1x128x128xbf16> to vector<128x128xbf16>
    %cst_198 = arith.constant dense<0.000000e+00> : vector<1x128xf32>
    %524 = tpu.matmul %521, %523, %cst_198 {dimension_numbers = #tpu.dot_dimension_numbers<[1], [0], [0], [1], [0, 0, 1, 1], [], []>} : vector<1x128xbf16>, vector<128x128xbf16>, vector<1x128xf32> -> vector<1x128xf32>
    %525 = arith.addf %519, %524 : vector<1x128xf32>
    %526 = vector.extract_strided_slice %500 {offsets = [4, 0], sizes = [1, 128], strides = [1, 1]} : vector<8x128xf32> to vector<1x128xf32>
    %527 = arith.truncf %526 : vector<1x128xf32> to vector<1x128xbf16>
    %c4 = arith.constant 4 : index
    %c0_199 = arith.constant 0 : index
    %c0_200 = arith.constant 0 : index
    %528 = vector.load %arg21[%c4, %c0_199, %c0_200] : memref<8x128x128xbf16, #tpu.memory_space<vmem>>, vector<1x128x128xbf16>
    %529 = vector.shape_cast %528 : vector<1x128x128xbf16> to vector<128x128xbf16>
    %cst_201 = arith.constant dense<0.000000e+00> : vector<1x128xf32>
    %530 = tpu.matmul %527, %529, %cst_201 {dimension_numbers = #tpu.dot_dimension_numbers<[1], [0], [0], [1], [0, 0, 1, 1], [], []>} : vector<1x128xbf16>, vector<128x128xbf16>, vector<1x128xf32> -> vector<1x128xf32>
    %531 = arith.addf %525, %530 : vector<1x128xf32>
    %532 = vector.extract_strided_slice %500 {offsets = [5, 0], sizes = [1, 128], strides = [1, 1]} : vector<8x128xf32> to vector<1x128xf32>
    %533 = arith.truncf %532 : vector<1x128xf32> to vector<1x128xbf16>
    %c5 = arith.constant 5 : index
    %c0_202 = arith.constant 0 : index
    %c0_203 = arith.constant 0 : index
    %534 = vector.load %arg21[%c5, %c0_202, %c0_203] : memref<8x128x128xbf16, #tpu.memory_space<vmem>>, vector<1x128x128xbf16>
    %535 = vector.shape_cast %534 : vector<1x128x128xbf16> to vector<128x128xbf16>
    %cst_204 = arith.constant dense<0.000000e+00> : vector<1x128xf32>
    %536 = tpu.matmul %533, %535, %cst_204 {dimension_numbers = #tpu.dot_dimension_numbers<[1], [0], [0], [1], [0, 0, 1, 1], [], []>} : vector<1x128xbf16>, vector<128x128xbf16>, vector<1x128xf32> -> vector<1x128xf32>
    %537 = arith.addf %531, %536 : vector<1x128xf32>
    %538 = vector.extract_strided_slice %500 {offsets = [6, 0], sizes = [1, 128], strides = [1, 1]} : vector<8x128xf32> to vector<1x128xf32>
    %539 = arith.truncf %538 : vector<1x128xf32> to vector<1x128xbf16>
    %c6 = arith.constant 6 : index
    %c0_205 = arith.constant 0 : index
    %c0_206 = arith.constant 0 : index
    %540 = vector.load %arg21[%c6, %c0_205, %c0_206] : memref<8x128x128xbf16, #tpu.memory_space<vmem>>, vector<1x128x128xbf16>
    %541 = vector.shape_cast %540 : vector<1x128x128xbf16> to vector<128x128xbf16>
    %cst_207 = arith.constant dense<0.000000e+00> : vector<1x128xf32>
    %542 = tpu.matmul %539, %541, %cst_207 {dimension_numbers = #tpu.dot_dimension_numbers<[1], [0], [0], [1], [0, 0, 1, 1], [], []>} : vector<1x128xbf16>, vector<128x128xbf16>, vector<1x128xf32> -> vector<1x128xf32>
    %543 = arith.addf %537, %542 : vector<1x128xf32>
    %544 = vector.extract_strided_slice %500 {offsets = [7, 0], sizes = [1, 128], strides = [1, 1]} : vector<8x128xf32> to vector<1x128xf32>
    %545 = arith.truncf %544 : vector<1x128xf32> to vector<1x128xbf16>
    %c7 = arith.constant 7 : index
    %c0_208 = arith.constant 0 : index
    %c0_209 = arith.constant 0 : index
    %546 = vector.load %arg21[%c7, %c0_208, %c0_209] : memref<8x128x128xbf16, #tpu.memory_space<vmem>>, vector<1x128x128xbf16>
    %547 = vector.shape_cast %546 : vector<1x128x128xbf16> to vector<128x128xbf16>
    %cst_210 = arith.constant dense<0.000000e+00> : vector<1x128xf32>
    %548 = tpu.matmul %545, %547, %cst_210 {dimension_numbers = #tpu.dot_dimension_numbers<[1], [0], [0], [1], [0, 0, 1, 1], [], []>} : vector<1x128xbf16>, vector<128x128xbf16>, vector<1x128xf32> -> vector<1x128xf32>
    %549 = arith.addf %543, %548 : vector<1x128xf32>
    %c0_211 = arith.constant 0 : index
    %c0_212 = arith.constant 0 : index
    %c0_213 = arith.constant 0 : index
    %550 = vector.load %arg23[%c0_211, %c0_212, %c0_213] : memref<1x1x128xf32, #tpu.memory_space<vmem>>, vector<1x1x128xf32>
    %551 = vector.shape_cast %550 : vector<1x1x128xf32> to vector<1x128xf32>
    %552 = vector.shape_cast %549 : vector<1x128xf32> to vector<1x1x128xf32>
    tpu.vector_store %arg23[%c0_211, %c0_212, %c0_213], %552 {strides = array<i32>} : memref<1x1x128xf32, #tpu.memory_space<vmem>>, vector<1x1x128xf32>,
    return
  }
  func.func @transform_0(%arg0: i32) -> i32 {
    %c0_i32 = arith.constant 0 : i32
    %c0_i32_0 = arith.constant 0 : i32
    return %c0_i32 : i32
  }
  func.func @transform_1(%arg0: i32) -> i32 {
    %c0_i32 = arith.constant 0 : i32
    %c0_i32_0 = arith.constant 0 : i32
    return %c0_i32 : i32
  }
  func.func @transform_2(%arg0: i32) -> (i32, i32, i32) {
    %c0_i32 = arith.constant 0 : i32
    %c0_i32_0 = arith.constant 0 : i32
    %c0_i32_1 = arith.constant 0 : i32
    return %arg0, %c0_i32, %c0_i32_0 : i32, i32, i32
  }
  func.func @transform_3(%arg0: i32) -> (i32, i32, i32) {
    %c0_i32 = arith.constant 0 : i32
    %c0_i32_0 = arith.constant 0 : i32
    %c0_i32_1 = arith.constant 0 : i32
    return %arg0, %c0_i32, %c0_i32_0 : i32, i32, i32
  }
  func.func @transform_4(%arg0: i32) -> (i32, i32, i32) {
    %c0_i32 = arith.constant 0 : i32
    %c0_i32_0 = arith.constant 0 : i32
    %c0_i32_1 = arith.constant 0 : i32
    return %arg0, %c0_i32, %c0_i32_0 : i32, i32, i32
  }
  func.func @transform_5(%arg0: i32) -> (i32, i32) {
    %c0_i32 = arith.constant 0 : i32
    %c0_i32_0 = arith.constant 0 : i32
    %c0_i32_1 = arith.constant 0 : i32
    return %c0_i32, %c0_i32_0 : i32, i32
  }
  func.func @transform_6(%arg0: i32) -> (i32, i32, i32) {
    %c0_i32 = arith.constant 0 : i32
    %c0_i32_0 = arith.constant 0 : i32
    %c0_i32_1 = arith.constant 0 : i32
    %c0_i32_2 = arith.constant 0 : i32
    return %c0_i32, %c0_i32_0, %c0_i32_1 : i32, i32, i32
  }
  func.func @transform_7(%arg0: i32) -> (i32, i32, i32) {
    %c0_i32 = arith.constant 0 : i32
    %c0_i32_0 = arith.constant 0 : i32
    %c0_i32_1 = arith.constant 0 : i32
    %c0_i32_2 = arith.constant 0 : i32
    return %c0_i32, %c0_i32_0, %c0_i32_1 : i32, i32, i32
  }
  func.func @transform_8(%arg0: i32) -> (i32, i32, i32) {
    %c0_i32 = arith.constant 0 : i32
    %c0_i32_0 = arith.constant 0 : i32
    %c0_i32_1 = arith.constant 0 : i32
    %c0_i32_2 = arith.constant 0 : i32
    return %c0_i32, %c0_i32_0, %c0_i32_1 : i32, i32, i32
  }
  func.func @transform_9(%arg0: i32) -> (i32, i32, i32) {
    %c0_i32 = arith.constant 0 : i32
    %c0_i32_0 = arith.constant 0 : i32
    %c0_i32_1 = arith.constant 0 : i32
    %c0_i32_2 = arith.constant 0 : i32
    return %c0_i32, %c0_i32_0, %c0_i32_1 : i32, i32, i32
  }
  func.func @transform_10(%arg0: i32) -> (i32, i32, i32) {
    %c0_i32 = arith.constant 0 : i32
    %c0_i32_0 = arith.constant 0 : i32
    %c0_i32_1 = arith.constant 0 : i32
    %c0_i32_2 = arith.constant 0 : i32
    return %c0_i32, %c0_i32_0, %c0_i32_1 : i32, i32, i32
  }
  func.func @transform_11(%arg0: i32) -> (i32, i32, i32) {
    %c0_i32 = arith.constant 0 : i32
    %c0_i32_0 = arith.constant 0 : i32
    %c0_i32_1 = arith.constant 0 : i32
    %c0_i32_2 = arith.constant 0 : i32
    return %c0_i32, %c0_i32_0, %c0_i32_1 : i32, i32, i32
  }
  func.func @transform_12(%arg0: i32) -> (i32, i32, i32) {
    %c0_i32 = arith.constant 0 : i32
    %c0_i32_0 = arith.constant 0 : i32
    %c0_i32_1 = arith.constant 0 : i32
    %c0_i32_2 = arith.constant 0 : i32
    return %c0_i32, %c0_i32_0, %c0_i32_1 : i32, i32, i32
  }
  func.func @transform_13(%arg0: i32) -> (i32, i32, i32) {
    %c0_i32 = arith.constant 0 : i32
    %c0_i32_0 = arith.constant 0 : i32
    %c0_i32_1 = arith.constant 0 : i32
    %c0_i32_2 = arith.constant 0 : i32
    return %c0_i32, %c0_i32_0, %c0_i32_1 : i32, i32, i32
  }
  func.func @transform_14(%arg0: i32) -> (i32, i32, i32) {
    %c0_i32 = arith.constant 0 : i32
    %c0_i32_0 = arith.constant 0 : i32
    %c0_i32_1 = arith.constant 0 : i32
    %c0_i32_2 = arith.constant 0 : i32
    return %c0_i32, %c0_i32_0, %c0_i32_1 : i32, i32, i32
  }
  func.func @transform_15(%arg0: i32) -> (i32, i32, i32) {
    %c0_i32 = arith.constant 0 : i32
    %c0_i32_0 = arith.constant 0 : i32
    %c0_i32_1 = arith.constant 0 : i32
    %c0_i32_2 = arith.constant 0 : i32
    return %c0_i32, %c0_i32_0, %c0_i32_1 : i32, i32, i32
  }
  func.func @transform_16(%arg0: i32) -> (i32, i32, i32) {
    %c0_i32 = arith.constant 0 : i32
    %c0_i32_0 = arith.constant 0 : i32
    %c0_i32_1 = arith.constant 0 : i32
    %c0_i32_2 = arith.constant 0 : i32
    return %c0_i32, %c0_i32_0, %c0_i32_1 : i32, i32, i32
  }
  func.func @transform_17(%arg0: i32) -> (i32, i32, i32) {
    %c0_i32 = arith.constant 0 : i32
    %c0_i32_0 = arith.constant 0 : i32
    %c0_i32_1 = arith.constant 0 : i32
    %c0_i32_2 = arith.constant 0 : i32
    return %c0_i32, %c0_i32_0, %c0_i32_1 : i32, i32, i32
  }
  func.func @transform_18(%arg0: i32) -> (i32, i32) {
    %c0_i32 = arith.constant 0 : i32
    %c0_i32_0 = arith.constant 0 : i32
    %c0_i32_1 = arith.constant 0 : i32
    return %c0_i32, %c0_i32_0 : i32, i32
  }
  func.func @transform_19(%arg0: i32) -> (i32, i32) {
    %c0_i32 = arith.constant 0 : i32
    %c0_i32_0 = arith.constant 0 : i32
    %c0_i32_1 = arith.constant 0 : i32
    return %c0_i32, %c0_i32_0 : i32, i32
  }
  func.func @transform_20(%arg0: i32) -> (i32, i32, i32) {
    %c0_i32 = arith.constant 0 : i32
    %c0_i32_0 = arith.constant 0 : i32
    %c0_i32_1 = arith.constant 0 : i32
    %c0_i32_2 = arith.constant 0 : i32
    return %c0_i32, %c0_i32_0, %c0_i32_1 : i32, i32, i32
  }
  func.func @transform_21(%arg0: i32) -> (i32, i32) {
    %c0_i32 = arith.constant 0 : i32
    %c0_i32_0 = arith.constant 0 : i32
    %c0_i32_1 = arith.constant 0 : i32
    return %c0_i32, %c0_i32_0 : i32, i32
  }
  func.func @transform_22(%arg0: i32) -> (i32, i32, i32) {
    %c0_i32 = arith.constant 0 : i32
    %c0_i32_0 = arith.constant 0 : i32
    %c0_i32_1 = arith.constant 0 : i32
    return %arg0, %c0_i32, %c0_i32_0 : i32, i32, i32
  }
}

</mosaic_0001>

<llo_original>
// kernel: vit_forward.2
$region0: #{vit_forward.2}
  #allocation0 [shape = 'u32[]', space=smem, size = 0x4, offset = 0x4, fixed_abs, tag = 'smem constant byte address 0x4 - core index']
  #allocation1 [shape = 'u32[144,128]{1,0:T(1,128)}', space=vmem, size = 0x12000, scoped, tag = 'internal scratch']
  %s0 = inlined_call_operand.vmem [shape: f32[16,4096], index: 0, kind: input, shape index: {}]
  %s1 = inlined_call_operand.vmem [shape: bf16[4096,128], index: 1, kind: input, shape index: {}]
  %s2 = inlined_call_operand.vmem [shape: f32[1,128], index: 2, kind: input, shape index: {}]
  %s3 = inlined_call_operand.vmem [shape: f32[16,128], index: 3, kind: output, shape index: {}]
  %s4 = sld [smem:[#allocation0]]
  $region22: #{vit_forward.2} parent=0
    _
  %s6 = ssub.s32 1, %s4
  %s7 = scalar_select 0, %s6, %s4
  // Predicated region
  $region2: #{vit_forward.2} parent=0 // pred_check
    _
  $region3: #{vit_forward.2} parent=0 // pred_check_branch
    %9 = sbr.rel (0) target = $region5
  $region4: #{vit_forward.2} parent=0 // pred_region
    _
  $region5: #{vit_forward.2} parent=0 // pred_fallthru
    _
  // Predicated region
  $region6: #{vit_forward.2} parent=0 // pred_check
    _
  $region7: #{vit_forward.2} parent=0 // pred_check_branch
    %11 = sbr.rel (0) target = $region9
  $region8: #{vit_forward.2} parent=0 // pred_region
    _
  $region9: #{vit_forward.2} parent=0 // pred_fallthru
    _
  // Predicated region
  $region10: #{vit_forward.2} parent=0 // pred_check
    _
  $region11: #{vit_forward.2} parent=0 // pred_check_branch
    %13 = sbr.rel (0) target = $region13
  $region12: #{vit_forward.2} parent=0 // pred_region
    _
  $region13: #{vit_forward.2} parent=0 // pred_fallthru
    _
  %v15 = vld [vmem:[%s0] sm:$0xff]
  %v16 = vld [vmem:[%s0 + $0x8] sm:$0xff]
  %v17 = vld [vmem:[%s0 + $0x10] sm:$0xff]
  %v18 = vld [vmem:[%s0 + $0x18] sm:$0xff]
  %v19 = vld [vmem:[%s0 + $0x20] sm:$0xff]
  %v20 = vld [vmem:[%s0 + $0x28] sm:$0xff]
  %v21 = vld [vmem:[%s0 + $0x30] sm:$0xff]
  %v22 = vld [vmem:[%s0 + $0x38] sm:$0xff]
  %v23 = vld [vmem:[%s0 + $0x40] sm:$0xff]
  %v24 = vld [vmem:[%s0 + $0x48] sm:$0xff]
  %v25 = vld [vmem:[%s0 + $0x50] sm:$0xff]
  %v26 = vld [vmem:[%s0 + $0x58] sm:$0xff]
  %v27 = vld [vmem:[%s0 + $0x60] sm:$0xff]
  %v28 = vld [vmem:[%s0 + $0x68] sm:$0xff]
  %v29 = vld [vmem:[%s0 + $0x70] sm:$0xff]
  %v30 = vld [vmem:[%s0 + $0x78] sm:$0xff]
  %v31 = vld [vmem:[%s0 + $0x80] sm:$0xff]
  %v32 = vld [vmem:[%s0 + $0x88] sm:$0xff]
  %v33 = vld [vmem:[%s0 + $0x90] sm:$0xff]
  %v34 = vld [vmem:[%s0 + $0x98] sm:$0xff]
  %v35 = vld [vmem:[%s0 + $0xa0] sm:$0xff]
  %v36 = vld [vmem:[%s0 + $0xa8] sm:$0xff]
  %v37 = vld [vmem:[%s0 + $0xb0] sm:$0xff]
  %v38 = vld [vmem:[%s0 + $0xb8] sm:$0xff]
  %v39 = vld [vmem:[%s0 + $0xc0] sm:$0xff]
  %v40 = vld [vmem:[%s0 + $0xc8] sm:$0xff]
  %v41 = vld [vmem:[%s0 + $0xd0] sm:$0xff]
  %v42 = vld [vmem:[%s0 + $0xd8] sm:$0xff]
  %v43 = vld [vmem:[%s0 + $0xe0] sm:$0xff]
  %v44 = vld [vmem:[%s0 + $0xe8] sm:$0xff]
  %v45 = vld [vmem:[%s0 + $0xf0] sm:$0xff]
  %v46 = vld [vmem:[%s0 + $0xf8] sm:$0xff]
  %v47 = vld [vmem:[%s0 + $0x100] sm:$0xff]
  %v48 = vld [vmem:[%s0 + $0x108] sm:$0xff]
  %v49 = vld [vmem:[%s0 + $0x110] sm:$0xff]
  %v50 = vld [vmem:[%s0 + $0x118] sm:$0xff]
  %v51 = vld [vmem:[%s0 + $0x120] sm:$0xff]
  %v52 = vld [vmem:[%s0 + $0x128] sm:$0xff]
  %v53 = vld [vmem:[%s0 + $0x130] sm:$0xff]
  %v54 = vld [vmem:[%s0 + $0x138] sm:$0xff]
  %v55 = vld [vmem:[%s0 + $0x140] sm:$0xff]
  %v56 = vld [vmem:[%s0 + $0x148] sm:$0xff]
  %v57 = vld [vmem:[%s0 + $0x150] sm:$0xff]
  %v58 = vld [vmem:[%s0 + $0x158] sm:$0xff]
  %v59 = vld [vmem:[%s0 + $0x160] sm:$0xff]
  %v60 = vld [vmem:[%s0 + $0x168] sm:$0xff]
  %v61 = vld [vmem:[%s0 + $0x170] sm:$0xff]
  %v62 = vld [vmem:[%s0 + $0x178] sm:$0xff]
  %v63 = vld [vmem:[%s0 + $0x180] sm:$0xff]
  %v64 = vld [vmem:[%s0 + $0x188] sm:$0xff]
  %v65 = vld [vmem:[%s0 + $0x190] sm:$0xff]
  %v66 = vld [vmem:[%s0 + $0x198] sm:$0xff]
  %v67 = vld [vmem:[%s0 + $0x1a0] sm:$0xff]
  %v68 = vld [vmem:[%s0 + $0x1a8] sm:$0xff]
  %v69 = vld [vmem:[%s0 + $0x1b0] sm:$0xff]
  %v70 = vld [vmem:[%s0 + $0x1b8] sm:$0xff]
  %v71 = vld [vmem:[%s0 + $0x1c0] sm:$0xff]
  %v72 = vld [vmem:[%s0 + $0x1c8] sm:$0xff]
  %v73 = vld [vmem:[%s0 + $0x1d0] sm:$0xff]
  %v74 = vld [vmem:[%s0 + $0x1d8] sm:$0xff]
  %v75 = vld [vmem:[%s0 + $0x1e0] sm:$0xff]
  %v76 = vld [vmem:[%s0 + $0x1e8] sm:$0xff]
  %v77 = vld [vmem:[%s0 + $0x1f0] sm:$0xff]
  %v78 = vld [vmem:[%s0 + $0x1f8] sm:$0xff]
  %v79 = vpack.c.bf16 %v47, %v15
  %v80 = vpack.c.bf16 %v48, %v16
  %v81 = vpack.c.bf16 %v49, %v17
  %v82 = vpack.c.bf16 %v50, %v18
  %v83 = vpack.c.bf16 %v51, %v19
  %v84 = vpack.c.bf16 %v52, %v20
  %v85 = vpack.c.bf16 %v53, %v21
  %v86 = vpack.c.bf16 %v54, %v22
  %v87 = vpack.c.bf16 %v55, %v23
  %v88 = vpack.c.bf16 %v56, %v24
  %v89 = vpack.c.bf16 %v57, %v25
  %v90 = vpack.c.bf16 %v58, %v26
  %v91 = vpack.c.bf16 %v59, %v27
  %v92 = vpack.c.bf16 %v60, %v28
  %v93 = vpack.c.bf16 %v61, %v29
  %v94 = vpack.c.bf16 %v62, %v30
  %v95 = vpack.c.bf16 %v63, %v31
  %v96 = vpack.c.bf16 %v64, %v32
  %v97 = vpack.c.bf16 %v65, %v33
  %v98 = vpack.c.bf16 %v66, %v34
  %v99 = vpack.c.bf16 %v67, %v35
  %v100 = vpack.c.bf16 %v68, %v36
  %v101 = vpack.c.bf16 %v69, %v37
  %v102 = vpack.c.bf16 %v70, %v38
  %v103 = vpack.c.bf16 %v71, %v39
  %v104 = vpack.c.bf16 %v72, %v40
  %v105 = vpack.c.bf16 %v73, %v41
  %v106 = vpack.c.bf16 %v74, %v42
  %v107 = vpack.c.bf16 %v75, %v43
  %v108 = vpack.c.bf16 %v76, %v44
  %v109 = vpack.c.bf16 %v77, %v45
  %v110 = vpack.c.bf16 %v78, %v46
  %v111 = vld [vmem:[%s1] sm:$0xf]
  %v112 = vld [vmem:[%s1 + $0x4] sm:$0xf]
  %v113 = vld [vmem:[%s1 + $0x8] sm:$0xf]
  %v114 = vld [vmem:[%s1 + $0xc] sm:$0xf]
  %v115 = vld [vmem:[%s1 + $0x10] sm:$0xf]
  %v116 = vld [vmem:[%s1 + $0x14] sm:$0xf]
  %v117 = vld [vmem:[%s1 + $0x18] sm:$0xf]
  %v118 = vld [vmem:[%s1 + $0x1c] sm:$0xf]
  %v119 = vld [vmem:[%s1 + $0x20] sm:$0xf]
  %v120 = vld [vmem:[%s1 + $0x24] sm:$0xf]
  %v121 = vld [vmem:[%s1 + $0x28] sm:$0xf]
  %v122 = vld [vmem:[%s1 + $0x2c] sm:$0xf]
  %v123 = vld [vmem:[%s1 + $0x30] sm:$0xf]
  %v124 = vld [vmem:[%s1 + $0x34] sm:$0xf]
  %v125 = vld [vmem:[%s1 + $0x38] sm:$0xf]
  %v126 = vld [vmem:[%s1 + $0x3c] sm:$0xf]
  %v127 = vld [vmem:[%s1 + $0x40] sm:$0xf]
  %v128 = vld [vmem:[%s1 + $0x44] sm:$0xf]
  %v129 = vld [vmem:[%s1 + $0x48] sm:$0xf]
  %v130 = vld [vmem:[%s1 + $0x4c] sm:$0xf]
  %v131 = vld [vmem:[%s1 + $0x50] sm:$0xf]
  %v132 = vld [vmem:[%s1 + $0x54] sm:$0xf]
  %v133 = vld [vmem:[%s1 + $0x58] sm:$0xf]
  %v134 = vld [vmem:[%s1 + $0x5c] sm:$0xf]
  %v135 = vld [vmem:[%s1 + $0x60] sm:$0xf]
  %v136 = vld [vmem:[%s1 + $0x64] sm:$0xf]
  %v137 = vld [vmem:[%s1 + $0x68] sm:$0xf]
  %v138 = vld [vmem:[%s1 + $0x6c] sm:$0xf]
  %v139 = vld [vmem:[%s1 + $0x70] sm:$0xf]
  %v140 = vld [vmem:[%s1 + $0x74] sm:$0xf]
  %v141 = vld [vmem:[%s1 + $0x78] sm:$0xf]
  %v142 = vld [vmem:[%s1 + $0x7c] sm:$0xf]
  %v143 = vld [vmem:[%s1 + $0x80] sm:$0xf]
  %v144 = vld [vmem:[%s1 + $0x84] sm:$0xf]
  %v145 = vld [vmem:[%s1 + $0x88] sm:$0xf]
  %v146 = vld [vmem:[%s1 + $0x8c] sm:$0xf]
  %v147 = vld [vmem:[%s1 + $0x90] sm:$0xf]
  %v148 = vld [vmem:[%s1 + $0x94] sm:$0xf]
  %v149 = vld [vmem:[%s1 + $0x98] sm:$0xf]
  %v150 = vld [vmem:[%s1 + $0x9c] sm:$0xf]
  %v151 = vld [vmem:[%s1 + $0xa0] sm:$0xf]
  %v152 = vld [vmem:[%s1 + $0xa4] sm:$0xf]
  %v153 = vld [vmem:[%s1 + $0xa8] sm:$0xf]
  %v154 = vld [vmem:[%s1 + $0xac] sm:$0xf]
  %v155 = vld [vmem:[%s1 + $0xb0] sm:$0xf]
  %v156 = vld [vmem:[%s1 + $0xb4] sm:$0xf]
  %v157 = vld [vmem:[%s1 + $0xb8] sm:$0xf]
  %v158 = vld [vmem:[%s1 + $0xbc] sm:$0xf]
  %v159 = vld [vmem:[%s1 + $0xc0] sm:$0xf]
  %v160 = vld [vmem:[%s1 + $0xc4] sm:$0xf]
  %v161 = vld [vmem:[%s1 + $0xc8] sm:$0xf]
  %v162 = vld [vmem:[%s1 + $0xcc] sm:$0xf]
  %v163 = vld [vmem:[%s1 + $0xd0] sm:$0xf]
  %v164 = vld [vmem:[%s1 + $0xd4] sm:$0xf]
  %v165 = vld [vmem:[%s1 + $0xd8] sm:$0xf]
  %v166 = vld [vmem:[%s1 + $0xdc] sm:$0xf]
  %v167 = vld [vmem:[%s1 + $0xe0] sm:$0xf]
  %v168 = vld [vmem:[%s1 + $0xe4] sm:$0xf]
  %v169 = vld [vmem:[%s1 + $0xe8] sm:$0xf]
  %v170 = vld [vmem:[%s1 + $0xec] sm:$0xf]
  %v171 = vld [vmem:[%s1 + $0xf0] sm:$0xf]
  %v172 = vld [vmem:[%s1 + $0xf4] sm:$0xf]
  %v173 = vld [vmem:[%s1 + $0xf8] sm:$0xf]
  %v174 = vld [vmem:[%s1 + $0xfc] sm:$0xf]
  %v175 = vld [vmem:[%s1 + $0x100] sm:$0xf]
  %v176 = vld [vmem:[%s1 + $0x104] sm:$0xf]
  %v177 = vld [vmem:[%s1 + $0x108] sm:$0xf]
  %v178 = vld [vmem:[%s1 + $0x10c] sm:$0xf]
  %v179 = vld [vmem:[%s1 + $0x110] sm:$0xf]
  %v180 = vld [vmem:[%s1 + $0x114] sm:$0xf]
  %v181 = vld [vmem:[%s1 + $0x118] sm:$0xf]
  %v182 = vld [vmem:[%s1 + $0x11c] sm:$0xf]
  %v183 = vld [vmem:[%s1 + $0x120] sm:$0xf]
  %v184 = vld [vmem:[%s1 + $0x124] sm:$0xf]
  %v185 = vld [vmem:[%s1 + $0x128] sm:$0xf]
  %v186 = vld [vmem:[%s1 + $0x12c] sm:$0xf]
  %v187 = vld [vmem:[%s1 + $0x130] sm:$0xf]
  %v188 = vld [vmem:[%s1 + $0x134] sm:$0xf]
  %v189 = vld [vmem:[%s1 + $0x138] sm:$0xf]
  %v190 = vld [vmem:[%s1 + $0x13c] sm:$0xf]
  %v191 = vld [vmem:[%s1 + $0x140] sm:$0xf]
  %v192 = vld [vmem:[%s1 + $0x144] sm:$0xf]
  %v193 = vld [vmem:[%s1 + $0x148] sm:$0xf]
  %v194 = vld [vmem:[%s1 + $0x14c] sm:$0xf]
  %v195 = vld [vmem:[%s1 + $0x150] sm:$0xf]
  %v196 = vld [vmem:[%s1 + $0x154] sm:$0xf]
  %v197 = vld [vmem:[%s1 + $0x158] sm:$0xf]
  %v198 = vld [vmem:[%s1 + $0x15c] sm:$0xf]
  %v199 = vld [vmem:[%s1 + $0x160] sm:$0xf]
  %v200 = vld [vmem:[%s1 + $0x164] sm:$0xf]
  %v201 = vld [vmem:[%s1 + $0x168] sm:$0xf]
  %v202 = vld [vmem:[%s1 + $0x16c] sm:$0xf]
  %v203 = vld [vmem:[%s1 + $0x170] sm:$0xf]
  %v204 = vld [vmem:[%s1 + $0x174] sm:$0xf]
  %v205 = vld [vmem:[%s1 + $0x178] sm:$0xf]
  %v206 = vld [vmem:[%s1 + $0x17c] sm:$0xf]
  %v207 = vld [vmem:[%s1 + $0x180] sm:$0xf]
  %v208 = vld [vmem:[%s1 + $0x184] sm:$0xf]
  %v209 = vld [vmem:[%s1 + $0x188] sm:$0xf]
  %v210 = vld [vmem:[%s1 + $0x18c] sm:$0xf]
  %v211 = vld [vmem:[%s1 + $0x190] sm:$0xf]
  %v212 = vld [vmem:[%s1 + $0x194] sm:$0xf]
  %v213 = vld [vmem:[%s1 + $0x198] sm:$0xf]
  %v214 = vld [vmem:[%s1 + $0x19c] sm:$0xf]
  %v215 = vld [vmem:[%s1 + $0x1a0] sm:$0xf]
  %v216 = vld [vmem:[%s1 + $0x1a4] sm:$0xf]
  %v217 = vld [vmem:[%s1 + $0x1a8] sm:$0xf]
  %v218 = vld [vmem:[%s1 + $0x1ac] sm:$0xf]
  %v219 = vld [vmem:[%s1 + $0x1b0] sm:$0xf]
  %v220 = vld [vmem:[%s1 + $0x1b4] sm:$0xf]
  %v221 = vld [vmem:[%s1 + $0x1b8] sm:$0xf]
  %v222 = vld [vmem:[%s1 + $0x1bc] sm:$0xf]
  %v223 = vld [vmem:[%s1 + $0x1c0] sm:$0xf]
  %v224 = vld [vmem:[%s1 + $0x1c4] sm:$0xf]
  %v225 = vld [vmem:[%s1 + $0x1c8] sm:$0xf]
  %v226 = vld [vmem:[%s1 + $0x1cc] sm:$0xf]
  %v227 = vld [vmem:[%s1 + $0x1d0] sm:$0xf]
  %v228 = vld [vmem:[%s1 + $0x1d4] sm:$0xf]
  %v229 = vld [vmem:[%s1 + $0x1d8] sm:$0xf]
  %v230 = vld [vmem:[%s1 + $0x1dc] sm:$0xf]
  %v231 = vld [vmem:[%s1 + $0x1e0] sm:$0xf]
  %v232 = vld [vmem:[%s1 + $0x1e4] sm:$0xf]
  %v233 = vld [vmem:[%s1 + $0x1e8] sm:$0xf]
  %v234 = vld [vmem:[%s1 + $0x1ec] sm:$0xf]
  %v235 = vld [vmem:[%s1 + $0x1f0] sm:$0xf]
  %v236 = vld [vmem:[%s1 + $0x1f4] sm:$0xf]
  %v237 = vld [vmem:[%s1 + $0x1f8] sm:$0xf]
  %v238 = vld [vmem:[%s1 + $0x1fc] sm:$0xf]
  %v239 = vld [vmem:[%s1 + $0x200] sm:$0xf]
  %v240 = vld [vmem:[%s1 + $0x204] sm:$0xf]
  %v241 = vld [vmem:[%s1 + $0x208] sm:$0xf]
  %v242 = vld [vmem:[%s1 + $0x20c] sm:$0xf]
  %v243 = vld [vmem:[%s1 + $0x210] sm:$0xf]
  %v244 = vld [vmem:[%s1 + $0x214] sm:$0xf]
  %v245 = vld [vmem:[%s1 + $0x218] sm:$0xf]
  %v246 = vld [vmem:[%s1 + $0x21c] sm:$0xf]
  %v247 = vld [vmem:[%s1 + $0x220] sm:$0xf]
  %v248 = vld [vmem:[%s1 + $0x224] sm:$0xf]
  %v249 = vld [vmem:[%s1 + $0x228] sm:$0xf]
  %v250 = vld [vmem:[%s1 + $0x22c] sm:$0xf]
  %v251 = vld [vmem:[%s1 + $0x230] sm:$0xf]
  %v252 = vld [vmem:[%s1 + $0x234] sm:$0xf]
  %v253 = vld [vmem:[%s1 + $0x238] sm:$0xf]
  %v254 = vld [vmem:[%s1 + $0x23c] sm:$0xf]
  %v255 = vld [vmem:[%s1 + $0x240] sm:$0xf]
  %v256 = vld [vmem:[%s1 + $0x244] sm:$0xf]
  %v257 = vld [vmem:[%s1 + $0x248] sm:$0xf]
  %v258 = vld [vmem:[%s1 + $0x24c] sm:$0xf]
  %v259 = vld [vmem:[%s1 + $0x250] sm:$0xf]
  %v260 = vld [vmem:[%s1 + $0x254] sm:$0xf]
  %v261 = vld [vmem:[%s1 + $0x258] sm:$0xf]
  %v262 = vld [vmem:[%s1 + $0x25c] sm:$0xf]
  %v263 = vld [vmem:[%s1 + $0x260] sm:$0xf]
  %v264 = vld [vmem:[%s1 + $0x264] sm:$0xf]
  %v265 = vld [vmem:[%s1 + $0x268] sm:$0xf]
  %v266 = vld [vmem:[%s1 + $0x26c] sm:$0xf]
  %v267 = vld [vmem:[%s1 + $0x270] sm:$0xf]
  %v268 = vld [vmem:[%s1 + $0x274] sm:$0xf]
  %v269 = vld [vmem:[%s1 + $0x278] sm:$0xf]
  %v270 = vld [vmem:[%s1 + $0x27c] sm:$0xf]
  %v271 = vld [vmem:[%s1 + $0x280] sm:$0xf]
  %v272 = vld [vmem:[%s1 + $0x284] sm:$0xf]
  %v273 = vld [vmem:[%s1 + $0x288] sm:$0xf]
  %v274 = vld [vmem:[%s1 + $0x28c] sm:$0xf]
  %v275 = vld [vmem:[%s1 + $0x290] sm:$0xf]
  %v276 = vld [vmem:[%s1 + $0x294] sm:$0xf]
  %v277 = vld [vmem:[%s1 + $0x298] sm:$0xf]
  %v278 = vld [vmem:[%s1 + $0x29c] sm:$0xf]
  %v279 = vld [vmem:[%s1 + $0x2a0] sm:$0xf]
  %v280 = vld [vmem:[%s1 + $0x2a4] sm:$0xf]
  %v281 = vld [vmem:[%s1 + $0x2a8] sm:$0xf]
  %v282 = vld [vmem:[%s1 + $0x2ac] sm:$0xf]
  %v283 = vld [vmem:[%s1 + $0x2b0] sm:$0xf]
  %v284 = vld [vmem:[%s1 + $0x2b4] sm:$0xf]
  %v285 = vld [vmem:[%s1 + $0x2b8] sm:$0xf]
  %v286 = vld [vmem:[%s1 + $0x2bc] sm:$0xf]
  %v287 = vld [vmem:[%s1 + $0x2c0] sm:$0xf]
  %v288 = vld [vmem:[%s1 + $0x2c4] sm:$0xf]
  %v289 = vld [vmem:[%s1 + $0x2c8] sm:$0xf]
  %v290 = vld [vmem:[%s1 + $0x2cc] sm:$0xf]
  %v291 = vld [vmem:[%s1 + $0x2d0] sm:$0xf]
  %v292 = vld [vmem:[%s1 + $0x2d4] sm:$0xf]
  %v293 = vld [vmem:[%s1 + $0x2d8] sm:$0xf]
  %v294 = vld [vmem:[%s1 + $0x2dc] sm:$0xf]
  %v295 = vld [vmem:[%s1 + $0x2e0] sm:$0xf]
  %v296 = vld [vmem:[%s1 + $0x2e4] sm:$0xf]
  %v297 = vld [vmem:[%s1 + $0x2e8] sm:$0xf]
  %v298 = vld [vmem:[%s1 + $0x2ec] sm:$0xf]
  %v299 = vld [vmem:[%s1 + $0x2f0] sm:$0xf]
  %v300 = vld [vmem:[%s1 + $0x2f4] sm:$0xf]
  %v301 = vld [vmem:[%s1 + $0x2f8] sm:$0xf]
  %v302 = vld [vmem:[%s1 + $0x2fc] sm:$0xf]
  %v303 = vld [vmem:[%s1 + $0x300] sm:$0xf]
  %v304 = vld [vmem:[%s1 + $0x304] sm:$0xf]
  %v305 = vld [vmem:[%s1 + $0x308] sm:$0xf]
  %v306 = vld [vmem:[%s1 + $0x30c] sm:$0xf]
  %v307 = vld [vmem:[%s1 + $0x310] sm:$0xf]
  %v308 = vld [vmem:[%s1 + $0x314] sm:$0xf]
  %v309 = vld [vmem:[%s1 + $0x318] sm:$0xf]
  %v310 = vld [vmem:[%s1 + $0x31c] sm:$0xf]
  %v311 = vld [vmem:[%s1 + $0x320] sm:$0xf]
  %v312 = vld [vmem:[%s1 + $0x324] sm:$0xf]
  %v313 = vld [vmem:[%s1 + $0x328] sm:$0xf]
  %v314 = vld [vmem:[%s1 + $0x32c] sm:$0xf]
  %v315 = vld [vmem:[%s1 + $0x330] sm:$0xf]
  %v316 = vld [vmem:[%s1 + $0x334] sm:$0xf]
  %v317 = vld [vmem:[%s1 + $0x338] sm:$0xf]
  %v318 = vld [vmem:[%s1 + $0x33c] sm:$0xf]
  %v319 = vld [vmem:[%s1 + $0x340] sm:$0xf]
  %v320 = vld [vmem:[%s1 + $0x344] sm:$0xf]
  %v321 = vld [vmem:[%s1 + $0x348] sm:$0xf]
  %v322 = vld [vmem:[%s1 + $0x34c] sm:$0xf]
  %v323 = vld [vmem:[%s1 + $0x350] sm:$0xf]
  %v324 = vld [vmem:[%s1 + $0x354] sm:$0xf]
  %v325 = vld [vmem:[%s1 + $0x358] sm:$0xf]
  %v326 = vld [vmem:[%s1 + $0x35c] sm:$0xf]
  %v327 = vld [vmem:[%s1 + $0x360] sm:$0xf]
  %v328 = vld [vmem:[%s1 + $0x364] sm:$0xf]
  %v329 = vld [vmem:[%s1 + $0x368] sm:$0xf]
  %v330 = vld [vmem:[%s1 + $0x36c] sm:$0xf]
  %v331 = vld [vmem:[%s1 + $0x370] sm:$0xf]
  %v332 = vld [vmem:[%s1 + $0x374] sm:$0xf]
  %v333 = vld [vmem:[%s1 + $0x378] sm:$0xf]
  %v334 = vld [vmem:[%s1 + $0x37c] sm:$0xf]
  %v335 = vld [vmem:[%s1 + $0x380] sm:$0xf]
  %v336 = vld [vmem:[%s1 + $0x384] sm:$0xf]
  %v337 = vld [vmem:[%s1 + $0x388] sm:$0xf]
  %v338 = vld [vmem:[%s1 + $0x38c] sm:$0xf]
  %v339 = vld [vmem:[%s1 + $0x390] sm:$0xf]
  %v340 = vld [vmem:[%s1 + $0x394] sm:$0xf]
  %v341 = vld [vmem:[%s1 + $0x398] sm:$0xf]
  %v342 = vld [vmem:[%s1 + $0x39c] sm:$0xf]
  %v343 = vld [vmem:[%s1 + $0x3a0] sm:$0xf]
  %v344 = vld [vmem:[%s1 + $0x3a4] sm:$0xf]
  %v345 = vld [vmem:[%s1 + $0x3a8] sm:$0xf]
  %v346 = vld [vmem:[%s1 + $0x3ac] sm:$0xf]
  %v347 = vld [vmem:[%s1 + $0x3b0] sm:$0xf]
  %v348 = vld [vmem:[%s1 + $0x3b4] sm:$0xf]
  %v349 = vld [vmem:[%s1 + $0x3b8] sm:$0xf]
  %v350 = vld [vmem:[%s1 + $0x3bc] sm:$0xf]
  %v351 = vld [vmem:[%s1 + $0x3c0] sm:$0xf]
  %v352 = vld [vmem:[%s1 + $0x3c4] sm:$0xf]
  %v353 = vld [vmem:[%s1 + $0x3c8] sm:$0xf]
  %v354 = vld [vmem:[%s1 + $0x3cc] sm:$0xf]
  %v355 = vld [vmem:[%s1 + $0x3d0] sm:$0xf]
  %v356 = vld [vmem:[%s1 + $0x3d4] sm:$0xf]
  %v357 = vld [vmem:[%s1 + $0x3d8] sm:$0xf]
  %v358 = vld [vmem:[%s1 + $0x3dc] sm:$0xf]
  %v359 = vld [vmem:[%s1 + $0x3e0] sm:$0xf]
  %v360 = vld [vmem:[%s1 + $0x3e4] sm:$0xf]
  %v361 = vld [vmem:[%s1 + $0x3e8] sm:$0xf]
  %v362 = vld [vmem:[%s1 + $0x3ec] sm:$0xf]
  %v363 = vld [vmem:[%s1 + $0x3f0] sm:$0xf]
  %v364 = vld [vmem:[%s1 + $0x3f4] sm:$0xf]
  %v365 = vld [vmem:[%s1 + $0x3f8] sm:$0xf]
  %v366 = vld [vmem:[%s1 + $0x3fc] sm:$0xf]
  %v367 = vld [vmem:[%s1 + $0x400] sm:$0xf]
  %v368 = vld [vmem:[%s1 + $0x404] sm:$0xf]
  %v369 = vld [vmem:[%s1 + $0x408] sm:$0xf]
  %v370 = vld [vmem:[%s1 + $0x40c] sm:$0xf]
  %v371 = vld [vmem:[%s1 + $0x410] sm:$0xf]
  %v372 = vld [vmem:[%s1 + $0x414] sm:$0xf]
  %v373 = vld [vmem:[%s1 + $0x418] sm:$0xf]
  %v374 = vld [vmem:[%s1 + $0x41c] sm:$0xf]
  %v375 = vld [vmem:[%s1 + $0x420] sm:$0xf]
  %v376 = vld [vmem:[%s1 + $0x424] sm:$0xf]
  %v377 = vld [vmem:[%s1 + $0x428] sm:$0xf]
  %v378 = vld [vmem:[%s1 + $0x42c] sm:$0xf]
  %v379 = vld [vmem:[%s1 + $0x430] sm:$0xf]
  %v380 = vld [vmem:[%s1 + $0x434] sm:$0xf]
  %v381 = vld [vmem:[%s1 + $0x438] sm:$0xf]
  %v382 = vld [vmem:[%s1 + $0x43c] sm:$0xf]
  %v383 = vld [vmem:[%s1 + $0x440] sm:$0xf]
  %v384 = vld [vmem:[%s1 + $0x444] sm:$0xf]
  %v385 = vld [vmem:[%s1 + $0x448] sm:$0xf]
  %v386 = vld [vmem:[%s1 + $0x44c] sm:$0xf]
  %v387 = vld [vmem:[%s1 + $0x450] sm:$0xf]
  %v388 = vld [vmem:[%s1 + $0x454] sm:$0xf]
  %v389 = vld [vmem:[%s1 + $0x458] sm:$0xf]
  %v390 = vld [vmem:[%s1 + $0x45c] sm:$0xf]
  %v391 = vld [vmem:[%s1 + $0x460] sm:$0xf]
  %v392 = vld [vmem:[%s1 + $0x464] sm:$0xf]
  %v393 = vld [vmem:[%s1 + $0x468] sm:$0xf]
  %v394 = vld [vmem:[%s1 + $0x46c] sm:$0xf]
  %v395 = vld [vmem:[%s1 + $0x470] sm:$0xf]
  %v396 = vld [vmem:[%s1 + $0x474] sm:$0xf]
  %v397 = vld [vmem:[%s1 + $0x478] sm:$0xf]
  %v398 = vld [vmem:[%s1 + $0x47c] sm:$0xf]
  %v399 = vld [vmem:[%s1 + $0x480] sm:$0xf]
  %v400 = vld [vmem:[%s1 + $0x484] sm:$0xf]
  %v401 = vld [vmem:[%s1 + $0x488] sm:$0xf]
  %v402 = vld [vmem:[%s1 + $0x48c] sm:$0xf]
  %v403 = vld [vmem:[%s1 + $0x490] sm:$0xf]
  %v404 = vld [vmem:[%s1 + $0x494] sm:$0xf]
  %v405 = vld [vmem:[%s1 + $0x498] sm:$0xf]
  %v406 = vld [vmem:[%s1 + $0x49c] sm:$0xf]
  %v407 = vld [vmem:[%s1 + $0x4a0] sm:$0xf]
  %v408 = vld [vmem:[%s1 + $0x4a4] sm:$0xf]
  %v409 = vld [vmem:[%s1 + $0x4a8] sm:$0xf]
  %v410 = vld [vmem:[%s1 + $0x4ac] sm:$0xf]
  %v411 = vld [vmem:[%s1 + $0x4b0] sm:$0xf]
  %v412 = vld [vmem:[%s1 + $0x4b4] sm:$0xf]
  %v413 = vld [vmem:[%s1 + $0x4b8] sm:$0xf]
  %v414 = vld [vmem:[%s1 + $0x4bc] sm:$0xf]
  %v415 = vld [vmem:[%s1 + $0x4c0] sm:$0xf]
  %v416 = vld [vmem:[%s1 + $0x4c4] sm:$0xf]
  %v417 = vld [vmem:[%s1 + $0x4c8] sm:$0xf]
  %v418 = vld [vmem:[%s1 + $0x4cc] sm:$0xf]
  %v419 = vld [vmem:[%s1 + $0x4d0] sm:$0xf]
  %v420 = vld [vmem:[%s1 + $0x4d4] sm:$0xf]
  %v421 = vld [vmem:[%s1 + $0x4d8] sm:$0xf]
  %v422 = vld [vmem:[%s1 + $0x4dc] sm:$0xf]
  %v423 = vld [vmem:[%s1 + $0x4e0] sm:$0xf]
  %v424 = vld [vmem:[%s1 + $0x4e4] sm:$0xf]
  %v425 = vld [vmem:[%s1 + $0x4e8] sm:$0xf]
  %v426 = vld [vmem:[%s1 + $0x4ec] sm:$0xf]
  %v427 = vld [vmem:[%s1 + $0x4f0] sm:$0xf]
  %v428 = vld [vmem:[%s1 + $0x4f4] sm:$0xf]
  %v429 = vld [vmem:[%s1 + $0x4f8] sm:$0xf]
  %v430 = vld [vmem:[%s1 + $0x4fc] sm:$0xf]
  %v431 = vld [vmem:[%s1 + $0x500] sm:$0xf]
  %v432 = vld [vmem:[%s1 + $0x504] sm:$0xf]
  %v433 = vld [vmem:[%s1 + $0x508] sm:$0xf]
  %v434 = vld [vmem:[%s1 + $0x50c] sm:$0xf]
  %v435 = vld [vmem:[%s1 + $0x510] sm:$0xf]
  %v436 = vld [vmem:[%s1 + $0x514] sm:$0xf]
  %v437 = vld [vmem:[%s1 + $0x518] sm:$0xf]
  %v438 = vld [vmem:[%s1 + $0x51c] sm:$0xf]
  %v439 = vld [vmem:[%s1 + $0x520] sm:$0xf]
  %v440 = vld [vmem:[%s1 + $0x524] sm:$0xf]
  %v441 = vld [vmem:[%s1 + $0x528] sm:$0xf]
  %v442 = vld [vmem:[%s1 + $0x52c] sm:$0xf]
  %v443 = vld [vmem:[%s1 + $0x530] sm:$0xf]
  %v444 = vld [vmem:[%s1 + $0x534] sm:$0xf]
  %v445 = vld [vmem:[%s1 + $0x538] sm:$0xf]
  %v446 = vld [vmem:[%s1 + $0x53c] sm:$0xf]
  %v447 = vld [vmem:[%s1 + $0x540] sm:$0xf]
  %v448 = vld [vmem:[%s1 + $0x544] sm:$0xf]
  %v449 = vld [vmem:[%s1 + $0x548] sm:$0xf]
  %v450 = vld [vmem:[%s1 + $0x54c] sm:$0xf]
  %v451 = vld [vmem:[%s1 + $0x550] sm:$0xf]
  %v452 = vld [vmem:[%s1 + $0x554] sm:$0xf]
  %v453 = vld [vmem:[%s1 + $0x558] sm:$0xf]
  %v454 = vld [vmem:[%s1 + $0x55c] sm:$0xf]
  %v455 = vld [vmem:[%s1 + $0x560] sm:$0xf]
  %v456 = vld [vmem:[%s1 + $0x564] sm:$0xf]
  %v457 = vld [vmem:[%s1 + $0x568] sm:$0xf]
  %v458 = vld [vmem:[%s1 + $0x56c] sm:$0xf]
  %v459 = vld [vmem:[%s1 + $0x570] sm:$0xf]
  %v460 = vld [vmem:[%s1 + $0x574] sm:$0xf]
  %v461 = vld [vmem:[%s1 + $0x578] sm:$0xf]
  %v462 = vld [vmem:[%s1 + $0x57c] sm:$0xf]
  %v463 = vld [vmem:[%s1 + $0x580] sm:$0xf]
  %v464 = vld [vmem:[%s1 + $0x584] sm:$0xf]
  %v465 = vld [vmem:[%s1 + $0x588] sm:$0xf]
  %v466 = vld [vmem:[%s1 + $0x58c] sm:$0xf]
  %v467 = vld [vmem:[%s1 + $0x590] sm:$0xf]
  %v468 = vld [vmem:[%s1 + $0x594] sm:$0xf]
  %v469 = vld [vmem:[%s1 + $0x598] sm:$0xf]
  %v470 = vld [vmem:[%s1 + $0x59c] sm:$0xf]
  %v471 = vld [vmem:[%s1 + $0x5a0] sm:$0xf]
  %v472 = vld [vmem:[%s1 + $0x5a4] sm:$0xf]
  %v473 = vld [vmem:[%s1 + $0x5a8] sm:$0xf]
  %v474 = vld [vmem:[%s1 + $0x5ac] sm:$0xf]
  %v475 = vld [vmem:[%s1 + $0x5b0] sm:$0xf]
  %v476 = vld [vmem:[%s1 + $0x5b4] sm:$0xf]
  %v477 = vld [vmem:[%s1 + $0x5b8] sm:$0xf]
  %v478 = vld [vmem:[%s1 + $0x5bc] sm:$0xf]
  %v479 = vld [vmem:[%s1 + $0x5c0] sm:$0xf]
  %v480 = vld [vmem:[%s1 + $0x5c4] sm:$0xf]
  %v481 = vld [vmem:[%s1 + $0x5c8] sm:$0xf]
  %v482 = vld [vmem:[%s1 + $0x5cc] sm:$0xf]
  %v483 = vld [vmem:[%s1 + $0x5d0] sm:$0xf]
  %v484 = vld [vmem:[%s1 + $0x5d4] sm:$0xf]
  %v485 = vld [vmem:[%s1 + $0x5d8] sm:$0xf]
  %v486 = vld [vmem:[%s1 + $0x5dc] sm:$0xf]
  %v487 = vld [vmem:[%s1 + $0x5e0] sm:$0xf]
  %v488 = vld [vmem:[%s1 + $0x5e4] sm:$0xf]
  %v489 = vld [vmem:[%s1 + $0x5e8] sm:$0xf]
  %v490 = vld [vmem:[%s1 + $0x5ec] sm:$0xf]
  %v491 = vld [vmem:[%s1 + $0x5f0] sm:$0xf]
  %v492 = vld [vmem:[%s1 + $0x5f4] sm:$0xf]
  %v493 = vld [vmem:[%s1 + $0x5f8] sm:$0xf]
  %v494 = vld [vmem:[%s1 + $0x5fc] sm:$0xf]
  %v495 = vld [vmem:[%s1 + $0x600] sm:$0xf]
  %v496 = vld [vmem:[%s1 + $0x604] sm:$0xf]
  %v497 = vld [vmem:[%s1 + $0x608] sm:$0xf]
  %v498 = vld [vmem:[%s1 + $0x60c] sm:$0xf]
  %v499 = vld [vmem:[%s1 + $0x610] sm:$0xf]
  %v500 = vld [vmem:[%s1 + $0x614] sm:$0xf]
  %v501 = vld [vmem:[%s1 + $0x618] sm:$0xf]
  %v502 = vld [vmem:[%s1 + $0x61c] sm:$0xf]
  %v503 = vld [vmem:[%s1 + $0x620] sm:$0xf]
  %v504 = vld [vmem:[%s1 + $0x624] sm:$0xf]
  %v505 = vld [vmem:[%s1 + $0x628] sm:$0xf]
  %v506 = vld [vmem:[%s1 + $0x62c] sm:$0xf]
  %v507 = vld [vmem:[%s1 + $0x630] sm:$0xf]
  %v508 = vld [vmem:[%s1 + $0x634] sm:$0xf]
  %v509 = vld [vmem:[%s1 + $0x638] sm:$0xf]
  %v510 = vld [vmem:[%s1 + $0x63c] sm:$0xf]
  %v511 = vld [vmem:[%s1 + $0x640] sm:$0xf]
  %v512 = vld [vmem:[%s1 + $0x644] sm:$0xf]
  %v513 = vld [vmem:[%s1 + $0x648] sm:$0xf]
  %v514 = vld [vmem:[%s1 + $0x64c] sm:$0xf]
  %v515 = vld [vmem:[%s1 + $0x650] sm:$0xf]
  %v516 = vld [vmem:[%s1 + $0x654] sm:$0xf]
  %v517 = vld [vmem:[%s1 + $0x658] sm:$0xf]
  %v518 = vld [vmem:[%s1 + $0x65c] sm:$0xf]
  %v519 = vld [vmem:[%s1 + $0x660] sm:$0xf]
  %v520 = vld [vmem:[%s1 + $0x664] sm:$0xf]
  %v521 = vld [vmem:[%s1 + $0x668] sm:$0xf]
  %v522 = vld [vmem:[%s1 + $0x66c] sm:$0xf]
  %v523 = vld [vmem:[%s1 + $0x670] sm:$0xf]
  %v524 = vld [vmem:[%s1 + $0x674] sm:$0xf]
  %v525 = vld [vmem:[%s1 + $0x678] sm:$0xf]
  %v526 = vld [vmem:[%s1 + $0x67c] sm:$0xf]
  %v527 = vld [vmem:[%s1 + $0x680] sm:$0xf]
  %v528 = vld [vmem:[%s1 + $0x684] sm:$0xf]
  %v529 = vld [vmem:[%s1 + $0x688] sm:$0xf]
  %v530 = vld [vmem:[%s1 + $0x68c] sm:$0xf]
  %v531 = vld [vmem:[%s1 + $0x690] sm:$0xf]
  %v532 = vld [vmem:[%s1 + $0x694] sm:$0xf]
  %v533 = vld [vmem:[%s1 + $0x698] sm:$0xf]
  %v534 = vld [vmem:[%s1 + $0x69c] sm:$0xf]
  %v535 = vld [vmem:[%s1 + $0x6a0] sm:$0xf]
  %v536 = vld [vmem:[%s1 + $0x6a4] sm:$0xf]
  %v537 = vld [vmem:[%s1 + $0x6a8] sm:$0xf]
  %v538 = vld [vmem:[%s1 + $0x6ac] sm:$0xf]
  %v539 = vld [vmem:[%s1 + $0x6b0] sm:$0xf]
  %v540 = vld [vmem:[%s1 + $0x6b4] sm:$0xf]
  %v541 = vld [vmem:[%s1 + $0x6b8] sm:$0xf]
  %v542 = vld [vmem:[%s1 + $0x6bc] sm:$0xf]
  %v543 = vld [vmem:[%s1 + $0x6c0] sm:$0xf]
  %v544 = vld [vmem:[%s1 + $0x6c4] sm:$0xf]
  %v545 = vld [vmem:[%s1 + $0x6c8] sm:$0xf]
  %v546 = vld [vmem:[%s1 + $0x6cc] sm:$0xf]
  %v547 = vld [vmem:[%s1 + $0x6d0] sm:$0xf]
  %v548 = vld [vmem:[%s1 + $0x6d4] sm:$0xf]
  %v549 = vld [vmem:[%s1 + $0x6d8] sm:$0xf]
  %v550 = vld [vmem:[%s1 + $0x6dc] sm:$0xf]
  %v551 = vld [vmem:[%s1 + $0x6e0] sm:$0xf]
  %v552 = vld [vmem:[%s1 + $0x6e4] sm:$0xf]
  %v553 = vld [vmem:[%s1 + $0x6e8] sm:$0xf]
  %v554 = vld [vmem:[%s1 + $0x6ec] sm:$0xf]
  %v555 = vld [vmem:[%s1 + $0x6f0] sm:$0xf]
  %v556 = vld [vmem:[%s1 + $0x6f4] sm:$0xf]
  %v557 = vld [vmem:[%s1 + $0x6f8] sm:$0xf]
  %v558 = vld [vmem:[%s1 + $0x6fc] sm:$0xf]
  %v559 = vld [vmem:[%s1 + $0x700] sm:$0xf]
  %v560 = vld [vmem:[%s1 + $0x704] sm:$0xf]
  %v561 = vld [vmem:[%s1 + $0x708] sm:$0xf]
  %v562 = vld [vmem:[%s1 + $0x70c] sm:$0xf]
  %v563 = vld [vmem:[%s1 + $0x710] sm:$0xf]
  %v564 = vld [vmem:[%s1 + $0x714] sm:$0xf]
  %v565 = vld [vmem:[%s1 + $0x718] sm:$0xf]
  %v566 = vld [vmem:[%s1 + $0x71c] sm:$0xf]
  %v567 = vld [vmem:[%s1 + $0x720] sm:$0xf]
  %v568 = vld [vmem:[%s1 + $0x724] sm:$0xf]
  %v569 = vld [vmem:[%s1 + $0x728] sm:$0xf]
  %v570 = vld [vmem:[%s1 + $0x72c] sm:$0xf]
  %v571 = vld [vmem:[%s1 + $0x730] sm:$0xf]
  %v572 = vld [vmem:[%s1 + $0x734] sm:$0xf]
  %v573 = vld [vmem:[%s1 + $0x738] sm:$0xf]
  %v574 = vld [vmem:[%s1 + $0x73c] sm:$0xf]
  %v575 = vld [vmem:[%s1 + $0x740] sm:$0xf]
  %v576 = vld [vmem:[%s1 + $0x744] sm:$0xf]
  %v577 = vld [vmem:[%s1 + $0x748] sm:$0xf]
  %v578 = vld [vmem:[%s1 + $0x74c] sm:$0xf]
  %v579 = vld [vmem:[%s1 + $0x750] sm:$0xf]
  %v580 = vld [vmem:[%s1 + $0x754] sm:$0xf]
  %v581 = vld [vmem:[%s1 + $0x758] sm:$0xf]
  %v582 = vld [vmem:[%s1 + $0x75c] sm:$0xf]
  %v583 = vld [vmem:[%s1 + $0x760] sm:$0xf]
  %v584 = vld [vmem:[%s1 + $0x764] sm:$0xf]
  %v585 = vld [vmem:[%s1 + $0x768] sm:$0xf]
  %v586 = vld [vmem:[%s1 + $0x76c] sm:$0xf]
  %v587 = vld [vmem:[%s1 + $0x770] sm:$0xf]
  %v588 = vld [vmem:[%s1 + $0x774] sm:$0xf]
  %v589 = vld [vmem:[%s1 + $0x778] sm:$0xf]
  %v590 = vld [vmem:[%s1 + $0x77c] sm:$0xf]
  %v591 = vld [vmem:[%s1 + $0x780] sm:$0xf]
  %v592 = vld [vmem:[%s1 + $0x784] sm:$0xf]
  %v593 = vld [vmem:[%s1 + $0x788] sm:$0xf]
  %v594 = vld [vmem:[%s1 + $0x78c] sm:$0xf]
  %v595 = vld [vmem:[%s1 + $0x790] sm:$0xf]
  %v596 = vld [vmem:[%s1 + $0x794] sm:$0xf]
  %v597 = vld [vmem:[%s1 + $0x798] sm:$0xf]
  %v598 = vld [vmem:[%s1 + $0x79c] sm:$0xf]
  %v599 = vld [vmem:[%s1 + $0x7a0] sm:$0xf]
  %v600 = vld [vmem:[%s1 + $0x7a4] sm:$0xf]
  %v601 = vld [vmem:[%s1 + $0x7a8] sm:$0xf]
  %v602 = vld [vmem:[%s1 + $0x7ac] sm:$0xf]
  %v603 = vld [vmem:[%s1 + $0x7b0] sm:$0xf]
  %v604 = vld [vmem:[%s1 + $0x7b4] sm:$0xf]
  %v605 = vld [vmem:[%s1 + $0x7b8] sm:$0xf]
  %v606 = vld [vmem:[%s1 + $0x7bc] sm:$0xf]
  %v607 = vld [vmem:[%s1 + $0x7c0] sm:$0xf]
  %v608 = vld [vmem:[%s1 + $0x7c4] sm:$0xf]
  %v609 = vld [vmem:[%s1 + $0x7c8] sm:$0xf]
  %v610 = vld [vmem:[%s1 + $0x7cc] sm:$0xf]
  %v611 = vld [vmem:[%s1 + $0x7d0] sm:$0xf]
  %v612 = vld [vmem:[%s1 + $0x7d4] sm:$0xf]
  %v613 = vld [vmem:[%s1 + $0x7d8] sm:$0xf]
  %v614 = vld [vmem:[%s1 + $0x7dc] sm:$0xf]
  %v615 = vld [vmem:[%s1 + $0x7e0] sm:$0xf]
  %v616 = vld [vmem:[%s1 + $0x7e4] sm:$0xf]
  %v617 = vld [vmem:[%s1 + $0x7e8] sm:$0xf]
  %v618 = vld [vmem:[%s1 + $0x7ec] sm:$0xf]
  %v619 = vld [vmem:[%s1 + $0x7f0] sm:$0xf]
  %v620 = vld [vmem:[%s1 + $0x7f4] sm:$0xf]
  %v621 = vld [vmem:[%s1 + $0x7f8] sm:$0xf]
  %v622 = vld [vmem:[%s1 + $0x7fc] sm:$0xf]
  %v623 = vld [vmem:[%s2] sm:$0x1]
  %v625 = vlaneseq
  %v626 = vshrl.u32 %v625, 7
  %v627 = vsub.s32 0, %v626
  %v628 = vrot.slane %v623, %v627
  %v1142 = vunpack.c.l.b16 %v111
  %v1143 = vunpack.c.l.b16 %v112
  %v1144 = vunpack.c.l.b16 %v113
  %v1145 = vunpack.c.l.b16 %v114
  %v1146 = vunpack.c.l.b16 %v115
  %v1147 = vunpack.c.l.b16 %v116
  %v1148 = vunpack.c.l.b16 %v117
  %v1149 = vunpack.c.l.b16 %v118
  %v1150 = vunpack.c.l.b16 %v119
  %v1151 = vunpack.c.l.b16 %v120
  %v1152 = vunpack.c.l.b16 %v121
  %v1153 = vunpack.c.l.b16 %v122
  %v1154 = vunpack.c.l.b16 %v123
  %v1155 = vunpack.c.l.b16 %v124
  %v1156 = vunpack.c.l.b16 %v125
  %v1157 = vunpack.c.l.b16 %v126
  %v1158 = vunpack.c.l.b16 %v127
  %v1159 = vunpack.c.l.b16 %v128
  %v1160 = vunpack.c.l.b16 %v129
  %v1161 = vunpack.c.l.b16 %v130
  %v1162 = vunpack.c.l.b16 %v131
  %v1163 = vunpack.c.l.b16 %v132
  %v1164 = vunpack.c.l.b16 %v133
  %v1165 = vunpack.c.l.b16 %v134
  %v1166 = vunpack.c.l.b16 %v135
  %v1167 = vunpack.c.l.b16 %v136
  %v1168 = vunpack.c.l.b16 %v137
  %v1169 = vunpack.c.l.b16 %v138
  %v1170 = vunpack.c.l.b16 %v139
  %v1171 = vunpack.c.l.b16 %v140
  %v1172 = vunpack.c.l.b16 %v141
  %v1173 = vunpack.c.l.b16 %v142
  %v1174 = vunpack.c.l.b16 %v143
  %v1175 = vunpack.c.l.b16 %v144
  %v1176 = vunpack.c.l.b16 %v145
  %v1177 = vunpack.c.l.b16 %v146
  %v1178 = vunpack.c.l.b16 %v147
  %v1179 = vunpack.c.l.b16 %v148
  %v1180 = vunpack.c.l.b16 %v149
  %v1181 = vunpack.c.l.b16 %v150
  %v1182 = vunpack.c.l.b16 %v151
  %v1183 = vunpack.c.l.b16 %v152
  %v1184 = vunpack.c.l.b16 %v153
  %v1185 = vunpack.c.l.b16 %v154
  %v1186 = vunpack.c.l.b16 %v155
  %v1187 = vunpack.c.l.b16 %v156
  %v1188 = vunpack.c.l.b16 %v157
  %v1189 = vunpack.c.l.b16 %v158
  %v1190 = vunpack.c.l.b16 %v159
  %v1191 = vunpack.c.l.b16 %v160
  %v1192 = vunpack.c.l.b16 %v161
  %v1193 = vunpack.c.l.b16 %v162
  %v1194 = vunpack.c.l.b16 %v163
  %v1195 = vunpack.c.l.b16 %v164
  %v1196 = vunpack.c.l.b16 %v165
  %v1197 = vunpack.c.l.b16 %v166
  %v1198 = vunpack.c.l.b16 %v167
  %v1199 = vunpack.c.l.b16 %v168
  %v1200 = vunpack.c.l.b16 %v169
  %v1201 = vunpack.c.l.b16 %v170
  %v1202 = vunpack.c.l.b16 %v171
  %v1203 = vunpack.c.l.b16 %v172
  %v1204 = vunpack.c.l.b16 %v173
  %v1205 = vunpack.c.l.b16 %v174
  %v1206 = vunpack.c.l.b16 %v175
  %v1207 = vunpack.c.l.b16 %v176
  %v1208 = vunpack.c.l.b16 %v177
  %v1209 = vunpack.c.l.b16 %v178
  %v1210 = vunpack.c.l.b16 %v179
  %v1211 = vunpack.c.l.b16 %v180
  %v1212 = vunpack.c.l.b16 %v181
  %v1213 = vunpack.c.l.b16 %v182
  %v1214 = vunpack.c.l.b16 %v183
  %v1215 = vunpack.c.l.b16 %v184
  %v1216 = vunpack.c.l.b16 %v185
  %v1217 = vunpack.c.l.b16 %v186
  %v1218 = vunpack.c.l.b16 %v187
  %v1219 = vunpack.c.l.b16 %v188
  %v1220 = vunpack.c.l.b16 %v189
  %v1221 = vunpack.c.l.b16 %v190
  %v1222 = vunpack.c.l.b16 %v191
  %v1223 = vunpack.c.l.b16 %v192
  %v1224 = vunpack.c.l.b16 %v193
  %v1225 = vunpack.c.l.b16 %v194
  %v1226 = vunpack.c.l.b16 %v195
  %v1227 = vunpack.c.l.b16 %v196
  %v1228 = vunpack.c.l.b16 %v197
  %v1229 = vunpack.c.l.b16 %v198
  %v1230 = vunpack.c.l.b16 %v199
  %v1231 = vunpack.c.l.b16 %v200
  %v1232 = vunpack.c.l.b16 %v201
  %v1233 = vunpack.c.l.b16 %v202
  %v1234 = vunpack.c.l.b16 %v203
  %v1235 = vunpack.c.l.b16 %v204
  %v1236 = vunpack.c.l.b16 %v205
  %v1237 = vunpack.c.l.b16 %v206
  %v1238 = vunpack.c.l.b16 %v207
  %v1239 = vunpack.c.l.b16 %v208
  %v1240 = vunpack.c.l.b16 %v209
  %v1241 = vunpack.c.l.b16 %v210
  %v1242 = vunpack.c.l.b16 %v211
  %v1243 = vunpack.c.l.b16 %v212
  %v1244 = vunpack.c.l.b16 %v213
  %v1245 = vunpack.c.l.b16 %v214
  %v1246 = vunpack.c.l.b16 %v215
  %v1247 = vunpack.c.l.b16 %v216
  %v1248 = vunpack.c.l.b16 %v217
  %v1249 = vunpack.c.l.b16 %v218
  %v1250 = vunpack.c.l.b16 %v219
  %v1251 = vunpack.c.l.b16 %v220
  %v1252 = vunpack.c.l.b16 %v221
  %v1253 = vunpack.c.l.b16 %v222
  %v1254 = vunpack.c.l.b16 %v223
  %v1255 = vunpack.c.l.b16 %v224
  %v1256 = vunpack.c.l.b16 %v225
  %v1257 = vunpack.c.l.b16 %v226
  %v1258 = vunpack.c.l.b16 %v227
  %v1259 = vunpack.c.l.b16 %v228
  %v1260 = vunpack.c.l.b16 %v229
  %v1261 = vunpack.c.l.b16 %v230
  %v1262 = vunpack.c.l.b16 %v231
  %v1263 = vunpack.c.l.b16 %v232
  %v1264 = vunpack.c.l.b16 %v233
  %v1265 = vunpack.c.l.b16 %v234
  %v1266 = vunpack.c.l.b16 %v235
  %v1267 = vunpack.c.l.b16 %v236
  %v1268 = vunpack.c.l.b16 %v237
  %v1269 = vunpack.c.l.b16 %v238
  %v1270 = vunpack.c.l.b16 %v239
  %v1271 = vunpack.c.l.b16 %v240
  %v1272 = vunpack.c.l.b16 %v241
  %v1273 = vunpack.c.l.b16 %v242
  %v1274 = vunpack.c.l.b16 %v243
  %v1275 = vunpack.c.l.b16 %v244
  %v1276 = vunpack.c.l.b16 %v245
  %v1277 = vunpack.c.l.b16 %v246
  %v1278 = vunpack.c.l.b16 %v247
  %v1279 = vunpack.c.l.b16 %v248
  %v1280 = vunpack.c.l.b16 %v249
  %v1281 = vunpack.c.l.b16 %v250
  %v1282 = vunpack.c.l.b16 %v251
  %v1283 = vunpack.c.l.b16 %v252
  %v1284 = vunpack.c.l.b16 %v253
  %v1285 = vunpack.c.l.b16 %v254
  %v1286 = vunpack.c.l.b16 %v255
  %v1287 = vunpack.c.l.b16 %v256
  %v1288 = vunpack.c.l.b16 %v257
  %v1289 = vunpack.c.l.b16 %v258
  %v1290 = vunpack.c.l.b16 %v259
  %v1291 = vunpack.c.l.b16 %v260
  %v1292 = vunpack.c.l.b16 %v261
  %v1293 = vunpack.c.l.b16 %v262
  %v1294 = vunpack.c.l.b16 %v263
  %v1295 = vunpack.c.l.b16 %v264
  %v1296 = vunpack.c.l.b16 %v265
  %v1297 = vunpack.c.l.b16 %v266
  %v1298 = vunpack.c.l.b16 %v267
  %v1299 = vunpack.c.l.b16 %v268
  %v1300 = vunpack.c.l.b16 %v269
  %v1301 = vunpack.c.l.b16 %v270
  %v1302 = vunpack.c.l.b16 %v271
  %v1303 = vunpack.c.l.b16 %v272
  %v1304 = vunpack.c.l.b16 %v273
  %v1305 = vunpack.c.l.b16 %v274
  %v1306 = vunpack.c.l.b16 %v275
  %v1307 = vunpack.c.l.b16 %v276
  %v1308 = vunpack.c.l.b16 %v277
  %v1309 = vunpack.c.l.b16 %v278
  %v1310 = vunpack.c.l.b16 %v279
  %v1311 = vunpack.c.l.b16 %v280
  %v1312 = vunpack.c.l.b16 %v281
  %v1313 = vunpack.c.l.b16 %v282
  %v1314 = vunpack.c.l.b16 %v283
  %v1315 = vunpack.c.l.b16 %v284
  %v1316 = vunpack.c.l.b16 %v285
  %v1317 = vunpack.c.l.b16 %v286
  %v1318 = vunpack.c.l.b16 %v287
  %v1319 = vunpack.c.l.b16 %v288
  %v1320 = vunpack.c.l.b16 %v289
  %v1321 = vunpack.c.l.b16 %v290
  %v1322 = vunpack.c.l.b16 %v291
  %v1323 = vunpack.c.l.b16 %v292
  %v1324 = vunpack.c.l.b16 %v293
  %v1325 = vunpack.c.l.b16 %v294
  %v1326 = vunpack.c.l.b16 %v295
  %v1327 = vunpack.c.l.b16 %v296
  %v1328 = vunpack.c.l.b16 %v297
  %v1329 = vunpack.c.l.b16 %v298
  %v1330 = vunpack.c.l.b16 %v299
  %v1331 = vunpack.c.l.b16 %v300
  %v1332 = vunpack.c.l.b16 %v301
  %v1333 = vunpack.c.l.b16 %v302
  %v1334 = vunpack.c.l.b16 %v303
  %v1335 = vunpack.c.l.b16 %v304
  %v1336 = vunpack.c.l.b16 %v305
  %v1337 = vunpack.c.l.b16 %v306
  %v1338 = vunpack.c.l.b16 %v307
  %v1339 = vunpack.c.l.b16 %v308
  %v1340 = vunpack.c.l.b16 %v309
  %v1341 = vunpack.c.l.b16 %v310
  %v1342 = vunpack.c.l.b16 %v311
  %v1343 = vunpack.c.l.b16 %v312
  %v1344 = vunpack.c.l.b16 %v313
  %v1345 = vunpack.c.l.b16 %v314
  %v1346 = vunpack.c.l.b16 %v315
  %v1347 = vunpack.c.l.b16 %v316
  %v1348 = vunpack.c.l.b16 %v317
  %v1349 = vunpack.c.l.b16 %v318
  %v1350 = vunpack.c.l.b16 %v319
  %v1351 = vunpack.c.l.b16 %v320
  %v1352 = vunpack.c.l.b16 %v321
  %v1353 = vunpack.c.l.b16 %v322
  %v1354 = vunpack.c.l.b16 %v323
  %v1355 = vunpack.c.l.b16 %v324
  %v1356 = vunpack.c.l.b16 %v325
  %v1357 = vunpack.c.l.b16 %v326
  %v1358 = vunpack.c.l.b16 %v327
  %v1359 = vunpack.c.l.b16 %v328
  %v1360 = vunpack.c.l.b16 %v329
  %v1361 = vunpack.c.l.b16 %v330
  %v1362 = vunpack.c.l.b16 %v331
  %v1363 = vunpack.c.l.b16 %v332
  %v1364 = vunpack.c.l.b16 %v333
  %v1365 = vunpack.c.l.b16 %v334
  %v1366 = vunpack.c.l.b16 %v335
  %v1367 = vunpack.c.l.b16 %v336
  %v1368 = vunpack.c.l.b16 %v337
  %v1369 = vunpack.c.l.b16 %v338
  %v1370 = vunpack.c.l.b16 %v339
  %v1371 = vunpack.c.l.b16 %v340
  %v1372 = vunpack.c.l.b16 %v341
  %v1373 = vunpack.c.l.b16 %v342
  %v1374 = vunpack.c.l.b16 %v343
  %v1375 = vunpack.c.l.b16 %v344
  %v1376 = vunpack.c.l.b16 %v345
  %v1377 = vunpack.c.l.b16 %v346
  %v1378 = vunpack.c.l.b16 %v347
  %v1379 = vunpack.c.l.b16 %v348
  %v1380 = vunpack.c.l.b16 %v349
  %v1381 = vunpack.c.l.b16 %v350
  %v1382 = vunpack.c.l.b16 %v351
  %v1383 = vunpack.c.l.b16 %v352
  %v1384 = vunpack.c.l.b16 %v353
  %v1385 = vunpack.c.l.b16 %v354
  %v1386 = vunpack.c.l.b16 %v355
  %v1387 = vunpack.c.l.b16 %v356
  %v1388 = vunpack.c.l.b16 %v357
  %v1389 = vunpack.c.l.b16 %v358
  %v1390 = vunpack.c.l.b16 %v359
  %v1391 = vunpack.c.l.b16 %v360
  %v1392 = vunpack.c.l.b16 %v361
  %v1393 = vunpack.c.l.b16 %v362
  %v1394 = vunpack.c.l.b16 %v363
  %v1395 = vunpack.c.l.b16 %v364
  %v1396 = vunpack.c.l.b16 %v365
  %v1397 = vunpack.c.l.b16 %v366
  %v1398 = vunpack.c.l.b16 %v367
  %v1399 = vunpack.c.l.b16 %v368
  %v1400 = vunpack.c.l.b16 %v369
  %v1401 = vunpack.c.l.b16 %v370
  %v1402 = vunpack.c.l.b16 %v371
  %v1403 = vunpack.c.l.b16 %v372
  %v1404 = vunpack.c.l.b16 %v373
  %v1405 = vunpack.c.l.b16 %v374
  %v1406 = vunpack.c.l.b16 %v375
  %v1407 = vunpack.c.l.b16 %v376
  %v1408 = vunpack.c.l.b16 %v377
  %v1409 = vunpack.c.l.b16 %v378
  %v1410 = vunpack.c.l.b16 %v379
  %v1411 = vunpack.c.l.b16 %v380
  %v1412 = vunpack.c.l.b16 %v381
  %v1413 = vunpack.c.l.b16 %v382
  %v1414 = vunpack.c.l.b16 %v383
  %v1415 = vunpack.c.l.b16 %v384
  %v1416 = vunpack.c.l.b16 %v385
  %v1417 = vunpack.c.l.b16 %v386
  %v1418 = vunpack.c.l.b16 %v387
  %v1419 = vunpack.c.l.b16 %v388
  %v1420 = vunpack.c.l.b16 %v389
  %v1421 = vunpack.c.l.b16 %v390
  %v1422 = vunpack.c.l.b16 %v391
  %v1423 = vunpack.c.l.b16 %v392
  %v1424 = vunpack.c.l.b16 %v393
  %v1425 = vunpack.c.l.b16 %v394
  %v1426 = vunpack.c.l.b16 %v395
  %v1427 = vunpack.c.l.b16 %v396
  %v1428 = vunpack.c.l.b16 %v397
  %v1429 = vunpack.c.l.b16 %v398
  %v1430 = vunpack.c.l.b16 %v399
  %v1431 = vunpack.c.l.b16 %v400
  %v1432 = vunpack.c.l.b16 %v401
  %v1433 = vunpack.c.l.b16 %v402
  %v1434 = vunpack.c.l.b16 %v403
  %v1435 = vunpack.c.l.b16 %v404
  %v1436 = vunpack.c.l.b16 %v405
  %v1437 = vunpack.c.l.b16 %v406
  %v1438 = vunpack.c.l.b16 %v407
  %v1439 = vunpack.c.l.b16 %v408
  %v1440 = vunpack.c.l.b16 %v409
  %v1441 = vunpack.c.l.b16 %v410
  %v1442 = vunpack.c.l.b16 %v411
  %v1443 = vunpack.c.l.b16 %v412
  %v1444 = vunpack.c.l.b16 %v413
  %v1445 = vunpack.c.l.b16 %v414
  %v1446 = vunpack.c.l.b16 %v415
  %v1447 = vunpack.c.l.b16 %v416
  %v1448 = vunpack.c.l.b16 %v417
  %v1449 = vunpack.c.l.b16 %v418
  %v1450 = vunpack.c.l.b16 %v419
  %v1451 = vunpack.c.l.b16 %v420
  %v1452 = vunpack.c.l.b16 %v421
  %v1453 = vunpack.c.l.b16 %v422
  %v1454 = vunpack.c.l.b16 %v423
  %v1455 = vunpack.c.l.b16 %v424
  %v1456 = vunpack.c.l.b16 %v425
  %v1457 = vunpack.c.l.b16 %v426
  %v1458 = vunpack.c.l.b16 %v427
  %v1459 = vunpack.c.l.b16 %v428
  %v1460 = vunpack.c.l.b16 %v429
  %v1461 = vunpack.c.l.b16 %v430
  %v1462 = vunpack.c.l.b16 %v431
  %v1463 = vunpack.c.l.b16 %v432
  %v1464 = vunpack.c.l.b16 %v433
  %v1465 = vunpack.c.l.b16 %v434
  %v1466 = vunpack.c.l.b16 %v435
  %v1467 = vunpack.c.l.b16 %v436
  %v1468 = vunpack.c.l.b16 %v437
  %v1469 = vunpack.c.l.b16 %v438
  %v1470 = vunpack.c.l.b16 %v439
  %v1471 = vunpack.c.l.b16 %v440
  %v1472 = vunpack.c.l.b16 %v441
  %v1473 = vunpack.c.l.b16 %v442
  %v1474 = vunpack.c.l.b16 %v443
  %v1475 = vunpack.c.l.b16 %v444
  %v1476 = vunpack.c.l.b16 %v445
  %v1477 = vunpack.c.l.b16 %v446
  %v1478 = vunpack.c.l.b16 %v447
  %v1479 = vunpack.c.l.b16 %v448
  %v1480 = vunpack.c.l.b16 %v449
  %v1481 = vunpack.c.l.b16 %v450
  %v1482 = vunpack.c.l.b16 %v451
  %v1483 = vunpack.c.l.b16 %v452
  %v1484 = vunpack.c.l.b16 %v453
  %v1485 = vunpack.c.l.b16 %v454
  %v1486 = vunpack.c.l.b16 %v455
  %v1487 = vunpack.c.l.b16 %v456
  %v1488 = vunpack.c.l.b16 %v457
  %v1489 = vunpack.c.l.b16 %v458
  %v1490 = vunpack.c.l.b16 %v459
  %v1491 = vunpack.c.l.b16 %v460
  %v1492 = vunpack.c.l.b16 %v461
  %v1493 = vunpack.c.l.b16 %v462
  %v1494 = vunpack.c.l.b16 %v463
  %v1495 = vunpack.c.l.b16 %v464
  %v1496 = vunpack.c.l.b16 %v465
  %v1497 = vunpack.c.l.b16 %v466
  %v1498 = vunpack.c.l.b16 %v467
  %v1499 = vunpack.c.l.b16 %v468
  %v1500 = vunpack.c.l.b16 %v469
  %v1501 = vunpack.c.l.b16 %v470
  %v1502 = vunpack.c.l.b16 %v471
  %v1503 = vunpack.c.l.b16 %v472
  %v1504 = vunpack.c.l.b16 %v473
  %v1505 = vunpack.c.l.b16 %v474
  %v1506 = vunpack.c.l.b16 %v475
  %v1507 = vunpack.c.l.b16 %v476
  %v1508 = vunpack.c.l.b16 %v477
  %v1509 = vunpack.c.l.b16 %v478
  %v1510 = vunpack.c.l.b16 %v479
  %v1511 = vunpack.c.l.b16 %v480
  %v1512 = vunpack.c.l.b16 %v481
  %v1513 = vunpack.c.l.b16 %v482
  %v1514 = vunpack.c.l.b16 %v483
  %v1515 = vunpack.c.l.b16 %v484
  %v1516 = vunpack.c.l.b16 %v485
  %v1517 = vunpack.c.l.b16 %v486
  %v1518 = vunpack.c.l.b16 %v487
  %v1519 = vunpack.c.l.b16 %v488
  %v1520 = vunpack.c.l.b16 %v489
  %v1521 = vunpack.c.l.b16 %v490
  %v1522 = vunpack.c.l.b16 %v491
  %v1523 = vunpack.c.l.b16 %v492
  %v1524 = vunpack.c.l.b16 %v493
  %v1525 = vunpack.c.l.b16 %v494
  %v1526 = vunpack.c.l.b16 %v495
  %v1527 = vunpack.c.l.b16 %v496
  %v1528 = vunpack.c.l.b16 %v497
  %v1529 = vunpack.c.l.b16 %v498
  %v1530 = vunpack.c.l.b16 %v499
  %v1531 = vunpack.c.l.b16 %v500
  %v1532 = vunpack.c.l.b16 %v501
  %v1533 = vunpack.c.l.b16 %v502
  %v1534 = vunpack.c.l.b16 %v503
  %v1535 = vunpack.c.l.b16 %v504
  %v1536 = vunpack.c.l.b16 %v505
  %v1537 = vunpack.c.l.b16 %v506
  %v1538 = vunpack.c.l.b16 %v507
  %v1539 = vunpack.c.l.b16 %v508
  %v1540 = vunpack.c.l.b16 %v509
  %v1541 = vunpack.c.l.b16 %v510
  %v1542 = vunpack.c.l.b16 %v511
  %v1543 = vunpack.c.l.b16 %v512
  %v1544 = vunpack.c.l.b16 %v513
  %v1545 = vunpack.c.l.b16 %v514
  %v1546 = vunpack.c.l.b16 %v515
  %v1547 = vunpack.c.l.b16 %v516
  %v1548 = vunpack.c.l.b16 %v517
  %v1549 = vunpack.c.l.b16 %v518
  %v1550 = vunpack.c.l.b16 %v519
  %v1551 = vunpack.c.l.b16 %v520
  %v1552 = vunpack.c.l.b16 %v521
  %v1553 = vunpack.c.l.b16 %v522
  %v1554 = vunpack.c.l.b16 %v523
  %v1555 = vunpack.c.l.b16 %v524
  %v1556 = vunpack.c.l.b16 %v525
  %v1557 = vunpack.c.l.b16 %v526
  %v1558 = vunpack.c.l.b16 %v527
  %v1559 = vunpack.c.l.b16 %v528
  %v1560 = vunpack.c.l.b16 %v529
  %v1561 = vunpack.c.l.b16 %v530
  %v1562 = vunpack.c.l.b16 %v531
  %v1563 = vunpack.c.l.b16 %v532
  %v1564 = vunpack.c.l.b16 %v533
  %v1565 = vunpack.c.l.b16 %v534
  %v1566 = vunpack.c.l.b16 %v535
  %v1567 = vunpack.c.l.b16 %v536
  %v1568 = vunpack.c.l.b16 %v537
  %v1569 = vunpack.c.l.b16 %v538
  %v1570 = vunpack.c.l.b16 %v539
  %v1571 = vunpack.c.l.b16 %v540
  %v1572 = vunpack.c.l.b16 %v541
  %v1573 = vunpack.c.l.b16 %v542
  %v1574 = vunpack.c.l.b16 %v543
  %v1575 = vunpack.c.l.b16 %v544
  %v1576 = vunpack.c.l.b16 %v545
  %v1577 = vunpack.c.l.b16 %v546
  %v1578 = vunpack.c.l.b16 %v547
  %v1579 = vunpack.c.l.b16 %v548
  %v1580 = vunpack.c.l.b16 %v549
  %v1581 = vunpack.c.l.b16 %v550
  %v1582 = vunpack.c.l.b16 %v551
  %v1583 = vunpack.c.l.b16 %v552
  %v1584 = vunpack.c.l.b16 %v553
  %v1585 = vunpack.c.l.b16 %v554
  %v1586 = vunpack.c.l.b16 %v555
  %v1587 = vunpack.c.l.b16 %v556
  %v1588 = vunpack.c.l.b16 %v557
  %v1589 = vunpack.c.l.b16 %v558
  %v1590 = vunpack.c.l.b16 %v559
  %v1591 = vunpack.c.l.b16 %v560
  %v1592 = vunpack.c.l.b16 %v561
  %v1593 = vunpack.c.l.b16 %v562
  %v1594 = vunpack.c.l.b16 %v563
  %v1595 = vunpack.c.l.b16 %v564
  %v1596 = vunpack.c.l.b16 %v565
  %v1597 = vunpack.c.l.b16 %v566
  %v1598 = vunpack.c.l.b16 %v567
  %v1599 = vunpack.c.l.b16 %v568
  %v1600 = vunpack.c.l.b16 %v569
  %v1601 = vunpack.c.l.b16 %v570
  %v1602 = vunpack.c.l.b16 %v571
  %v1603 = vunpack.c.l.b16 %v572
  %v1604 = vunpack.c.l.b16 %v573
  %v1605 = vunpack.c.l.b16 %v574
  %v1606 = vunpack.c.l.b16 %v575
  %v1607 = vunpack.c.l.b16 %v576
  %v1608 = vunpack.c.l.b16 %v577
  %v1609 = vunpack.c.l.b16 %v578
  %v1610 = vunpack.c.l.b16 %v579
  %v1611 = vunpack.c.l.b16 %v580
  %v1612 = vunpack.c.l.b16 %v581
  %v1613 = vunpack.c.l.b16 %v582
  %v1614 = vunpack.c.l.b16 %v583
  %v1615 = vunpack.c.l.b16 %v584
  %v1616 = vunpack.c.l.b16 %v585
  %v1617 = vunpack.c.l.b16 %v586
  %v1618 = vunpack.c.l.b16 %v587
  %v1619 = vunpack.c.l.b16 %v588
  %v1620 = vunpack.c.l.b16 %v589
  %v1621 = vunpack.c.l.b16 %v590
  %v1622 = vunpack.c.l.b16 %v591
  %v1623 = vunpack.c.l.b16 %v592
  %v1624 = vunpack.c.l.b16 %v593
  %v1625 = vunpack.c.l.b16 %v594
  %v1626 = vunpack.c.l.b16 %v595
  %v1627 = vunpack.c.l.b16 %v596
  %v1628 = vunpack.c.l.b16 %v597
  %v1629 = vunpack.c.l.b16 %v598
  %v1630 = vunpack.c.l.b16 %v599
  %v1631 = vunpack.c.l.b16 %v600
  %v1632 = vunpack.c.l.b16 %v601
  %v1633 = vunpack.c.l.b16 %v602
  %v1634 = vunpack.c.l.b16 %v603
  %v1635 = vunpack.c.l.b16 %v604
  %v1636 = vunpack.c.l.b16 %v605
  %v1637 = vunpack.c.l.b16 %v606
  %v1638 = vunpack.c.l.b16 %v607
  %v1639 = vunpack.c.l.b16 %v608
  %v1640 = vunpack.c.l.b16 %v609
  %v1641 = vunpack.c.l.b16 %v610
  %v1642 = vunpack.c.l.b16 %v611
  %v1643 = vunpack.c.l.b16 %v612
  %v1644 = vunpack.c.l.b16 %v613
  %v1645 = vunpack.c.l.b16 %v614
  %v1646 = vunpack.c.l.b16 %v615
  %v1647 = vunpack.c.l.b16 %v616
  %v1648 = vunpack.c.l.b16 %v617
  %v1649 = vunpack.c.l.b16 %v618
  %v1650 = vunpack.c.l.b16 %v619
  %v1651 = vunpack.c.l.b16 %v620
  %v1652 = vunpack.c.l.b16 %v621
  %v1653 = vunpack.c.l.b16 %v622
  %v1654 = vpack.c.b16 %v1143, %v1142
  %v1655 = vpack.c.b16 %v1145, %v1144
  %v1656 = vpack.c.b16 %v1147, %v1146
  %v1657 = vpack.c.b16 %v1149, %v1148
  %v1658 = vpack.c.b16 %v1151, %v1150
  %v1659 = vpack.c.b16 %v1153, %v1152
  %v1660 = vpack.c.b16 %v1155, %v1154
  %v1661 = vpack.c.b16 %v1157, %v1156
  %v1662 = vpack.c.b16 %v1159, %v1158
  %v1663 = vpack.c.b16 %v1161, %v1160
  %v1664 = vpack.c.b16 %v1163, %v1162
  %v1665 = vpack.c.b16 %v1165, %v1164
  %v1666 = vpack.c.b16 %v1167, %v1166
  %v1667 = vpack.c.b16 %v1169, %v1168
  %v1668 = vpack.c.b16 %v1171, %v1170
  %v1669 = vpack.c.b16 %v1173, %v1172
  %v1670 = vpack.c.b16 %v1175, %v1174
  %v1671 = vpack.c.b16 %v1177, %v1176
  %v1672 = vpack.c.b16 %v1179, %v1178
  %v1673 = vpack.c.b16 %v1181, %v1180
  %v1674 = vpack.c.b16 %v1183, %v1182
  %v1675 = vpack.c.b16 %v1185, %v1184
  %v1676 = vpack.c.b16 %v1187, %v1186
  %v1677 = vpack.c.b16 %v1189, %v1188
  %v1678 = vpack.c.b16 %v1191, %v1190
  %v1679 = vpack.c.b16 %v1193, %v1192
  %v1680 = vpack.c.b16 %v1195, %v1194
  %v1681 = vpack.c.b16 %v1197, %v1196
  %v1682 = vpack.c.b16 %v1199, %v1198
  %v1683 = vpack.c.b16 %v1201, %v1200
  %v1684 = vpack.c.b16 %v1203, %v1202
  %v1685 = vpack.c.b16 %v1205, %v1204
  %v1686 = vpack.c.b16 %v1207, %v1206
  %v1687 = vpack.c.b16 %v1209, %v1208
  %v1688 = vpack.c.b16 %v1211, %v1210
  %v1689 = vpack.c.b16 %v1213, %v1212
  %v1690 = vpack.c.b16 %v1215, %v1214
  %v1691 = vpack.c.b16 %v1217, %v1216
  %v1692 = vpack.c.b16 %v1219, %v1218
  %v1693 = vpack.c.b16 %v1221, %v1220
  %v1694 = vpack.c.b16 %v1223, %v1222
  %v1695 = vpack.c.b16 %v1225, %v1224
  %v1696 = vpack.c.b16 %v1227, %v1226
  %v1697 = vpack.c.b16 %v1229, %v1228
  %v1698 = vpack.c.b16 %v1231, %v1230
  %v1699 = vpack.c.b16 %v1233, %v1232
  %v1700 = vpack.c.b16 %v1235, %v1234
  %v1701 = vpack.c.b16 %v1237, %v1236
  %v1702 = vpack.c.b16 %v1239, %v1238
  %v1703 = vpack.c.b16 %v1241, %v1240
  %v1704 = vpack.c.b16 %v1243, %v1242
  %v1705 = vpack.c.b16 %v1245, %v1244
  %v1706 = vpack.c.b16 %v1247, %v1246
  %v1707 = vpack.c.b16 %v1249, %v1248
  %v1708 = vpack.c.b16 %v1251, %v1250
  %v1709 = vpack.c.b16 %v1253, %v1252
  %v1710 = vpack.c.b16 %v1255, %v1254
  %v1711 = vpack.c.b16 %v1257, %v1256
  %v1712 = vpack.c.b16 %v1259, %v1258
  %v1713 = vpack.c.b16 %v1261, %v1260
  %v1714 = vpack.c.b16 %v1263, %v1262
  %v1715 = vpack.c.b16 %v1265, %v1264
  %v1716 = vpack.c.b16 %v1267, %v1266
  %v1717 = vpack.c.b16 %v1269, %v1268
  %v1718 = vpack.c.b16 %v1271, %v1270
  %v1719 = vpack.c.b16 %v1273, %v1272
  %v1720 = vpack.c.b16 %v1275, %v1274
  %v1721 = vpack.c.b16 %v1277, %v1276
  %v1722 = vpack.c.b16 %v1279, %v1278
  %v1723 = vpack.c.b16 %v1281, %v1280
  %v1724 = vpack.c.b16 %v1283, %v1282
  %v1725 = vpack.c.b16 %v1285, %v1284
  %v1726 = vpack.c.b16 %v1287, %v1286
  %v1727 = vpack.c.b16 %v1289, %v1288
  %v1728 = vpack.c.b16 %v1291, %v1290
  %v1729 = vpack.c.b16 %v1293, %v1292
  %v1730 = vpack.c.b16 %v1295, %v1294
  %v1731 = vpack.c.b16 %v1297, %v1296
  %v1732 = vpack.c.b16 %v1299, %v1298
  %v1733 = vpack.c.b16 %v1301, %v1300
  %v1734 = vpack.c.b16 %v1303, %v1302
  %v1735 = vpack.c.b16 %v1305, %v1304
  %v1736 = vpack.c.b16 %v1307, %v1306
  %v1737 = vpack.c.b16 %v1309, %v1308
  %v1738 = vpack.c.b16 %v1311, %v1310
  %v1739 = vpack.c.b16 %v1313, %v1312
  %v1740 = vpack.c.b16 %v1315, %v1314
  %v1741 = vpack.c.b16 %v1317, %v1316
  %v1742 = vpack.c.b16 %v1319, %v1318
  %v1743 = vpack.c.b16 %v1321, %v1320
  %v1744 = vpack.c.b16 %v1323, %v1322
  %v1745 = vpack.c.b16 %v1325, %v1324
  %v1746 = vpack.c.b16 %v1327, %v1326
  %v1747 = vpack.c.b16 %v1329, %v1328
  %v1748 = vpack.c.b16 %v1331, %v1330
  %v1749 = vpack.c.b16 %v1333, %v1332
  %v1750 = vpack.c.b16 %v1335, %v1334
  %v1751 = vpack.c.b16 %v1337, %v1336
  %v1752 = vpack.c.b16 %v1339, %v1338
  %v1753 = vpack.c.b16 %v1341, %v1340
  %v1754 = vpack.c.b16 %v1343, %v1342
  %v1755 = vpack.c.b16 %v1345, %v1344
  %v1756 = vpack.c.b16 %v1347, %v1346
  %v1757 = vpack.c.b16 %v1349, %v1348
  %v1758 = vpack.c.b16 %v1351, %v1350
  %v1759 = vpack.c.b16 %v1353, %v1352
  %v1760 = vpack.c.b16 %v1355, %v1354
  %v1761 = vpack.c.b16 %v1357, %v1356
  %v1762 = vpack.c.b16 %v1359, %v1358
  %v1763 = vpack.c.b16 %v1361, %v1360
  %v1764 = vpack.c.b16 %v1363, %v1362
  %v1765 = vpack.c.b16 %v1365, %v1364
  %v1766 = vpack.c.b16 %v1367, %v1366
  %v1767 = vpack.c.b16 %v1369, %v1368
  %v1768 = vpack.c.b16 %v1371, %v1370
  %v1769 = vpack.c.b16 %v1373, %v1372
  %v1770 = vpack.c.b16 %v1375, %v1374
  %v1771 = vpack.c.b16 %v1377, %v1376
  %v1772 = vpack.c.b16 %v1379, %v1378
  %v1773 = vpack.c.b16 %v1381, %v1380
  %v1774 = vpack.c.b16 %v1383, %v1382
  %v1775 = vpack.c.b16 %v1385, %v1384
  %v1776 = vpack.c.b16 %v1387, %v1386
  %v1777 = vpack.c.b16 %v1389, %v1388
  %v1778 = vpack.c.b16 %v1391, %v1390
  %v1779 = vpack.c.b16 %v1393, %v1392
  %v1780 = vpack.c.b16 %v1395, %v1394
  %v1781 = vpack.c.b16 %v1397, %v1396
  %v1782 = vpack.c.b16 %v1399, %v1398
  %v1783 = vpack.c.b16 %v1401, %v1400
  %v1784 = vpack.c.b16 %v1403, %v1402
  %v1785 = vpack.c.b16 %v1405, %v1404
  %v1786 = vpack.c.b16 %v1407, %v1406
  %v1787 = vpack.c.b16 %v1409, %v1408
  %v1788 = vpack.c.b16 %v1411, %v1410
  %v1789 = vpack.c.b16 %v1413, %v1412
  %v1790 = vpack.c.b16 %v1415, %v1414
  %v1791 = vpack.c.b16 %v1417, %v1416
  %v1792 = vpack.c.b16 %v1419, %v1418
  %v1793 = vpack.c.b16 %v1421, %v1420
  %v1794 = vpack.c.b16 %v1423, %v1422
  %v1795 = vpack.c.b16 %v1425, %v1424
  %v1796 = vpack.c.b16 %v1427, %v1426
  %v1797 = vpack.c.b16 %v1429, %v1428
  %v1798 = vpack.c.b16 %v1431, %v1430
  %v1799 = vpack.c.b16 %v1433, %v1432
  %v1800 = vpack.c.b16 %v1435, %v1434
  %v1801 = vpack.c.b16 %v1437, %v1436
  %v1802 = vpack.c.b16 %v1439, %v1438
  %v1803 = vpack.c.b16 %v1441, %v1440
  %v1804 = vpack.c.b16 %v1443, %v1442
  %v1805 = vpack.c.b16 %v1445, %v1444
  %v1806 = vpack.c.b16 %v1447, %v1446
  %v1807 = vpack.c.b16 %v1449, %v1448
  %v1808 = vpack.c.b16 %v1451, %v1450
  %v1809 = vpack.c.b16 %v1453, %v1452
  %v1810 = vpack.c.b16 %v1455, %v1454
  %v1811 = vpack.c.b16 %v1457, %v1456
  %v1812 = vpack.c.b16 %v1459, %v1458
  %v1813 = vpack.c.b16 %v1461, %v1460
  %v1814 = vpack.c.b16 %v1463, %v1462
  %v1815 = vpack.c.b16 %v1465, %v1464
  %v1816 = vpack.c.b16 %v1467, %v1466
  %v1817 = vpack.c.b16 %v1469, %v1468
  %v1818 = vpack.c.b16 %v1471, %v1470
  %v1819 = vpack.c.b16 %v1473, %v1472
  %v1820 = vpack.c.b16 %v1475, %v1474
  %v1821 = vpack.c.b16 %v1477, %v1476
  %v1822 = vpack.c.b16 %v1479, %v1478
  %v1823 = vpack.c.b16 %v1481, %v1480
  %v1824 = vpack.c.b16 %v1483, %v1482
  %v1825 = vpack.c.b16 %v1485, %v1484
  %v1826 = vpack.c.b16 %v1487, %v1486
  %v1827 = vpack.c.b16 %v1489, %v1488
  %v1828 = vpack.c.b16 %v1491, %v1490
  %v1829 = vpack.c.b16 %v1493, %v1492
  %v1830 = vpack.c.b16 %v1495, %v1494
  %v1831 = vpack.c.b16 %v1497, %v1496
  %v1832 = vpack.c.b16 %v1499, %v1498
  %v1833 = vpack.c.b16 %v1501, %v1500
  %v1834 = vpack.c.b16 %v1503, %v1502
  %v1835 = vpack.c.b16 %v1505, %v1504
  %v1836 = vpack.c.b16 %v1507, %v1506
  %v1837 = vpack.c.b16 %v1509, %v1508
  %v1838 = vpack.c.b16 %v1511, %v1510
  %v1839 = vpack.c.b16 %v1513, %v1512
  %v1840 = vpack.c.b16 %v1515, %v1514
  %v1841 = vpack.c.b16 %v1517, %v1516
  %v1842 = vpack.c.b16 %v1519, %v1518
  %v1843 = vpack.c.b16 %v1521, %v1520
  %v1844 = vpack.c.b16 %v1523, %v1522
  %v1845 = vpack.c.b16 %v1525, %v1524
  %v1846 = vpack.c.b16 %v1527, %v1526
  %v1847 = vpack.c.b16 %v1529, %v1528
  %v1848 = vpack.c.b16 %v1531, %v1530
  %v1849 = vpack.c.b16 %v1533, %v1532
  %v1850 = vpack.c.b16 %v1535, %v1534
  %v1851 = vpack.c.b16 %v1537, %v1536
  %v1852 = vpack.c.b16 %v1539, %v1538
  %v1853 = vpack.c.b16 %v1541, %v1540
  %v1854 = vpack.c.b16 %v1543, %v1542
  %v1855 = vpack.c.b16 %v1545, %v1544
  %v1856 = vpack.c.b16 %v1547, %v1546
  %v1857 = vpack.c.b16 %v1549, %v1548
  %v1858 = vpack.c.b16 %v1551, %v1550
  %v1859 = vpack.c.b16 %v1553, %v1552
  %v1860 = vpack.c.b16 %v1555, %v1554
  %v1861 = vpack.c.b16 %v1557, %v1556
  %v1862 = vpack.c.b16 %v1559, %v1558
  %v1863 = vpack.c.b16 %v1561, %v1560
  %v1864 = vpack.c.b16 %v1563, %v1562
  %v1865 = vpack.c.b16 %v1565, %v1564
  %v1866 = vpack.c.b16 %v1567, %v1566
  %v1867 = vpack.c.b16 %v1569, %v1568
  %v1868 = vpack.c.b16 %v1571, %v1570
  %v1869 = vpack.c.b16 %v1573, %v1572
  %v1870 = vpack.c.b16 %v1575, %v1574
  %v1871 = vpack.c.b16 %v1577, %v1576
  %v1872 = vpack.c.b16 %v1579, %v1578
  %v1873 = vpack.c.b16 %v1581, %v1580
  %v1874 = vpack.c.b16 %v1583, %v1582
  %v1875 = vpack.c.b16 %v1585, %v1584
  %v1876 = vpack.c.b16 %v1587, %v1586
  %v1877 = vpack.c.b16 %v1589, %v1588
  %v1878 = vpack.c.b16 %v1591, %v1590
  %v1879 = vpack.c.b16 %v1593, %v1592
  %v1880 = vpack.c.b16 %v1595, %v1594
  %v1881 = vpack.c.b16 %v1597, %v1596
  %v1882 = vpack.c.b16 %v1599, %v1598
  %v1883 = vpack.c.b16 %v1601, %v1600
  %v1884 = vpack.c.b16 %v1603, %v1602
  %v1885 = vpack.c.b16 %v1605, %v1604
  %v1886 = vpack.c.b16 %v1607, %v1606
  %v1887 = vpack.c.b16 %v1609, %v1608
  %v1888 = vpack.c.b16 %v1611, %v1610
  %v1889 = vpack.c.b16 %v1613, %v1612
  %v1890 = vpack.c.b16 %v1615, %v1614
  %v1891 = vpack.c.b16 %v1617, %v1616
  %v1892 = vpack.c.b16 %v1619, %v1618
  %v1893 = vpack.c.b16 %v1621, %v1620
  %v1894 = vpack.c.b16 %v1623, %v1622
  %v1895 = vpack.c.b16 %v1625, %v1624
  %v1896 = vpack.c.b16 %v1627, %v1626
  %v1897 = vpack.c.b16 %v1629, %v1628
  %v1898 = vpack.c.b16 %v1631, %v1630
  %v1899 = vpack.c.b16 %v1633, %v1632
  %v1900 = vpack.c.b16 %v1635, %v1634
  %v1901 = vpack.c.b16 %v1637, %v1636
  %v1902 = vpack.c.b16 %v1639, %v1638
  %v1903 = vpack.c.b16 %v1641, %v1640
  %v1904 = vpack.c.b16 %v1643, %v1642
  %v1905 = vpack.c.b16 %v1645, %v1644
  %v1906 = vpack.c.b16 %v1647, %v1646
  %v1907 = vpack.c.b16 %v1649, %v1648
  %v1908 = vpack.c.b16 %v1651, %v1650
  %v1909 = vpack.c.b16 %v1653, %v1652
  %2166 = vmatprep.subr.bf16.mxu0 0
  %2167 = vmatpush1.bf16.msra.mxu0 %v1661
  %2168 = vmatprep.subr.bf16.mxu0 0
  %2169 = vmatpush1.bf16.msra.mxu0 %v1660
  %2170 = vmatprep.subr.bf16.mxu0 0
  %2171 = vmatpush1.bf16.msra.mxu0 %v1659
  %2172 = vmatprep.subr.bf16.mxu0 0
  %2173 = vmatpush1.bf16.msra.mxu0 %v1658
  %2174 = vmatprep.subr.bf16.mxu0 0
  %2175 = vmatpush1.bf16.msra.mxu0 %v1657
  %2176 = vmatprep.subr.bf16.mxu0 0
  %2177 = vmatpush1.bf16.msra.mxu0 %v1656
  %2178 = vmatprep.subr.bf16.mxu0 0
  %2179 = vmatpush1.bf16.msra.mxu0 %v1655
  %2180 = vmatprep.subr.bf16.mxu0 0
  %2181 = vmatpush1.bf16.msra.mxu0 %v1654
  %2182 = vmatprep.subr.bf16.mxu0 0
  %2183 = vmatpush2.bf16.msra.mxu0 %v1669
  %2184 = vmatprep.subr.bf16.mxu0 0
  %2185 = vmatpush2.bf16.msra.mxu0 %v1668
  %2186 = vmatprep.subr.bf16.mxu0 0
  %2187 = vmatpush2.bf16.msra.mxu0 %v1667
  %2188 = vmatprep.subr.bf16.mxu0 0
  %2189 = vmatpush2.bf16.msra.mxu0 %v1666
  %2190 = vmatprep.subr.bf16.mxu0 0
  %2191 = vmatpush2.bf16.msra.mxu0 %v1665
  %2192 = vmatprep.subr.bf16.mxu0 0
  %2193 = vmatpush2.bf16.msra.mxu0 %v1664
  %2194 = vmatprep.subr.bf16.mxu0 0
  %2195 = vmatpush2.bf16.msra.mxu0 %v1663
  %2196 = vmatprep.subr.bf16.mxu0 0
  %2197 = vmatpush2.bf16.msra.mxu0 %v1662
  %2198 = vmatprep.mubr.bf16.mxu0 %v80
  %2199 = vmatmul.mubr.bf16.gmra.mxu0 %v79
  %v2200 = vpop.f32.mrf.mxu0
  %v2201 = vadd.f32 %v628, %v2200
  %v2202 = vpop.f32.mrf.mxu0
  %v2203 = vpop.f32.mrf.mxu0
  %v2204 = vadd.f32 %v628, %v2203
  %v2205 = vpop.f32.mrf.mxu0
  %2206 = vdwg.mxu0
  %2207 = vmatprep.subr.bf16.mxu0 0
  %2208 = vmatpush1.bf16.msra.mxu0 %v1677
  %2209 = vmatprep.subr.bf16.mxu0 0
  %2210 = vmatpush1.bf16.msra.mxu0 %v1676
  %2211 = vmatprep.subr.bf16.mxu0 0
  %2212 = vmatpush1.bf16.msra.mxu0 %v1675
  %2213 = vmatprep.subr.bf16.mxu0 0
  %2214 = vmatpush1.bf16.msra.mxu0 %v1674
  %2215 = vmatprep.subr.bf16.mxu0 0
  %2216 = vmatpush1.bf16.msra.mxu0 %v1673
  %2217 = vmatprep.subr.bf16.mxu0 0
  %2218 = vmatpush1.bf16.msra.mxu0 %v1672
  %2219 = vmatprep.subr.bf16.mxu0 0
  %2220 = vmatpush1.bf16.msra.mxu0 %v1671
  %2221 = vmatprep.subr.bf16.mxu0 0
  %2222 = vmatpush1.bf16.msra.mxu0 %v1670
  %2223 = vmatprep.subr.bf16.mxu0 0
  %2224 = vmatpush2.bf16.msra.mxu0 %v1685
  %2225 = vmatprep.subr.bf16.mxu0 0
  %2226 = vmatpush2.bf16.msra.mxu0 %v1684
  %2227 = vmatprep.subr.bf16.mxu0 0
  %2228 = vmatpush2.bf16.msra.mxu0 %v1683
  %2229 = vmatprep.subr.bf16.mxu0 0
  %2230 = vmatpush2.bf16.msra.mxu0 %v1682
  %2231 = vmatprep.subr.bf16.mxu0 0
  %2232 = vmatpush2.bf16.msra.mxu0 %v1681
  %2233 = vmatprep.subr.bf16.mxu0 0
  %2234 = vmatpush2.bf16.msra.mxu0 %v1680
  %2235 = vmatprep.subr.bf16.mxu0 0
  %2236 = vmatpush2.bf16.msra.mxu0 %v1679
  %2237 = vmatprep.subr.bf16.mxu0 0
  %2238 = vmatpush2.bf16.msra.mxu0 %v1678
  %2239 = vmatprep.mubr.bf16.mxu0 %v82
  %2240 = vmatmul.mubr.bf16.gmra.mxu0 %v81
  %v2241 = vpop.f32.mrf.mxu0
  %v2242 = vadd.f32 %v2201, %v2241
  %v2243 = vpop.f32.mrf.mxu0
  %v2244 = vpop.f32.mrf.mxu0
  %v2245 = vadd.f32 %v2204, %v2244
  %v2246 = vpop.f32.mrf.mxu0
  %2247 = vdwg.mxu0
  %2248 = vmatprep.subr.bf16.mxu0 0
  %2249 = vmatpush1.bf16.msra.mxu0 %v1693
  %2250 = vmatprep.subr.bf16.mxu0 0
  %2251 = vmatpush1.bf16.msra.mxu0 %v1692
  %2252 = vmatprep.subr.bf16.mxu0 0
  %2253 = vmatpush1.bf16.msra.mxu0 %v1691
  %2254 = vmatprep.subr.bf16.mxu0 0
  %2255 = vmatpush1.bf16.msra.mxu0 %v1690
  %2256 = vmatprep.subr.bf16.mxu0 0
  %2257 = vmatpush1.bf16.msra.mxu0 %v1689
  %2258 = vmatprep.subr.bf16.mxu0 0
  %2259 = vmatpush1.bf16.msra.mxu0 %v1688
  %2260 = vmatprep.subr.bf16.mxu0 0
  %2261 = vmatpush1.bf16.msra.mxu0 %v1687
  %2262 = vmatprep.subr.bf16.mxu0 0
  %2263 = vmatpush1.bf16.msra.mxu0 %v1686
  %2264 = vmatprep.subr.bf16.mxu0 0
  %2265 = vmatpush2.bf16.msra.mxu0 %v1701
  %2266 = vmatprep.subr.bf16.mxu0 0
  %2267 = vmatpush2.bf16.msra.mxu0 %v1700
  %2268 = vmatprep.subr.bf16.mxu0 0
  %2269 = vmatpush2.bf16.msra.mxu0 %v1699
  %2270 = vmatprep.subr.bf16.mxu0 0
  %2271 = vmatpush2.bf16.msra.mxu0 %v1698
  %2272 = vmatprep.subr.bf16.mxu0 0
  %2273 = vmatpush2.bf16.msra.mxu0 %v1697
  %2274 = vmatprep.subr.bf16.mxu0 0
  %2275 = vmatpush2.bf16.msra.mxu0 %v1696
  %2276 = vmatprep.subr.bf16.mxu0 0
  %2277 = vmatpush2.bf16.msra.mxu0 %v1695
  %2278 = vmatprep.subr.bf16.mxu0 0
  %2279 = vmatpush2.bf16.msra.mxu0 %v1694
  %2280 = vmatprep.mubr.bf16.mxu0 %v84
  %2281 = vmatmul.mubr.bf16.gmra.mxu0 %v83
  %v2282 = vpop.f32.mrf.mxu0
  %v2283 = vadd.f32 %v2242, %v2282
  %v2284 = vpop.f32.mrf.mxu0
  %v2285 = vpop.f32.mrf.mxu0
  %v2286 = vadd.f32 %v2245, %v2285
  %v2287 = vpop.f32.mrf.mxu0
  %2288 = vdwg.mxu0
  %2289 = vmatprep.subr.bf16.mxu0 0
  %2290 = vmatpush1.bf16.msra.mxu0 %v1709
  %2291 = vmatprep.subr.bf16.mxu0 0
  %2292 = vmatpush1.bf16.msra.mxu0 %v1708
  %2293 = vmatprep.subr.bf16.mxu0 0
  %2294 = vmatpush1.bf16.msra.mxu0 %v1707
  %2295 = vmatprep.subr.bf16.mxu0 0
  %2296 = vmatpush1.bf16.msra.mxu0 %v1706
  %2297 = vmatprep.subr.bf16.mxu0 0
  %2298 = vmatpush1.bf16.msra.mxu0 %v1705
  %2299 = vmatprep.subr.bf16.mxu0 0
  %2300 = vmatpush1.bf16.msra.mxu0 %v1704
  %2301 = vmatprep.subr.bf16.mxu0 0
  %2302 = vmatpush1.bf16.msra.mxu0 %v1703
  %2303 = vmatprep.subr.bf16.mxu0 0
  %2304 = vmatpush1.bf16.msra.mxu0 %v1702
  %2305 = vmatprep.subr.bf16.mxu0 0
  %2306 = vmatpush2.bf16.msra.mxu0 %v1717
  %2307 = vmatprep.subr.bf16.mxu0 0
  %2308 = vmatpush2.bf16.msra.mxu0 %v1716
  %2309 = vmatprep.subr.bf16.mxu0 0
  %2310 = vmatpush2.bf16.msra.mxu0 %v1715
  %2311 = vmatprep.subr.bf16.mxu0 0
  %2312 = vmatpush2.bf16.msra.mxu0 %v1714
  %2313 = vmatprep.subr.bf16.mxu0 0
  %2314 = vmatpush2.bf16.msra.mxu0 %v1713
  %2315 = vmatprep.subr.bf16.mxu0 0
  %2316 = vmatpush2.bf16.msra.mxu0 %v1712
  %2317 = vmatprep.subr.bf16.mxu0 0
  %2318 = vmatpush2.bf16.msra.mxu0 %v1711
  %2319 = vmatprep.subr.bf16.mxu0 0
  %2320 = vmatpush2.bf16.msra.mxu0 %v1710
  %2321 = vmatprep.mubr.bf16.mxu0 %v86
  %2322 = vmatmul.mubr.bf16.gmra.mxu0 %v85
  %v2323 = vpop.f32.mrf.mxu0
  %v2324 = vadd.f32 %v2283, %v2323
  %v2325 = vpop.f32.mrf.mxu0
  %v2326 = vpop.f32.mrf.mxu0
  %v2327 = vadd.f32 %v2286, %v2326
  %v2328 = vpop.f32.mrf.mxu0
  %2329 = vdwg.mxu0
  %2330 = vmatprep.subr.bf16.mxu0 0
  %2331 = vmatpush1.bf16.msra.mxu0 %v1725
  %2332 = vmatprep.subr.bf16.mxu0 0
  %2333 = vmatpush1.bf16.msra.mxu0 %v1724
  %2334 = vmatprep.subr.bf16.mxu0 0
  %2335 = vmatpush1.bf16.msra.mxu0 %v1723
  %2336 = vmatprep.subr.bf16.mxu0 0
  %2337 = vmatpush1.bf16.msra.mxu0 %v1722
  %2338 = vmatprep.subr.bf16.mxu0 0
  %2339 = vmatpush1.bf16.msra.mxu0 %v1721
  %2340 = vmatprep.subr.bf16.mxu0 0
  %2341 = vmatpush1.bf16.msra.mxu0 %v1720
  %2342 = vmatprep.subr.bf16.mxu0 0
  %2343 = vmatpush1.bf16.msra.mxu0 %v1719
  %2344 = vmatprep.subr.bf16.mxu0 0
  %2345 = vmatpush1.bf16.msra.mxu0 %v1718
  %2346 = vmatprep.subr.bf16.mxu0 0
  %2347 = vmatpush2.bf16.msra.mxu0 %v1733
  %2348 = vmatprep.subr.bf16.mxu0 0
  %2349 = vmatpush2.bf16.msra.mxu0 %v1732
  %2350 = vmatprep.subr.bf16.mxu0 0
  %2351 = vmatpush2.bf16.msra.mxu0 %v1731
  %2352 = vmatprep.subr.bf16.mxu0 0
  %2353 = vmatpush2.bf16.msra.mxu0 %v1730
  %2354 = vmatprep.subr.bf16.mxu0 0
  %2355 = vmatpush2.bf16.msra.mxu0 %v1729
  %2356 = vmatprep.subr.bf16.mxu0 0
  %2357 = vmatpush2.bf16.msra.mxu0 %v1728
  %2358 = vmatprep.subr.bf16.mxu0 0
  %2359 = vmatpush2.bf16.msra.mxu0 %v1727
  %2360 = vmatprep.subr.bf16.mxu0 0
  %2361 = vmatpush2.bf16.msra.mxu0 %v1726
  %2362 = vmatprep.mubr.bf16.mxu0 %v88
  %2363 = vmatmul.mubr.bf16.gmra.mxu0 %v87
  %v2364 = vpop.f32.mrf.mxu0
  %v2365 = vadd.f32 %v2324, %v2364
  %v2366 = vpop.f32.mrf.mxu0
  %v2367 = vpop.f32.mrf.mxu0
  %v2368 = vadd.f32 %v2327, %v2367
  %v2369 = vpop.f32.mrf.mxu0
  %2370 = vdwg.mxu0
  %2371 = vmatprep.subr.bf16.mxu0 0
  %2372 = vmatpush1.bf16.msra.mxu0 %v1741
  %2373 = vmatprep.subr.bf16.mxu0 0
  %2374 = vmatpush1.bf16.msra.mxu0 %v1740
  %2375 = vmatprep.subr.bf16.mxu0 0
  %2376 = vmatpush1.bf16.msra.mxu0 %v1739
  %2377 = vmatprep.subr.bf16.mxu0 0
  %2378 = vmatpush1.bf16.msra.mxu0 %v1738
  %2379 = vmatprep.subr.bf16.mxu0 0
  %2380 = vmatpush1.bf16.msra.mxu0 %v1737
  %2381 = vmatprep.subr.bf16.mxu0 0
  %2382 = vmatpush1.bf16.msra.mxu0 %v1736
  %2383 = vmatprep.subr.bf16.mxu0 0
  %2384 = vmatpush1.bf16.msra.mxu0 %v1735
  %2385 = vmatprep.subr.bf16.mxu0 0
  %2386 = vmatpush1.bf16.msra.mxu0 %v1734
  %2387 = vmatprep.subr.bf16.mxu0 0
  %2388 = vmatpush2.bf16.msra.mxu0 %v1749
  %2389 = vmatprep.subr.bf16.mxu0 0
  %2390 = vmatpush2.bf16.msra.mxu0 %v1748
  %2391 = vmatprep.subr.bf16.mxu0 0
  %2392 = vmatpush2.bf16.msra.mxu0 %v1747
  %2393 = vmatprep.subr.bf16.mxu0 0
  %2394 = vmatpush2.bf16.msra.mxu0 %v1746
  %2395 = vmatprep.subr.bf16.mxu0 0
  %2396 = vmatpush2.bf16.msra.mxu0 %v1745
  %2397 = vmatprep.subr.bf16.mxu0 0
  %2398 = vmatpush2.bf16.msra.mxu0 %v1744
  %2399 = vmatprep.subr.bf16.mxu0 0
  %2400 = vmatpush2.bf16.msra.mxu0 %v1743
  %2401 = vmatprep.subr.bf16.mxu0 0
  %2402 = vmatpush2.bf16.msra.mxu0 %v1742
  %2403 = vmatprep.mubr.bf16.mxu0 %v90
  %2404 = vmatmul.mubr.bf16.gmra.mxu0 %v89
  %v2405 = vpop.f32.mrf.mxu0
  %v2406 = vadd.f32 %v2365, %v2405
  %v2407 = vpop.f32.mrf.mxu0
  %v2408 = vpop.f32.mrf.mxu0
  %v2409 = vadd.f32 %v2368, %v2408
  %v2410 = vpop.f32.mrf.mxu0
  %2411 = vdwg.mxu0
  %2412 = vmatprep.subr.bf16.mxu0 0
  %2413 = vmatpush1.bf16.msra.mxu0 %v1757
  %2414 = vmatprep.subr.bf16.mxu0 0
  %2415 = vmatpush1.bf16.msra.mxu0 %v1756
  %2416 = vmatprep.subr.bf16.mxu0 0
  %2417 = vmatpush1.bf16.msra.mxu0 %v1755
  %2418 = vmatprep.subr.bf16.mxu0 0
  %2419 = vmatpush1.bf16.msra.mxu0 %v1754
  %2420 = vmatprep.subr.bf16.mxu0 0
  %2421 = vmatpush1.bf16.msra.mxu0 %v1753
  %2422 = vmatprep.subr.bf16.mxu0 0
  %2423 = vmatpush1.bf16.msra.mxu0 %v1752
  %2424 = vmatprep.subr.bf16.mxu0 0
  %2425 = vmatpush1.bf16.msra.mxu0 %v1751
  %2426 = vmatprep.subr.bf16.mxu0 0
  %2427 = vmatpush1.bf16.msra.mxu0 %v1750
  %2428 = vmatprep.subr.bf16.mxu0 0
  %2429 = vmatpush2.bf16.msra.mxu0 %v1765
  %2430 = vmatprep.subr.bf16.mxu0 0
  %2431 = vmatpush2.bf16.msra.mxu0 %v1764
  %2432 = vmatprep.subr.bf16.mxu0 0
  %2433 = vmatpush2.bf16.msra.mxu0 %v1763
  %2434 = vmatprep.subr.bf16.mxu0 0
  %2435 = vmatpush2.bf16.msra.mxu0 %v1762
  %2436 = vmatprep.subr.bf16.mxu0 0
  %2437 = vmatpush2.bf16.msra.mxu0 %v1761
  %2438 = vmatprep.subr.bf16.mxu0 0
  %2439 = vmatpush2.bf16.msra.mxu0 %v1760
  %2440 = vmatprep.subr.bf16.mxu0 0
  %2441 = vmatpush2.bf16.msra.mxu0 %v1759
  %2442 = vmatprep.subr.bf16.mxu0 0
  %2443 = vmatpush2.bf16.msra.mxu0 %v1758
  %2444 = vmatprep.mubr.bf16.mxu0 %v92
  %2445 = vmatmul.mubr.bf16.gmra.mxu0 %v91
  %v2446 = vpop.f32.mrf.mxu0
  %v2447 = vadd.f32 %v2406, %v2446
  %v2448 = vpop.f32.mrf.mxu0
  %v2449 = vpop.f32.mrf.mxu0
  %v2450 = vadd.f32 %v2409, %v2449
  %v2451 = vpop.f32.mrf.mxu0
  %2452 = vdwg.mxu0
  %2453 = vmatprep.subr.bf16.mxu0 0
  %2454 = vmatpush1.bf16.msra.mxu0 %v1773
  %2455 = vmatprep.subr.bf16.mxu0 0
  %2456 = vmatpush1.bf16.msra.mxu0 %v1772
  %2457 = vmatprep.subr.bf16.mxu0 0
  %2458 = vmatpush1.bf16.msra.mxu0 %v1771
  %2459 = vmatprep.subr.bf16.mxu0 0
  %2460 = vmatpush1.bf16.msra.mxu0 %v1770
  %2461 = vmatprep.subr.bf16.mxu0 0
  %2462 = vmatpush1.bf16.msra.mxu0 %v1769
  %2463 = vmatprep.subr.bf16.mxu0 0
  %2464 = vmatpush1.bf16.msra.mxu0 %v1768
  %2465 = vmatprep.subr.bf16.mxu0 0
  %2466 = vmatpush1.bf16.msra.mxu0 %v1767
  %2467 = vmatprep.subr.bf16.mxu0 0
  %2468 = vmatpush1.bf16.msra.mxu0 %v1766
  %2469 = vmatprep.subr.bf16.mxu0 0
  %2470 = vmatpush2.bf16.msra.mxu0 %v1781
  %2471 = vmatprep.subr.bf16.mxu0 0
  %2472 = vmatpush2.bf16.msra.mxu0 %v1780
  %2473 = vmatprep.subr.bf16.mxu0 0
  %2474 = vmatpush2.bf16.msra.mxu0 %v1779
  %2475 = vmatprep.subr.bf16.mxu0 0
  %2476 = vmatpush2.bf16.msra.mxu0 %v1778
  %2477 = vmatprep.subr.bf16.mxu0 0
  %2478 = vmatpush2.bf16.msra.mxu0 %v1777
  %2479 = vmatprep.subr.bf16.mxu0 0
  %2480 = vmatpush2.bf16.msra.mxu0 %v1776
  %2481 = vmatprep.subr.bf16.mxu0 0
  %2482 = vmatpush2.bf16.msra.mxu0 %v1775
  %2483 = vmatprep.subr.bf16.mxu0 0
  %2484 = vmatpush2.bf16.msra.mxu0 %v1774
  %2485 = vmatprep.mubr.bf16.mxu0 %v94
  %2486 = vmatmul.mubr.bf16.gmra.mxu0 %v93
  %v2487 = vpop.f32.mrf.mxu0
  %v2488 = vadd.f32 %v2447, %v2487
  %v2489 = vpop.f32.mrf.mxu0
  %v2490 = vpop.f32.mrf.mxu0
  %v2491 = vadd.f32 %v2450, %v2490
  %v2492 = vpop.f32.mrf.mxu0
  %2493 = vdwg.mxu0
  %2494 = vmatprep.subr.bf16.mxu0 0
  %2495 = vmatpush1.bf16.msra.mxu0 %v1789
  %2496 = vmatprep.subr.bf16.mxu0 0
  %2497 = vmatpush1.bf16.msra.mxu0 %v1788
  %2498 = vmatprep.subr.bf16.mxu0 0
  %2499 = vmatpush1.bf16.msra.mxu0 %v1787
  %2500 = vmatprep.subr.bf16.mxu0 0
  %2501 = vmatpush1.bf16.msra.mxu0 %v1786
  %2502 = vmatprep.subr.bf16.mxu0 0
  %2503 = vmatpush1.bf16.msra.mxu0 %v1785
  %2504 = vmatprep.subr.bf16.mxu0 0
  %2505 = vmatpush1.bf16.msra.mxu0 %v1784
  %2506 = vmatprep.subr.bf16.mxu0 0
  %2507 = vmatpush1.bf16.msra.mxu0 %v1783
  %2508 = vmatprep.subr.bf16.mxu0 0
  %2509 = vmatpush1.bf16.msra.mxu0 %v1782
  %2510 = vmatprep.subr.bf16.mxu0 0
  %2511 = vmatpush2.bf16.msra.mxu0 %v1797
  %2512 = vmatprep.subr.bf16.mxu0 0
  %2513 = vmatpush2.bf16.msra.mxu0 %v1796
  %2514 = vmatprep.subr.bf16.mxu0 0
  %2515 = vmatpush2.bf16.msra.mxu0 %v1795
  %2516 = vmatprep.subr.bf16.mxu0 0
  %2517 = vmatpush2.bf16.msra.mxu0 %v1794
  %2518 = vmatprep.subr.bf16.mxu0 0
  %2519 = vmatpush2.bf16.msra.mxu0 %v1793
  %2520 = vmatprep.subr.bf16.mxu0 0
  %2521 = vmatpush2.bf16.msra.mxu0 %v1792
  %2522 = vmatprep.subr.bf16.mxu0 0
  %2523 = vmatpush2.bf16.msra.mxu0 %v1791
  %2524 = vmatprep.subr.bf16.mxu0 0
  %2525 = vmatpush2.bf16.msra.mxu0 %v1790
  %2526 = vmatprep.mubr.bf16.mxu0 %v96
  %2527 = vmatmul.mubr.bf16.gmra.mxu0 %v95
  %v2528 = vpop.f32.mrf.mxu0
  %v2529 = vadd.f32 %v2488, %v2528
  %v2530 = vpop.f32.mrf.mxu0
  %v2531 = vpop.f32.mrf.mxu0
  %v2532 = vadd.f32 %v2491, %v2531
  %v2533 = vpop.f32.mrf.mxu0
  %2534 = vdwg.mxu0
  %2535 = vmatprep.subr.bf16.mxu0 0
  %2536 = vmatpush1.bf16.msra.mxu0 %v1805
  %2537 = vmatprep.subr.bf16.mxu0 0
  %2538 = vmatpush1.bf16.msra.mxu0 %v1804
  %2539 = vmatprep.subr.bf16.mxu0 0
  %2540 = vmatpush1.bf16.msra.mxu0 %v1803
  %2541 = vmatprep.subr.bf16.mxu0 0
  %2542 = vmatpush1.bf16.msra.mxu0 %v1802
  %2543 = vmatprep.subr.bf16.mxu0 0
  %2544 = vmatpush1.bf16.msra.mxu0 %v1801
  %2545 = vmatprep.subr.bf16.mxu0 0
  %2546 = vmatpush1.bf16.msra.mxu0 %v1800
  %2547 = vmatprep.subr.bf16.mxu0 0
  %2548 = vmatpush1.bf16.msra.mxu0 %v1799
  %2549 = vmatprep.subr.bf16.mxu0 0
  %2550 = vmatpush1.bf16.msra.mxu0 %v1798
  %2551 = vmatprep.subr.bf16.mxu0 0
  %2552 = vmatpush2.bf16.msra.mxu0 %v1813
  %2553 = vmatprep.subr.bf16.mxu0 0
  %2554 = vmatpush2.bf16.msra.mxu0 %v1812
  %2555 = vmatprep.subr.bf16.mxu0 0
  %2556 = vmatpush2.bf16.msra.mxu0 %v1811
  %2557 = vmatprep.subr.bf16.mxu0 0
  %2558 = vmatpush2.bf16.msra.mxu0 %v1810
  %2559 = vmatprep.subr.bf16.mxu0 0
  %2560 = vmatpush2.bf16.msra.mxu0 %v1809
  %2561 = vmatprep.subr.bf16.mxu0 0
  %2562 = vmatpush2.bf16.msra.mxu0 %v1808
  %2563 = vmatprep.subr.bf16.mxu0 0
  %2564 = vmatpush2.bf16.msra.mxu0 %v1807
  %2565 = vmatprep.subr.bf16.mxu0 0
  %2566 = vmatpush2.bf16.msra.mxu0 %v1806
  %2567 = vmatprep.mubr.bf16.mxu0 %v98
  %2568 = vmatmul.mubr.bf16.gmra.mxu0 %v97
  %v2569 = vpop.f32.mrf.mxu0
  %v2570 = vadd.f32 %v2529, %v2569
  %v2571 = vpop.f32.mrf.mxu0
  %v2572 = vpop.f32.mrf.mxu0
  %v2573 = vadd.f32 %v2532, %v2572
  %v2574 = vpop.f32.mrf.mxu0
  %2575 = vdwg.mxu0
  %2576 = vmatprep.subr.bf16.mxu0 0
  %2577 = vmatpush1.bf16.msra.mxu0 %v1821
  %2578 = vmatprep.subr.bf16.mxu0 0
  %2579 = vmatpush1.bf16.msra.mxu0 %v1820
  %2580 = vmatprep.subr.bf16.mxu0 0
  %2581 = vmatpush1.bf16.msra.mxu0 %v1819
  %2582 = vmatprep.subr.bf16.mxu0 0
  %2583 = vmatpush1.bf16.msra.mxu0 %v1818
  %2584 = vmatprep.subr.bf16.mxu0 0
  %2585 = vmatpush1.bf16.msra.mxu0 %v1817
  %2586 = vmatprep.subr.bf16.mxu0 0
  %2587 = vmatpush1.bf16.msra.mxu0 %v1816
  %2588 = vmatprep.subr.bf16.mxu0 0
  %2589 = vmatpush1.bf16.msra.mxu0 %v1815
  %2590 = vmatprep.subr.bf16.mxu0 0
  %2591 = vmatpush1.bf16.msra.mxu0 %v1814
  %2592 = vmatprep.subr.bf16.mxu0 0
  %2593 = vmatpush2.bf16.msra.mxu0 %v1829
  %2594 = vmatprep.subr.bf16.mxu0 0
  %2595 = vmatpush2.bf16.msra.mxu0 %v1828
  %2596 = vmatprep.subr.bf16.mxu0 0
  %2597 = vmatpush2.bf16.msra.mxu0 %v1827
  %2598 = vmatprep.subr.bf16.mxu0 0
  %2599 = vmatpush2.bf16.msra.mxu0 %v1826
  %2600 = vmatprep.subr.bf16.mxu0 0
  %2601 = vmatpush2.bf16.msra.mxu0 %v1825
  %2602 = vmatprep.subr.bf16.mxu0 0
  %2603 = vmatpush2.bf16.msra.mxu0 %v1824
  %2604 = vmatprep.subr.bf16.mxu0 0
  %2605 = vmatpush2.bf16.msra.mxu0 %v1823
  %2606 = vmatprep.subr.bf16.mxu0 0
  %2607 = vmatpush2.bf16.msra.mxu0 %v1822
  %2608 = vmatprep.mubr.bf16.mxu0 %v100
  %2609 = vmatmul.mubr.bf16.gmra.mxu0 %v99
  %v2610 = vpop.f32.mrf.mxu0
  %v2611 = vadd.f32 %v2570, %v2610
  %v2612 = vpop.f32.mrf.mxu0
  %v2613 = vpop.f32.mrf.mxu0
  %v2614 = vadd.f32 %v2573, %v2613
  %v2615 = vpop.f32.mrf.mxu0
  %2616 = vdwg.mxu0
  %2617 = vmatprep.subr.bf16.mxu0 0
  %2618 = vmatpush1.bf16.msra.mxu0 %v1837
  %2619 = vmatprep.subr.bf16.mxu0 0
  %2620 = vmatpush1.bf16.msra.mxu0 %v1836
  %2621 = vmatprep.subr.bf16.mxu0 0
  %2622 = vmatpush1.bf16.msra.mxu0 %v1835
  %2623 = vmatprep.subr.bf16.mxu0 0
  %2624 = vmatpush1.bf16.msra.mxu0 %v1834
  %2625 = vmatprep.subr.bf16.mxu0 0
  %2626 = vmatpush1.bf16.msra.mxu0 %v1833
  %2627 = vmatprep.subr.bf16.mxu0 0
  %2628 = vmatpush1.bf16.msra.mxu0 %v1832
  %2629 = vmatprep.subr.bf16.mxu0 0
  %2630 = vmatpush1.bf16.msra.mxu0 %v1831
  %2631 = vmatprep.subr.bf16.mxu0 0
  %2632 = vmatpush1.bf16.msra.mxu0 %v1830
  %2633 = vmatprep.subr.bf16.mxu0 0
  %2634 = vmatpush2.bf16.msra.mxu0 %v1845
  %2635 = vmatprep.subr.bf16.mxu0 0
  %2636 = vmatpush2.bf16.msra.mxu0 %v1844
  %2637 = vmatprep.subr.bf16.mxu0 0
  %2638 = vmatpush2.bf16.msra.mxu0 %v1843
  %2639 = vmatprep.subr.bf16.mxu0 0
  %2640 = vmatpush2.bf16.msra.mxu0 %v1842
  %2641 = vmatprep.subr.bf16.mxu0 0
  %2642 = vmatpush2.bf16.msra.mxu0 %v1841
  %2643 = vmatprep.subr.bf16.mxu0 0
  %2644 = vmatpush2.bf16.msra.mxu0 %v1840
  %2645 = vmatprep.subr.bf16.mxu0 0
  %2646 = vmatpush2.bf16.msra.mxu0 %v1839
  %2647 = vmatprep.subr.bf16.mxu0 0
  %2648 = vmatpush2.bf16.msra.mxu0 %v1838
  %2649 = vmatprep.mubr.bf16.mxu0 %v102
  %2650 = vmatmul.mubr.bf16.gmra.mxu0 %v101
  %v2651 = vpop.f32.mrf.mxu0
  %v2652 = vadd.f32 %v2611, %v2651
  %v2653 = vpop.f32.mrf.mxu0
  %v2654 = vpop.f32.mrf.mxu0
  %v2655 = vadd.f32 %v2614, %v2654
  %v2656 = vpop.f32.mrf.mxu0
  %2657 = vdwg.mxu0
  %2658 = vmatprep.subr.bf16.mxu0 0
  %2659 = vmatpush1.bf16.msra.mxu0 %v1853
  %2660 = vmatprep.subr.bf16.mxu0 0
  %2661 = vmatpush1.bf16.msra.mxu0 %v1852
  %2662 = vmatprep.subr.bf16.mxu0 0
  %2663 = vmatpush1.bf16.msra.mxu0 %v1851
  %2664 = vmatprep.subr.bf16.mxu0 0
  %2665 = vmatpush1.bf16.msra.mxu0 %v1850
  %2666 = vmatprep.subr.bf16.mxu0 0
  %2667 = vmatpush1.bf16.msra.mxu0 %v1849
  %2668 = vmatprep.subr.bf16.mxu0 0
  %2669 = vmatpush1.bf16.msra.mxu0 %v1848
  %2670 = vmatprep.subr.bf16.mxu0 0
  %2671 = vmatpush1.bf16.msra.mxu0 %v1847
  %2672 = vmatprep.subr.bf16.mxu0 0
  %2673 = vmatpush1.bf16.msra.mxu0 %v1846
  %2674 = vmatprep.subr.bf16.mxu0 0
  %2675 = vmatpush2.bf16.msra.mxu0 %v1861
  %2676 = vmatprep.subr.bf16.mxu0 0
  %2677 = vmatpush2.bf16.msra.mxu0 %v1860
  %2678 = vmatprep.subr.bf16.mxu0 0
  %2679 = vmatpush2.bf16.msra.mxu0 %v1859
  %2680 = vmatprep.subr.bf16.mxu0 0
  %2681 = vmatpush2.bf16.msra.mxu0 %v1858
  %2682 = vmatprep.subr.bf16.mxu0 0
  %2683 = vmatpush2.bf16.msra.mxu0 %v1857
  %2684 = vmatprep.subr.bf16.mxu0 0
  %2685 = vmatpush2.bf16.msra.mxu0 %v1856
  %2686 = vmatprep.subr.bf16.mxu0 0
  %2687 = vmatpush2.bf16.msra.mxu0 %v1855
  %2688 = vmatprep.subr.bf16.mxu0 0
  %2689 = vmatpush2.bf16.msra.mxu0 %v1854
  %2690 = vmatprep.mubr.bf16.mxu0 %v104
  %2691 = vmatmul.mubr.bf16.gmra.mxu0 %v103
  %v2692 = vpop.f32.mrf.mxu0
  %v2693 = vadd.f32 %v2652, %v2692
  %v2694 = vpop.f32.mrf.mxu0
  %v2695 = vpop.f32.mrf.mxu0
  %v2696 = vadd.f32 %v2655, %v2695
  %v2697 = vpop.f32.mrf.mxu0
  %2698 = vdwg.mxu0
  %2699 = vmatprep.subr.bf16.mxu0 0
  %2700 = vmatpush1.bf16.msra.mxu0 %v1869
  %2701 = vmatprep.subr.bf16.mxu0 0
  %2702 = vmatpush1.bf16.msra.mxu0 %v1868
  %2703 = vmatprep.subr.bf16.mxu0 0
  %2704 = vmatpush1.bf16.msra.mxu0 %v1867
  %2705 = vmatprep.subr.bf16.mxu0 0
  %2706 = vmatpush1.bf16.msra.mxu0 %v1866
  %2707 = vmatprep.subr.bf16.mxu0 0
  %2708 = vmatpush1.bf16.msra.mxu0 %v1865
  %2709 = vmatprep.subr.bf16.mxu0 0
  %2710 = vmatpush1.bf16.msra.mxu0 %v1864
  %2711 = vmatprep.subr.bf16.mxu0 0
  %2712 = vmatpush1.bf16.msra.mxu0 %v1863
  %2713 = vmatprep.subr.bf16.mxu0 0
  %2714 = vmatpush1.bf16.msra.mxu0 %v1862
  %2715 = vmatprep.subr.bf16.mxu0 0
  %2716 = vmatpush2.bf16.msra.mxu0 %v1877
  %2717 = vmatprep.subr.bf16.mxu0 0
  %2718 = vmatpush2.bf16.msra.mxu0 %v1876
  %2719 = vmatprep.subr.bf16.mxu0 0
  %2720 = vmatpush2.bf16.msra.mxu0 %v1875
  %2721 = vmatprep.subr.bf16.mxu0 0
  %2722 = vmatpush2.bf16.msra.mxu0 %v1874
  %2723 = vmatprep.subr.bf16.mxu0 0
  %2724 = vmatpush2.bf16.msra.mxu0 %v1873
  %2725 = vmatprep.subr.bf16.mxu0 0
  %2726 = vmatpush2.bf16.msra.mxu0 %v1872
  %2727 = vmatprep.subr.bf16.mxu0 0
  %2728 = vmatpush2.bf16.msra.mxu0 %v1871
  %2729 = vmatprep.subr.bf16.mxu0 0
  %2730 = vmatpush2.bf16.msra.mxu0 %v1870
  %2731 = vmatprep.mubr.bf16.mxu0 %v106
  %2732 = vmatmul.mubr.bf16.gmra.mxu0 %v105
  %v2733 = vpop.f32.mrf.mxu0
  %v2734 = vadd.f32 %v2693, %v2733
  %v2735 = vpop.f32.mrf.mxu0
  %v2736 = vpop.f32.mrf.mxu0
  %v2737 = vadd.f32 %v2696, %v2736
  %v2738 = vpop.f32.mrf.mxu0
  %2739 = vdwg.mxu0
  %2740 = vmatprep.subr.bf16.mxu0 0
  %2741 = vmatpush1.bf16.msra.mxu0 %v1885
  %2742 = vmatprep.subr.bf16.mxu0 0
  %2743 = vmatpush1.bf16.msra.mxu0 %v1884
  %2744 = vmatprep.subr.bf16.mxu0 0
  %2745 = vmatpush1.bf16.msra.mxu0 %v1883
  %2746 = vmatprep.subr.bf16.mxu0 0
  %2747 = vmatpush1.bf16.msra.mxu0 %v1882
  %2748 = vmatprep.subr.bf16.mxu0 0
  %2749 = vmatpush1.bf16.msra.mxu0 %v1881
  %2750 = vmatprep.subr.bf16.mxu0 0
  %2751 = vmatpush1.bf16.msra.mxu0 %v1880
  %2752 = vmatprep.subr.bf16.mxu0 0
  %2753 = vmatpush1.bf16.msra.mxu0 %v1879
  %2754 = vmatprep.subr.bf16.mxu0 0
  %2755 = vmatpush1.bf16.msra.mxu0 %v1878
  %2756 = vmatprep.subr.bf16.mxu0 0
  %2757 = vmatpush2.bf16.msra.mxu0 %v1893
  %2758 = vmatprep.subr.bf16.mxu0 0
  %2759 = vmatpush2.bf16.msra.mxu0 %v1892
  %2760 = vmatprep.subr.bf16.mxu0 0
  %2761 = vmatpush2.bf16.msra.mxu0 %v1891
  %2762 = vmatprep.subr.bf16.mxu0 0
  %2763 = vmatpush2.bf16.msra.mxu0 %v1890
  %2764 = vmatprep.subr.bf16.mxu0 0
  %2765 = vmatpush2.bf16.msra.mxu0 %v1889
  %2766 = vmatprep.subr.bf16.mxu0 0
  %2767 = vmatpush2.bf16.msra.mxu0 %v1888
  %2768 = vmatprep.subr.bf16.mxu0 0
  %2769 = vmatpush2.bf16.msra.mxu0 %v1887
  %2770 = vmatprep.subr.bf16.mxu0 0
  %2771 = vmatpush2.bf16.msra.mxu0 %v1886
  %2772 = vmatprep.mubr.bf16.mxu0 %v108
  %2773 = vmatmul.mubr.bf16.gmra.mxu0 %v107
  %v2774 = vpop.f32.mrf.mxu0
  %v2775 = vadd.f32 %v2734, %v2774
  %v2776 = vpop.f32.mrf.mxu0
  %v2777 = vpop.f32.mrf.mxu0
  %v2778 = vadd.f32 %v2737, %v2777
  %v2779 = vpop.f32.mrf.mxu0
  %2780 = vdwg.mxu0
  %2781 = vmatprep.subr.bf16.mxu0 0
  %2782 = vmatpush1.bf16.msra.mxu0 %v1901
  %2783 = vmatprep.subr.bf16.mxu0 0
  %2784 = vmatpush1.bf16.msra.mxu0 %v1900
  %2785 = vmatprep.subr.bf16.mxu0 0
  %2786 = vmatpush1.bf16.msra.mxu0 %v1899
  %2787 = vmatprep.subr.bf16.mxu0 0
  %2788 = vmatpush1.bf16.msra.mxu0 %v1898
  %2789 = vmatprep.subr.bf16.mxu0 0
  %2790 = vmatpush1.bf16.msra.mxu0 %v1897
  %2791 = vmatprep.subr.bf16.mxu0 0
  %2792 = vmatpush1.bf16.msra.mxu0 %v1896
  %2793 = vmatprep.subr.bf16.mxu0 0
  %2794 = vmatpush1.bf16.msra.mxu0 %v1895
  %2795 = vmatprep.subr.bf16.mxu0 0
  %2796 = vmatpush1.bf16.msra.mxu0 %v1894
  %2797 = vmatprep.subr.bf16.mxu0 0
  %2798 = vmatpush2.bf16.msra.mxu0 %v1909
  %2799 = vmatprep.subr.bf16.mxu0 0
  %2800 = vmatpush2.bf16.msra.mxu0 %v1908
  %2801 = vmatprep.subr.bf16.mxu0 0
  %2802 = vmatpush2.bf16.msra.mxu0 %v1907
  %2803 = vmatprep.subr.bf16.mxu0 0
  %2804 = vmatpush2.bf16.msra.mxu0 %v1906
  %2805 = vmatprep.subr.bf16.mxu0 0
  %2806 = vmatpush2.bf16.msra.mxu0 %v1905
  %2807 = vmatprep.subr.bf16.mxu0 0
  %2808 = vmatpush2.bf16.msra.mxu0 %v1904
  %2809 = vmatprep.subr.bf16.mxu0 0
  %2810 = vmatpush2.bf16.msra.mxu0 %v1903
  %2811 = vmatprep.subr.bf16.mxu0 0
  %2812 = vmatpush2.bf16.msra.mxu0 %v1902
  %2813 = vmatprep.mubr.bf16.mxu0 %v110
  %2814 = vmatmul.mubr.bf16.gmra.mxu0 %v109
  %v2815 = vpop.f32.mrf.mxu0
  %v2816 = vadd.f32 %v2775, %v2815
  %v2817 = vpop.f32.mrf.mxu0
  %v2818 = vpop.f32.mrf.mxu0
  %v2819 = vadd.f32 %v2778, %v2818
  %v2820 = vpop.f32.mrf.mxu0
  %2821 = vdwg.mxu0
  %2822 = vst [vmem:[%s3] sm:$0xff] %v2816
  %2823 = vst [vmem:[%s3 + $0x8] sm:$0xff] %v2819
  // Predicated region
  $region14: #{vit_forward.2} parent=0 // pred_check
    _
  $region15: #{vit_forward.2} parent=0 // pred_check_branch
    %2825 = sbr.rel (0) target = $region17
  $region16: #{vit_forward.2} parent=0 // pred_region
    _
  $region17: #{vit_forward.2} parent=0 // pred_fallthru
    _
  // Predicated region
  $region18: #{vit_forward.2} parent=0 // pred_check
    _
  $region19: #{vit_forward.2} parent=0 // pred_check_branch
    %2827 = sbr.rel (0) target = $region21
  $region20: #{vit_forward.2} parent=0 // pred_region
    _
  $region21: #{vit_forward.2} parent=0 // pred_fallthru
    _

// kernel: vit_forward.3
$region0: #{vit_forward.3}
  #allocation0 [shape = 'u32[]', space=smem, size = 0x4, offset = 0x4, fixed_abs, tag = 'smem constant byte address 0x4 - core index']
  #allocation1 [shape = 'u32[144,128]{1,0:T(1,128)}', space=vmem, size = 0x12000, scoped, tag = 'internal scratch']
  %s0 = inlined_call_operand.vmem [shape: f32[2], index: 0, kind: input, shape index: {}]
  %s1 = inlined_call_operand.vmem [shape: f32[2], index: 1, kind: input, shape index: {}]
  %s2 = inlined_call_operand.vmem [shape: f32[2,8,128], index: 2, kind: input, shape index: {}]
  %s3 = inlined_call_operand.vmem [shape: f32[2,8,1], index: 3, kind: input, shape index: {}]
  %s4 = inlined_call_operand.vmem [shape: f32[2,1,8], index: 4, kind: input, shape index: {}]
  %s5 = inlined_call_operand.vmem [shape: f32[8,128], index: 5, kind: input, shape index: {}]
  %s6 = inlined_call_operand.vmem [shape: f32[2,1,128], index: 6, kind: input, shape index: {}]
  %s7 = inlined_call_operand.vmem [shape: f32[2,1,128], index: 7, kind: input, shape index: {}]
  %s8 = inlined_call_operand.vmem [shape: bf16[2,128,384], index: 8, kind: input, shape index: {}]
  %s9 = inlined_call_operand.vmem [shape: f32[2,1,384], index: 9, kind: input, shape index: {}]
  %s10 = inlined_call_operand.vmem [shape: bf16[2,128,128], index: 10, kind: input, shape index: {}]
  %s11 = inlined_call_operand.vmem [shape: f32[2,1,128], index: 11, kind: input, shape index: {}]
  %s12 = inlined_call_operand.vmem [shape: f32[2,1,128], index: 12, kind: input, shape index: {}]
  %s13 = inlined_call_operand.vmem [shape: f32[2,1,128], index: 13, kind: input, shape index: {}]
  %s14 = inlined_call_operand.vmem [shape: bf16[2,128,256], index: 14, kind: input, shape index: {}]
  %s15 = inlined_call_operand.vmem [shape: f32[2,1,256], index: 15, kind: input, shape index: {}]
  %s16 = inlined_call_operand.vmem [shape: bf16[2,256,128], index: 16, kind: input, shape index: {}]
  %s17 = inlined_call_operand.vmem [shape: f32[2,1,128], index: 17, kind: input, shape index: {}]
  %s18 = inlined_call_operand.vmem [shape: f32[1,128], index: 18, kind: input, shape index: {}]
  %s19 = inlined_call_operand.vmem [shape: f32[1,128], index: 19, kind: input, shape index: {}]
  %s20 = inlined_call_operand.vmem [shape: bf16[8,128,128], index: 20, kind: input, shape index: {}]
  %s21 = inlined_call_operand.vmem [shape: f32[1,128], index: 21, kind: input, shape index: {}]
  %s22 = inlined_call_operand.hbm [shape: f32[2,1,128], index: 22, kind: output, shape index: {}]
  %s23 = sld [smem:[#allocation0]]
  $region129: #{vit_forward.3} parent=0
    _
  %s25 = ssub.s32 1, %s23
  %s26 = scalar_select 0, %s25, %s23
  $region1: #{vit_forward.3} parent=0
    #allocation2 [shape = 'u8[512]{0}', space=smem, size = 0x200, scoped, tag = 'input window, operand 0, single buffered']
    #allocation3 [shape = 's32[2]{0}', space=sflag, size = 0x8, scoped, tag = 'scoped memory for vit_forward.3']
    #allocation4 [shape = 's32[2]{0}', space=sflag, size = 0x8, scoped, tag = 'scoped memory for vit_forward.3']
    #allocation5 [shape = 'u8[512]{0}', space=smem, size = 0x200, scoped, tag = 'input window, operand 1, single buffered']
    #allocation6 [shape = 's32[1]{0}', space=sflag, size = 0x4, scoped, tag = 'scoped memory for vit_forward.3']
    #allocation7 [shape = 'u8[1024]{0}', space=vmem, size = 0x400, scoped, tag = 'output window, operand 0']
    %27 = vsyncpa [#allocation4], 0
    %28 = vsyncpa [#allocation6], 0
    %29 = vsyncpa [#allocation3], 0
    %s30 = scalar_lea.sflag [#allocation3], 1
    %31 = vsyncpa %s30, 0
    loop: start=0, step=1, limit=4
    $region2: #{vit_forward.3} parent=1 // loop_pre_header
      _
    $region3: #{vit_forward.3} parent=1 // loop_header
      %s33 = sphi 0, %s37
      %p34 = scmp.ge.s32.totalorder %s33, 4
      %s41 = sphi 0, %s41
      %s43 = sphi 0, %s41
      %s44 = sphi 0, %s43
      %s58 = sphi 0, %s44
      %s62 = sphi 0, %s62
      %s64 = sphi 0, %s62
      %s65 = sphi 0, %s64
      %s79 = sphi 0, %s65
      %s85 = sphi 0, %s87
      %s88 = sphi 0, %s85
      %s89 = sphi 0, %s88
      %s105 = sphi 0, %s89
      %s111 = sphi 0, %s113
      %s114 = sphi 0, %s111
      %s115 = sphi 0, %s114
      %s131 = sphi 0, %s115
      %s137 = sphi 0, %s139
      %s140 = sphi 0, %s137
      %s141 = sphi 0, %s140
      %s157 = sphi 0, %s141
      %s161 = sphi 0, %s161
      %s163 = sphi 0, %s161
      %s164 = sphi 0, %s163
      %s178 = sphi 0, %s164
      %s182 = sphi 0, %s182
      %s184 = sphi 0, %s182
      %s185 = sphi 0, %s184
      %s199 = sphi 0, %s185
      %s203 = sphi 0, %s203
      %s205 = sphi 0, %s203
      %s206 = sphi 0, %s205
      %s220 = sphi 0, %s206
      %s224 = sphi 0, %s224
      %s226 = sphi 0, %s224
      %s227 = sphi 0, %s226
      %s241 = sphi 0, %s227
      %s245 = sphi 0, %s245
      %s247 = sphi 0, %s245
      %s248 = sphi 0, %s247
      %s262 = sphi 0, %s248
      %s266 = sphi 0, %s266
      %s268 = sphi 0, %s266
      %s269 = sphi 0, %s268
      %s283 = sphi 0, %s269
      %s287 = sphi 0, %s287
      %s289 = sphi 0, %s287
      %s290 = sphi 0, %s289
      %s304 = sphi 0, %s290
      %s308 = sphi 0, %s308
      %s310 = sphi 0, %s308
      %s311 = sphi 0, %s310
      %s325 = sphi 0, %s311
      %s329 = sphi 0, %s329
      %s331 = sphi 0, %s329
      %s332 = sphi 0, %s331
      %s346 = sphi 0, %s332
      %s350 = sphi 0, %s350
      %s352 = sphi 0, %s350
      %s353 = sphi 0, %s352
      %s367 = sphi 0, %s353
      %s371 = sphi 0, %s371
      %s373 = sphi 0, %s371
      %s374 = sphi 0, %s373
      %s388 = sphi 0, %s374
      %s392 = sphi 0, %s392
      %s394 = sphi 0, %s392
      %s395 = sphi 0, %s394
      %s409 = sphi 0, %s395
      %s413 = sphi 0, %s413
      %s415 = sphi 0, %s413
      %s416 = sphi 0, %s415
      %s430 = sphi 0, %s416
      %s434 = sphi 0, %s434
      %s436 = sphi 0, %s434
      %s437 = sphi 0, %s436
      %s451 = sphi 0, %s437
      %s455 = sphi 0, %s455
      %s457 = sphi 0, %s455
      %s458 = sphi 0, %s457
      %s472 = sphi 0, %s458
      %s476 = sphi 0, %s476
      %s478 = sphi 0, %s476
      %s479 = sphi 0, %s478
      %s493 = sphi 0, %s479
      %s497 = sphi 0, %s497
      %s499 = sphi 0, %s497
      %s500 = sphi 0, %s499
      %s514 = sphi 0, %s500
      %s520 = sphi 0, %s522
      %s523 = sphi 0, %s520
      %s524 = sphi 0, %s523
      %s540 = sphi 0, %s524
    $region4: #{vit_forward.3} parent=1 // loop_header_branch
      %36 = sbr.rel (%p34) target = $region8
    $region5: #{vit_forward.3} parent=1 // loop_body
      %s38 = ssub.s32 %s33, 1
      %s39 = ssub.s32 %s33, 2
      %s40 = sadd.s32 %s33, 1
      %s42 = sadd.s32 %s41, 1
      %p45 = scmp.eq.s32.totalorder %s33, 1
      %p46 = scmp.ne.s32.totalorder %s41, %s43
      %p47 = scmp.eq.s32.totalorder %s33, 0
      %p48 = por %p46, %p47
      %p49 = scmp.ne.s32.totalorder %s41, %s43
      %p50 = scmp.eq.s32.totalorder %s38, 1
      %p51 = por %p49, %p50
      %p52 = scmp.ne.s32.totalorder %s43, %s44
      %p53 = scmp.eq.s32.totalorder %s38, 0
      %p54 = por %p52, %p53
      %p55 = scmp.ne.s32.totalorder %s43, %s44
      %p56 = scmp.eq.s32.totalorder %s39, 1
      %p57 = por %p55, %p56
      %p59 = scmp.ne.s32.totalorder %s44, %s58
      %p60 = scmp.eq.s32.totalorder %s39, 0
      %p61 = por %p59, %p60
      %s63 = sadd.s32 %s62, 1
      %p66 = scmp.eq.s32.totalorder %s33, 1
      %p67 = scmp.ne.s32.totalorder %s62, %s64
      %p68 = scmp.eq.s32.totalorder %s33, 0
      %p69 = por %p67, %p68
      %p70 = scmp.ne.s32.totalorder %s62, %s64
      %p71 = scmp.eq.s32.totalorder %s38, 1
      %p72 = por %p70, %p71
      %p73 = scmp.ne.s32.totalorder %s64, %s65
      %p74 = scmp.eq.s32.totalorder %s38, 0
      %p75 = por %p73, %p74
      %p76 = scmp.ne.s32.totalorder %s64, %s65
      %p77 = scmp.eq.s32.totalorder %s39, 1
      %p78 = por %p76, %p77
      %p80 = scmp.ne.s32.totalorder %s65, %s79
      %p81 = scmp.eq.s32.totalorder %s39, 0
      %p82 = por %p80, %p81
      %s83 = ssub.s32 %s33, %s40
      %p84 = scmp.eq.s32.totalorder %s83, 0
      %s86 = sadd.s32 %s85, 1
      %s87 = scalar_select %p84, %s85, %s86
      %p90 = pneg %p84
      %p91 = scmp.eq.s32.totalorder %s33, 1
      %p92 = por %p90, %p91
      %p93 = scmp.ne.s32.totalorder %s85, %s88
      %p94 = scmp.eq.s32.totalorder %s33, 0
      %p95 = por %p93, %p94
      %p96 = scmp.ne.s32.totalorder %s85, %s88
      %p97 = scmp.eq.s32.totalorder %s38, 1
      %p98 = por %p96, %p97
      %p99 = scmp.ne.s32.totalorder %s88, %s89
      %p100 = scmp.eq.s32.totalorder %s38, 0
      %p101 = por %p99, %p100
      %p102 = scmp.ne.s32.totalorder %s88, %s89
      %p103 = scmp.eq.s32.totalorder %s39, 1
      %p104 = por %p102, %p103
      %p106 = scmp.ne.s32.totalorder %s89, %s105
      %p107 = scmp.eq.s32.totalorder %s39, 0
      %p108 = por %p106, %p107
      %s109 = ssub.s32 %s33, %s40
      %p110 = scmp.eq.s32.totalorder %s109, 0
      %s112 = sadd.s32 %s111, 1
      %s113 = scalar_select %p110, %s111, %s112
      %p116 = pneg %p110
      %p117 = scmp.eq.s32.totalorder %s33, 1
      %p118 = por %p116, %p117
      %p119 = scmp.ne.s32.totalorder %s111, %s114
      %p120 = scmp.eq.s32.totalorder %s33, 0
      %p121 = por %p119, %p120
      %p122 = scmp.ne.s32.totalorder %s111, %s114
      %p123 = scmp.eq.s32.totalorder %s38, 1
      %p124 = por %p122, %p123
      %p125 = scmp.ne.s32.totalorder %s114, %s115
      %p126 = scmp.eq.s32.totalorder %s38, 0
      %p127 = por %p125, %p126
      %p128 = scmp.ne.s32.totalorder %s114, %s115
      %p129 = scmp.eq.s32.totalorder %s39, 1
      %p130 = por %p128, %p129
      %p132 = scmp.ne.s32.totalorder %s115, %s131
      %p133 = scmp.eq.s32.totalorder %s39, 0
      %p134 = por %p132, %p133
      %s135 = ssub.s32 %s33, %s40
      %p136 = scmp.eq.s32.totalorder %s135, 0
      %s138 = sadd.s32 %s137, 1
      %s139 = scalar_select %p136, %s137, %s138
      %p142 = pneg %p136
      %p143 = scmp.eq.s32.totalorder %s33, 1
      %p144 = por %p142, %p143
      %p145 = scmp.ne.s32.totalorder %s137, %s140
      %p146 = scmp.eq.s32.totalorder %s33, 0
      %p147 = por %p145, %p146
      %p148 = scmp.ne.s32.totalorder %s137, %s140
      %p149 = scmp.eq.s32.totalorder %s38, 1
      %p150 = por %p148, %p149
      %p151 = scmp.ne.s32.totalorder %s140, %s141
      %p152 = scmp.eq.s32.totalorder %s38, 0
      %p153 = por %p151, %p152
      %p154 = scmp.ne.s32.totalorder %s140, %s141
      %p155 = scmp.eq.s32.totalorder %s39, 1
      %p156 = por %p154, %p155
      %p158 = scmp.ne.s32.totalorder %s141, %s157
      %p159 = scmp.eq.s32.totalorder %s39, 0
      %p160 = por %p158, %p159
      %s162 = sadd.s32 %s161, 1
      %p165 = scmp.eq.s32.totalorder %s33, 1
      %p166 = scmp.ne.s32.totalorder %s161, %s163
      %p167 = scmp.eq.s32.totalorder %s33, 0
      %p168 = por %p166, %p167
      %p169 = scmp.ne.s32.totalorder %s161, %s163
      %p170 = scmp.eq.s32.totalorder %s38, 1
      %p171 = por %p169, %p170
      %p172 = scmp.ne.s32.totalorder %s163, %s164
      %p173 = scmp.eq.s32.totalorder %s38, 0
      %p174 = por %p172, %p173
      %p175 = scmp.ne.s32.totalorder %s163, %s164
      %p176 = scmp.eq.s32.totalorder %s39, 1
      %p177 = por %p175, %p176
      %p179 = scmp.ne.s32.totalorder %s164, %s178
      %p180 = scmp.eq.s32.totalorder %s39, 0
      %p181 = por %p179, %p180
      %s183 = sadd.s32 %s182, 1
      %p186 = scmp.eq.s32.totalorder %s33, 1
      %p187 = scmp.ne.s32.totalorder %s182, %s184
      %p188 = scmp.eq.s32.totalorder %s33, 0
      %p189 = por %p187, %p188
      %p190 = scmp.ne.s32.totalorder %s182, %s184
      %p191 = scmp.eq.s32.totalorder %s38, 1
      %p192 = por %p190, %p191
      %p193 = scmp.ne.s32.totalorder %s184, %s185
      %p194 = scmp.eq.s32.totalorder %s38, 0
      %p195 = por %p193, %p194
      %p196 = scmp.ne.s32.totalorder %s184, %s185
      %p197 = scmp.eq.s32.totalorder %s39, 1
      %p198 = por %p196, %p197
      %p200 = scmp.ne.s32.totalorder %s185, %s199
      %p201 = scmp.eq.s32.totalorder %s39, 0
      %p202 = por %p200, %p201
      %s204 = sadd.s32 %s203, 1
      %p207 = scmp.eq.s32.totalorder %s33, 1
      %p208 = scmp.ne.s32.totalorder %s203, %s205
      %p209 = scmp.eq.s32.totalorder %s33, 0
      %p210 = por %p208, %p209
      %p211 = scmp.ne.s32.totalorder %s203, %s205
      %p212 = scmp.eq.s32.totalorder %s38, 1
      %p213 = por %p211, %p212
      %p214 = scmp.ne.s32.totalorder %s205, %s206
      %p215 = scmp.eq.s32.totalorder %s38, 0
      %p216 = por %p214, %p215
      %p217 = scmp.ne.s32.totalorder %s205, %s206
      %p218 = scmp.eq.s32.totalorder %s39, 1
      %p219 = por %p217, %p218
      %p221 = scmp.ne.s32.totalorder %s206, %s220
      %p222 = scmp.eq.s32.totalorder %s39, 0
      %p223 = por %p221, %p222
      %s225 = sadd.s32 %s224, 1
      %p228 = scmp.eq.s32.totalorder %s33, 1
      %p229 = scmp.ne.s32.totalorder %s224, %s226
      %p230 = scmp.eq.s32.totalorder %s33, 0
      %p231 = por %p229, %p230
      %p232 = scmp.ne.s32.totalorder %s224, %s226
      %p233 = scmp.eq.s32.totalorder %s38, 1
      %p234 = por %p232, %p233
      %p235 = scmp.ne.s32.totalorder %s226, %s227
      %p236 = scmp.eq.s32.totalorder %s38, 0
      %p237 = por %p235, %p236
      %p238 = scmp.ne.s32.totalorder %s226, %s227
      %p239 = scmp.eq.s32.totalorder %s39, 1
      %p240 = por %p238, %p239
      %p242 = scmp.ne.s32.totalorder %s227, %s241
      %p243 = scmp.eq.s32.totalorder %s39, 0
      %p244 = por %p242, %p243
      %s246 = sadd.s32 %s245, 1
      %p249 = scmp.eq.s32.totalorder %s33, 1
      %p250 = scmp.ne.s32.totalorder %s245, %s247
      %p251 = scmp.eq.s32.totalorder %s33, 0
      %p252 = por %p250, %p251
      %p253 = scmp.ne.s32.totalorder %s245, %s247
      %p254 = scmp.eq.s32.totalorder %s38, 1
      %p255 = por %p253, %p254
      %p256 = scmp.ne.s32.totalorder %s247, %s248
      %p257 = scmp.eq.s32.totalorder %s38, 0
      %p258 = por %p256, %p257
      %p259 = scmp.ne.s32.totalorder %s247, %s248
      %p260 = scmp.eq.s32.totalorder %s39, 1
      %p261 = por %p259, %p260
      %p263 = scmp.ne.s32.totalorder %s248, %s262
      %p264 = scmp.eq.s32.totalorder %s39, 0
      %p265 = por %p263, %p264
      %s267 = sadd.s32 %s266, 1
      %p270 = scmp.eq.s32.totalorder %s33, 1
      %p271 = scmp.ne.s32.totalorder %s266, %s268
      %p272 = scmp.eq.s32.totalorder %s33, 0
      %p273 = por %p271, %p272
      %p274 = scmp.ne.s32.totalorder %s266, %s268
      %p275 = scmp.eq.s32.totalorder %s38, 1
      %p276 = por %p274, %p275
      %p277 = scmp.ne.s32.totalorder %s268, %s269
      %p278 = scmp.eq.s32.totalorder %s38, 0
      %p279 = por %p277, %p278
      %p280 = scmp.ne.s32.totalorder %s268, %s269
      %p281 = scmp.eq.s32.totalorder %s39, 1
      %p282 = por %p280, %p281
      %p284 = scmp.ne.s32.totalorder %s269, %s283
      %p285 = scmp.eq.s32.totalorder %s39, 0
      %p286 = por %p284, %p285
      %s288 = sadd.s32 %s287, 1
      %p291 = scmp.eq.s32.totalorder %s33, 1
      %p292 = scmp.ne.s32.totalorder %s287, %s289
      %p293 = scmp.eq.s32.totalorder %s33, 0
      %p294 = por %p292, %p293
      %p295 = scmp.ne.s32.totalorder %s287, %s289
      %p296 = scmp.eq.s32.totalorder %s38, 1
      %p297 = por %p295, %p296
      %p298 = scmp.ne.s32.totalorder %s289, %s290
      %p299 = scmp.eq.s32.totalorder %s38, 0
      %p300 = por %p298, %p299
      %p301 = scmp.ne.s32.totalorder %s289, %s290
      %p302 = scmp.eq.s32.totalorder %s39, 1
      %p303 = por %p301, %p302
      %p305 = scmp.ne.s32.totalorder %s290, %s304
      %p306 = scmp.eq.s32.totalorder %s39, 0
      %p307 = por %p305, %p306
      %s309 = sadd.s32 %s308, 1
      %p312 = scmp.eq.s32.totalorder %s33, 1
      %p313 = scmp.ne.s32.totalorder %s308, %s310
      %p314 = scmp.eq.s32.totalorder %s33, 0
      %p315 = por %p313, %p314
      %p316 = scmp.ne.s32.totalorder %s308, %s310
      %p317 = scmp.eq.s32.totalorder %s38, 1
      %p318 = por %p316, %p317
      %p319 = scmp.ne.s32.totalorder %s310, %s311
      %p320 = scmp.eq.s32.totalorder %s38, 0
      %p321 = por %p319, %p320
      %p322 = scmp.ne.s32.totalorder %s310, %s311
      %p323 = scmp.eq.s32.totalorder %s39, 1
      %p324 = por %p322, %p323
      %p326 = scmp.ne.s32.totalorder %s311, %s325
      %p327 = scmp.eq.s32.totalorder %s39, 0
      %p328 = por %p326, %p327
      %s330 = sadd.s32 %s329, 1
      %p333 = scmp.eq.s32.totalorder %s33, 1
      %p334 = scmp.ne.s32.totalorder %s329, %s331
      %p335 = scmp.eq.s32.totalorder %s33, 0
      %p336 = por %p334, %p335
      %p337 = scmp.ne.s32.totalorder %s329, %s331
      %p338 = scmp.eq.s32.totalorder %s38, 1
      %p339 = por %p337, %p338
      %p340 = scmp.ne.s32.totalorder %s331, %s332
      %p341 = scmp.eq.s32.totalorder %s38, 0
      %p342 = por %p340, %p341
      %p343 = scmp.ne.s32.totalorder %s331, %s332
      %p344 = scmp.eq.s32.totalorder %s39, 1
      %p345 = por %p343, %p344
      %p347 = scmp.ne.s32.totalorder %s332, %s346
      %p348 = scmp.eq.s32.totalorder %s39, 0
      %p349 = por %p347, %p348
      %s351 = sadd.s32 %s350, 1
      %p354 = scmp.eq.s32.totalorder %s33, 1
      %p355 = scmp.ne.s32.totalorder %s350, %s352
      %p356 = scmp.eq.s32.totalorder %s33, 0
      %p357 = por %p355, %p356
      %p358 = scmp.ne.s32.totalorder %s350, %s352
      %p359 = scmp.eq.s32.totalorder %s38, 1
      %p360 = por %p358, %p359
      %p361 = scmp.ne.s32.totalorder %s352, %s353
      %p362 = scmp.eq.s32.totalorder %s38, 0
      %p363 = por %p361, %p362
      %p364 = scmp.ne.s32.totalorder %s352, %s353
      %p365 = scmp.eq.s32.totalorder %s39, 1
      %p366 = por %p364, %p365
      %p368 = scmp.ne.s32.totalorder %s353, %s367
      %p369 = scmp.eq.s32.totalorder %s39, 0
      %p370 = por %p368, %p369
      %s372 = sadd.s32 %s371, 1
      %p375 = scmp.eq.s32.totalorder %s33, 1
      %p376 = scmp.ne.s32.totalorder %s371, %s373
      %p377 = scmp.eq.s32.totalorder %s33, 0
      %p378 = por %p376, %p377
      %p379 = scmp.ne.s32.totalorder %s371, %s373
      %p380 = scmp.eq.s32.totalorder %s38, 1
      %p381 = por %p379, %p380
      %p382 = scmp.ne.s32.totalorder %s373, %s374
      %p383 = scmp.eq.s32.totalorder %s38, 0
      %p384 = por %p382, %p383
      %p385 = scmp.ne.s32.totalorder %s373, %s374
      %p386 = scmp.eq.s32.totalorder %s39, 1
      %p387 = por %p385, %p386
      %p389 = scmp.ne.s32.totalorder %s374, %s388
      %p390 = scmp.eq.s32.totalorder %s39, 0
      %p391 = por %p389, %p390
      %s393 = sadd.s32 %s392, 1
      %p396 = scmp.eq.s32.totalorder %s33, 1
      %p397 = scmp.ne.s32.totalorder %s392, %s394
      %p398 = scmp.eq.s32.totalorder %s33, 0
      %p399 = por %p397, %p398
      %p400 = scmp.ne.s32.totalorder %s392, %s394
      %p401 = scmp.eq.s32.totalorder %s38, 1
      %p402 = por %p400, %p401
      %p403 = scmp.ne.s32.totalorder %s394, %s395
      %p404 = scmp.eq.s32.totalorder %s38, 0
      %p405 = por %p403, %p404
      %p406 = scmp.ne.s32.totalorder %s394, %s395
      %p407 = scmp.eq.s32.totalorder %s39, 1
      %p408 = por %p406, %p407
      %p410 = scmp.ne.s32.totalorder %s395, %s409
      %p411 = scmp.eq.s32.totalorder %s39, 0
      %p412 = por %p410, %p411
      %s414 = sadd.s32 %s413, 1
      %p417 = scmp.eq.s32.totalorder %s33, 1
      %p418 = scmp.ne.s32.totalorder %s413, %s415
      %p419 = scmp.eq.s32.totalorder %s33, 0
      %p420 = por %p418, %p419
      %p421 = scmp.ne.s32.totalorder %s413, %s415
      %p422 = scmp.eq.s32.totalorder %s38, 1
      %p423 = por %p421, %p422
      %p424 = scmp.ne.s32.totalorder %s415, %s416
      %p425 = scmp.eq.s32.totalorder %s38, 0
      %p426 = por %p424, %p425
      %p427 = scmp.ne.s32.totalorder %s415, %s416
      %p428 = scmp.eq.s32.totalorder %s39, 1
      %p429 = por %p427, %p428
      %p431 = scmp.ne.s32.totalorder %s416, %s430
      %p432 = scmp.eq.s32.totalorder %s39, 0
      %p433 = por %p431, %p432
      %s435 = sadd.s32 %s434, 1
      %p438 = scmp.eq.s32.totalorder %s33, 1
      %p439 = scmp.ne.s32.totalorder %s434, %s436
      %p440 = scmp.eq.s32.totalorder %s33, 0
      %p441 = por %p439, %p440
      %p442 = scmp.ne.s32.totalorder %s434, %s436
      %p443 = scmp.eq.s32.totalorder %s38, 1
      %p444 = por %p442, %p443
      %p445 = scmp.ne.s32.totalorder %s436, %s437
      %p446 = scmp.eq.s32.totalorder %s38, 0
      %p447 = por %p445, %p446
      %p448 = scmp.ne.s32.totalorder %s436, %s437
      %p449 = scmp.eq.s32.totalorder %s39, 1
      %p450 = por %p448, %p449
      %p452 = scmp.ne.s32.totalorder %s437, %s451
      %p453 = scmp.eq.s32.totalorder %s39, 0
      %p454 = por %p452, %p453
      %s456 = sadd.s32 %s455, 1
      %p459 = scmp.eq.s32.totalorder %s33, 1
      %p460 = scmp.ne.s32.totalorder %s455, %s457
      %p461 = scmp.eq.s32.totalorder %s33, 0
      %p462 = por %p460, %p461
      %p463 = scmp.ne.s32.totalorder %s455, %s457
      %p464 = scmp.eq.s32.totalorder %s38, 1
      %p465 = por %p463, %p464
      %p466 = scmp.ne.s32.totalorder %s457, %s458
      %p467 = scmp.eq.s32.totalorder %s38, 0
      %p468 = por %p466, %p467
      %p469 = scmp.ne.s32.totalorder %s457, %s458
      %p470 = scmp.eq.s32.totalorder %s39, 1
      %p471 = por %p469, %p470
      %p473 = scmp.ne.s32.totalorder %s458, %s472
      %p474 = scmp.eq.s32.totalorder %s39, 0
      %p475 = por %p473, %p474
      %s477 = sadd.s32 %s476, 1
      %p480 = scmp.eq.s32.totalorder %s33, 1
      %p481 = scmp.ne.s32.totalorder %s476, %s478
      %p482 = scmp.eq.s32.totalorder %s33, 0
      %p483 = por %p481, %p482
      %p484 = scmp.ne.s32.totalorder %s476, %s478
      %p485 = scmp.eq.s32.totalorder %s38, 1
      %p486 = por %p484, %p485
      %p487 = scmp.ne.s32.totalorder %s478, %s479
      %p488 = scmp.eq.s32.totalorder %s38, 0
      %p489 = por %p487, %p488
      %p490 = scmp.ne.s32.totalorder %s478, %s479
      %p491 = scmp.eq.s32.totalorder %s39, 1
      %p492 = por %p490, %p491
      %p494 = scmp.ne.s32.totalorder %s479, %s493
      %p495 = scmp.eq.s32.totalorder %s39, 0
      %p496 = por %p494, %p495
      %s498 = sadd.s32 %s497, 1
      %p501 = scmp.eq.s32.totalorder %s33, 1
      %p502 = scmp.ne.s32.totalorder %s497, %s499
      %p503 = scmp.eq.s32.totalorder %s33, 0
      %p504 = por %p502, %p503
      %p505 = scmp.ne.s32.totalorder %s497, %s499
      %p506 = scmp.eq.s32.totalorder %s38, 1
      %p507 = por %p505, %p506
      %p508 = scmp.ne.s32.totalorder %s499, %s500
      %p509 = scmp.eq.s32.totalorder %s38, 0
      %p510 = por %p508, %p509
      %p511 = scmp.ne.s32.totalorder %s499, %s500
      %p512 = scmp.eq.s32.totalorder %s39, 1
      %p513 = por %p511, %p512
      %p515 = scmp.ne.s32.totalorder %s500, %s514
      %p516 = scmp.eq.s32.totalorder %s39, 0
      %p517 = por %p515, %p516
      %s518 = ssub.s32 %s33, %s40
      %p519 = scmp.eq.s32.totalorder %s518, 0
      %s521 = sadd.s32 %s520, 1
      %s522 = scalar_select %p519, %s520, %s521
      %p525 = pneg %p519
      %p526 = scmp.eq.s32.totalorder %s33, 1
      %p527 = por %p525, %p526
      %p528 = scmp.ne.s32.totalorder %s520, %s523
      %p529 = scmp.eq.s32.totalorder %s33, 0
      %p530 = por %p528, %p529
      %p531 = scmp.ne.s32.totalorder %s520, %s523
      %p532 = scmp.eq.s32.totalorder %s38, 1
      %p533 = por %p531, %p532
      %p534 = scmp.ne.s32.totalorder %s523, %s524
      %p535 = scmp.eq.s32.totalorder %s38, 0
      %p536 = por %p534, %p535
      %p537 = scmp.ne.s32.totalorder %s523, %s524
      %p538 = scmp.eq.s32.totalorder %s39, 1
      %p539 = por %p537, %p538
      %p541 = scmp.ne.s32.totalorder %s524, %s540
      %p542 = scmp.eq.s32.totalorder %s39, 0
      %p543 = por %p541, %p542
      %p544 = scmp.le.s32.totalorder 1, %s33
      %p545 = scmp.lt.s32.totalorder %s33, 3
      %p546 = pnand %p544, %p545
      %p547 = pneg %p546
      // Predicated region
      $region9: #{vit_forward.3} parent=5 // pred_check
        _
      $region10: #{vit_forward.3} parent=5 // pred_check_branch
        %549 = sbr.rel (%p546) target = $region12
      $region11: #{vit_forward.3} parent=5 // pred_region
        %s550 = ssub.s32 %s33, 1
        // Predicated region
        $region13: #{vit_forward.3} parent=11 // pred_check
          %p551 = pneg %p54
        $region14: #{vit_forward.3} parent=11 // pred_check_branch
          %553 = sbr.rel (%p551) target = $region16
        $region15: #{vit_forward.3} parent=11 // pred_region
          %s555 = ssub.s32 16, 16
          %556 = vsyncadd [#allocation4], %s555
          %s558 = sshll.u32 %s0, 4
          %s559 = int_to_ptr.vmem [resolvable:$true] %s558
          %561 = dma.vmem_to_smem %s559, 16, [#allocation2], [#allocation4]
        $region16: #{vit_forward.3} parent=11 // pred_fallthru
          _
        // Predicated region
        $region17: #{vit_forward.3} parent=11 // pred_check
          %p562 = pneg %p75
        $region18: #{vit_forward.3} parent=11 // pred_check_branch
          %564 = sbr.rel (%p562) target = $region20
        $region19: #{vit_forward.3} parent=11 // pred_region
          %s566 = ssub.s32 16, 16
          %567 = vsyncadd [#allocation6], %s566
          %s569 = sshll.u32 %s1, 4
          %s570 = int_to_ptr.vmem [resolvable:$true] %s569
          %572 = dma.vmem_to_smem %s570, 16, [#allocation5], [#allocation6]
        $region20: #{vit_forward.3} parent=11 // pred_fallthru
          _
        // Predicated region
        $region21: #{vit_forward.3} parent=11 // pred_check
          %p573 = pneg %p174
        $region22: #{vit_forward.3} parent=11 // pred_check_branch
          %575 = sbr.rel (%p573) target = $region24
        $region23: #{vit_forward.3} parent=11 // pred_region
          _
        $region24: #{vit_forward.3} parent=11 // pred_fallthru
          _
        // Predicated region
        $region25: #{vit_forward.3} parent=11 // pred_check
          %p576 = pneg %p195
        $region26: #{vit_forward.3} parent=11 // pred_check_branch
          %578 = sbr.rel (%p576) target = $region28
        $region27: #{vit_forward.3} parent=11 // pred_region
          _
        $region28: #{vit_forward.3} parent=11 // pred_fallthru
          _
        // Predicated region
        $region29: #{vit_forward.3} parent=11 // pred_check
          %p579 = pneg %p216
        $region30: #{vit_forward.3} parent=11 // pred_check_branch
          %581 = sbr.rel (%p579) target = $region32
        $region31: #{vit_forward.3} parent=11 // pred_region
          _
        $region32: #{vit_forward.3} parent=11 // pred_fallthru
          _
        // Predicated region
        $region33: #{vit_forward.3} parent=11 // pred_check
          %p582 = pneg %p237
        $region34: #{vit_forward.3} parent=11 // pred_check_branch
          %584 = sbr.rel (%p582) target = $region36
        $region35: #{vit_forward.3} parent=11 // pred_region
          _
        $region36: #{vit_forward.3} parent=11 // pred_fallthru
          _
        // Predicated region
        $region37: #{vit_forward.3} parent=11 // pred_check
          %p585 = pneg %p258
        $region38: #{vit_forward.3} parent=11 // pred_check_branch
          %587 = sbr.rel (%p585) target = $region40
        $region39: #{vit_forward.3} parent=11 // pred_region
          _
        $region40: #{vit_forward.3} parent=11 // pred_fallthru
          _
        // Predicated region
        $region41: #{vit_forward.3} parent=11 // pred_check
          %p588 = pneg %p279
        $region42: #{vit_forward.3} parent=11 // pred_check_branch
          %590 = sbr.rel (%p588) target = $region44
        $region43: #{vit_forward.3} parent=11 // pred_region
          _
        $region44: #{vit_forward.3} parent=11 // pred_fallthru
          _
        // Predicated region
        $region45: #{vit_forward.3} parent=11 // pred_check
          %p591 = pneg %p300
        $region46: #{vit_forward.3} parent=11 // pred_check_branch
          %593 = sbr.rel (%p591) target = $region48
        $region47: #{vit_forward.3} parent=11 // pred_region
          _
        $region48: #{vit_forward.3} parent=11 // pred_fallthru
          _
        // Predicated region
        $region49: #{vit_forward.3} parent=11 // pred_check
          %p594 = pneg %p321
        $region50: #{vit_forward.3} parent=11 // pred_check_branch
          %596 = sbr.rel (%p594) target = $region52
        $region51: #{vit_forward.3} parent=11 // pred_region
          _
        $region52: #{vit_forward.3} parent=11 // pred_fallthru
          _
        // Predicated region
        $region53: #{vit_forward.3} parent=11 // pred_check
          %p597 = pneg %p342
        $region54: #{vit_forward.3} parent=11 // pred_check_branch
          %599 = sbr.rel (%p597) target = $region56
        $region55: #{vit_forward.3} parent=11 // pred_region
          _
        $region56: #{vit_forward.3} parent=11 // pred_fallthru
          _
        // Predicated region
        $region57: #{vit_forward.3} parent=11 // pred_check
          %p600 = pneg %p363
        $region58: #{vit_forward.3} parent=11 // pred_check_branch
          %602 = sbr.rel (%p600) target = $region60
        $region59: #{vit_forward.3} parent=11 // pred_region
          _
        $region60: #{vit_forward.3} parent=11 // pred_fallthru
          _
        // Predicated region
        $region61: #{vit_forward.3} parent=11 // pred_check
          %p603 = pneg %p384
        $region62: #{vit_forward.3} parent=11 // pred_check_branch
          %605 = sbr.rel (%p603) target = $region64
        $region63: #{vit_forward.3} parent=11 // pred_region
          _
        $region64: #{vit_forward.3} parent=11 // pred_fallthru
          _
        // Predicated region
        $region65: #{vit_forward.3} parent=11 // pred_check
          %p606 = pneg %p405
        $region66: #{vit_forward.3} parent=11 // pred_check_branch
          %608 = sbr.rel (%p606) target = $region68
        $region67: #{vit_forward.3} parent=11 // pred_region
          _
        $region68: #{vit_forward.3} parent=11 // pred_fallthru
          _
        // Predicated region
        $region69: #{vit_forward.3} parent=11 // pred_check
          %p609 = pneg %p426
        $region70: #{vit_forward.3} parent=11 // pred_check_branch
          %611 = sbr.rel (%p609) target = $region72
        $region71: #{vit_forward.3} parent=11 // pred_region
          _
        $region72: #{vit_forward.3} parent=11 // pred_fallthru
          _
        // Predicated region
        $region73: #{vit_forward.3} parent=11 // pred_check
          %p612 = pneg %p447
        $region74: #{vit_forward.3} parent=11 // pred_check_branch
          %614 = sbr.rel (%p612) target = $region76
        $region75: #{vit_forward.3} parent=11 // pred_region
          _
        $region76: #{vit_forward.3} parent=11 // pred_fallthru
          _
        // Predicated region
        $region77: #{vit_forward.3} parent=11 // pred_check
          %p615 = pneg %p468
        $region78: #{vit_forward.3} parent=11 // pred_check_branch
          %617 = sbr.rel (%p615) target = $region80
        $region79: #{vit_forward.3} parent=11 // pred_region
          _
        $region80: #{vit_forward.3} parent=11 // pred_fallthru
          _
        // Predicated region
        $region81: #{vit_forward.3} parent=11 // pred_check
          %p618 = pneg %p489
        $region82: #{vit_forward.3} parent=11 // pred_check_branch
          %620 = sbr.rel (%p618) target = $region84
        $region83: #{vit_forward.3} parent=11 // pred_region
          _
        $region84: #{vit_forward.3} parent=11 // pred_fallthru
          _
        // Predicated region
        $region85: #{vit_forward.3} parent=11 // pred_check
          %p621 = pneg %p510
        $region86: #{vit_forward.3} parent=11 // pred_check_branch
          %623 = sbr.rel (%p621) target = $region88
        $region87: #{vit_forward.3} parent=11 // pred_region
          _
        $region88: #{vit_forward.3} parent=11 // pred_fallthru
          _
      $region12: #{vit_forward.3} parent=5 // pred_fallthru
        _
      %p624 = scmp.lt.s32.totalorder %s33, 2
      // Predicated region
      $region89: #{vit_forward.3} parent=5 // pred_check
        %p625 = pneg %p624
      $region90: #{vit_forward.3} parent=5 // pred_check_branch
        %627 = sbr.rel (%p625) target = $region92
      $region91: #{vit_forward.3} parent=5 // pred_region
        // Predicated region
        $region93: #{vit_forward.3} parent=91 // pred_check
          %p628 = pneg %p95
        $region94: #{vit_forward.3} parent=91 // pred_check_branch
          %630 = sbr.rel (%p628) target = $region96
        $region95: #{vit_forward.3} parent=91 // pred_region
          %p631 = scmp.lt.s32.totalorder %s33, 1
          %s632 = scalar_select %p631, %s33, 1
          %s633 = smul.addr %s632, 8
          %s634 = scalar_lea.vmem %s2, %s633
        $region96: #{vit_forward.3} parent=91 // pred_fallthru
          _
        // Predicated region
        $region97: #{vit_forward.3} parent=91 // pred_check
          %p635 = pneg %p121
        $region98: #{vit_forward.3} parent=91 // pred_check_branch
          %637 = sbr.rel (%p635) target = $region100
        $region99: #{vit_forward.3} parent=91 // pred_region
          %p638 = scmp.lt.s32.totalorder %s33, 1
          %s639 = scalar_select %p638, %s33, 1
          %s640 = smul.addr %s639, 8
          %s641 = scalar_lea.vmem %s3, %s640
        $region100: #{vit_forward.3} parent=91 // pred_fallthru
          _
        // Predicated region
        $region101: #{vit_forward.3} parent=91 // pred_check
          %p642 = pneg %p147
        $region102: #{vit_forward.3} parent=91 // pred_check_branch
          %644 = sbr.rel (%p642) target = $region104
        $region103: #{vit_forward.3} parent=91 // pred_region
          %p645 = scmp.lt.s32.totalorder %s33, 1
          %s646 = scalar_select %p645, %s33, 1
          %s647 = scalar_lea.vmem %s4, %s646
        $region104: #{vit_forward.3} parent=91 // pred_fallthru
          _
      $region92: #{vit_forward.3} parent=5 // pred_fallthru
        _
      %p648 = scmp.le.s32.totalorder 1, %s33
      %p649 = scmp.lt.s32.totalorder %s33, 3
      %p650 = pnand %p648, %p649
      %p651 = pneg %p650
      // Predicated region
      $region105: #{vit_forward.3} parent=5 // pred_check
        _
      $region106: #{vit_forward.3} parent=5 // pred_check_branch
        %653 = sbr.rel (%p650) target = $region108
      $region107: #{vit_forward.3} parent=5 // pred_region
        %s654 = ssub.s32 %s33, 1
        // Predicated region
        $region109: #{vit_forward.3} parent=107 // pred_check
          %p655 = pneg %p54
        $region110: #{vit_forward.3} parent=107 // pred_check_branch
          %657 = sbr.rel (%p655) target = $region112
        $region111: #{vit_forward.3} parent=107 // pred_region
          %658 = dma.done [#allocation4], 16
        $region112: #{vit_forward.3} parent=107 // pred_fallthru
          _
        // Predicated region
        $region113: #{vit_forward.3} parent=107 // pred_check
          %p659 = pneg %p75
        $region114: #{vit_forward.3} parent=107 // pred_check_branch
          %661 = sbr.rel (%p659) target = $region116
        $region115: #{vit_forward.3} parent=107 // pred_region
          %662 = dma.done [#allocation6], 16
        $region116: #{vit_forward.3} parent=107 // pred_fallthru
          _
        %663 = sfence
        %p664 = pneg %p54
        %p665 = pneg %p51
        %p666 = pneg %p75
        %p667 = pneg %p72
        %p668 = scmp.lt.s32.totalorder %s38, 1
        %s669 = scalar_select %p668, %s38, 1
        %s670 = smul.addr %s669, 8
        %s671 = scalar_lea.vmem %s2, %s670
        %p672 = pneg %p101
        %p673 = pneg %p98
        %p674 = scmp.lt.s32.totalorder %s38, 1
        %s675 = scalar_select %p674, %s38, 1
        %s676 = smul.addr %s675, 8
        %s677 = scalar_lea.vmem %s3, %s676
        %p678 = pneg %p127
        %p679 = pneg %p124
        %p680 = scmp.lt.s32.totalorder %s38, 1
        %s681 = scalar_select %p680, %s38, 1
        %s682 = scalar_lea.vmem %s4, %s681
        %p683 = pneg %p153
        %p684 = pneg %p150
        %p685 = pneg %p174
        %p686 = pneg %p171
        %p687 = pneg %p195
        %p688 = pneg %p192
        %p689 = pneg %p216
        %p690 = pneg %p213
        %p691 = pneg %p237
        %p692 = pneg %p234
        %p693 = pneg %p258
        %p694 = pneg %p255
        %p695 = pneg %p279
        %p696 = pneg %p276
        %p697 = pneg %p300
        %p698 = pneg %p297
        %p699 = pneg %p321
        %p700 = pneg %p318
        %p701 = pneg %p342
        %p702 = pneg %p339
        %p703 = pneg %p363
        %p704 = pneg %p360
        %p705 = pneg %p384
        %p706 = pneg %p381
        %p707 = pneg %p405
        %p708 = pneg %p402
        %p709 = pneg %p426
        %p710 = pneg %p423
        %p711 = pneg %p447
        %p712 = pneg %p444
        %p713 = pneg %p468
        %p714 = pneg %p465
        %p715 = pneg %p489
        %p716 = pneg %p486
        %p717 = pneg %p510
        %p718 = pneg %p507
        %p719 = pneg %p536
        %p720 = pneg %p533
        %s721 = sand.u32 %s523, 1
        %s722 = scalar_lea.sflag [#allocation3], %s721
        %s723 = sand.u32 %s523, 1
        %s724 = scalar_lea.vmem [#allocation7], %s723
        %p725 = scmp.lt.s32.totalorder %s38, 1
        %s726 = scalar_select %p725, %s38, 1
        %s727 = smul.addr %s726, 8
        %s728 = scalar_lea.vmem %s2, %s727
        %p729 = scmp.lt.s32.totalorder %s38, 1
        %s730 = scalar_select %p729, %s38, 1
        %s731 = smul.addr %s730, 8
        %s732 = scalar_lea.vmem %s3, %s731
        %p733 = scmp.lt.s32.totalorder %s38, 1
        %s734 = scalar_select %p733, %s38, 1
        %s735 = scalar_lea.vmem %s4, %s734
        %v737 = vld [vmem:[%s728] sm:$0xff]
        %v738 = vld [vmem:[%s5] sm:$0xff]
        %v739 = vadd.f32 %v737, %v738
        %v740 = vld [vmem:[%s732] sm:$0xff]
        %v741 = vld [vmem:[%s735] sm:$0x1]
        %vm742 = vcmp.eq.f32.partialorder %v740, 1.0
        %v743 = vsel %vm742, 1, 0
        %v744 = vcvt.s32.f32 %v743
        %vm745 = vcmp.eq.f32.partialorder %v740, 2.0
        %v746 = vsel %vm745, 1, 0
        %v747 = vcvt.s32.f32 %v746
        %vm748 = vcmp.eq.f32.partialorder %v741, 1.0
        %v749 = vsel %vm748, 1, 0
        %v750 = vcvt.s32.f32 %v749
        %vm751 = vcmp.eq.f32.partialorder %v741, 2.0
        %v752 = vsel %vm751, 1, 0
        %v753 = vcvt.s32.f32 %v752
        %s754 = sld [smem:[#allocation2]]
        %s755 = sld [smem:[#allocation5]]
        %v756 = vld [vmem:[%s6] sm:$0x1]
        %v757 = vld [vmem:[%s7] sm:$0x1]
        %758 = vadd.xlane.f32.xlu0 %v739
        %v759 = vpop.xlane.xlu0 %758
        %v760 = vrcp.pop 128.0
        %v761 = vmul.f32 %v759, %v760
        %v762 = vsub.f32 %v739, %v761
        %v763 = vmul.f32 %v762, %v762
        %764 = vadd.xlane.f32.xlu0 %v763
        %v765 = vpop.xlane.xlu0 %764
        %v766 = vmul.f32 %v765, %v760
        %v767 = vadd.f32 %v766, 1e-06
        %v768 = vrsqrt.pop %v767
        %v769 = vmul.f32 %v762, %v768
        %v771 = vlaneseq
        %v772 = vshrl.u32 %v771, 7
        %v773 = vsub.s32 0, %v772
        %v774 = vrot.slane %v756, %v773
        %v776 = vmul.f32 %v769, %v774
        %v778 = vlaneseq
        %v779 = vshrl.u32 %v778, 7
        %v780 = vsub.s32 0, %v779
        %v781 = vrot.slane %v757, %v780
        %v783 = vadd.f32 %v776, %v781
        %v784 = vpack.c.bf16 %v783, %v783
        %v785 = vld [vmem:[%s8] sm:$0xff]
        %v786 = vld [vmem:[%s8 + $0x8] sm:$0xf]
        %v787 = vld [vmem:[%s8 + $0xc] sm:$0xff]
        %v788 = vld [vmem:[%s8 + $0x14] sm:$0xf]
        %v789 = vld [vmem:[%s8 + $0x18] sm:$0xff]
        %v790 = vld [vmem:[%s8 + $0x20] sm:$0xf]
        %v791 = vld [vmem:[%s8 + $0x24] sm:$0xff]
        %v792 = vld [vmem:[%s8 + $0x2c] sm:$0xf]
        %v793 = vld [vmem:[%s8 + $0x30] sm:$0xff]
        %v794 = vld [vmem:[%s8 + $0x38] sm:$0xf]
        %v795 = vld [vmem:[%s8 + $0x3c] sm:$0xff]
        %v796 = vld [vmem:[%s8 + $0x44] sm:$0xf]
        %v797 = vld [vmem:[%s8 + $0x48] sm:$0xff]
        %v798 = vld [vmem:[%s8 + $0x50] sm:$0xf]
        %v799 = vld [vmem:[%s8 + $0x54] sm:$0xff]
        %v800 = vld [vmem:[%s8 + $0x5c] sm:$0xf]
        %v801 = vld [vmem:[%s8 + $0x60] sm:$0xff]
        %v802 = vld [vmem:[%s8 + $0x68] sm:$0xf]
        %v803 = vld [vmem:[%s8 + $0x6c] sm:$0xff]
        %v804 = vld [vmem:[%s8 + $0x74] sm:$0xf]
        %v805 = vld [vmem:[%s8 + $0x78] sm:$0xff]
        %v806 = vld [vmem:[%s8 + $0x80] sm:$0xf]
        %v807 = vld [vmem:[%s8 + $0x84] sm:$0xff]
        %v808 = vld [vmem:[%s8 + $0x8c] sm:$0xf]
        %v809 = vld [vmem:[%s8 + $0x90] sm:$0xff]
        %v810 = vld [vmem:[%s8 + $0x98] sm:$0xf]
        %v811 = vld [vmem:[%s8 + $0x9c] sm:$0xff]
        %v812 = vld [vmem:[%s8 + $0xa4] sm:$0xf]
        %v813 = vld [vmem:[%s8 + $0xa8] sm:$0xff]
        %v814 = vld [vmem:[%s8 + $0xb0] sm:$0xf]
        %v815 = vld [vmem:[%s8 + $0xb4] sm:$0xff]
        %v816 = vld [vmem:[%s8 + $0xbc] sm:$0xf]
        %v817 = vld [vmem:[%s9] sm:$0x7]
        %v819 = vlaneseq
        %v820 = vshrl.u32 %v819, 7
        %v821 = vsub.s32 0, %v820
        %v822 = vrot.slane %v817, %v821
        %v823 = vlaneseq
        %v824 = vshrl.u32 %v823, 7
        %v825 = vsub.s32 1, %v824
        %v826 = vrot.slane %v817, %v825
        %v827 = vlaneseq
        %v828 = vshrl.u32 %v827, 7
        %v829 = vsub.s32 2, %v828
        %v830 = vrot.slane %v817, %v829
        %v866 = vunpack.c.l.b16 %v785
        %v867 = vunpack.c.h.b16 %v785
        %v868 = vunpack.c.l.b16 %v786
        %v869 = vunpack.c.l.b16 %v787
        %v870 = vunpack.c.h.b16 %v787
        %v871 = vunpack.c.l.b16 %v788
        %v872 = vunpack.c.l.b16 %v789
        %v873 = vunpack.c.h.b16 %v789
        %v874 = vunpack.c.l.b16 %v790
        %v875 = vunpack.c.l.b16 %v791
        %v876 = vunpack.c.h.b16 %v791
        %v877 = vunpack.c.l.b16 %v792
        %v878 = vunpack.c.l.b16 %v793
        %v879 = vunpack.c.h.b16 %v793
        %v880 = vunpack.c.l.b16 %v794
        %v881 = vunpack.c.l.b16 %v795
        %v882 = vunpack.c.h.b16 %v795
        %v883 = vunpack.c.l.b16 %v796
        %v884 = vunpack.c.l.b16 %v797
        %v885 = vunpack.c.h.b16 %v797
        %v886 = vunpack.c.l.b16 %v798
        %v887 = vunpack.c.l.b16 %v799
        %v888 = vunpack.c.h.b16 %v799
        %v889 = vunpack.c.l.b16 %v800
        %v890 = vunpack.c.l.b16 %v801
        %v891 = vunpack.c.h.b16 %v801
        %v892 = vunpack.c.l.b16 %v802
        %v893 = vunpack.c.l.b16 %v803
        %v894 = vunpack.c.h.b16 %v803
        %v895 = vunpack.c.l.b16 %v804
        %v896 = vunpack.c.l.b16 %v805
        %v897 = vunpack.c.h.b16 %v805
        %v898 = vunpack.c.l.b16 %v806
        %v899 = vunpack.c.l.b16 %v807
        %v900 = vunpack.c.h.b16 %v807
        %v901 = vunpack.c.l.b16 %v808
        %v902 = vunpack.c.l.b16 %v809
        %v903 = vunpack.c.h.b16 %v809
        %v904 = vunpack.c.l.b16 %v810
        %v905 = vunpack.c.l.b16 %v811
        %v906 = vunpack.c.h.b16 %v811
        %v907 = vunpack.c.l.b16 %v812
        %v908 = vunpack.c.l.b16 %v813
        %v909 = vunpack.c.h.b16 %v813
        %v910 = vunpack.c.l.b16 %v814
        %v911 = vunpack.c.l.b16 %v815
        %v912 = vunpack.c.h.b16 %v815
        %v913 = vunpack.c.l.b16 %v816
        %v914 = vpack.c.b16 %v869, %v866
        %v915 = vpack.c.b16 %v870, %v867
        %v916 = vpack.c.b16 %v871, %v868
        %v917 = vpack.c.b16 %v875, %v872
        %v918 = vpack.c.b16 %v876, %v873
        %v919 = vpack.c.b16 %v877, %v874
        %v920 = vpack.c.b16 %v881, %v878
        %v921 = vpack.c.b16 %v882, %v879
        %v922 = vpack.c.b16 %v883, %v880
        %v923 = vpack.c.b16 %v887, %v884
        %v924 = vpack.c.b16 %v888, %v885
        %v925 = vpack.c.b16 %v889, %v886
        %v926 = vpack.c.b16 %v893, %v890
        %v927 = vpack.c.b16 %v894, %v891
        %v928 = vpack.c.b16 %v895, %v892
        %v929 = vpack.c.b16 %v899, %v896
        %v930 = vpack.c.b16 %v900, %v897
        %v931 = vpack.c.b16 %v901, %v898
        %v932 = vpack.c.b16 %v905, %v902
        %v933 = vpack.c.b16 %v906, %v903
        %v934 = vpack.c.b16 %v907, %v904
        %v935 = vpack.c.b16 %v911, %v908
        %v936 = vpack.c.b16 %v912, %v909
        %v937 = vpack.c.b16 %v913, %v910
        %962 = vmatprep.subr.bf16.mxu0 %v936
        %963 = vmatpush1.bf16.msra.mxu0 %v935
        %964 = vmatprep.subr.bf16.mxu0 %v933
        %965 = vmatpush1.bf16.msra.mxu0 %v932
        %966 = vmatprep.subr.bf16.mxu0 %v930
        %967 = vmatpush1.bf16.msra.mxu0 %v929
        %968 = vmatprep.subr.bf16.mxu0 %v927
        %969 = vmatpush1.bf16.msra.mxu0 %v926
        %970 = vmatprep.subr.bf16.mxu0 %v924
        %971 = vmatpush1.bf16.msra.mxu0 %v923
        %972 = vmatprep.subr.bf16.mxu0 %v921
        %973 = vmatpush1.bf16.msra.mxu0 %v920
        %974 = vmatprep.subr.bf16.mxu0 %v918
        %975 = vmatpush1.bf16.msra.mxu0 %v917
        %976 = vmatprep.subr.bf16.mxu0 %v915
        %977 = vmatpush1.bf16.msra.mxu0 %v914
        %978 = vmatprep.subr.bf16.mxu0 0
        %979 = vmatpush2.bf16.msra.mxu0 0
        %980 = vmatprep.subr.bf16.mxu0 0
        %981 = vmatpush2.bf16.msra.mxu0 0
        %982 = vmatprep.subr.bf16.mxu0 0
        %983 = vmatpush2.bf16.msra.mxu0 0
        %984 = vmatprep.subr.bf16.mxu0 0
        %985 = vmatpush2.bf16.msra.mxu0 0
        %986 = vmatprep.subr.bf16.mxu0 0
        %987 = vmatpush2.bf16.msra.mxu0 0
        %988 = vmatprep.subr.bf16.mxu0 0
        %989 = vmatpush2.bf16.msra.mxu0 0
        %990 = vmatprep.subr.bf16.mxu0 0
        %991 = vmatpush2.bf16.msra.mxu0 0
        %992 = vmatprep.subr.bf16.mxu0 0
        %993 = vmatpush2.bf16.msra.mxu0 0
        %994 = vmatprep.mubr.bf16.mxu0 0
        %995 = vmatmul.mubr.bf16.gmra.mxu0 %v784
        %v996 = vpop.f32.mrf.mxu0
        %v997 = vadd.f32 %v822, %v996
        %v998 = vpop.f32.mrf.mxu0
        %v999 = vadd.f32 %v826, %v998
        %v1000 = vpop.f32.mrf.mxu0
        %v1001 = vpop.f32.mrf.mxu0
        %1002 = vdwg.mxu0
        %1003 = vmatprep.subr.bf16.mxu0 0
        %1004 = vmatpush1.bf16.msra.mxu0 %v937
        %1005 = vmatprep.subr.bf16.mxu0 0
        %1006 = vmatpush1.bf16.msra.mxu0 %v934
        %1007 = vmatprep.subr.bf16.mxu0 0
        %1008 = vmatpush1.bf16.msra.mxu0 %v931
        %1009 = vmatprep.subr.bf16.mxu0 0
        %1010 = vmatpush1.bf16.msra.mxu0 %v928
        %1011 = vmatprep.subr.bf16.mxu0 0
        %1012 = vmatpush1.bf16.msra.mxu0 %v925
        %1013 = vmatprep.subr.bf16.mxu0 0
        %1014 = vmatpush1.bf16.msra.mxu0 %v922
        %1015 = vmatprep.subr.bf16.mxu0 0
        %1016 = vmatpush1.bf16.msra.mxu0 %v919
        %1017 = vmatprep.subr.bf16.mxu0 0
        %1018 = vmatpush1.bf16.msra.mxu0 %v916
        %1019 = vmatprep.subr.bf16.mxu0 0
        %1020 = vmatpush2.bf16.msra.mxu0 0
        %1021 = vmatprep.subr.bf16.mxu0 0
        %1022 = vmatpush2.bf16.msra.mxu0 0
        %1023 = vmatprep.subr.bf16.mxu0 0
        %1024 = vmatpush2.bf16.msra.mxu0 0
        %1025 = vmatprep.subr.bf16.mxu0 0
        %1026 = vmatpush2.bf16.msra.mxu0 0
        %1027 = vmatprep.subr.bf16.mxu0 0
        %1028 = vmatpush2.bf16.msra.mxu0 0
        %1029 = vmatprep.subr.bf16.mxu0 0
        %1030 = vmatpush2.bf16.msra.mxu0 0
        %1031 = vmatprep.subr.bf16.mxu0 0
        %1032 = vmatpush2.bf16.msra.mxu0 0
        %1033 = vmatprep.subr.bf16.mxu0 0
        %1034 = vmatpush2.bf16.msra.mxu0 0
        %1035 = vmatprep.mubr.bf16.mxu0 0
        %1036 = vmatmul.mubr.bf16.gmra.mxu0 %v784
        %v1037 = vpop.f32.mrf.mxu0
        %v1038 = vadd.f32 %v830, %v1037
        %v1039 = vpop.f32.mrf.mxu0
        %v1040 = vpop.f32.mrf.mxu0
        %v1041 = vpop.f32.mrf.mxu0
        %1042 = vdwg.mxu0
        %v1043 = vld [vmem:[%s10] sm:$0xf]
        %v1044 = vld [vmem:[%s10 + $0x4] sm:$0xf]
        %v1045 = vld [vmem:[%s10 + $0x8] sm:$0xf]
        %v1046 = vld [vmem:[%s10 + $0xc] sm:$0xf]
        %v1047 = vld [vmem:[%s10 + $0x10] sm:$0xf]
        %v1048 = vld [vmem:[%s10 + $0x14] sm:$0xf]
        %v1049 = vld [vmem:[%s10 + $0x18] sm:$0xf]
        %v1050 = vld [vmem:[%s10 + $0x1c] sm:$0xf]
        %v1051 = vld [vmem:[%s10 + $0x20] sm:$0xf]
        %v1052 = vld [vmem:[%s10 + $0x24] sm:$0xf]
        %v1053 = vld [vmem:[%s10 + $0x28] sm:$0xf]
        %v1054 = vld [vmem:[%s10 + $0x2c] sm:$0xf]
        %v1055 = vld [vmem:[%s10 + $0x30] sm:$0xf]
        %v1056 = vld [vmem:[%s10 + $0x34] sm:$0xf]
        %v1057 = vld [vmem:[%s10 + $0x38] sm:$0xf]
        %v1058 = vld [vmem:[%s10 + $0x3c] sm:$0xf]
        %v1059 = vstv %s754
        %v1060 = vmul.f32 %v1059, %v744
        %v1061 = vstv %s755
        %v1062 = vmul.f32 %v1061, %v747
        %v1063 = vadd.f32 %v1060, %v1062
        %v1064 = vmul.f32 %v1059, %v750
        %v1065 = vmul.f32 %v1061, %v753
        %v1066 = vadd.f32 %v1064, %v1065
        %v1067 = vmul.f32 %v1063, %v1063
        %vm1068 = vcmask 7168
        %v1069 = vsel %vm1068, %v1067, 0.0
        %1070 = vadd.xlane.f32.xlu0 %v1069
        %v1071 = vpop.xlane.xlu0 %1070
        %v1072 = vrot.slane %v1071, 4
        %v1073 = vadd.f32 %v1071, %v1072
        %v1074 = vrot.slane %v1073, 2
        %v1075 = vadd.f32 %v1073, %v1074
        %v1076 = vrot.slane %v1075, 1
        %v1077 = vadd.f32 %v1075, %v1076
        %s1078 = vtos %v1077
        %s1079 = smax.f32 %s1078, 1e-12
        %v1080 = vstv %s1079
        %v1081 = vrcp.pop %v1080
        %s1082 = vtos %v1081
        %s1083 = smul.f32 50.0, %s1082
        %1085 = vset.pattern.permute.xlu0 0
        %1086 = vperm.xlu0 %1085, %v1063
        %v1087 = vpop.permute.xlu0 %1086
        %v1090 = vlaneseq
        %v1091 = vshrl.u32 %v1090, 7
        %v1092 = vsub.s32 0, %v1091
        %v1093 = vrot.slane %v1066, %v1092
        %v1095 = vmul.f32 %v1087, %v1093
        %v1096 = vstv %s1083
        %v1097 = vmul.f32 %v1096, %v1095
        %v1098 = vpack.c.bf16 %v997, %v997
        %v1099 = vpack.c.bf16 %v999, %v999
        %vm1100 = vcmask 261120
        %v1102 = vsel %vm1100, %v1098, 0
        %v1105 = vsel %vm1100, %v1099, 0
        %1107 = vmatprep.subr.bf16.mxu0 0
        %1108 = vmatpush1.bf16.xpose.msra.mxu0 0
        %1109 = vmatprep.subr.bf16.mxu0 0
        %1110 = vmatpush1.bf16.xpose.msra.mxu0 0
        %1111 = vmatprep.subr.bf16.mxu0 0
        %1112 = vmatpush1.bf16.xpose.msra.mxu0 0
        %1113 = vmatprep.subr.bf16.mxu0 0
        %1114 = vmatpush1.bf16.xpose.msra.mxu0 0
        %1115 = vmatprep.subr.bf16.mxu0 0
        %1116 = vmatpush1.bf16.xpose.msra.mxu0 0
        %1117 = vmatprep.subr.bf16.mxu0 0
        %1118 = vmatpush1.bf16.xpose.msra.mxu0 0
        %1119 = vmatprep.subr.bf16.mxu0 0
        %1120 = vmatpush1.bf16.xpose.msra.mxu0 0
        %1121 = vmatprep.subr.bf16.mxu0 0
        %1122 = vmatpush1.bf16.xpose.msra.mxu0 %v1105
        %1123 = vmatprep.subr.bf16.mxu0 0
        %1124 = vmatpush2.bf16.xpose.msra.mxu0 0
        %1125 = vmatprep.subr.bf16.mxu0 0
        %1126 = vmatpush2.bf16.xpose.msra.mxu0 0
        %1127 = vmatprep.subr.bf16.mxu0 0
        %1128 = vmatpush2.bf16.xpose.msra.mxu0 0
        %1129 = vmatprep.subr.bf16.mxu0 0
        %1130 = vmatpush2.bf16.xpose.msra.mxu0 0
        %1131 = vmatprep.subr.bf16.mxu0 0
        %1132 = vmatpush2.bf16.xpose.msra.mxu0 0
        %1133 = vmatprep.subr.bf16.mxu0 0
        %1134 = vmatpush2.bf16.xpose.msra.mxu0 0
        %1135 = vmatprep.subr.bf16.mxu0 0
        %1136 = vmatpush2.bf16.xpose.msra.mxu0 0
        %1137 = vmatprep.subr.bf16.mxu0 0
        %1138 = vmatpush2.bf16.xpose.msra.mxu0 0
        %1139 = vmatprep.mubr.bf16.mxu0 0
        %1140 = vmatmul.mubr.bf16.gmra.mxu0 %v1102
        %v1141 = vpop.f32.mrf.mxu0
        %v1142 = vadd.f32 0.0, %v1141
        %v1143 = vpop.f32.mrf.mxu0
        %v1144 = vpop.f32.mrf.mxu0
        %v1145 = vpop.f32.mrf.mxu0
        %1146 = vdwg.mxu0
        %v1147 = vmul.f32 %v1142, 0.17677669
        %v1148 = vadd.f32 %v1147, %v1097
        %vm1149 = vcmask 64512
        %v1150 = vsel %vm1149, %v1148, -inf
        %1151 = vmax.xlane.f32.xlu0 %v1150
        %v1152 = vpop.xlane.xlu0 %1151
        %v1153 = vsub.f32 %v1148, %v1152
        %v1154 = vmul.f32 %v1153, 1.442695
        %v1155 = vpow.pop %v1154
        %v1156 = vsel %vm1149, %v1155, 0.0
        %1157 = vadd.xlane.f32.xlu0 %v1156
        %v1158 = vpop.xlane.xlu0 %1157
        %v1159 = vrcp.pop %v1158
        %v1160 = vmul.f32 %v1155, %v1159
        %v1161 = vpack.c.bf16 %v1160, %v1160
        %v1162 = vpack.c.bf16 %v1038, %v1038
        %v1164 = vsel %vm1149, %v1161, 0
        %vm1166 = vcmask 1043456
        %v1168 = vsel %vm1166, %v1162, 0
        %1170 = vmatprep.subr.bf16.mxu0 0
        %1171 = vmatpush1.bf16.msra.mxu0 0
        %1172 = vmatprep.subr.bf16.mxu0 0
        %1173 = vmatpush1.bf16.msra.mxu0 0
        %1174 = vmatprep.subr.bf16.mxu0 0
        %1175 = vmatpush1.bf16.msra.mxu0 0
        %1176 = vmatprep.subr.bf16.mxu0 0
        %1177 = vmatpush1.bf16.msra.mxu0 0
        %1178 = vmatprep.subr.bf16.mxu0 0
        %1179 = vmatpush1.bf16.msra.mxu0 0
        %1180 = vmatprep.subr.bf16.mxu0 0
        %1181 = vmatpush1.bf16.msra.mxu0 0
        %1182 = vmatprep.subr.bf16.mxu0 0
        %1183 = vmatpush1.bf16.msra.mxu0 0
        %1184 = vmatprep.subr.bf16.mxu0 0
        %1185 = vmatpush1.bf16.msra.mxu0 %v1168
        %1186 = vmatprep.subr.bf16.mxu0 0
        %1187 = vmatpush2.bf16.msra.mxu0 0
        %1188 = vmatprep.subr.bf16.mxu0 0
        %1189 = vmatpush2.bf16.msra.mxu0 0
        %1190 = vmatprep.subr.bf16.mxu0 0
        %1191 = vmatpush2.bf16.msra.mxu0 0
        %1192 = vmatprep.subr.bf16.mxu0 0
        %1193 = vmatpush2.bf16.msra.mxu0 0
        %1194 = vmatprep.subr.bf16.mxu0 0
        %1195 = vmatpush2.bf16.msra.mxu0 0
        %1196 = vmatprep.subr.bf16.mxu0 0
        %1197 = vmatpush2.bf16.msra.mxu0 0
        %1198 = vmatprep.subr.bf16.mxu0 0
        %1199 = vmatpush2.bf16.msra.mxu0 0
        %1200 = vmatprep.subr.bf16.mxu0 0
        %1201 = vmatpush2.bf16.msra.mxu0 0
        %1202 = vmatprep.mubr.bf16.mxu0 0
        %1203 = vmatmul.mubr.bf16.gmra.mxu0 %v1164
        %v1204 = vpop.f32.mrf.mxu0
        %v1205 = vadd.f32 0.0, %v1204
        %v1206 = vpop.f32.mrf.mxu0
        %v1207 = vpop.f32.mrf.mxu0
        %v1208 = vpop.f32.mrf.mxu0
        %1209 = vdwg.mxu0
        %v1210 = vpack.c.bf16 %v1205, %v1205
        %1212 = vrot.lane.b32.xlu0 %v1098, 96
        %v1213 = vpop.permute.xlu0 %1212
        %1215 = vrot.lane.b32.xlu0 %v1099, 96
        %v1216 = vpop.permute.xlu0 %1215
        %v1218 = vsel %vm1100, %v1213, 0
        %v1221 = vsel %vm1100, %v1216, 0
        %1223 = vmatprep.subr.bf16.mxu0 0
        %1224 = vmatpush1.bf16.xpose.msra.mxu0 0
        %1225 = vmatprep.subr.bf16.mxu0 0
        %1226 = vmatpush1.bf16.xpose.msra.mxu0 0
        %1227 = vmatprep.subr.bf16.mxu0 0
        %1228 = vmatpush1.bf16.xpose.msra.mxu0 0
        %1229 = vmatprep.subr.bf16.mxu0 0
        %1230 = vmatpush1.bf16.xpose.msra.mxu0 0
        %1231 = vmatprep.subr.bf16.mxu0 0
        %1232 = vmatpush1.bf16.xpose.msra.mxu0 0
        %1233 = vmatprep.subr.bf16.mxu0 0
        %1234 = vmatpush1.bf16.xpose.msra.mxu0 0
        %1235 = vmatprep.subr.bf16.mxu0 0
        %1236 = vmatpush1.bf16.xpose.msra.mxu0 0
        %1237 = vmatprep.subr.bf16.mxu0 0
        %1238 = vmatpush1.bf16.xpose.msra.mxu0 %v1221
        %1239 = vmatprep.subr.bf16.mxu0 0
        %1240 = vmatpush2.bf16.xpose.msra.mxu0 0
        %1241 = vmatprep.subr.bf16.mxu0 0
        %1242 = vmatpush2.bf16.xpose.msra.mxu0 0
        %1243 = vmatprep.subr.bf16.mxu0 0
        %1244 = vmatpush2.bf16.xpose.msra.mxu0 0
        %1245 = vmatprep.subr.bf16.mxu0 0
        %1246 = vmatpush2.bf16.xpose.msra.mxu0 0
        %1247 = vmatprep.subr.bf16.mxu0 0
        %1248 = vmatpush2.bf16.xpose.msra.mxu0 0
        %1249 = vmatprep.subr.bf16.mxu0 0
        %1250 = vmatpush2.bf16.xpose.msra.mxu0 0
        %1251 = vmatprep.subr.bf16.mxu0 0
        %1252 = vmatpush2.bf16.xpose.msra.mxu0 0
        %1253 = vmatprep.subr.bf16.mxu0 0
        %1254 = vmatpush2.bf16.xpose.msra.mxu0 0
        %1255 = vmatprep.mubr.bf16.mxu0 0
        %1256 = vmatmul.mubr.bf16.gmra.mxu0 %v1218
        %v1257 = vpop.f32.mrf.mxu0
        %v1258 = vadd.f32 0.0, %v1257
        %v1259 = vpop.f32.mrf.mxu0
        %v1260 = vpop.f32.mrf.mxu0
        %v1261 = vpop.f32.mrf.mxu0
        %1262 = vdwg.mxu0
        %v1263 = vmul.f32 %v1258, 0.17677669
        %v1264 = vadd.f32 %v1263, %v1097
        %v1265 = vsel %vm1149, %v1264, -inf
        %1266 = vmax.xlane.f32.xlu0 %v1265
        %v1267 = vpop.xlane.xlu0 %1266
        %v1268 = vsub.f32 %v1264, %v1267
        %v1269 = vmul.f32 %v1268, 1.442695
        %v1270 = vpow.pop %v1269
        %v1271 = vsel %vm1149, %v1270, 0.0
        %1272 = vadd.xlane.f32.xlu0 %v1271
        %v1273 = vpop.xlane.xlu0 %1272
        %v1274 = vrcp.pop %v1273
        %v1275 = vmul.f32 %v1270, %v1274
        %v1276 = vpack.c.bf16 %v1275, %v1275
        %1278 = vrot.lane.b32.xlu0 %v1162, 96
        %v1279 = vpop.permute.xlu0 %1278
        %v1281 = vsel %vm1149, %v1276, 0
        %v1284 = vsel %vm1166, %v1279, 0
        %1286 = vmatprep.subr.bf16.mxu0 0
        %1287 = vmatpush1.bf16.msra.mxu0 0
        %1288 = vmatprep.subr.bf16.mxu0 0
        %1289 = vmatpush1.bf16.msra.mxu0 0
        %1290 = vmatprep.subr.bf16.mxu0 0
        %1291 = vmatpush1.bf16.msra.mxu0 0
        %1292 = vmatprep.subr.bf16.mxu0 0
        %1293 = vmatpush1.bf16.msra.mxu0 0
        %1294 = vmatprep.subr.bf16.mxu0 0
        %1295 = vmatpush1.bf16.msra.mxu0 0
        %1296 = vmatprep.subr.bf16.mxu0 0
        %1297 = vmatpush1.bf16.msra.mxu0 0
        %1298 = vmatprep.subr.bf16.mxu0 0
        %1299 = vmatpush1.bf16.msra.mxu0 0
        %1300 = vmatprep.subr.bf16.mxu0 0
        %1301 = vmatpush1.bf16.msra.mxu0 %v1284
        %1302 = vmatprep.subr.bf16.mxu0 0
        %1303 = vmatpush2.bf16.msra.mxu0 0
        %1304 = vmatprep.subr.bf16.mxu0 0
        %1305 = vmatpush2.bf16.msra.mxu0 0
        %1306 = vmatprep.subr.bf16.mxu0 0
        %1307 = vmatpush2.bf16.msra.mxu0 0
        %1308 = vmatprep.subr.bf16.mxu0 0
        %1309 = vmatpush2.bf16.msra.mxu0 0
        %1310 = vmatprep.subr.bf16.mxu0 0
        %1311 = vmatpush2.bf16.msra.mxu0 0
        %1312 = vmatprep.subr.bf16.mxu0 0
        %1313 = vmatpush2.bf16.msra.mxu0 0
        %1314 = vmatprep.subr.bf16.mxu0 0
        %1315 = vmatpush2.bf16.msra.mxu0 0
        %1316 = vmatprep.subr.bf16.mxu0 0
        %1317 = vmatpush2.bf16.msra.mxu0 0
        %1318 = vmatprep.mubr.bf16.mxu0 0
        %1319 = vmatmul.mubr.bf16.gmra.mxu0 %v1281
        %v1320 = vpop.f32.mrf.mxu0
        %v1321 = vadd.f32 0.0, %v1320
        %v1322 = vpop.f32.mrf.mxu0
        %v1323 = vpop.f32.mrf.mxu0
        %v1324 = vpop.f32.mrf.mxu0
        %1325 = vdwg.mxu0
        %v1326 = vpack.c.bf16 %v1321, %v1321
        %v1331 = vunpack.c.l.b16 %v1047
        %v1332 = vunpack.c.l.b16 %v1048
        %v1333 = vunpack.c.l.b16 %v1049
        %v1334 = vunpack.c.l.b16 %v1050
        %v1335 = vpack.c.b16 %v1332, %v1331
        %v1336 = vpack.c.b16 %v1334, %v1333
        %v1340 = vsel %vm1100, %v1326, 0
        %1342 = vmatprep.subr.bf16.mxu0 0
        %1343 = vmatpush1.bf16.msra.mxu0 0
        %1344 = vmatprep.subr.bf16.mxu0 0
        %1345 = vmatpush1.bf16.msra.mxu0 0
        %1346 = vmatprep.subr.bf16.mxu0 0
        %1347 = vmatpush1.bf16.msra.mxu0 0
        %1348 = vmatprep.subr.bf16.mxu0 0
        %1349 = vmatpush1.bf16.msra.mxu0 0
        %1350 = vmatprep.subr.bf16.mxu0 0
        %1351 = vmatpush1.bf16.msra.mxu0 0
        %1352 = vmatprep.subr.bf16.mxu0 0
        %1353 = vmatpush1.bf16.msra.mxu0 0
        %1354 = vmatprep.subr.bf16.mxu0 0
        %1355 = vmatpush1.bf16.msra.mxu0 %v1336
        %1356 = vmatprep.subr.bf16.mxu0 0
        %1357 = vmatpush1.bf16.msra.mxu0 %v1335
        %1358 = vmatprep.subr.bf16.mxu0 0
        %1359 = vmatpush2.bf16.msra.mxu0 0
        %1360 = vmatprep.subr.bf16.mxu0 0
        %1361 = vmatpush2.bf16.msra.mxu0 0
        %1362 = vmatprep.subr.bf16.mxu0 0
        %1363 = vmatpush2.bf16.msra.mxu0 0
        %1364 = vmatprep.subr.bf16.mxu0 0
        %1365 = vmatpush2.bf16.msra.mxu0 0
        %1366 = vmatprep.subr.bf16.mxu0 0
        %1367 = vmatpush2.bf16.msra.mxu0 0
        %1368 = vmatprep.subr.bf16.mxu0 0
        %1369 = vmatpush2.bf16.msra.mxu0 0
        %1370 = vmatprep.subr.bf16.mxu0 0
        %1371 = vmatpush2.bf16.msra.mxu0 0
        %1372 = vmatprep.subr.bf16.mxu0 0
        %1373 = vmatpush2.bf16.msra.mxu0 0
        %1374 = vmatprep.mubr.bf16.mxu0 0
        %1375 = vmatmul.mubr.bf16.gmra.mxu0 %v1340
        %v1376 = vpop.f32.mrf.mxu0
        %v1377 = vadd.f32 0.0, %v1376
        %v1378 = vpop.f32.mrf.mxu0
        %v1379 = vpop.f32.mrf.mxu0
        %v1380 = vpop.f32.mrf.mxu0
        %1381 = vdwg.mxu0
        %v1386 = vunpack.c.l.b16 %v1043
        %v1387 = vunpack.c.l.b16 %v1044
        %v1388 = vunpack.c.l.b16 %v1045
        %v1389 = vunpack.c.l.b16 %v1046
        %v1390 = vpack.c.b16 %v1387, %v1386
        %v1391 = vpack.c.b16 %v1389, %v1388
        %v1395 = vsel %vm1100, %v1210, 0
        %1397 = vmatprep.subr.bf16.mxu0 0
        %1398 = vmatpush1.bf16.msra.mxu0 0
        %1399 = vmatprep.subr.bf16.mxu0 0
        %1400 = vmatpush1.bf16.msra.mxu0 0
        %1401 = vmatprep.subr.bf16.mxu0 0
        %1402 = vmatpush1.bf16.msra.mxu0 0
        %1403 = vmatprep.subr.bf16.mxu0 0
        %1404 = vmatpush1.bf16.msra.mxu0 0
        %1405 = vmatprep.subr.bf16.mxu0 0
        %1406 = vmatpush1.bf16.msra.mxu0 0
        %1407 = vmatprep.subr.bf16.mxu0 0
        %1408 = vmatpush1.bf16.msra.mxu0 0
        %1409 = vmatprep.subr.bf16.mxu0 0
        %1410 = vmatpush1.bf16.msra.mxu0 %v1391
        %1411 = vmatprep.subr.bf16.mxu0 0
        %1412 = vmatpush1.bf16.msra.mxu0 %v1390
        %1413 = vmatprep.subr.bf16.mxu0 0
        %1414 = vmatpush2.bf16.msra.mxu0 0
        %1415 = vmatprep.subr.bf16.mxu0 0
        %1416 = vmatpush2.bf16.msra.mxu0 0
        %1417 = vmatprep.subr.bf16.mxu0 0
        %1418 = vmatpush2.bf16.msra.mxu0 0
        %1419 = vmatprep.subr.bf16.mxu0 0
        %1420 = vmatpush2.bf16.msra.mxu0 0
        %1421 = vmatprep.subr.bf16.mxu0 0
        %1422 = vmatpush2.bf16.msra.mxu0 0
        %1423 = vmatprep.subr.bf16.mxu0 0
        %1424 = vmatpush2.bf16.msra.mxu0 0
        %1425 = vmatprep.subr.bf16.mxu0 0
        %1426 = vmatpush2.bf16.msra.mxu0 0
        %1427 = vmatprep.subr.bf16.mxu0 0
        %1428 = vmatpush2.bf16.msra.mxu0 0
        %1429 = vmatprep.mubr.bf16.mxu0 0
        %1430 = vmatmul.mubr.bf16.gmra.mxu0 %v1395
        %v1431 = vpop.f32.mrf.mxu0
        %v1432 = vadd.f32 %v1377, %v1431
        %v1433 = vpop.f32.mrf.mxu0
        %v1434 = vpop.f32.mrf.mxu0
        %v1435 = vpop.f32.mrf.mxu0
        %1436 = vdwg.mxu0
        %1437 = vrot.lane.b32.xlu0 %v1098, 64
        %v1438 = vpop.permute.xlu0 %1437
        %1439 = vrot.lane.b32.xlu0 %v1099, 64
        %v1440 = vpop.permute.xlu0 %1439
        %v1442 = vsel %vm1100, %v1438, 0
        %v1445 = vsel %vm1100, %v1440, 0
        %1447 = vmatprep.subr.bf16.mxu0 0
        %1448 = vmatpush1.bf16.xpose.msra.mxu0 0
        %1449 = vmatprep.subr.bf16.mxu0 0
        %1450 = vmatpush1.bf16.xpose.msra.mxu0 0
        %1451 = vmatprep.subr.bf16.mxu0 0
        %1452 = vmatpush1.bf16.xpose.msra.mxu0 0
        %1453 = vmatprep.subr.bf16.mxu0 0
        %1454 = vmatpush1.bf16.xpose.msra.mxu0 0
        %1455 = vmatprep.subr.bf16.mxu0 0
        %1456 = vmatpush1.bf16.xpose.msra.mxu0 0
        %1457 = vmatprep.subr.bf16.mxu0 0
        %1458 = vmatpush1.bf16.xpose.msra.mxu0 0
        %1459 = vmatprep.subr.bf16.mxu0 0
        %1460 = vmatpush1.bf16.xpose.msra.mxu0 0
        %1461 = vmatprep.subr.bf16.mxu0 0
        %1462 = vmatpush1.bf16.xpose.msra.mxu0 %v1445
        %1463 = vmatprep.subr.bf16.mxu0 0
        %1464 = vmatpush2.bf16.xpose.msra.mxu0 0
        %1465 = vmatprep.subr.bf16.mxu0 0
        %1466 = vmatpush2.bf16.xpose.msra.mxu0 0
        %1467 = vmatprep.subr.bf16.mxu0 0
        %1468 = vmatpush2.bf16.xpose.msra.mxu0 0
        %1469 = vmatprep.subr.bf16.mxu0 0
        %1470 = vmatpush2.bf16.xpose.msra.mxu0 0
        %1471 = vmatprep.subr.bf16.mxu0 0
        %1472 = vmatpush2.bf16.xpose.msra.mxu0 0
        %1473 = vmatprep.subr.bf16.mxu0 0
        %1474 = vmatpush2.bf16.xpose.msra.mxu0 0
        %1475 = vmatprep.subr.bf16.mxu0 0
        %1476 = vmatpush2.bf16.xpose.msra.mxu0 0
        %1477 = vmatprep.subr.bf16.mxu0 0
        %1478 = vmatpush2.bf16.xpose.msra.mxu0 0
        %1479 = vmatprep.mubr.bf16.mxu0 0
        %1480 = vmatmul.mubr.bf16.gmra.mxu0 %v1442
        %v1481 = vpop.f32.mrf.mxu0
        %v1482 = vadd.f32 0.0, %v1481
        %v1483 = vpop.f32.mrf.mxu0
        %v1484 = vpop.f32.mrf.mxu0
        %v1485 = vpop.f32.mrf.mxu0
        %1486 = vdwg.mxu0
        %v1487 = vmul.f32 %v1482, 0.17677669
        %v1488 = vadd.f32 %v1487, %v1097
        %v1489 = vsel %vm1149, %v1488, -inf
        %1490 = vmax.xlane.f32.xlu0 %v1489
        %v1491 = vpop.xlane.xlu0 %1490
        %v1492 = vsub.f32 %v1488, %v1491
        %v1493 = vmul.f32 %v1492, 1.442695
        %v1494 = vpow.pop %v1493
        %v1495 = vsel %vm1149, %v1494, 0.0
        %1496 = vadd.xlane.f32.xlu0 %v1495
        %v1497 = vpop.xlane.xlu0 %1496
        %v1498 = vrcp.pop %v1497
        %v1499 = vmul.f32 %v1494, %v1498
        %v1500 = vpack.c.bf16 %v1499, %v1499
        %1501 = vrot.lane.b32.xlu0 %v1162, 64
        %v1502 = vpop.permute.xlu0 %1501
        %v1504 = vsel %vm1149, %v1500, 0
        %v1507 = vsel %vm1166, %v1502, 0
        %1509 = vmatprep.subr.bf16.mxu0 0
        %1510 = vmatpush1.bf16.msra.mxu0 0
        %1511 = vmatprep.subr.bf16.mxu0 0
        %1512 = vmatpush1.bf16.msra.mxu0 0
        %1513 = vmatprep.subr.bf16.mxu0 0
        %1514 = vmatpush1.bf16.msra.mxu0 0
        %1515 = vmatprep.subr.bf16.mxu0 0
        %1516 = vmatpush1.bf16.msra.mxu0 0
        %1517 = vmatprep.subr.bf16.mxu0 0
        %1518 = vmatpush1.bf16.msra.mxu0 0
        %1519 = vmatprep.subr.bf16.mxu0 0
        %1520 = vmatpush1.bf16.msra.mxu0 0
        %1521 = vmatprep.subr.bf16.mxu0 0
        %1522 = vmatpush1.bf16.msra.mxu0 0
        %1523 = vmatprep.subr.bf16.mxu0 0
        %1524 = vmatpush1.bf16.msra.mxu0 %v1507
        %1525 = vmatprep.subr.bf16.mxu0 0
        %1526 = vmatpush2.bf16.msra.mxu0 0
        %1527 = vmatprep.subr.bf16.mxu0 0
        %1528 = vmatpush2.bf16.msra.mxu0 0
        %1529 = vmatprep.subr.bf16.mxu0 0
        %1530 = vmatpush2.bf16.msra.mxu0 0
        %1531 = vmatprep.subr.bf16.mxu0 0
        %1532 = vmatpush2.bf16.msra.mxu0 0
        %1533 = vmatprep.subr.bf16.mxu0 0
        %1534 = vmatpush2.bf16.msra.mxu0 0
        %1535 = vmatprep.subr.bf16.mxu0 0
        %1536 = vmatpush2.bf16.msra.mxu0 0
        %1537 = vmatprep.subr.bf16.mxu0 0
        %1538 = vmatpush2.bf16.msra.mxu0 0
        %1539 = vmatprep.subr.bf16.mxu0 0
        %1540 = vmatpush2.bf16.msra.mxu0 0
        %1541 = vmatprep.mubr.bf16.mxu0 0
        %1542 = vmatmul.mubr.bf16.gmra.mxu0 %v1504
        %v1543 = vpop.f32.mrf.mxu0
        %v1544 = vadd.f32 0.0, %v1543
        %v1545 = vpop.f32.mrf.mxu0
        %v1546 = vpop.f32.mrf.mxu0
        %v1547 = vpop.f32.mrf.mxu0
        %1548 = vdwg.mxu0
        %v1549 = vpack.c.bf16 %v1544, %v1544
        %v1554 = vunpack.c.l.b16 %v1051
        %v1555 = vunpack.c.l.b16 %v1052
        %v1556 = vunpack.c.l.b16 %v1053
        %v1557 = vunpack.c.l.b16 %v1054
        %v1558 = vpack.c.b16 %v1555, %v1554
        %v1559 = vpack.c.b16 %v1557, %v1556
        %v1563 = vsel %vm1100, %v1549, 0
        %1565 = vmatprep.subr.bf16.mxu0 0
        %1566 = vmatpush1.bf16.msra.mxu0 0
        %1567 = vmatprep.subr.bf16.mxu0 0
        %1568 = vmatpush1.bf16.msra.mxu0 0
        %1569 = vmatprep.subr.bf16.mxu0 0
        %1570 = vmatpush1.bf16.msra.mxu0 0
        %1571 = vmatprep.subr.bf16.mxu0 0
        %1572 = vmatpush1.bf16.msra.mxu0 0
        %1573 = vmatprep.subr.bf16.mxu0 0
        %1574 = vmatpush1.bf16.msra.mxu0 0
        %1575 = vmatprep.subr.bf16.mxu0 0
        %1576 = vmatpush1.bf16.msra.mxu0 0
        %1577 = vmatprep.subr.bf16.mxu0 0
        %1578 = vmatpush1.bf16.msra.mxu0 %v1559
        %1579 = vmatprep.subr.bf16.mxu0 0
        %1580 = vmatpush1.bf16.msra.mxu0 %v1558
        %1581 = vmatprep.subr.bf16.mxu0 0
        %1582 = vmatpush2.bf16.msra.mxu0 0
        %1583 = vmatprep.subr.bf16.mxu0 0
        %1584 = vmatpush2.bf16.msra.mxu0 0
        %1585 = vmatprep.subr.bf16.mxu0 0
        %1586 = vmatpush2.bf16.msra.mxu0 0
        %1587 = vmatprep.subr.bf16.mxu0 0
        %1588 = vmatpush2.bf16.msra.mxu0 0
        %1589 = vmatprep.subr.bf16.mxu0 0
        %1590 = vmatpush2.bf16.msra.mxu0 0
        %1591 = vmatprep.subr.bf16.mxu0 0
        %1592 = vmatpush2.bf16.msra.mxu0 0
        %1593 = vmatprep.subr.bf16.mxu0 0
        %1594 = vmatpush2.bf16.msra.mxu0 0
        %1595 = vmatprep.subr.bf16.mxu0 0
        %1596 = vmatpush2.bf16.msra.mxu0 0
        %1597 = vmatprep.mubr.bf16.mxu0 0
        %1598 = vmatmul.mubr.bf16.gmra.mxu0 %v1563
        %v1599 = vpop.f32.mrf.mxu0
        %v1600 = vadd.f32 0.0, %v1599
        %v1601 = vpop.f32.mrf.mxu0
        %v1602 = vpop.f32.mrf.mxu0
        %v1603 = vpop.f32.mrf.mxu0
        %1604 = vdwg.mxu0
        %v1605 = vadd.f32 %v1432, %v1600
        %1606 = vrot.lane.b32.xlu0 %v1098, 32
        %v1607 = vpop.permute.xlu0 %1606
        %1608 = vrot.lane.b32.xlu0 %v1099, 32
        %v1609 = vpop.permute.xlu0 %1608
        %v1611 = vsel %vm1100, %v1607, 0
        %v1614 = vsel %vm1100, %v1609, 0
        %1616 = vmatprep.subr.bf16.mxu0 0
        %1617 = vmatpush1.bf16.xpose.msra.mxu0 0
        %1618 = vmatprep.subr.bf16.mxu0 0
        %1619 = vmatpush1.bf16.xpose.msra.mxu0 0
        %1620 = vmatprep.subr.bf16.mxu0 0
        %1621 = vmatpush1.bf16.xpose.msra.mxu0 0
        %1622 = vmatprep.subr.bf16.mxu0 0
        %1623 = vmatpush1.bf16.xpose.msra.mxu0 0
        %1624 = vmatprep.subr.bf16.mxu0 0
        %1625 = vmatpush1.bf16.xpose.msra.mxu0 0
        %1626 = vmatprep.subr.bf16.mxu0 0
        %1627 = vmatpush1.bf16.xpose.msra.mxu0 0
        %1628 = vmatprep.subr.bf16.mxu0 0
        %1629 = vmatpush1.bf16.xpose.msra.mxu0 0
        %1630 = vmatprep.subr.bf16.mxu0 0
        %1631 = vmatpush1.bf16.xpose.msra.mxu0 %v1614
        %1632 = vmatprep.subr.bf16.mxu0 0
        %1633 = vmatpush2.bf16.xpose.msra.mxu0 0
        %1634 = vmatprep.subr.bf16.mxu0 0
        %1635 = vmatpush2.bf16.xpose.msra.mxu0 0
        %1636 = vmatprep.subr.bf16.mxu0 0
        %1637 = vmatpush2.bf16.xpose.msra.mxu0 0
        %1638 = vmatprep.subr.bf16.mxu0 0
        %1639 = vmatpush2.bf16.xpose.msra.mxu0 0
        %1640 = vmatprep.subr.bf16.mxu0 0
        %1641 = vmatpush2.bf16.xpose.msra.mxu0 0
        %1642 = vmatprep.subr.bf16.mxu0 0
        %1643 = vmatpush2.bf16.xpose.msra.mxu0 0
        %1644 = vmatprep.subr.bf16.mxu0 0
        %1645 = vmatpush2.bf16.xpose.msra.mxu0 0
        %1646 = vmatprep.subr.bf16.mxu0 0
        %1647 = vmatpush2.bf16.xpose.msra.mxu0 0
        %1648 = vmatprep.mubr.bf16.mxu0 0
        %1649 = vmatmul.mubr.bf16.gmra.mxu0 %v1611
        %v1650 = vpop.f32.mrf.mxu0
        %v1651 = vadd.f32 0.0, %v1650
        %v1652 = vpop.f32.mrf.mxu0
        %v1653 = vpop.f32.mrf.mxu0
        %v1654 = vpop.f32.mrf.mxu0
        %1655 = vdwg.mxu0
        %v1656 = vmul.f32 %v1651, 0.17677669
        %v1657 = vadd.f32 %v1656, %v1097
        %v1658 = vsel %vm1149, %v1657, -inf
        %1659 = vmax.xlane.f32.xlu0 %v1658
        %v1660 = vpop.xlane.xlu0 %1659
        %v1661 = vsub.f32 %v1657, %v1660
        %v1662 = vmul.f32 %v1661, 1.442695
        %v1663 = vpow.pop %v1662
        %v1664 = vsel %vm1149, %v1663, 0.0
        %1665 = vadd.xlane.f32.xlu0 %v1664
        %v1666 = vpop.xlane.xlu0 %1665
        %v1667 = vrcp.pop %v1666
        %v1668 = vmul.f32 %v1663, %v1667
        %v1669 = vpack.c.bf16 %v1668, %v1668
        %1670 = vrot.lane.b32.xlu0 %v1162, 32
        %v1671 = vpop.permute.xlu0 %1670
        %v1673 = vsel %vm1149, %v1669, 0
        %v1676 = vsel %vm1166, %v1671, 0
        %1678 = vmatprep.subr.bf16.mxu0 0
        %1679 = vmatpush1.bf16.msra.mxu0 0
        %1680 = vmatprep.subr.bf16.mxu0 0
        %1681 = vmatpush1.bf16.msra.mxu0 0
        %1682 = vmatprep.subr.bf16.mxu0 0
        %1683 = vmatpush1.bf16.msra.mxu0 0
        %1684 = vmatprep.subr.bf16.mxu0 0
        %1685 = vmatpush1.bf16.msra.mxu0 0
        %1686 = vmatprep.subr.bf16.mxu0 0
        %1687 = vmatpush1.bf16.msra.mxu0 0
        %1688 = vmatprep.subr.bf16.mxu0 0
        %1689 = vmatpush1.bf16.msra.mxu0 0
        %1690 = vmatprep.subr.bf16.mxu0 0
        %1691 = vmatpush1.bf16.msra.mxu0 0
        %1692 = vmatprep.subr.bf16.mxu0 0
        %1693 = vmatpush1.bf16.msra.mxu0 %v1676
        %1694 = vmatprep.subr.bf16.mxu0 0
        %1695 = vmatpush2.bf16.msra.mxu0 0
        %1696 = vmatprep.subr.bf16.mxu0 0
        %1697 = vmatpush2.bf16.msra.mxu0 0
        %1698 = vmatprep.subr.bf16.mxu0 0
        %1699 = vmatpush2.bf16.msra.mxu0 0
        %1700 = vmatprep.subr.bf16.mxu0 0
        %1701 = vmatpush2.bf16.msra.mxu0 0
        %1702 = vmatprep.subr.bf16.mxu0 0
        %1703 = vmatpush2.bf16.msra.mxu0 0
        %1704 = vmatprep.subr.bf16.mxu0 0
        %1705 = vmatpush2.bf16.msra.mxu0 0
        %1706 = vmatprep.subr.bf16.mxu0 0
        %1707 = vmatpush2.bf16.msra.mxu0 0
        %1708 = vmatprep.subr.bf16.mxu0 0
        %1709 = vmatpush2.bf16.msra.mxu0 0
        %1710 = vmatprep.mubr.bf16.mxu0 0
        %1711 = vmatmul.mubr.bf16.gmra.mxu0 %v1673
        %v1712 = vpop.f32.mrf.mxu0
        %v1713 = vadd.f32 0.0, %v1712
        %v1714 = vpop.f32.mrf.mxu0
        %v1715 = vpop.f32.mrf.mxu0
        %v1716 = vpop.f32.mrf.mxu0
        %1717 = vdwg.mxu0
        %v1718 = vpack.c.bf16 %v1713, %v1713
        %v1723 = vunpack.c.l.b16 %v1055
        %v1724 = vunpack.c.l.b16 %v1056
        %v1725 = vunpack.c.l.b16 %v1057
        %v1726 = vunpack.c.l.b16 %v1058
        %v1727 = vpack.c.b16 %v1724, %v1723
        %v1728 = vpack.c.b16 %v1726, %v1725
        %v1732 = vsel %vm1100, %v1718, 0
        %1734 = vmatprep.subr.bf16.mxu0 0
        %1735 = vmatpush1.bf16.msra.mxu0 0
        %1736 = vmatprep.subr.bf16.mxu0 0
        %1737 = vmatpush1.bf16.msra.mxu0 0
        %1738 = vmatprep.subr.bf16.mxu0 0
        %1739 = vmatpush1.bf16.msra.mxu0 0
        %1740 = vmatprep.subr.bf16.mxu0 0
        %1741 = vmatpush1.bf16.msra.mxu0 0
        %1742 = vmatprep.subr.bf16.mxu0 0
        %1743 = vmatpush1.bf16.msra.mxu0 0
        %1744 = vmatprep.subr.bf16.mxu0 0
        %1745 = vmatpush1.bf16.msra.mxu0 0
        %1746 = vmatprep.subr.bf16.mxu0 0
        %1747 = vmatpush1.bf16.msra.mxu0 %v1728
        %1748 = vmatprep.subr.bf16.mxu0 0
        %1749 = vmatpush1.bf16.msra.mxu0 %v1727
        %1750 = vmatprep.subr.bf16.mxu0 0
        %1751 = vmatpush2.bf16.msra.mxu0 0
        %1752 = vmatprep.subr.bf16.mxu0 0
        %1753 = vmatpush2.bf16.msra.mxu0 0
        %1754 = vmatprep.subr.bf16.mxu0 0
        %1755 = vmatpush2.bf16.msra.mxu0 0
        %1756 = vmatprep.subr.bf16.mxu0 0
        %1757 = vmatpush2.bf16.msra.mxu0 0
        %1758 = vmatprep.subr.bf16.mxu0 0
        %1759 = vmatpush2.bf16.msra.mxu0 0
        %1760 = vmatprep.subr.bf16.mxu0 0
        %1761 = vmatpush2.bf16.msra.mxu0 0
        %1762 = vmatprep.subr.bf16.mxu0 0
        %1763 = vmatpush2.bf16.msra.mxu0 0
        %1764 = vmatprep.subr.bf16.mxu0 0
        %1765 = vmatpush2.bf16.msra.mxu0 0
        %1766 = vmatprep.mubr.bf16.mxu0 0
        %1767 = vmatmul.mubr.bf16.gmra.mxu0 %v1732
        %v1768 = vpop.f32.mrf.mxu0
        %v1769 = vadd.f32 0.0, %v1768
        %v1770 = vpop.f32.mrf.mxu0
        %v1771 = vpop.f32.mrf.mxu0
        %v1772 = vpop.f32.mrf.mxu0
        %1773 = vdwg.mxu0
        %v1774 = vadd.f32 %v1605, %v1769
        %v1775 = vadd.f32 %v739, %v1774
        %v1776 = vld [vmem:[%s11] sm:$0x1]
        %v1778 = vlaneseq
        %v1779 = vshrl.u32 %v1778, 7
        %v1780 = vsub.s32 0, %v1779
        %v1781 = vrot.slane %v1776, %v1780
        %v1783 = vadd.f32 %v1775, %v1781
        %v1784 = vld [vmem:[%s12] sm:$0x1]
        %v1785 = vld [vmem:[%s13] sm:$0x1]
        %1786 = vadd.xlane.f32.xlu0 %v1783
        %v1787 = vpop.xlane.xlu0 %1786
        %v1788 = vmul.f32 %v1787, %v760
        %v1789 = vsub.f32 %v1783, %v1788
        %v1790 = vmul.f32 %v1789, %v1789
        %1791 = vadd.xlane.f32.xlu0 %v1790
        %v1792 = vpop.xlane.xlu0 %1791
        %v1793 = vmul.f32 %v1792, %v760
        %v1794 = vadd.f32 %v1793, 1e-06
        %v1795 = vrsqrt.pop %v1794
        %v1796 = vmul.f32 %v1789, %v1795
        %v1798 = vlaneseq
        %v1799 = vshrl.u32 %v1798, 7
        %v1800 = vsub.s32 0, %v1799
        %v1801 = vrot.slane %v1784, %v1800
        %v1803 = vmul.f32 %v1796, %v1801
        %v1805 = vlaneseq
        %v1806 = vshrl.u32 %v1805, 7
        %v1807 = vsub.s32 0, %v1806
        %v1808 = vrot.slane %v1785, %v1807
        %v1810 = vadd.f32 %v1803, %v1808
        %v1811 = vpack.c.bf16 %v1810, %v1810
        %v1812 = vld [vmem:[%s14] sm:$0xff]
        %v1813 = vld [vmem:[%s14 + $0x8] sm:$0xff]
        %v1814 = vld [vmem:[%s14 + $0x10] sm:$0xff]
        %v1815 = vld [vmem:[%s14 + $0x18] sm:$0xff]
        %v1816 = vld [vmem:[%s14 + $0x20] sm:$0xff]
        %v1817 = vld [vmem:[%s14 + $0x28] sm:$0xff]
        %v1818 = vld [vmem:[%s14 + $0x30] sm:$0xff]
        %v1819 = vld [vmem:[%s14 + $0x38] sm:$0xff]
        %v1820 = vld [vmem:[%s14 + $0x40] sm:$0xff]
        %v1821 = vld [vmem:[%s14 + $0x48] sm:$0xff]
        %v1822 = vld [vmem:[%s14 + $0x50] sm:$0xff]
        %v1823 = vld [vmem:[%s14 + $0x58] sm:$0xff]
        %v1824 = vld [vmem:[%s14 + $0x60] sm:$0xff]
        %v1825 = vld [vmem:[%s14 + $0x68] sm:$0xff]
        %v1826 = vld [vmem:[%s14 + $0x70] sm:$0xff]
        %v1827 = vld [vmem:[%s14 + $0x78] sm:$0xff]
        %v1828 = vld [vmem:[%s15] sm:$0x3]
        %v1830 = vlaneseq
        %v1831 = vshrl.u32 %v1830, 7
        %v1832 = vsub.s32 0, %v1831
        %v1833 = vrot.slane %v1828, %v1832
        %v1834 = vlaneseq
        %v1835 = vshrl.u32 %v1834, 7
        %v1836 = vsub.s32 1, %v1835
        %v1837 = vrot.slane %v1828, %v1836
        %v1856 = vunpack.c.l.b16 %v1812
        %v1857 = vunpack.c.h.b16 %v1812
        %v1858 = vunpack.c.l.b16 %v1813
        %v1859 = vunpack.c.h.b16 %v1813
        %v1860 = vunpack.c.l.b16 %v1814
        %v1861 = vunpack.c.h.b16 %v1814
        %v1862 = vunpack.c.l.b16 %v1815
        %v1863 = vunpack.c.h.b16 %v1815
        %v1864 = vunpack.c.l.b16 %v1816
        %v1865 = vunpack.c.h.b16 %v1816
        %v1866 = vunpack.c.l.b16 %v1817
        %v1867 = vunpack.c.h.b16 %v1817
        %v1868 = vunpack.c.l.b16 %v1818
        %v1869 = vunpack.c.h.b16 %v1818
        %v1870 = vunpack.c.l.b16 %v1819
        %v1871 = vunpack.c.h.b16 %v1819
        %v1872 = vunpack.c.l.b16 %v1820
        %v1873 = vunpack.c.h.b16 %v1820
        %v1874 = vunpack.c.l.b16 %v1821
        %v1875 = vunpack.c.h.b16 %v1821
        %v1876 = vunpack.c.l.b16 %v1822
        %v1877 = vunpack.c.h.b16 %v1822
        %v1878 = vunpack.c.l.b16 %v1823
        %v1879 = vunpack.c.h.b16 %v1823
        %v1880 = vunpack.c.l.b16 %v1824
        %v1881 = vunpack.c.h.b16 %v1824
        %v1882 = vunpack.c.l.b16 %v1825
        %v1883 = vunpack.c.h.b16 %v1825
        %v1884 = vunpack.c.l.b16 %v1826
        %v1885 = vunpack.c.h.b16 %v1826
        %v1886 = vunpack.c.l.b16 %v1827
        %v1887 = vunpack.c.h.b16 %v1827
        %v1888 = vpack.c.b16 %v1858, %v1856
        %v1889 = vpack.c.b16 %v1859, %v1857
        %v1890 = vpack.c.b16 %v1862, %v1860
        %v1891 = vpack.c.b16 %v1863, %v1861
        %v1892 = vpack.c.b16 %v1866, %v1864
        %v1893 = vpack.c.b16 %v1867, %v1865
        %v1894 = vpack.c.b16 %v1870, %v1868
        %v1895 = vpack.c.b16 %v1871, %v1869
        %v1896 = vpack.c.b16 %v1874, %v1872
        %v1897 = vpack.c.b16 %v1875, %v1873
        %v1898 = vpack.c.b16 %v1878, %v1876
        %v1899 = vpack.c.b16 %v1879, %v1877
        %v1900 = vpack.c.b16 %v1882, %v1880
        %v1901 = vpack.c.b16 %v1883, %v1881
        %v1902 = vpack.c.b16 %v1886, %v1884
        %v1903 = vpack.c.b16 %v1887, %v1885
        %1920 = vmatprep.subr.bf16.mxu0 %v1903
        %1921 = vmatpush1.bf16.msra.mxu0 %v1902
        %1922 = vmatprep.subr.bf16.mxu0 %v1901
        %1923 = vmatpush1.bf16.msra.mxu0 %v1900
        %1924 = vmatprep.subr.bf16.mxu0 %v1899
        %1925 = vmatpush1.bf16.msra.mxu0 %v1898
        %1926 = vmatprep.subr.bf16.mxu0 %v1897
        %1927 = vmatpush1.bf16.msra.mxu0 %v1896
        %1928 = vmatprep.subr.bf16.mxu0 %v1895
        %1929 = vmatpush1.bf16.msra.mxu0 %v1894
        %1930 = vmatprep.subr.bf16.mxu0 %v1893
        %1931 = vmatpush1.bf16.msra.mxu0 %v1892
        %1932 = vmatprep.subr.bf16.mxu0 %v1891
        %1933 = vmatpush1.bf16.msra.mxu0 %v1890
        %1934 = vmatprep.subr.bf16.mxu0 %v1889
        %1935 = vmatpush1.bf16.msra.mxu0 %v1888
        %1936 = vmatprep.subr.bf16.mxu0 0
        %1937 = vmatpush2.bf16.msra.mxu0 0
        %1938 = vmatprep.subr.bf16.mxu0 0
        %1939 = vmatpush2.bf16.msra.mxu0 0
        %1940 = vmatprep.subr.bf16.mxu0 0
        %1941 = vmatpush2.bf16.msra.mxu0 0
        %1942 = vmatprep.subr.bf16.mxu0 0
        %1943 = vmatpush2.bf16.msra.mxu0 0
        %1944 = vmatprep.subr.bf16.mxu0 0
        %1945 = vmatpush2.bf16.msra.mxu0 0
        %1946 = vmatprep.subr.bf16.mxu0 0
        %1947 = vmatpush2.bf16.msra.mxu0 0
        %1948 = vmatprep.subr.bf16.mxu0 0
        %1949 = vmatpush2.bf16.msra.mxu0 0
        %1950 = vmatprep.subr.bf16.mxu0 0
        %1951 = vmatpush2.bf16.msra.mxu0 0
        %1952 = vmatprep.mubr.bf16.mxu0 0
        %1953 = vmatmul.mubr.bf16.gmra.mxu0 %v1811
        %v1954 = vpop.f32.mrf.mxu0
        %v1955 = vadd.f32 %v1833, %v1954
        %v1956 = vpop.f32.mrf.mxu0
        %v1957 = vadd.f32 %v1837, %v1956
        %v1958 = vpop.f32.mrf.mxu0
        %v1959 = vpop.f32.mrf.mxu0
        %1960 = vdwg.mxu0
        %v1961 = vmul.f32 %v1955, 0.5
        %v1962 = vmul.f32 %v1957, 0.5
        %v1963 = vmul.f32 %v1955, 0.70710677
        %v1964 = vmul.f32 %v1957, 0.70710677
        %v1965 = verf.f32.pop %v1963
        %v1966 = verf.f32.pop %v1964
        %v1967 = vadd.f32 %v1965, 1.0
        %v1968 = vadd.f32 %v1966, 1.0
        %v1969 = vmul.f32 %v1961, %v1967
        %v1970 = vmul.f32 %v1962, %v1968
        %v1971 = vpack.c.bf16 %v1969, %v1969
        %v1972 = vpack.c.bf16 %v1970, %v1970
        %v1973 = vld [vmem:[%s16] sm:$0xf]
        %v1974 = vld [vmem:[%s16 + $0x4] sm:$0xf]
        %v1975 = vld [vmem:[%s16 + $0x8] sm:$0xf]
        %v1976 = vld [vmem:[%s16 + $0xc] sm:$0xf]
        %v1977 = vld [vmem:[%s16 + $0x10] sm:$0xf]
        %v1978 = vld [vmem:[%s16 + $0x14] sm:$0xf]
        %v1979 = vld [vmem:[%s16 + $0x18] sm:$0xf]
        %v1980 = vld [vmem:[%s16 + $0x1c] sm:$0xf]
        %v1981 = vld [vmem:[%s16 + $0x20] sm:$0xf]
        %v1982 = vld [vmem:[%s16 + $0x24] sm:$0xf]
        %v1983 = vld [vmem:[%s16 + $0x28] sm:$0xf]
        %v1984 = vld [vmem:[%s16 + $0x2c] sm:$0xf]
        %v1985 = vld [vmem:[%s16 + $0x30] sm:$0xf]
        %v1986 = vld [vmem:[%s16 + $0x34] sm:$0xf]
        %v1987 = vld [vmem:[%s16 + $0x38] sm:$0xf]
        %v1988 = vld [vmem:[%s16 + $0x3c] sm:$0xf]
        %v1989 = vld [vmem:[%s16 + $0x40] sm:$0xf]
        %v1990 = vld [vmem:[%s16 + $0x44] sm:$0xf]
        %v1991 = vld [vmem:[%s16 + $0x48] sm:$0xf]
        %v1992 = vld [vmem:[%s16 + $0x4c] sm:$0xf]
        %v1993 = vld [vmem:[%s16 + $0x50] sm:$0xf]
        %v1994 = vld [vmem:[%s16 + $0x54] sm:$0xf]
        %v1995 = vld [vmem:[%s16 + $0x58] sm:$0xf]
        %v1996 = vld [vmem:[%s16 + $0x5c] sm:$0xf]
        %v1997 = vld [vmem:[%s16 + $0x60] sm:$0xf]
        %v1998 = vld [vmem:[%s16 + $0x64] sm:$0xf]
        %v1999 = vld [vmem:[%s16 + $0x68] sm:$0xf]
        %v2000 = vld [vmem:[%s16 + $0x6c] sm:$0xf]
        %v2001 = vld [vmem:[%s16 + $0x70] sm:$0xf]
        %v2002 = vld [vmem:[%s16 + $0x74] sm:$0xf]
        %v2003 = vld [vmem:[%s16 + $0x78] sm:$0xf]
        %v2004 = vld [vmem:[%s16 + $0x7c] sm:$0xf]
        %v2005 = vld [vmem:[%s17] sm:$0x1]
        %v2007 = vlaneseq
        %v2008 = vshrl.u32 %v2007, 7
        %v2009 = vsub.s32 0, %v2008
        %v2010 = vrot.slane %v2005, %v2009
        %v2044 = vunpack.c.l.b16 %v1973
        %v2045 = vunpack.c.l.b16 %v1974
        %v2046 = vunpack.c.l.b16 %v1975
        %v2047 = vunpack.c.l.b16 %v1976
        %v2048 = vunpack.c.l.b16 %v1977
        %v2049 = vunpack.c.l.b16 %v1978
        %v2050 = vunpack.c.l.b16 %v1979
        %v2051 = vunpack.c.l.b16 %v1980
        %v2052 = vunpack.c.l.b16 %v1981
        %v2053 = vunpack.c.l.b16 %v1982
        %v2054 = vunpack.c.l.b16 %v1983
        %v2055 = vunpack.c.l.b16 %v1984
        %v2056 = vunpack.c.l.b16 %v1985
        %v2057 = vunpack.c.l.b16 %v1986
        %v2058 = vunpack.c.l.b16 %v1987
        %v2059 = vunpack.c.l.b16 %v1988
        %v2060 = vunpack.c.l.b16 %v1989
        %v2061 = vunpack.c.l.b16 %v1990
        %v2062 = vunpack.c.l.b16 %v1991
        %v2063 = vunpack.c.l.b16 %v1992
        %v2064 = vunpack.c.l.b16 %v1993
        %v2065 = vunpack.c.l.b16 %v1994
        %v2066 = vunpack.c.l.b16 %v1995
        %v2067 = vunpack.c.l.b16 %v1996
        %v2068 = vunpack.c.l.b16 %v1997
        %v2069 = vunpack.c.l.b16 %v1998
        %v2070 = vunpack.c.l.b16 %v1999
        %v2071 = vunpack.c.l.b16 %v2000
        %v2072 = vunpack.c.l.b16 %v2001
        %v2073 = vunpack.c.l.b16 %v2002
        %v2074 = vunpack.c.l.b16 %v2003
        %v2075 = vunpack.c.l.b16 %v2004
        %v2076 = vpack.c.b16 %v2045, %v2044
        %v2077 = vpack.c.b16 %v2047, %v2046
        %v2078 = vpack.c.b16 %v2049, %v2048
        %v2079 = vpack.c.b16 %v2051, %v2050
        %v2080 = vpack.c.b16 %v2053, %v2052
        %v2081 = vpack.c.b16 %v2055, %v2054
        %v2082 = vpack.c.b16 %v2057, %v2056
        %v2083 = vpack.c.b16 %v2059, %v2058
        %v2084 = vpack.c.b16 %v2061, %v2060
        %v2085 = vpack.c.b16 %v2063, %v2062
        %v2086 = vpack.c.b16 %v2065, %v2064
        %v2087 = vpack.c.b16 %v2067, %v2066
        %v2088 = vpack.c.b16 %v2069, %v2068
        %v2089 = vpack.c.b16 %v2071, %v2070
        %v2090 = vpack.c.b16 %v2073, %v2072
        %v2091 = vpack.c.b16 %v2075, %v2074
        %2108 = vmatprep.subr.bf16.mxu0 0
        %2109 = vmatpush1.bf16.msra.mxu0 %v2083
        %2110 = vmatprep.subr.bf16.mxu0 0
        %2111 = vmatpush1.bf16.msra.mxu0 %v2082
        %2112 = vmatprep.subr.bf16.mxu0 0
        %2113 = vmatpush1.bf16.msra.mxu0 %v2081
        %2114 = vmatprep.subr.bf16.mxu0 0
        %2115 = vmatpush1.bf16.msra.mxu0 %v2080
        %2116 = vmatprep.subr.bf16.mxu0 0
        %2117 = vmatpush1.bf16.msra.mxu0 %v2079
        %2118 = vmatprep.subr.bf16.mxu0 0
        %2119 = vmatpush1.bf16.msra.mxu0 %v2078
        %2120 = vmatprep.subr.bf16.mxu0 0
        %2121 = vmatpush1.bf16.msra.mxu0 %v2077
        %2122 = vmatprep.subr.bf16.mxu0 0
        %2123 = vmatpush1.bf16.msra.mxu0 %v2076
        %2124 = vmatprep.subr.bf16.mxu0 0
        %2125 = vmatpush2.bf16.msra.mxu0 %v2091
        %2126 = vmatprep.subr.bf16.mxu0 0
        %2127 = vmatpush2.bf16.msra.mxu0 %v2090
        %2128 = vmatprep.subr.bf16.mxu0 0
        %2129 = vmatpush2.bf16.msra.mxu0 %v2089
        %2130 = vmatprep.subr.bf16.mxu0 0
        %2131 = vmatpush2.bf16.msra.mxu0 %v2088
        %2132 = vmatprep.subr.bf16.mxu0 0
        %2133 = vmatpush2.bf16.msra.mxu0 %v2087
        %2134 = vmatprep.subr.bf16.mxu0 0
        %2135 = vmatpush2.bf16.msra.mxu0 %v2086
        %2136 = vmatprep.subr.bf16.mxu0 0
        %2137 = vmatpush2.bf16.msra.mxu0 %v2085
        %2138 = vmatprep.subr.bf16.mxu0 0
        %2139 = vmatpush2.bf16.msra.mxu0 %v2084
        %2140 = vmatprep.mubr.bf16.mxu0 %v1972
        %2141 = vmatmul.mubr.bf16.gmra.mxu0 %v1971
        %v2142 = vpop.f32.mrf.mxu0
        %v2143 = vadd.f32 %v2010, %v2142
        %v2144 = vpop.f32.mrf.mxu0
        %v2145 = vpop.f32.mrf.mxu0
        %v2146 = vpop.f32.mrf.mxu0
        %2147 = vdwg.mxu0
        %v2148 = vadd.f32 %v1783, %v2143
        %s2149 = sld [smem:[#allocation2 + $0x1]]
        %s2150 = sld [smem:[#allocation5 + $0x1]]
        %s2151 = scalar_lea.vmem %s6, 1
        %v2152 = vld [vmem:[%s2151] sm:$0x1]
        %s2153 = scalar_lea.vmem %s7, 1
        %v2154 = vld [vmem:[%s2153] sm:$0x1]
        %2155 = vadd.xlane.f32.xlu0 %v2148
        %v2156 = vpop.xlane.xlu0 %2155
        %v2157 = vmul.f32 %v2156, %v760
        %v2158 = vsub.f32 %v2148, %v2157
        %v2159 = vmul.f32 %v2158, %v2158
        %2160 = vadd.xlane.f32.xlu0 %v2159
        %v2161 = vpop.xlane.xlu0 %2160
        %v2162 = vmul.f32 %v2161, %v760
        %v2163 = vadd.f32 %v2162, 1e-06
        %v2164 = vrsqrt.pop %v2163
        %v2165 = vmul.f32 %v2158, %v2164
        %v2167 = vlaneseq
        %v2168 = vshrl.u32 %v2167, 7
        %v2169 = vsub.s32 0, %v2168
        %v2170 = vrot.slane %v2152, %v2169
        %v2172 = vmul.f32 %v2165, %v2170
        %v2174 = vlaneseq
        %v2175 = vshrl.u32 %v2174, 7
        %v2176 = vsub.s32 0, %v2175
        %v2177 = vrot.slane %v2154, %v2176
        %v2179 = vadd.f32 %v2172, %v2177
        %v2180 = vpack.c.bf16 %v2179, %v2179
        %s2181 = scalar_lea.vmem %s8, 192
        %v2182 = vld [vmem:[%s2181] sm:$0xff]
        %v2183 = vld [vmem:[%s2181 + $0x8] sm:$0xf]
        %v2184 = vld [vmem:[%s2181 + $0xc] sm:$0xff]
        %v2185 = vld [vmem:[%s2181 + $0x14] sm:$0xf]
        %v2186 = vld [vmem:[%s2181 + $0x18] sm:$0xff]
        %v2187 = vld [vmem:[%s2181 + $0x20] sm:$0xf]
        %v2188 = vld [vmem:[%s2181 + $0x24] sm:$0xff]
        %v2189 = vld [vmem:[%s2181 + $0x2c] sm:$0xf]
        %v2190 = vld [vmem:[%s2181 + $0x30] sm:$0xff]
        %v2191 = vld [vmem:[%s2181 + $0x38] sm:$0xf]
        %v2192 = vld [vmem:[%s2181 + $0x3c] sm:$0xff]
        %v2193 = vld [vmem:[%s2181 + $0x44] sm:$0xf]
        %v2194 = vld [vmem:[%s2181 + $0x48] sm:$0xff]
        %v2195 = vld [vmem:[%s2181 + $0x50] sm:$0xf]
        %v2196 = vld [vmem:[%s2181 + $0x54] sm:$0xff]
        %v2197 = vld [vmem:[%s2181 + $0x5c] sm:$0xf]
        %v2198 = vld [vmem:[%s2181 + $0x60] sm:$0xff]
        %v2199 = vld [vmem:[%s2181 + $0x68] sm:$0xf]
        %v2200 = vld [vmem:[%s2181 + $0x6c] sm:$0xff]
        %v2201 = vld [vmem:[%s2181 + $0x74] sm:$0xf]
        %v2202 = vld [vmem:[%s2181 + $0x78] sm:$0xff]
        %v2203 = vld [vmem:[%s2181 + $0x80] sm:$0xf]
        %v2204 = vld [vmem:[%s2181 + $0x84] sm:$0xff]
        %v2205 = vld [vmem:[%s2181 + $0x8c] sm:$0xf]
        %v2206 = vld [vmem:[%s2181 + $0x90] sm:$0xff]
        %v2207 = vld [vmem:[%s2181 + $0x98] sm:$0xf]
        %v2208 = vld [vmem:[%s2181 + $0x9c] sm:$0xff]
        %v2209 = vld [vmem:[%s2181 + $0xa4] sm:$0xf]
        %v2210 = vld [vmem:[%s2181 + $0xa8] sm:$0xff]
        %v2211 = vld [vmem:[%s2181 + $0xb0] sm:$0xf]
        %v2212 = vld [vmem:[%s2181 + $0xb4] sm:$0xff]
        %v2213 = vld [vmem:[%s2181 + $0xbc] sm:$0xf]
        %s2214 = scalar_lea.vmem %s9, 3
        %v2215 = vld [vmem:[%s2214] sm:$0x7]
        %v2217 = vlaneseq
        %v2218 = vshrl.u32 %v2217, 7
        %v2219 = vsub.s32 0, %v2218
        %v2220 = vrot.slane %v2215, %v2219
        %v2221 = vlaneseq
        %v2222 = vshrl.u32 %v2221, 7
        %v2223 = vsub.s32 1, %v2222
        %v2224 = vrot.slane %v2215, %v2223
        %v2225 = vlaneseq
        %v2226 = vshrl.u32 %v2225, 7
        %v2227 = vsub.s32 2, %v2226
        %v2228 = vrot.slane %v2215, %v2227
        %v2264 = vunpack.c.l.b16 %v2182
        %v2265 = vunpack.c.h.b16 %v2182
        %v2266 = vunpack.c.l.b16 %v2183
        %v2267 = vunpack.c.l.b16 %v2184
        %v2268 = vunpack.c.h.b16 %v2184
        %v2269 = vunpack.c.l.b16 %v2185
        %v2270 = vunpack.c.l.b16 %v2186
        %v2271 = vunpack.c.h.b16 %v2186
        %v2272 = vunpack.c.l.b16 %v2187
        %v2273 = vunpack.c.l.b16 %v2188
        %v2274 = vunpack.c.h.b16 %v2188
        %v2275 = vunpack.c.l.b16 %v2189
        %v2276 = vunpack.c.l.b16 %v2190
        %v2277 = vunpack.c.h.b16 %v2190
        %v2278 = vunpack.c.l.b16 %v2191
        %v2279 = vunpack.c.l.b16 %v2192
        %v2280 = vunpack.c.h.b16 %v2192
        %v2281 = vunpack.c.l.b16 %v2193
        %v2282 = vunpack.c.l.b16 %v2194
        %v2283 = vunpack.c.h.b16 %v2194
        %v2284 = vunpack.c.l.b16 %v2195
        %v2285 = vunpack.c.l.b16 %v2196
        %v2286 = vunpack.c.h.b16 %v2196
        %v2287 = vunpack.c.l.b16 %v2197
        %v2288 = vunpack.c.l.b16 %v2198
        %v2289 = vunpack.c.h.b16 %v2198
        %v2290 = vunpack.c.l.b16 %v2199
        %v2291 = vunpack.c.l.b16 %v2200
        %v2292 = vunpack.c.h.b16 %v2200
        %v2293 = vunpack.c.l.b16 %v2201
        %v2294 = vunpack.c.l.b16 %v2202
        %v2295 = vunpack.c.h.b16 %v2202
        %v2296 = vunpack.c.l.b16 %v2203
        %v2297 = vunpack.c.l.b16 %v2204
        %v2298 = vunpack.c.h.b16 %v2204
        %v2299 = vunpack.c.l.b16 %v2205
        %v2300 = vunpack.c.l.b16 %v2206
        %v2301 = vunpack.c.h.b16 %v2206
        %v2302 = vunpack.c.l.b16 %v2207
        %v2303 = vunpack.c.l.b16 %v2208
        %v2304 = vunpack.c.h.b16 %v2208
        %v2305 = vunpack.c.l.b16 %v2209
        %v2306 = vunpack.c.l.b16 %v2210
        %v2307 = vunpack.c.h.b16 %v2210
        %v2308 = vunpack.c.l.b16 %v2211
        %v2309 = vunpack.c.l.b16 %v2212
        %v2310 = vunpack.c.h.b16 %v2212
        %v2311 = vunpack.c.l.b16 %v2213
        %v2312 = vpack.c.b16 %v2267, %v2264
        %v2313 = vpack.c.b16 %v2268, %v2265
        %v2314 = vpack.c.b16 %v2269, %v2266
        %v2315 = vpack.c.b16 %v2273, %v2270
        %v2316 = vpack.c.b16 %v2274, %v2271
        %v2317 = vpack.c.b16 %v2275, %v2272
        %v2318 = vpack.c.b16 %v2279, %v2276
        %v2319 = vpack.c.b16 %v2280, %v2277
        %v2320 = vpack.c.b16 %v2281, %v2278
        %v2321 = vpack.c.b16 %v2285, %v2282
        %v2322 = vpack.c.b16 %v2286, %v2283
        %v2323 = vpack.c.b16 %v2287, %v2284
        %v2324 = vpack.c.b16 %v2291, %v2288
        %v2325 = vpack.c.b16 %v2292, %v2289
        %v2326 = vpack.c.b16 %v2293, %v2290
        %v2327 = vpack.c.b16 %v2297, %v2294
        %v2328 = vpack.c.b16 %v2298, %v2295
        %v2329 = vpack.c.b16 %v2299, %v2296
        %v2330 = vpack.c.b16 %v2303, %v2300
        %v2331 = vpack.c.b16 %v2304, %v2301
        %v2332 = vpack.c.b16 %v2305, %v2302
        %v2333 = vpack.c.b16 %v2309, %v2306
        %v2334 = vpack.c.b16 %v2310, %v2307
        %v2335 = vpack.c.b16 %v2311, %v2308
        %2360 = vmatprep.subr.bf16.mxu0 %v2334
        %2361 = vmatpush1.bf16.msra.mxu0 %v2333
        %2362 = vmatprep.subr.bf16.mxu0 %v2331
        %2363 = vmatpush1.bf16.msra.mxu0 %v2330
        %2364 = vmatprep.subr.bf16.mxu0 %v2328
        %2365 = vmatpush1.bf16.msra.mxu0 %v2327
        %2366 = vmatprep.subr.bf16.mxu0 %v2325
        %2367 = vmatpush1.bf16.msra.mxu0 %v2324
        %2368 = vmatprep.subr.bf16.mxu0 %v2322
        %2369 = vmatpush1.bf16.msra.mxu0 %v2321
        %2370 = vmatprep.subr.bf16.mxu0 %v2319
        %2371 = vmatpush1.bf16.msra.mxu0 %v2318
        %2372 = vmatprep.subr.bf16.mxu0 %v2316
        %2373 = vmatpush1.bf16.msra.mxu0 %v2315
        %2374 = vmatprep.subr.bf16.mxu0 %v2313
        %2375 = vmatpush1.bf16.msra.mxu0 %v2312
        %2376 = vmatprep.subr.bf16.mxu0 0
        %2377 = vmatpush2.bf16.msra.mxu0 0
        %2378 = vmatprep.subr.bf16.mxu0 0
        %2379 = vmatpush2.bf16.msra.mxu0 0
        %2380 = vmatprep.subr.bf16.mxu0 0
        %2381 = vmatpush2.bf16.msra.mxu0 0
        %2382 = vmatprep.subr.bf16.mxu0 0
        %2383 = vmatpush2.bf16.msra.mxu0 0
        %2384 = vmatprep.subr.bf16.mxu0 0
        %2385 = vmatpush2.bf16.msra.mxu0 0
        %2386 = vmatprep.subr.bf16.mxu0 0
        %2387 = vmatpush2.bf16.msra.mxu0 0
        %2388 = vmatprep.subr.bf16.mxu0 0
        %2389 = vmatpush2.bf16.msra.mxu0 0
        %2390 = vmatprep.subr.bf16.mxu0 0
        %2391 = vmatpush2.bf16.msra.mxu0 0
        %2392 = vmatprep.mubr.bf16.mxu0 0
        %2393 = vmatmul.mubr.bf16.gmra.mxu0 %v2180
        %v2394 = vpop.f32.mrf.mxu0
        %v2395 = vadd.f32 %v2220, %v2394
        %v2396 = vpop.f32.mrf.mxu0
        %v2397 = vadd.f32 %v2224, %v2396
        %v2398 = vpop.f32.mrf.mxu0
        %v2399 = vpop.f32.mrf.mxu0
        %2400 = vdwg.mxu0
        %2401 = vmatprep.subr.bf16.mxu0 0
        %2402 = vmatpush1.bf16.msra.mxu0 %v2335
        %2403 = vmatprep.subr.bf16.mxu0 0
        %2404 = vmatpush1.bf16.msra.mxu0 %v2332
        %2405 = vmatprep.subr.bf16.mxu0 0
        %2406 = vmatpush1.bf16.msra.mxu0 %v2329
        %2407 = vmatprep.subr.bf16.mxu0 0
        %2408 = vmatpush1.bf16.msra.mxu0 %v2326
        %2409 = vmatprep.subr.bf16.mxu0 0
        %2410 = vmatpush1.bf16.msra.mxu0 %v2323
        %2411 = vmatprep.subr.bf16.mxu0 0
        %2412 = vmatpush1.bf16.msra.mxu0 %v2320
        %2413 = vmatprep.subr.bf16.mxu0 0
        %2414 = vmatpush1.bf16.msra.mxu0 %v2317
        %2415 = vmatprep.subr.bf16.mxu0 0
        %2416 = vmatpush1.bf16.msra.mxu0 %v2314
        %2417 = vmatprep.subr.bf16.mxu0 0
        %2418 = vmatpush2.bf16.msra.mxu0 0
        %2419 = vmatprep.subr.bf16.mxu0 0
        %2420 = vmatpush2.bf16.msra.mxu0 0
        %2421 = vmatprep.subr.bf16.mxu0 0
        %2422 = vmatpush2.bf16.msra.mxu0 0
        %2423 = vmatprep.subr.bf16.mxu0 0
        %2424 = vmatpush2.bf16.msra.mxu0 0
        %2425 = vmatprep.subr.bf16.mxu0 0
        %2426 = vmatpush2.bf16.msra.mxu0 0
        %2427 = vmatprep.subr.bf16.mxu0 0
        %2428 = vmatpush2.bf16.msra.mxu0 0
        %2429 = vmatprep.subr.bf16.mxu0 0
        %2430 = vmatpush2.bf16.msra.mxu0 0
        %2431 = vmatprep.subr.bf16.mxu0 0
        %2432 = vmatpush2.bf16.msra.mxu0 0
        %2433 = vmatprep.mubr.bf16.mxu0 0
        %2434 = vmatmul.mubr.bf16.gmra.mxu0 %v2180
        %v2435 = vpop.f32.mrf.mxu0
        %v2436 = vadd.f32 %v2228, %v2435
        %v2437 = vpop.f32.mrf.mxu0
        %v2438 = vpop.f32.mrf.mxu0
        %v2439 = vpop.f32.mrf.mxu0
        %2440 = vdwg.mxu0
        %s2441 = scalar_lea.vmem %s10, 64
        %v2442 = vld [vmem:[%s2441] sm:$0xf]
        %v2443 = vld [vmem:[%s2441 + $0x4] sm:$0xf]
        %v2444 = vld [vmem:[%s2441 + $0x8] sm:$0xf]
        %v2445 = vld [vmem:[%s2441 + $0xc] sm:$0xf]
        %v2446 = vld [vmem:[%s2441 + $0x10] sm:$0xf]
        %v2447 = vld [vmem:[%s2441 + $0x14] sm:$0xf]
        %v2448 = vld [vmem:[%s2441 + $0x18] sm:$0xf]
        %v2449 = vld [vmem:[%s2441 + $0x1c] sm:$0xf]
        %v2450 = vld [vmem:[%s2441 + $0x20] sm:$0xf]
        %v2451 = vld [vmem:[%s2441 + $0x24] sm:$0xf]
        %v2452 = vld [vmem:[%s2441 + $0x28] sm:$0xf]
        %v2453 = vld [vmem:[%s2441 + $0x2c] sm:$0xf]
        %v2454 = vld [vmem:[%s2441 + $0x30] sm:$0xf]
        %v2455 = vld [vmem:[%s2441 + $0x34] sm:$0xf]
        %v2456 = vld [vmem:[%s2441 + $0x38] sm:$0xf]
        %v2457 = vld [vmem:[%s2441 + $0x3c] sm:$0xf]
        %v2458 = vstv %s2149
        %v2459 = vmul.f32 %v2458, %v744
        %v2460 = vstv %s2150
        %v2461 = vmul.f32 %v2460, %v747
        %v2462 = vadd.f32 %v2459, %v2461
        %v2463 = vmul.f32 %v2458, %v750
        %v2464 = vmul.f32 %v2460, %v753
        %v2465 = vadd.f32 %v2463, %v2464
        %v2466 = vmul.f32 %v2462, %v2462
        %v2467 = vsel %vm1068, %v2466, 0.0
        %2468 = vadd.xlane.f32.xlu0 %v2467
        %v2469 = vpop.xlane.xlu0 %2468
        %v2470 = vrot.slane %v2469, 4
        %v2471 = vadd.f32 %v2469, %v2470
        %v2472 = vrot.slane %v2471, 2
        %v2473 = vadd.f32 %v2471, %v2472
        %v2474 = vrot.slane %v2473, 1
        %v2475 = vadd.f32 %v2473, %v2474
        %s2476 = vtos %v2475
        %s2477 = smax.f32 %s2476, 1e-12
        %v2478 = vstv %s2477
        %v2479 = vrcp.pop %v2478
        %s2480 = vtos %v2479
        %s2481 = smul.f32 50.0, %s2480
        %2483 = vset.pattern.permute.xlu0 0
        %2484 = vperm.xlu0 %2483, %v2462
        %v2485 = vpop.permute.xlu0 %2484
        %v2488 = vlaneseq
        %v2489 = vshrl.u32 %v2488, 7
        %v2490 = vsub.s32 0, %v2489
        %v2491 = vrot.slane %v2465, %v2490
        %v2493 = vmul.f32 %v2485, %v2491
        %v2494 = vstv %s2481
        %v2495 = vmul.f32 %v2494, %v2493
        %v2496 = vpack.c.bf16 %v2395, %v2395
        %v2497 = vpack.c.bf16 %v2397, %v2397
        %v2499 = vsel %vm1100, %v2496, 0
        %v2502 = vsel %vm1100, %v2497, 0
        %2504 = vmatprep.subr.bf16.mxu0 0
        %2505 = vmatpush1.bf16.xpose.msra.mxu0 0
        %2506 = vmatprep.subr.bf16.mxu0 0
        %2507 = vmatpush1.bf16.xpose.msra.mxu0 0
        %2508 = vmatprep.subr.bf16.mxu0 0
        %2509 = vmatpush1.bf16.xpose.msra.mxu0 0
        %2510 = vmatprep.subr.bf16.mxu0 0
        %2511 = vmatpush1.bf16.xpose.msra.mxu0 0
        %2512 = vmatprep.subr.bf16.mxu0 0
        %2513 = vmatpush1.bf16.xpose.msra.mxu0 0
        %2514 = vmatprep.subr.bf16.mxu0 0
        %2515 = vmatpush1.bf16.xpose.msra.mxu0 0
        %2516 = vmatprep.subr.bf16.mxu0 0
        %2517 = vmatpush1.bf16.xpose.msra.mxu0 0
        %2518 = vmatprep.subr.bf16.mxu0 0
        %2519 = vmatpush1.bf16.xpose.msra.mxu0 %v2502
        %2520 = vmatprep.subr.bf16.mxu0 0
        %2521 = vmatpush2.bf16.xpose.msra.mxu0 0
        %2522 = vmatprep.subr.bf16.mxu0 0
        %2523 = vmatpush2.bf16.xpose.msra.mxu0 0
        %2524 = vmatprep.subr.bf16.mxu0 0
        %2525 = vmatpush2.bf16.xpose.msra.mxu0 0
        %2526 = vmatprep.subr.bf16.mxu0 0
        %2527 = vmatpush2.bf16.xpose.msra.mxu0 0
        %2528 = vmatprep.subr.bf16.mxu0 0
        %2529 = vmatpush2.bf16.xpose.msra.mxu0 0
        %2530 = vmatprep.subr.bf16.mxu0 0
        %2531 = vmatpush2.bf16.xpose.msra.mxu0 0
        %2532 = vmatprep.subr.bf16.mxu0 0
        %2533 = vmatpush2.bf16.xpose.msra.mxu0 0
        %2534 = vmatprep.subr.bf16.mxu0 0
        %2535 = vmatpush2.bf16.xpose.msra.mxu0 0
        %2536 = vmatprep.mubr.bf16.mxu0 0
        %2537 = vmatmul.mubr.bf16.gmra.mxu0 %v2499
        %v2538 = vpop.f32.mrf.mxu0
        %v2539 = vadd.f32 0.0, %v2538
        %v2540 = vpop.f32.mrf.mxu0
        %v2541 = vpop.f32.mrf.mxu0
        %v2542 = vpop.f32.mrf.mxu0
        %2543 = vdwg.mxu0
        %v2544 = vmul.f32 %v2539, 0.17677669
        %v2545 = vadd.f32 %v2544, %v2495
        %v2546 = vsel %vm1149, %v2545, -inf
        %2547 = vmax.xlane.f32.xlu0 %v2546
        %v2548 = vpop.xlane.xlu0 %2547
        %v2549 = vsub.f32 %v2545, %v2548
        %v2550 = vmul.f32 %v2549, 1.442695
        %v2551 = vpow.pop %v2550
        %v2552 = vsel %vm1149, %v2551, 0.0
        %2553 = vadd.xlane.f32.xlu0 %v2552
        %v2554 = vpop.xlane.xlu0 %2553
        %v2555 = vrcp.pop %v2554
        %v2556 = vmul.f32 %v2551, %v2555
        %v2557 = vpack.c.bf16 %v2556, %v2556
        %v2558 = vpack.c.bf16 %v2436, %v2436
        %v2560 = vsel %vm1149, %v2557, 0
        %v2563 = vsel %vm1166, %v2558, 0
        %2565 = vmatprep.subr.bf16.mxu0 0
        %2566 = vmatpush1.bf16.msra.mxu0 0
        %2567 = vmatprep.subr.bf16.mxu0 0
        %2568 = vmatpush1.bf16.msra.mxu0 0
        %2569 = vmatprep.subr.bf16.mxu0 0
        %2570 = vmatpush1.bf16.msra.mxu0 0
        %2571 = vmatprep.subr.bf16.mxu0 0
        %2572 = vmatpush1.bf16.msra.mxu0 0
        %2573 = vmatprep.subr.bf16.mxu0 0
        %2574 = vmatpush1.bf16.msra.mxu0 0
        %2575 = vmatprep.subr.bf16.mxu0 0
        %2576 = vmatpush1.bf16.msra.mxu0 0
        %2577 = vmatprep.subr.bf16.mxu0 0
        %2578 = vmatpush1.bf16.msra.mxu0 0
        %2579 = vmatprep.subr.bf16.mxu0 0
        %2580 = vmatpush1.bf16.msra.mxu0 %v2563
        %2581 = vmatprep.subr.bf16.mxu0 0
        %2582 = vmatpush2.bf16.msra.mxu0 0
        %2583 = vmatprep.subr.bf16.mxu0 0
        %2584 = vmatpush2.bf16.msra.mxu0 0
        %2585 = vmatprep.subr.bf16.mxu0 0
        %2586 = vmatpush2.bf16.msra.mxu0 0
        %2587 = vmatprep.subr.bf16.mxu0 0
        %2588 = vmatpush2.bf16.msra.mxu0 0
        %2589 = vmatprep.subr.bf16.mxu0 0
        %2590 = vmatpush2.bf16.msra.mxu0 0
        %2591 = vmatprep.subr.bf16.mxu0 0
        %2592 = vmatpush2.bf16.msra.mxu0 0
        %2593 = vmatprep.subr.bf16.mxu0 0
        %2594 = vmatpush2.bf16.msra.mxu0 0
        %2595 = vmatprep.subr.bf16.mxu0 0
        %2596 = vmatpush2.bf16.msra.mxu0 0
        %2597 = vmatprep.mubr.bf16.mxu0 0
        %2598 = vmatmul.mubr.bf16.gmra.mxu0 %v2560
        %v2599 = vpop.f32.mrf.mxu0
        %v2600 = vadd.f32 0.0, %v2599
        %v2601 = vpop.f32.mrf.mxu0
        %v2602 = vpop.f32.mrf.mxu0
        %v2603 = vpop.f32.mrf.mxu0
        %2604 = vdwg.mxu0
        %v2605 = vpack.c.bf16 %v2600, %v2600
        %2607 = vrot.lane.b32.xlu0 %v2496, 96
        %v2608 = vpop.permute.xlu0 %2607
        %2610 = vrot.lane.b32.xlu0 %v2497, 96
        %v2611 = vpop.permute.xlu0 %2610
        %v2613 = vsel %vm1100, %v2608, 0
        %v2616 = vsel %vm1100, %v2611, 0
        %2618 = vmatprep.subr.bf16.mxu0 0
        %2619 = vmatpush1.bf16.xpose.msra.mxu0 0
        %2620 = vmatprep.subr.bf16.mxu0 0
        %2621 = vmatpush1.bf16.xpose.msra.mxu0 0
        %2622 = vmatprep.subr.bf16.mxu0 0
        %2623 = vmatpush1.bf16.xpose.msra.mxu0 0
        %2624 = vmatprep.subr.bf16.mxu0 0
        %2625 = vmatpush1.bf16.xpose.msra.mxu0 0
        %2626 = vmatprep.subr.bf16.mxu0 0
        %2627 = vmatpush1.bf16.xpose.msra.mxu0 0
        %2628 = vmatprep.subr.bf16.mxu0 0
        %2629 = vmatpush1.bf16.xpose.msra.mxu0 0
        %2630 = vmatprep.subr.bf16.mxu0 0
        %2631 = vmatpush1.bf16.xpose.msra.mxu0 0
        %2632 = vmatprep.subr.bf16.mxu0 0
        %2633 = vmatpush1.bf16.xpose.msra.mxu0 %v2616
        %2634 = vmatprep.subr.bf16.mxu0 0
        %2635 = vmatpush2.bf16.xpose.msra.mxu0 0
        %2636 = vmatprep.subr.bf16.mxu0 0
        %2637 = vmatpush2.bf16.xpose.msra.mxu0 0
        %2638 = vmatprep.subr.bf16.mxu0 0
        %2639 = vmatpush2.bf16.xpose.msra.mxu0 0
        %2640 = vmatprep.subr.bf16.mxu0 0
        %2641 = vmatpush2.bf16.xpose.msra.mxu0 0
        %2642 = vmatprep.subr.bf16.mxu0 0
        %2643 = vmatpush2.bf16.xpose.msra.mxu0 0
        %2644 = vmatprep.subr.bf16.mxu0 0
        %2645 = vmatpush2.bf16.xpose.msra.mxu0 0
        %2646 = vmatprep.subr.bf16.mxu0 0
        %2647 = vmatpush2.bf16.xpose.msra.mxu0 0
        %2648 = vmatprep.subr.bf16.mxu0 0
        %2649 = vmatpush2.bf16.xpose.msra.mxu0 0
        %2650 = vmatprep.mubr.bf16.mxu0 0
        %2651 = vmatmul.mubr.bf16.gmra.mxu0 %v2613
        %v2652 = vpop.f32.mrf.mxu0
        %v2653 = vadd.f32 0.0, %v2652
        %v2654 = vpop.f32.mrf.mxu0
        %v2655 = vpop.f32.mrf.mxu0
        %v2656 = vpop.f32.mrf.mxu0
        %2657 = vdwg.mxu0
        %v2658 = vmul.f32 %v2653, 0.17677669
        %v2659 = vadd.f32 %v2658, %v2495
        %v2660 = vsel %vm1149, %v2659, -inf
        %2661 = vmax.xlane.f32.xlu0 %v2660
        %v2662 = vpop.xlane.xlu0 %2661
        %v2663 = vsub.f32 %v2659, %v2662
        %v2664 = vmul.f32 %v2663, 1.442695
        %v2665 = vpow.pop %v2664
        %v2666 = vsel %vm1149, %v2665, 0.0
        %2667 = vadd.xlane.f32.xlu0 %v2666
        %v2668 = vpop.xlane.xlu0 %2667
        %v2669 = vrcp.pop %v2668
        %v2670 = vmul.f32 %v2665, %v2669
        %v2671 = vpack.c.bf16 %v2670, %v2670
        %2673 = vrot.lane.b32.xlu0 %v2558, 96
        %v2674 = vpop.permute.xlu0 %2673
        %v2676 = vsel %vm1149, %v2671, 0
        %v2679 = vsel %vm1166, %v2674, 0
        %2681 = vmatprep.subr.bf16.mxu0 0
        %2682 = vmatpush1.bf16.msra.mxu0 0
        %2683 = vmatprep.subr.bf16.mxu0 0
        %2684 = vmatpush1.bf16.msra.mxu0 0
        %2685 = vmatprep.subr.bf16.mxu0 0
        %2686 = vmatpush1.bf16.msra.mxu0 0
        %2687 = vmatprep.subr.bf16.mxu0 0
        %2688 = vmatpush1.bf16.msra.mxu0 0
        %2689 = vmatprep.subr.bf16.mxu0 0
        %2690 = vmatpush1.bf16.msra.mxu0 0
        %2691 = vmatprep.subr.bf16.mxu0 0
        %2692 = vmatpush1.bf16.msra.mxu0 0
        %2693 = vmatprep.subr.bf16.mxu0 0
        %2694 = vmatpush1.bf16.msra.mxu0 0
        %2695 = vmatprep.subr.bf16.mxu0 0
        %2696 = vmatpush1.bf16.msra.mxu0 %v2679
        %2697 = vmatprep.subr.bf16.mxu0 0
        %2698 = vmatpush2.bf16.msra.mxu0 0
        %2699 = vmatprep.subr.bf16.mxu0 0
        %2700 = vmatpush2.bf16.msra.mxu0 0
        %2701 = vmatprep.subr.bf16.mxu0 0
        %2702 = vmatpush2.bf16.msra.mxu0 0
        %2703 = vmatprep.subr.bf16.mxu0 0
        %2704 = vmatpush2.bf16.msra.mxu0 0
        %2705 = vmatprep.subr.bf16.mxu0 0
        %2706 = vmatpush2.bf16.msra.mxu0 0
        %2707 = vmatprep.subr.bf16.mxu0 0
        %2708 = vmatpush2.bf16.msra.mxu0 0
        %2709 = vmatprep.subr.bf16.mxu0 0
        %2710 = vmatpush2.bf16.msra.mxu0 0
        %2711 = vmatprep.subr.bf16.mxu0 0
        %2712 = vmatpush2.bf16.msra.mxu0 0
        %2713 = vmatprep.mubr.bf16.mxu0 0
        %2714 = vmatmul.mubr.bf16.gmra.mxu0 %v2676
        %v2715 = vpop.f32.mrf.mxu0
        %v2716 = vadd.f32 0.0, %v2715
        %v2717 = vpop.f32.mrf.mxu0
        %v2718 = vpop.f32.mrf.mxu0
        %v2719 = vpop.f32.mrf.mxu0
        %2720 = vdwg.mxu0
        %v2721 = vpack.c.bf16 %v2716, %v2716
        %v2726 = vunpack.c.l.b16 %v2446
        %v2727 = vunpack.c.l.b16 %v2447
        %v2728 = vunpack.c.l.b16 %v2448
        %v2729 = vunpack.c.l.b16 %v2449
        %v2730 = vpack.c.b16 %v2727, %v2726
        %v2731 = vpack.c.b16 %v2729, %v2728
        %v2735 = vsel %vm1100, %v2721, 0
        %2737 = vmatprep.subr.bf16.mxu0 0
        %2738 = vmatpush1.bf16.msra.mxu0 0
        %2739 = vmatprep.subr.bf16.mxu0 0
        %2740 = vmatpush1.bf16.msra.mxu0 0
        %2741 = vmatprep.subr.bf16.mxu0 0
        %2742 = vmatpush1.bf16.msra.mxu0 0
        %2743 = vmatprep.subr.bf16.mxu0 0
        %2744 = vmatpush1.bf16.msra.mxu0 0
        %2745 = vmatprep.subr.bf16.mxu0 0
        %2746 = vmatpush1.bf16.msra.mxu0 0
        %2747 = vmatprep.subr.bf16.mxu0 0
        %2748 = vmatpush1.bf16.msra.mxu0 0
        %2749 = vmatprep.subr.bf16.mxu0 0
        %2750 = vmatpush1.bf16.msra.mxu0 %v2731
        %2751 = vmatprep.subr.bf16.mxu0 0
        %2752 = vmatpush1.bf16.msra.mxu0 %v2730
        %2753 = vmatprep.subr.bf16.mxu0 0
        %2754 = vmatpush2.bf16.msra.mxu0 0
        %2755 = vmatprep.subr.bf16.mxu0 0
        %2756 = vmatpush2.bf16.msra.mxu0 0
        %2757 = vmatprep.subr.bf16.mxu0 0
        %2758 = vmatpush2.bf16.msra.mxu0 0
        %2759 = vmatprep.subr.bf16.mxu0 0
        %2760 = vmatpush2.bf16.msra.mxu0 0
        %2761 = vmatprep.subr.bf16.mxu0 0
        %2762 = vmatpush2.bf16.msra.mxu0 0
        %2763 = vmatprep.subr.bf16.mxu0 0
        %2764 = vmatpush2.bf16.msra.mxu0 0
        %2765 = vmatprep.subr.bf16.mxu0 0
        %2766 = vmatpush2.bf16.msra.mxu0 0
        %2767 = vmatprep.subr.bf16.mxu0 0
        %2768 = vmatpush2.bf16.msra.mxu0 0
        %2769 = vmatprep.mubr.bf16.mxu0 0
        %2770 = vmatmul.mubr.bf16.gmra.mxu0 %v2735
        %v2771 = vpop.f32.mrf.mxu0
        %v2772 = vadd.f32 0.0, %v2771
        %v2773 = vpop.f32.mrf.mxu0
        %v2774 = vpop.f32.mrf.mxu0
        %v2775 = vpop.f32.mrf.mxu0
        %2776 = vdwg.mxu0
        %v2781 = vunpack.c.l.b16 %v2442
        %v2782 = vunpack.c.l.b16 %v2443
        %v2783 = vunpack.c.l.b16 %v2444
        %v2784 = vunpack.c.l.b16 %v2445
        %v2785 = vpack.c.b16 %v2782, %v2781
        %v2786 = vpack.c.b16 %v2784, %v2783
        %v2790 = vsel %vm1100, %v2605, 0
        %2792 = vmatprep.subr.bf16.mxu0 0
        %2793 = vmatpush1.bf16.msra.mxu0 0
        %2794 = vmatprep.subr.bf16.mxu0 0
        %2795 = vmatpush1.bf16.msra.mxu0 0
        %2796 = vmatprep.subr.bf16.mxu0 0
        %2797 = vmatpush1.bf16.msra.mxu0 0
        %2798 = vmatprep.subr.bf16.mxu0 0
        %2799 = vmatpush1.bf16.msra.mxu0 0
        %2800 = vmatprep.subr.bf16.mxu0 0
        %2801 = vmatpush1.bf16.msra.mxu0 0
        %2802 = vmatprep.subr.bf16.mxu0 0
        %2803 = vmatpush1.bf16.msra.mxu0 0
        %2804 = vmatprep.subr.bf16.mxu0 0
        %2805 = vmatpush1.bf16.msra.mxu0 %v2786
        %2806 = vmatprep.subr.bf16.mxu0 0
        %2807 = vmatpush1.bf16.msra.mxu0 %v2785
        %2808 = vmatprep.subr.bf16.mxu0 0
        %2809 = vmatpush2.bf16.msra.mxu0 0
        %2810 = vmatprep.subr.bf16.mxu0 0
        %2811 = vmatpush2.bf16.msra.mxu0 0
        %2812 = vmatprep.subr.bf16.mxu0 0
        %2813 = vmatpush2.bf16.msra.mxu0 0
        %2814 = vmatprep.subr.bf16.mxu0 0
        %2815 = vmatpush2.bf16.msra.mxu0 0
        %2816 = vmatprep.subr.bf16.mxu0 0
        %2817 = vmatpush2.bf16.msra.mxu0 0
        %2818 = vmatprep.subr.bf16.mxu0 0
        %2819 = vmatpush2.bf16.msra.mxu0 0
        %2820 = vmatprep.subr.bf16.mxu0 0
        %2821 = vmatpush2.bf16.msra.mxu0 0
        %2822 = vmatprep.subr.bf16.mxu0 0
        %2823 = vmatpush2.bf16.msra.mxu0 0
        %2824 = vmatprep.mubr.bf16.mxu0 0
        %2825 = vmatmul.mubr.bf16.gmra.mxu0 %v2790
        %v2826 = vpop.f32.mrf.mxu0
        %v2827 = vadd.f32 %v2772, %v2826
        %v2828 = vpop.f32.mrf.mxu0
        %v2829 = vpop.f32.mrf.mxu0
        %v2830 = vpop.f32.mrf.mxu0
        %2831 = vdwg.mxu0
        %2832 = vrot.lane.b32.xlu0 %v2496, 64
        %v2833 = vpop.permute.xlu0 %2832
        %2834 = vrot.lane.b32.xlu0 %v2497, 64
        %v2835 = vpop.permute.xlu0 %2834
        %v2837 = vsel %vm1100, %v2833, 0
        %v2840 = vsel %vm1100, %v2835, 0
        %2842 = vmatprep.subr.bf16.mxu0 0
        %2843 = vmatpush1.bf16.xpose.msra.mxu0 0
        %2844 = vmatprep.subr.bf16.mxu0 0
        %2845 = vmatpush1.bf16.xpose.msra.mxu0 0
        %2846 = vmatprep.subr.bf16.mxu0 0
        %2847 = vmatpush1.bf16.xpose.msra.mxu0 0
        %2848 = vmatprep.subr.bf16.mxu0 0
        %2849 = vmatpush1.bf16.xpose.msra.mxu0 0
        %2850 = vmatprep.subr.bf16.mxu0 0
        %2851 = vmatpush1.bf16.xpose.msra.mxu0 0
        %2852 = vmatprep.subr.bf16.mxu0 0
        %2853 = vmatpush1.bf16.xpose.msra.mxu0 0
        %2854 = vmatprep.subr.bf16.mxu0 0
        %2855 = vmatpush1.bf16.xpose.msra.mxu0 0
        %2856 = vmatprep.subr.bf16.mxu0 0
        %2857 = vmatpush1.bf16.xpose.msra.mxu0 %v2840
        %2858 = vmatprep.subr.bf16.mxu0 0
        %2859 = vmatpush2.bf16.xpose.msra.mxu0 0
        %2860 = vmatprep.subr.bf16.mxu0 0
        %2861 = vmatpush2.bf16.xpose.msra.mxu0 0
        %2862 = vmatprep.subr.bf16.mxu0 0
        %2863 = vmatpush2.bf16.xpose.msra.mxu0 0
        %2864 = vmatprep.subr.bf16.mxu0 0
        %2865 = vmatpush2.bf16.xpose.msra.mxu0 0
        %2866 = vmatprep.subr.bf16.mxu0 0
        %2867 = vmatpush2.bf16.xpose.msra.mxu0 0
        %2868 = vmatprep.subr.bf16.mxu0 0
        %2869 = vmatpush2.bf16.xpose.msra.mxu0 0
        %2870 = vmatprep.subr.bf16.mxu0 0
        %2871 = vmatpush2.bf16.xpose.msra.mxu0 0
        %2872 = vmatprep.subr.bf16.mxu0 0
        %2873 = vmatpush2.bf16.xpose.msra.mxu0 0
        %2874 = vmatprep.mubr.bf16.mxu0 0
        %2875 = vmatmul.mubr.bf16.gmra.mxu0 %v2837
        %v2876 = vpop.f32.mrf.mxu0
        %v2877 = vadd.f32 0.0, %v2876
        %v2878 = vpop.f32.mrf.mxu0
        %v2879 = vpop.f32.mrf.mxu0
        %v2880 = vpop.f32.mrf.mxu0
        %2881 = vdwg.mxu0
        %v2882 = vmul.f32 %v2877, 0.17677669
        %v2883 = vadd.f32 %v2882, %v2495
        %v2884 = vsel %vm1149, %v2883, -inf
        %2885 = vmax.xlane.f32.xlu0 %v2884
        %v2886 = vpop.xlane.xlu0 %2885
        %v2887 = vsub.f32 %v2883, %v2886
        %v2888 = vmul.f32 %v2887, 1.442695
        %v2889 = vpow.pop %v2888
        %v2890 = vsel %vm1149, %v2889, 0.0
        %2891 = vadd.xlane.f32.xlu0 %v2890
        %v2892 = vpop.xlane.xlu0 %2891
        %v2893 = vrcp.pop %v2892
        %v2894 = vmul.f32 %v2889, %v2893
        %v2895 = vpack.c.bf16 %v2894, %v2894
        %2896 = vrot.lane.b32.xlu0 %v2558, 64
        %v2897 = vpop.permute.xlu0 %2896
        %v2899 = vsel %vm1149, %v2895, 0
        %v2902 = vsel %vm1166, %v2897, 0
        %2904 = vmatprep.subr.bf16.mxu0 0
        %2905 = vmatpush1.bf16.msra.mxu0 0
        %2906 = vmatprep.subr.bf16.mxu0 0
        %2907 = vmatpush1.bf16.msra.mxu0 0
        %2908 = vmatprep.subr.bf16.mxu0 0
        %2909 = vmatpush1.bf16.msra.mxu0 0
        %2910 = vmatprep.subr.bf16.mxu0 0
        %2911 = vmatpush1.bf16.msra.mxu0 0
        %2912 = vmatprep.subr.bf16.mxu0 0
        %2913 = vmatpush1.bf16.msra.mxu0 0
        %2914 = vmatprep.subr.bf16.mxu0 0
        %2915 = vmatpush1.bf16.msra.mxu0 0
        %2916 = vmatprep.subr.bf16.mxu0 0
        %2917 = vmatpush1.bf16.msra.mxu0 0
        %2918 = vmatprep.subr.bf16.mxu0 0
        %2919 = vmatpush1.bf16.msra.mxu0 %v2902
        %2920 = vmatprep.subr.bf16.mxu0 0
        %2921 = vmatpush2.bf16.msra.mxu0 0
        %2922 = vmatprep.subr.bf16.mxu0 0
        %2923 = vmatpush2.bf16.msra.mxu0 0
        %2924 = vmatprep.subr.bf16.mxu0 0
        %2925 = vmatpush2.bf16.msra.mxu0 0
        %2926 = vmatprep.subr.bf16.mxu0 0
        %2927 = vmatpush2.bf16.msra.mxu0 0
        %2928 = vmatprep.subr.bf16.mxu0 0
        %2929 = vmatpush2.bf16.msra.mxu0 0
        %2930 = vmatprep.subr.bf16.mxu0 0
        %2931 = vmatpush2.bf16.msra.mxu0 0
        %2932 = vmatprep.subr.bf16.mxu0 0
        %2933 = vmatpush2.bf16.msra.mxu0 0
        %2934 = vmatprep.subr.bf16.mxu0 0
        %2935 = vmatpush2.bf16.msra.mxu0 0
        %2936 = vmatprep.mubr.bf16.mxu0 0
        %2937 = vmatmul.mubr.bf16.gmra.mxu0 %v2899
        %v2938 = vpop.f32.mrf.mxu0
        %v2939 = vadd.f32 0.0, %v2938
        %v2940 = vpop.f32.mrf.mxu0
        %v2941 = vpop.f32.mrf.mxu0
        %v2942 = vpop.f32.mrf.mxu0
        %2943 = vdwg.mxu0
        %v2944 = vpack.c.bf16 %v2939, %v2939
        %v2949 = vunpack.c.l.b16 %v2450
        %v2950 = vunpack.c.l.b16 %v2451
        %v2951 = vunpack.c.l.b16 %v2452
        %v2952 = vunpack.c.l.b16 %v2453
        %v2953 = vpack.c.b16 %v2950, %v2949
        %v2954 = vpack.c.b16 %v2952, %v2951
        %v2958 = vsel %vm1100, %v2944, 0
        %2960 = vmatprep.subr.bf16.mxu0 0
        %2961 = vmatpush1.bf16.msra.mxu0 0
        %2962 = vmatprep.subr.bf16.mxu0 0
        %2963 = vmatpush1.bf16.msra.mxu0 0
        %2964 = vmatprep.subr.bf16.mxu0 0
        %2965 = vmatpush1.bf16.msra.mxu0 0
        %2966 = vmatprep.subr.bf16.mxu0 0
        %2967 = vmatpush1.bf16.msra.mxu0 0
        %2968 = vmatprep.subr.bf16.mxu0 0
        %2969 = vmatpush1.bf16.msra.mxu0 0
        %2970 = vmatprep.subr.bf16.mxu0 0
        %2971 = vmatpush1.bf16.msra.mxu0 0
        %2972 = vmatprep.subr.bf16.mxu0 0
        %2973 = vmatpush1.bf16.msra.mxu0 %v2954
        %2974 = vmatprep.subr.bf16.mxu0 0
        %2975 = vmatpush1.bf16.msra.mxu0 %v2953
        %2976 = vmatprep.subr.bf16.mxu0 0
        %2977 = vmatpush2.bf16.msra.mxu0 0
        %2978 = vmatprep.subr.bf16.mxu0 0
        %2979 = vmatpush2.bf16.msra.mxu0 0
        %2980 = vmatprep.subr.bf16.mxu0 0
        %2981 = vmatpush2.bf16.msra.mxu0 0
        %2982 = vmatprep.subr.bf16.mxu0 0
        %2983 = vmatpush2.bf16.msra.mxu0 0
        %2984 = vmatprep.subr.bf16.mxu0 0
        %2985 = vmatpush2.bf16.msra.mxu0 0
        %2986 = vmatprep.subr.bf16.mxu0 0
        %2987 = vmatpush2.bf16.msra.mxu0 0
        %2988 = vmatprep.subr.bf16.mxu0 0
        %2989 = vmatpush2.bf16.msra.mxu0 0
        %2990 = vmatprep.subr.bf16.mxu0 0
        %2991 = vmatpush2.bf16.msra.mxu0 0
        %2992 = vmatprep.mubr.bf16.mxu0 0
        %2993 = vmatmul.mubr.bf16.gmra.mxu0 %v2958
        %v2994 = vpop.f32.mrf.mxu0
        %v2995 = vadd.f32 0.0, %v2994
        %v2996 = vpop.f32.mrf.mxu0
        %v2997 = vpop.f32.mrf.mxu0
        %v2998 = vpop.f32.mrf.mxu0
        %2999 = vdwg.mxu0
        %v3000 = vadd.f32 %v2827, %v2995
        %3001 = vrot.lane.b32.xlu0 %v2496, 32
        %v3002 = vpop.permute.xlu0 %3001
        %3003 = vrot.lane.b32.xlu0 %v2497, 32
        %v3004 = vpop.permute.xlu0 %3003
        %v3006 = vsel %vm1100, %v3002, 0
        %v3009 = vsel %vm1100, %v3004, 0
        %3011 = vmatprep.subr.bf16.mxu0 0
        %3012 = vmatpush1.bf16.xpose.msra.mxu0 0
        %3013 = vmatprep.subr.bf16.mxu0 0
        %3014 = vmatpush1.bf16.xpose.msra.mxu0 0
        %3015 = vmatprep.subr.bf16.mxu0 0
        %3016 = vmatpush1.bf16.xpose.msra.mxu0 0
        %3017 = vmatprep.subr.bf16.mxu0 0
        %3018 = vmatpush1.bf16.xpose.msra.mxu0 0
        %3019 = vmatprep.subr.bf16.mxu0 0
        %3020 = vmatpush1.bf16.xpose.msra.mxu0 0
        %3021 = vmatprep.subr.bf16.mxu0 0
        %3022 = vmatpush1.bf16.xpose.msra.mxu0 0
        %3023 = vmatprep.subr.bf16.mxu0 0
        %3024 = vmatpush1.bf16.xpose.msra.mxu0 0
        %3025 = vmatprep.subr.bf16.mxu0 0
        %3026 = vmatpush1.bf16.xpose.msra.mxu0 %v3009
        %3027 = vmatprep.subr.bf16.mxu0 0
        %3028 = vmatpush2.bf16.xpose.msra.mxu0 0
        %3029 = vmatprep.subr.bf16.mxu0 0
        %3030 = vmatpush2.bf16.xpose.msra.mxu0 0
        %3031 = vmatprep.subr.bf16.mxu0 0
        %3032 = vmatpush2.bf16.xpose.msra.mxu0 0
        %3033 = vmatprep.subr.bf16.mxu0 0
        %3034 = vmatpush2.bf16.xpose.msra.mxu0 0
        %3035 = vmatprep.subr.bf16.mxu0 0
        %3036 = vmatpush2.bf16.xpose.msra.mxu0 0
        %3037 = vmatprep.subr.bf16.mxu0 0
        %3038 = vmatpush2.bf16.xpose.msra.mxu0 0
        %3039 = vmatprep.subr.bf16.mxu0 0
        %3040 = vmatpush2.bf16.xpose.msra.mxu0 0
        %3041 = vmatprep.subr.bf16.mxu0 0
        %3042 = vmatpush2.bf16.xpose.msra.mxu0 0
        %3043 = vmatprep.mubr.bf16.mxu0 0
        %3044 = vmatmul.mubr.bf16.gmra.mxu0 %v3006
        %v3045 = vpop.f32.mrf.mxu0
        %v3046 = vadd.f32 0.0, %v3045
        %v3047 = vpop.f32.mrf.mxu0
        %v3048 = vpop.f32.mrf.mxu0
        %v3049 = vpop.f32.mrf.mxu0
        %3050 = vdwg.mxu0
        %v3051 = vmul.f32 %v3046, 0.17677669
        %v3052 = vadd.f32 %v3051, %v2495
        %v3053 = vsel %vm1149, %v3052, -inf
        %3054 = vmax.xlane.f32.xlu0 %v3053
        %v3055 = vpop.xlane.xlu0 %3054
        %v3056 = vsub.f32 %v3052, %v3055
        %v3057 = vmul.f32 %v3056, 1.442695
        %v3058 = vpow.pop %v3057
        %v3059 = vsel %vm1149, %v3058, 0.0
        %3060 = vadd.xlane.f32.xlu0 %v3059
        %v3061 = vpop.xlane.xlu0 %3060
        %v3062 = vrcp.pop %v3061
        %v3063 = vmul.f32 %v3058, %v3062
        %v3064 = vpack.c.bf16 %v3063, %v3063
        %3065 = vrot.lane.b32.xlu0 %v2558, 32
        %v3066 = vpop.permute.xlu0 %3065
        %v3068 = vsel %vm1149, %v3064, 0
        %v3071 = vsel %vm1166, %v3066, 0
        %3073 = vmatprep.subr.bf16.mxu0 0
        %3074 = vmatpush1.bf16.msra.mxu0 0
        %3075 = vmatprep.subr.bf16.mxu0 0
        %3076 = vmatpush1.bf16.msra.mxu0 0
        %3077 = vmatprep.subr.bf16.mxu0 0
        %3078 = vmatpush1.bf16.msra.mxu0 0
        %3079 = vmatprep.subr.bf16.mxu0 0
        %3080 = vmatpush1.bf16.msra.mxu0 0
        %3081 = vmatprep.subr.bf16.mxu0 0
        %3082 = vmatpush1.bf16.msra.mxu0 0
        %3083 = vmatprep.subr.bf16.mxu0 0
        %3084 = vmatpush1.bf16.msra.mxu0 0
        %3085 = vmatprep.subr.bf16.mxu0 0
        %3086 = vmatpush1.bf16.msra.mxu0 0
        %3087 = vmatprep.subr.bf16.mxu0 0
        %3088 = vmatpush1.bf16.msra.mxu0 %v3071
        %3089 = vmatprep.subr.bf16.mxu0 0
        %3090 = vmatpush2.bf16.msra.mxu0 0
        %3091 = vmatprep.subr.bf16.mxu0 0
        %3092 = vmatpush2.bf16.msra.mxu0 0
        %3093 = vmatprep.subr.bf16.mxu0 0
        %3094 = vmatpush2.bf16.msra.mxu0 0
        %3095 = vmatprep.subr.bf16.mxu0 0
        %3096 = vmatpush2.bf16.msra.mxu0 0
        %3097 = vmatprep.subr.bf16.mxu0 0
        %3098 = vmatpush2.bf16.msra.mxu0 0
        %3099 = vmatprep.subr.bf16.mxu0 0
        %3100 = vmatpush2.bf16.msra.mxu0 0
        %3101 = vmatprep.subr.bf16.mxu0 0
        %3102 = vmatpush2.bf16.msra.mxu0 0
        %3103 = vmatprep.subr.bf16.mxu0 0
        %3104 = vmatpush2.bf16.msra.mxu0 0
        %3105 = vmatprep.mubr.bf16.mxu0 0
        %3106 = vmatmul.mubr.bf16.gmra.mxu0 %v3068
        %v3107 = vpop.f32.mrf.mxu0
        %v3108 = vadd.f32 0.0, %v3107
        %v3109 = vpop.f32.mrf.mxu0
        %v3110 = vpop.f32.mrf.mxu0
        %v3111 = vpop.f32.mrf.mxu0
        %3112 = vdwg.mxu0
        %v3113 = vpack.c.bf16 %v3108, %v3108
        %v3118 = vunpack.c.l.b16 %v2454
        %v3119 = vunpack.c.l.b16 %v2455
        %v3120 = vunpack.c.l.b16 %v2456
        %v3121 = vunpack.c.l.b16 %v2457
        %v3122 = vpack.c.b16 %v3119, %v3118
        %v3123 = vpack.c.b16 %v3121, %v3120
        %v3127 = vsel %vm1100, %v3113, 0
        %3129 = vmatprep.subr.bf16.mxu0 0
        %3130 = vmatpush1.bf16.msra.mxu0 0
        %3131 = vmatprep.subr.bf16.mxu0 0
        %3132 = vmatpush1.bf16.msra.mxu0 0
        %3133 = vmatprep.subr.bf16.mxu0 0
        %3134 = vmatpush1.bf16.msra.mxu0 0
        %3135 = vmatprep.subr.bf16.mxu0 0
        %3136 = vmatpush1.bf16.msra.mxu0 0
        %3137 = vmatprep.subr.bf16.mxu0 0
        %3138 = vmatpush1.bf16.msra.mxu0 0
        %3139 = vmatprep.subr.bf16.mxu0 0
        %3140 = vmatpush1.bf16.msra.mxu0 0
        %3141 = vmatprep.subr.bf16.mxu0 0
        %3142 = vmatpush1.bf16.msra.mxu0 %v3123
        %3143 = vmatprep.subr.bf16.mxu0 0
        %3144 = vmatpush1.bf16.msra.mxu0 %v3122
        %3145 = vmatprep.subr.bf16.mxu0 0
        %3146 = vmatpush2.bf16.msra.mxu0 0
        %3147 = vmatprep.subr.bf16.mxu0 0
        %3148 = vmatpush2.bf16.msra.mxu0 0
        %3149 = vmatprep.subr.bf16.mxu0 0
        %3150 = vmatpush2.bf16.msra.mxu0 0
        %3151 = vmatprep.subr.bf16.mxu0 0
        %3152 = vmatpush2.bf16.msra.mxu0 0
        %3153 = vmatprep.subr.bf16.mxu0 0
        %3154 = vmatpush2.bf16.msra.mxu0 0
        %3155 = vmatprep.subr.bf16.mxu0 0
        %3156 = vmatpush2.bf16.msra.mxu0 0
        %3157 = vmatprep.subr.bf16.mxu0 0
        %3158 = vmatpush2.bf16.msra.mxu0 0
        %3159 = vmatprep.subr.bf16.mxu0 0
        %3160 = vmatpush2.bf16.msra.mxu0 0
        %3161 = vmatprep.mubr.bf16.mxu0 0
        %3162 = vmatmul.mubr.bf16.gmra.mxu0 %v3127
        %v3163 = vpop.f32.mrf.mxu0
        %v3164 = vadd.f32 0.0, %v3163
        %v3165 = vpop.f32.mrf.mxu0
        %v3166 = vpop.f32.mrf.mxu0
        %v3167 = vpop.f32.mrf.mxu0
        %3168 = vdwg.mxu0
        %v3169 = vadd.f32 %v3000, %v3164
        %v3170 = vadd.f32 %v2148, %v3169
        %s3171 = scalar_lea.vmem %s11, 1
        %v3172 = vld [vmem:[%s3171] sm:$0x1]
        %v3174 = vlaneseq
        %v3175 = vshrl.u32 %v3174, 7
        %v3176 = vsub.s32 0, %v3175
        %v3177 = vrot.slane %v3172, %v3176
        %v3179 = vadd.f32 %v3170, %v3177
        %s3180 = scalar_lea.vmem %s12, 1
        %v3181 = vld [vmem:[%s3180] sm:$0x1]
        %s3182 = scalar_lea.vmem %s13, 1
        %v3183 = vld [vmem:[%s3182] sm:$0x1]
        %3184 = vadd.xlane.f32.xlu0 %v3179
        %v3185 = vpop.xlane.xlu0 %3184
        %v3186 = vmul.f32 %v3185, %v760
        %v3187 = vsub.f32 %v3179, %v3186
        %v3188 = vmul.f32 %v3187, %v3187
        %3189 = vadd.xlane.f32.xlu0 %v3188
        %v3190 = vpop.xlane.xlu0 %3189
        %v3191 = vmul.f32 %v3190, %v760
        %v3192 = vadd.f32 %v3191, 1e-06
        %v3193 = vrsqrt.pop %v3192
        %v3194 = vmul.f32 %v3187, %v3193
        %v3196 = vlaneseq
        %v3197 = vshrl.u32 %v3196, 7
        %v3198 = vsub.s32 0, %v3197
        %v3199 = vrot.slane %v3181, %v3198
        %v3201 = vmul.f32 %v3194, %v3199
        %v3203 = vlaneseq
        %v3204 = vshrl.u32 %v3203, 7
        %v3205 = vsub.s32 0, %v3204
        %v3206 = vrot.slane %v3183, %v3205
        %v3208 = vadd.f32 %v3201, %v3206
        %v3209 = vpack.c.bf16 %v3208, %v3208
        %s3210 = scalar_lea.vmem %s14, 128
        %v3211 = vld [vmem:[%s3210] sm:$0xff]
        %v3212 = vld [vmem:[%s3210 + $0x8] sm:$0xff]
        %v3213 = vld [vmem:[%s3210 + $0x10] sm:$0xff]
        %v3214 = vld [vmem:[%s3210 + $0x18] sm:$0xff]
        %v3215 = vld [vmem:[%s3210 + $0x20] sm:$0xff]
        %v3216 = vld [vmem:[%s3210 + $0x28] sm:$0xff]
        %v3217 = vld [vmem:[%s3210 + $0x30] sm:$0xff]
        %v3218 = vld [vmem:[%s3210 + $0x38] sm:$0xff]
        %v3219 = vld [vmem:[%s3210 + $0x40] sm:$0xff]
        %v3220 = vld [vmem:[%s3210 + $0x48] sm:$0xff]
        %v3221 = vld [vmem:[%s3210 + $0x50] sm:$0xff]
        %v3222 = vld [vmem:[%s3210 + $0x58] sm:$0xff]
        %v3223 = vld [vmem:[%s3210 + $0x60] sm:$0xff]
        %v3224 = vld [vmem:[%s3210 + $0x68] sm:$0xff]
        %v3225 = vld [vmem:[%s3210 + $0x70] sm:$0xff]
        %v3226 = vld [vmem:[%s3210 + $0x78] sm:$0xff]
        %s3227 = scalar_lea.vmem %s15, 2
        %v3228 = vld [vmem:[%s3227] sm:$0x3]
        %v3230 = vlaneseq
        %v3231 = vshrl.u32 %v3230, 7
        %v3232 = vsub.s32 0, %v3231
        %v3233 = vrot.slane %v3228, %v3232
        %v3234 = vlaneseq
        %v3235 = vshrl.u32 %v3234, 7
        %v3236 = vsub.s32 1, %v3235
        %v3237 = vrot.slane %v3228, %v3236
        %v3256 = vunpack.c.l.b16 %v3211
        %v3257 = vunpack.c.h.b16 %v3211
        %v3258 = vunpack.c.l.b16 %v3212
        %v3259 = vunpack.c.h.b16 %v3212
        %v3260 = vunpack.c.l.b16 %v3213
        %v3261 = vunpack.c.h.b16 %v3213
        %v3262 = vunpack.c.l.b16 %v3214
        %v3263 = vunpack.c.h.b16 %v3214
        %v3264 = vunpack.c.l.b16 %v3215
        %v3265 = vunpack.c.h.b16 %v3215
        %v3266 = vunpack.c.l.b16 %v3216
        %v3267 = vunpack.c.h.b16 %v3216
        %v3268 = vunpack.c.l.b16 %v3217
        %v3269 = vunpack.c.h.b16 %v3217
        %v3270 = vunpack.c.l.b16 %v3218
        %v3271 = vunpack.c.h.b16 %v3218
        %v3272 = vunpack.c.l.b16 %v3219
        %v3273 = vunpack.c.h.b16 %v3219
        %v3274 = vunpack.c.l.b16 %v3220
        %v3275 = vunpack.c.h.b16 %v3220
        %v3276 = vunpack.c.l.b16 %v3221
        %v3277 = vunpack.c.h.b16 %v3221
        %v3278 = vunpack.c.l.b16 %v3222
        %v3279 = vunpack.c.h.b16 %v3222
        %v3280 = vunpack.c.l.b16 %v3223
        %v3281 = vunpack.c.h.b16 %v3223
        %v3282 = vunpack.c.l.b16 %v3224
        %v3283 = vunpack.c.h.b16 %v3224
        %v3284 = vunpack.c.l.b16 %v3225
        %v3285 = vunpack.c.h.b16 %v3225
        %v3286 = vunpack.c.l.b16 %v3226
        %v3287 = vunpack.c.h.b16 %v3226
        %v3288 = vpack.c.b16 %v3258, %v3256
        %v3289 = vpack.c.b16 %v3259, %v3257
        %v3290 = vpack.c.b16 %v3262, %v3260
        %v3291 = vpack.c.b16 %v3263, %v3261
        %v3292 = vpack.c.b16 %v3266, %v3264
        %v3293 = vpack.c.b16 %v3267, %v3265
        %v3294 = vpack.c.b16 %v3270, %v3268
        %v3295 = vpack.c.b16 %v3271, %v3269
        %v3296 = vpack.c.b16 %v3274, %v3272
        %v3297 = vpack.c.b16 %v3275, %v3273
        %v3298 = vpack.c.b16 %v3278, %v3276
        %v3299 = vpack.c.b16 %v3279, %v3277
        %v3300 = vpack.c.b16 %v3282, %v3280
        %v3301 = vpack.c.b16 %v3283, %v3281
        %v3302 = vpack.c.b16 %v3286, %v3284
        %v3303 = vpack.c.b16 %v3287, %v3285
        %3320 = vmatprep.subr.bf16.mxu0 %v3303
        %3321 = vmatpush1.bf16.msra.mxu0 %v3302
        %3322 = vmatprep.subr.bf16.mxu0 %v3301
        %3323 = vmatpush1.bf16.msra.mxu0 %v3300
        %3324 = vmatprep.subr.bf16.mxu0 %v3299
        %3325 = vmatpush1.bf16.msra.mxu0 %v3298
        %3326 = vmatprep.subr.bf16.mxu0 %v3297
        %3327 = vmatpush1.bf16.msra.mxu0 %v3296
        %3328 = vmatprep.subr.bf16.mxu0 %v3295
        %3329 = vmatpush1.bf16.msra.mxu0 %v3294
        %3330 = vmatprep.subr.bf16.mxu0 %v3293
        %3331 = vmatpush1.bf16.msra.mxu0 %v3292
        %3332 = vmatprep.subr.bf16.mxu0 %v3291
        %3333 = vmatpush1.bf16.msra.mxu0 %v3290
        %3334 = vmatprep.subr.bf16.mxu0 %v3289
        %3335 = vmatpush1.bf16.msra.mxu0 %v3288
        %3336 = vmatprep.subr.bf16.mxu0 0
        %3337 = vmatpush2.bf16.msra.mxu0 0
        %3338 = vmatprep.subr.bf16.mxu0 0
        %3339 = vmatpush2.bf16.msra.mxu0 0
        %3340 = vmatprep.subr.bf16.mxu0 0
        %3341 = vmatpush2.bf16.msra.mxu0 0
        %3342 = vmatprep.subr.bf16.mxu0 0
        %3343 = vmatpush2.bf16.msra.mxu0 0
        %3344 = vmatprep.subr.bf16.mxu0 0
        %3345 = vmatpush2.bf16.msra.mxu0 0
        %3346 = vmatprep.subr.bf16.mxu0 0
        %3347 = vmatpush2.bf16.msra.mxu0 0
        %3348 = vmatprep.subr.bf16.mxu0 0
        %3349 = vmatpush2.bf16.msra.mxu0 0
        %3350 = vmatprep.subr.bf16.mxu0 0
        %3351 = vmatpush2.bf16.msra.mxu0 0
        %3352 = vmatprep.mubr.bf16.mxu0 0
        %3353 = vmatmul.mubr.bf16.gmra.mxu0 %v3209
        %v3354 = vpop.f32.mrf.mxu0
        %v3355 = vadd.f32 %v3233, %v3354
        %v3356 = vpop.f32.mrf.mxu0
        %v3357 = vadd.f32 %v3237, %v3356
        %v3358 = vpop.f32.mrf.mxu0
        %v3359 = vpop.f32.mrf.mxu0
        %3360 = vdwg.mxu0
        %v3361 = vmul.f32 %v3355, 0.5
        %v3362 = vmul.f32 %v3357, 0.5
        %v3363 = vmul.f32 %v3355, 0.70710677
        %v3364 = vmul.f32 %v3357, 0.70710677
        %v3365 = verf.f32.pop %v3363
        %v3366 = verf.f32.pop %v3364
        %v3367 = vadd.f32 %v3365, 1.0
        %v3368 = vadd.f32 %v3366, 1.0
        %v3369 = vmul.f32 %v3361, %v3367
        %v3370 = vmul.f32 %v3362, %v3368
        %v3371 = vpack.c.bf16 %v3369, %v3369
        %v3372 = vpack.c.bf16 %v3370, %v3370
        %s3373 = scalar_lea.vmem %s16, 128
        %v3374 = vld [vmem:[%s3373] sm:$0xf]
        %v3375 = vld [vmem:[%s3373 + $0x4] sm:$0xf]
        %v3376 = vld [vmem:[%s3373 + $0x8] sm:$0xf]
        %v3377 = vld [vmem:[%s3373 + $0xc] sm:$0xf]
        %v3378 = vld [vmem:[%s3373 + $0x10] sm:$0xf]
        %v3379 = vld [vmem:[%s3373 + $0x14] sm:$0xf]
        %v3380 = vld [vmem:[%s3373 + $0x18] sm:$0xf]
        %v3381 = vld [vmem:[%s3373 + $0x1c] sm:$0xf]
        %v3382 = vld [vmem:[%s3373 + $0x20] sm:$0xf]
        %v3383 = vld [vmem:[%s3373 + $0x24] sm:$0xf]
        %v3384 = vld [vmem:[%s3373 + $0x28] sm:$0xf]
        %v3385 = vld [vmem:[%s3373 + $0x2c] sm:$0xf]
        %v3386 = vld [vmem:[%s3373 + $0x30] sm:$0xf]
        %v3387 = vld [vmem:[%s3373 + $0x34] sm:$0xf]
        %v3388 = vld [vmem:[%s3373 + $0x38] sm:$0xf]
        %v3389 = vld [vmem:[%s3373 + $0x3c] sm:$0xf]
        %v3390 = vld [vmem:[%s3373 + $0x40] sm:$0xf]
        %v3391 = vld [vmem:[%s3373 + $0x44] sm:$0xf]
        %v3392 = vld [vmem:[%s3373 + $0x48] sm:$0xf]
        %v3393 = vld [vmem:[%s3373 + $0x4c] sm:$0xf]
        %v3394 = vld [vmem:[%s3373 + $0x50] sm:$0xf]
        %v3395 = vld [vmem:[%s3373 + $0x54] sm:$0xf]
        %v3396 = vld [vmem:[%s3373 + $0x58] sm:$0xf]
        %v3397 = vld [vmem:[%s3373 + $0x5c] sm:$0xf]
        %v3398 = vld [vmem:[%s3373 + $0x60] sm:$0xf]
        %v3399 = vld [vmem:[%s3373 + $0x64] sm:$0xf]
        %v3400 = vld [vmem:[%s3373 + $0x68] sm:$0xf]
        %v3401 = vld [vmem:[%s3373 + $0x6c] sm:$0xf]
        %v3402 = vld [vmem:[%s3373 + $0x70] sm:$0xf]
        %v3403 = vld [vmem:[%s3373 + $0x74] sm:$0xf]
        %v3404 = vld [vmem:[%s3373 + $0x78] sm:$0xf]
        %v3405 = vld [vmem:[%s3373 + $0x7c] sm:$0xf]
        %s3406 = scalar_lea.vmem %s17, 1
        %v3407 = vld [vmem:[%s3406] sm:$0x1]
        %v3409 = vlaneseq
        %v3410 = vshrl.u32 %v3409, 7
        %v3411 = vsub.s32 0, %v3410
        %v3412 = vrot.slane %v3407, %v3411
        %v3446 = vunpack.c.l.b16 %v3374
        %v3447 = vunpack.c.l.b16 %v3375
        %v3448 = vunpack.c.l.b16 %v3376
        %v3449 = vunpack.c.l.b16 %v3377
        %v3450 = vunpack.c.l.b16 %v3378
        %v3451 = vunpack.c.l.b16 %v3379
        %v3452 = vunpack.c.l.b16 %v3380
        %v3453 = vunpack.c.l.b16 %v3381
        %v3454 = vunpack.c.l.b16 %v3382
        %v3455 = vunpack.c.l.b16 %v3383
        %v3456 = vunpack.c.l.b16 %v3384
        %v3457 = vunpack.c.l.b16 %v3385
        %v3458 = vunpack.c.l.b16 %v3386
        %v3459 = vunpack.c.l.b16 %v3387
        %v3460 = vunpack.c.l.b16 %v3388
        %v3461 = vunpack.c.l.b16 %v3389
        %v3462 = vunpack.c.l.b16 %v3390
        %v3463 = vunpack.c.l.b16 %v3391
        %v3464 = vunpack.c.l.b16 %v3392
        %v3465 = vunpack.c.l.b16 %v3393
        %v3466 = vunpack.c.l.b16 %v3394
        %v3467 = vunpack.c.l.b16 %v3395
        %v3468 = vunpack.c.l.b16 %v3396
        %v3469 = vunpack.c.l.b16 %v3397
        %v3470 = vunpack.c.l.b16 %v3398
        %v3471 = vunpack.c.l.b16 %v3399
        %v3472 = vunpack.c.l.b16 %v3400
        %v3473 = vunpack.c.l.b16 %v3401
        %v3474 = vunpack.c.l.b16 %v3402
        %v3475 = vunpack.c.l.b16 %v3403
        %v3476 = vunpack.c.l.b16 %v3404
        %v3477 = vunpack.c.l.b16 %v3405
        %v3478 = vpack.c.b16 %v3447, %v3446
        %v3479 = vpack.c.b16 %v3449, %v3448
        %v3480 = vpack.c.b16 %v3451, %v3450
        %v3481 = vpack.c.b16 %v3453, %v3452
        %v3482 = vpack.c.b16 %v3455, %v3454
        %v3483 = vpack.c.b16 %v3457, %v3456
        %v3484 = vpack.c.b16 %v3459, %v3458
        %v3485 = vpack.c.b16 %v3461, %v3460
        %v3486 = vpack.c.b16 %v3463, %v3462
        %v3487 = vpack.c.b16 %v3465, %v3464
        %v3488 = vpack.c.b16 %v3467, %v3466
        %v3489 = vpack.c.b16 %v3469, %v3468
        %v3490 = vpack.c.b16 %v3471, %v3470
        %v3491 = vpack.c.b16 %v3473, %v3472
        %v3492 = vpack.c.b16 %v3475, %v3474
        %v3493 = vpack.c.b16 %v3477, %v3476
        %3510 = vmatprep.subr.bf16.mxu0 0
        %3511 = vmatpush1.bf16.msra.mxu0 %v3485
        %3512 = vmatprep.subr.bf16.mxu0 0
        %3513 = vmatpush1.bf16.msra.mxu0 %v3484
        %3514 = vmatprep.subr.bf16.mxu0 0
        %3515 = vmatpush1.bf16.msra.mxu0 %v3483
        %3516 = vmatprep.subr.bf16.mxu0 0
        %3517 = vmatpush1.bf16.msra.mxu0 %v3482
        %3518 = vmatprep.subr.bf16.mxu0 0
        %3519 = vmatpush1.bf16.msra.mxu0 %v3481
        %3520 = vmatprep.subr.bf16.mxu0 0
        %3521 = vmatpush1.bf16.msra.mxu0 %v3480
        %3522 = vmatprep.subr.bf16.mxu0 0
        %3523 = vmatpush1.bf16.msra.mxu0 %v3479
        %3524 = vmatprep.subr.bf16.mxu0 0
        %3525 = vmatpush1.bf16.msra.mxu0 %v3478
        %3526 = vmatprep.subr.bf16.mxu0 0
        %3527 = vmatpush2.bf16.msra.mxu0 %v3493
        %3528 = vmatprep.subr.bf16.mxu0 0
        %3529 = vmatpush2.bf16.msra.mxu0 %v3492
        %3530 = vmatprep.subr.bf16.mxu0 0
        %3531 = vmatpush2.bf16.msra.mxu0 %v3491
        %3532 = vmatprep.subr.bf16.mxu0 0
        %3533 = vmatpush2.bf16.msra.mxu0 %v3490
        %3534 = vmatprep.subr.bf16.mxu0 0
        %3535 = vmatpush2.bf16.msra.mxu0 %v3489
        %3536 = vmatprep.subr.bf16.mxu0 0
        %3537 = vmatpush2.bf16.msra.mxu0 %v3488
        %3538 = vmatprep.subr.bf16.mxu0 0
        %3539 = vmatpush2.bf16.msra.mxu0 %v3487
        %3540 = vmatprep.subr.bf16.mxu0 0
        %3541 = vmatpush2.bf16.msra.mxu0 %v3486
        %3542 = vmatprep.mubr.bf16.mxu0 %v3372
        %3543 = vmatmul.mubr.bf16.gmra.mxu0 %v3371
        %v3544 = vpop.f32.mrf.mxu0
        %v3545 = vadd.f32 %v3412, %v3544
        %v3546 = vpop.f32.mrf.mxu0
        %v3547 = vpop.f32.mrf.mxu0
        %v3548 = vpop.f32.mrf.mxu0
        %3549 = vdwg.mxu0
        %v3550 = vadd.f32 %v3179, %v3545
        %v3551 = vld [vmem:[%s18] sm:$0x1]
        %v3552 = vld [vmem:[%s19] sm:$0x1]
        %3553 = vadd.xlane.f32.xlu0 %v3550
        %v3554 = vpop.xlane.xlu0 %3553
        %v3555 = vmul.f32 %v3554, %v760
        %v3556 = vsub.f32 %v3550, %v3555
        %v3557 = vmul.f32 %v3556, %v3556
        %3558 = vadd.xlane.f32.xlu0 %v3557
        %v3559 = vpop.xlane.xlu0 %3558
        %v3560 = vmul.f32 %v3559, %v760
        %v3561 = vadd.f32 %v3560, 1e-05
        %v3562 = vrsqrt.pop %v3561
        %v3563 = vmul.f32 %v3556, %v3562
        %v3565 = vlaneseq
        %v3566 = vshrl.u32 %v3565, 7
        %v3567 = vsub.s32 0, %v3566
        %v3568 = vrot.slane %v3551, %v3567
        %v3570 = vmul.f32 %v3563, %v3568
        %v3572 = vlaneseq
        %v3573 = vshrl.u32 %v3572, 7
        %v3574 = vsub.s32 0, %v3573
        %v3575 = vrot.slane %v3552, %v3574
        %v3577 = vadd.f32 %v3570, %v3575
        %v3578 = vld [vmem:[%s21] sm:$0x1]
        %v3579 = vpack.c.bf16 %v3577, %v3577
        %v3580 = vld [vmem:[%s20] sm:$0xf]
        %v3581 = vld [vmem:[%s20 + $0x4] sm:$0xf]
        %v3582 = vld [vmem:[%s20 + $0x8] sm:$0xf]
        %v3583 = vld [vmem:[%s20 + $0xc] sm:$0xf]
        %v3584 = vld [vmem:[%s20 + $0x10] sm:$0xf]
        %v3585 = vld [vmem:[%s20 + $0x14] sm:$0xf]
        %v3586 = vld [vmem:[%s20 + $0x18] sm:$0xf]
        %v3587 = vld [vmem:[%s20 + $0x1c] sm:$0xf]
        %v3588 = vld [vmem:[%s20 + $0x20] sm:$0xf]
        %v3589 = vld [vmem:[%s20 + $0x24] sm:$0xf]
        %v3590 = vld [vmem:[%s20 + $0x28] sm:$0xf]
        %v3591 = vld [vmem:[%s20 + $0x2c] sm:$0xf]
        %v3592 = vld [vmem:[%s20 + $0x30] sm:$0xf]
        %v3593 = vld [vmem:[%s20 + $0x34] sm:$0xf]
        %v3594 = vld [vmem:[%s20 + $0x38] sm:$0xf]
        %v3595 = vld [vmem:[%s20 + $0x3c] sm:$0xf]
        %v3612 = vunpack.c.l.b16 %v3580
        %v3613 = vunpack.c.l.b16 %v3581
        %v3614 = vunpack.c.l.b16 %v3582
        %v3615 = vunpack.c.l.b16 %v3583
        %v3616 = vunpack.c.l.b16 %v3584
        %v3617 = vunpack.c.l.b16 %v3585
        %v3618 = vunpack.c.l.b16 %v3586
        %v3619 = vunpack.c.l.b16 %v3587
        %v3620 = vunpack.c.l.b16 %v3588
        %v3621 = vunpack.c.l.b16 %v3589
        %v3622 = vunpack.c.l.b16 %v3590
        %v3623 = vunpack.c.l.b16 %v3591
        %v3624 = vunpack.c.l.b16 %v3592
        %v3625 = vunpack.c.l.b16 %v3593
        %v3626 = vunpack.c.l.b16 %v3594
        %v3627 = vunpack.c.l.b16 %v3595
        %v3628 = vpack.c.b16 %v3613, %v3612
        %v3629 = vpack.c.b16 %v3615, %v3614
        %v3630 = vpack.c.b16 %v3617, %v3616
        %v3631 = vpack.c.b16 %v3619, %v3618
        %v3632 = vpack.c.b16 %v3621, %v3620
        %v3633 = vpack.c.b16 %v3623, %v3622
        %v3634 = vpack.c.b16 %v3625, %v3624
        %v3635 = vpack.c.b16 %v3627, %v3626
        %3644 = vmatprep.subr.bf16.mxu0 0
        %3645 = vmatpush1.bf16.msra.mxu0 %v3635
        %3646 = vmatprep.subr.bf16.mxu0 0
        %3647 = vmatpush1.bf16.msra.mxu0 %v3634
        %3648 = vmatprep.subr.bf16.mxu0 0
        %3649 = vmatpush1.bf16.msra.mxu0 %v3633
        %3650 = vmatprep.subr.bf16.mxu0 0
        %3651 = vmatpush1.bf16.msra.mxu0 %v3632
        %3652 = vmatprep.subr.bf16.mxu0 0
        %3653 = vmatpush1.bf16.msra.mxu0 %v3631
        %3654 = vmatprep.subr.bf16.mxu0 0
        %3655 = vmatpush1.bf16.msra.mxu0 %v3630
        %3656 = vmatprep.subr.bf16.mxu0 0
        %3657 = vmatpush1.bf16.msra.mxu0 %v3629
        %3658 = vmatprep.subr.bf16.mxu0 0
        %3659 = vmatpush1.bf16.msra.mxu0 %v3628
        %3660 = vmatprep.subr.bf16.mxu0 0
        %3661 = vmatpush2.bf16.msra.mxu0 0
        %3662 = vmatprep.subr.bf16.mxu0 0
        %3663 = vmatpush2.bf16.msra.mxu0 0
        %3664 = vmatprep.subr.bf16.mxu0 0
        %3665 = vmatpush2.bf16.msra.mxu0 0
        %3666 = vmatprep.subr.bf16.mxu0 0
        %3667 = vmatpush2.bf16.msra.mxu0 0
        %3668 = vmatprep.subr.bf16.mxu0 0
        %3669 = vmatpush2.bf16.msra.mxu0 0
        %3670 = vmatprep.subr.bf16.mxu0 0
        %3671 = vmatpush2.bf16.msra.mxu0 0
        %3672 = vmatprep.subr.bf16.mxu0 0
        %3673 = vmatpush2.bf16.msra.mxu0 0
        %3674 = vmatprep.subr.bf16.mxu0 0
        %3675 = vmatpush2.bf16.msra.mxu0 0
        %3676 = vmatprep.mubr.bf16.mxu0 0
        %3677 = vmatmul.mubr.bf16.gmra.mxu0 %v3579
        %v3678 = vpop.f32.mrf.mxu0
        %v3679 = vadd.f32 0.0, %v3678
        %v3680 = vpop.f32.mrf.mxu0
        %v3681 = vpop.f32.mrf.mxu0
        %v3682 = vpop.f32.mrf.mxu0
        %3683 = vdwg.mxu0
        %v3684 = vadd.f32 %v3578, %v3679
        %s3685 = scalar_lea.vmem %s20, 64
        %v3686 = vld [vmem:[%s3685] sm:$0xf]
        %v3687 = vld [vmem:[%s3685 + $0x4] sm:$0xf]
        %v3688 = vld [vmem:[%s3685 + $0x8] sm:$0xf]
        %v3689 = vld [vmem:[%s3685 + $0xc] sm:$0xf]
        %v3690 = vld [vmem:[%s3685 + $0x10] sm:$0xf]
        %v3691 = vld [vmem:[%s3685 + $0x14] sm:$0xf]
        %v3692 = vld [vmem:[%s3685 + $0x18] sm:$0xf]
        %v3693 = vld [vmem:[%s3685 + $0x1c] sm:$0xf]
        %v3694 = vld [vmem:[%s3685 + $0x20] sm:$0xf]
        %v3695 = vld [vmem:[%s3685 + $0x24] sm:$0xf]
        %v3696 = vld [vmem:[%s3685 + $0x28] sm:$0xf]
        %v3697 = vld [vmem:[%s3685 + $0x2c] sm:$0xf]
        %v3698 = vld [vmem:[%s3685 + $0x30] sm:$0xf]
        %v3699 = vld [vmem:[%s3685 + $0x34] sm:$0xf]
        %v3700 = vld [vmem:[%s3685 + $0x38] sm:$0xf]
        %v3701 = vld [vmem:[%s3685 + $0x3c] sm:$0xf]
        %v3703 = vshrl.u32 %v3579, 16
        %v3722 = vunpack.c.l.b16 %v3686
        %v3723 = vunpack.c.l.b16 %v3687
        %v3724 = vunpack.c.l.b16 %v3688
        %v3725 = vunpack.c.l.b16 %v3689
        %v3726 = vunpack.c.l.b16 %v3690
        %v3727 = vunpack.c.l.b16 %v3691
        %v3728 = vunpack.c.l.b16 %v3692
        %v3729 = vunpack.c.l.b16 %v3693
        %v3730 = vunpack.c.l.b16 %v3694
        %v3731 = vunpack.c.l.b16 %v3695
        %v3732 = vunpack.c.l.b16 %v3696
        %v3733 = vunpack.c.l.b16 %v3697
        %v3734 = vunpack.c.l.b16 %v3698
        %v3735 = vunpack.c.l.b16 %v3699
        %v3736 = vunpack.c.l.b16 %v3700
        %v3737 = vunpack.c.l.b16 %v3701
        %v3738 = vpack.c.b16 %v3723, %v3722
        %v3739 = vpack.c.b16 %v3725, %v3724
        %v3740 = vpack.c.b16 %v3727, %v3726
        %v3741 = vpack.c.b16 %v3729, %v3728
        %v3742 = vpack.c.b16 %v3731, %v3730
        %v3743 = vpack.c.b16 %v3733, %v3732
        %v3744 = vpack.c.b16 %v3735, %v3734
        %v3745 = vpack.c.b16 %v3737, %v3736
        %3754 = vmatprep.subr.bf16.mxu0 0
        %3755 = vmatpush1.bf16.msra.mxu0 %v3745
        %3756 = vmatprep.subr.bf16.mxu0 0
        %3757 = vmatpush1.bf16.msra.mxu0 %v3744
        %3758 = vmatprep.subr.bf16.mxu0 0
        %3759 = vmatpush1.bf16.msra.mxu0 %v3743
        %3760 = vmatprep.subr.bf16.mxu0 0
        %3761 = vmatpush1.bf16.msra.mxu0 %v3742
        %3762 = vmatprep.subr.bf16.mxu0 0
        %3763 = vmatpush1.bf16.msra.mxu0 %v3741
        %3764 = vmatprep.subr.bf16.mxu0 0
        %3765 = vmatpush1.bf16.msra.mxu0 %v3740
        %3766 = vmatprep.subr.bf16.mxu0 0
        %3767 = vmatpush1.bf16.msra.mxu0 %v3739
        %3768 = vmatprep.subr.bf16.mxu0 0
        %3769 = vmatpush1.bf16.msra.mxu0 %v3738
        %3770 = vmatprep.subr.bf16.mxu0 0
        %3771 = vmatpush2.bf16.msra.mxu0 0
        %3772 = vmatprep.subr.bf16.mxu0 0
        %3773 = vmatpush2.bf16.msra.mxu0 0
        %3774 = vmatprep.subr.bf16.mxu0 0
        %3775 = vmatpush2.bf16.msra.mxu0 0
        %3776 = vmatprep.subr.bf16.mxu0 0
        %3777 = vmatpush2.bf16.msra.mxu0 0
        %3778 = vmatprep.subr.bf16.mxu0 0
        %3779 = vmatpush2.bf16.msra.mxu0 0
        %3780 = vmatprep.subr.bf16.mxu0 0
        %3781 = vmatpush2.bf16.msra.mxu0 0
        %3782 = vmatprep.subr.bf16.mxu0 0
        %3783 = vmatpush2.bf16.msra.mxu0 0
        %3784 = vmatprep.subr.bf16.mxu0 0
        %3785 = vmatpush2.bf16.msra.mxu0 0
        %3786 = vmatprep.mubr.bf16.mxu0 0
        %3787 = vmatmul.mubr.bf16.gmra.mxu0 %v3703
        %v3788 = vpop.f32.mrf.mxu0
        %v3789 = vadd.f32 0.0, %v3788
        %v3790 = vpop.f32.mrf.mxu0
        %v3791 = vpop.f32.mrf.mxu0
        %v3792 = vpop.f32.mrf.mxu0
        %3793 = vdwg.mxu0
        %v3794 = vadd.f32 %v3684, %v3789
        %s3795 = scalar_lea.vmem %s20, 128
        %v3796 = vld [vmem:[%s3795] sm:$0xf]
        %v3797 = vld [vmem:[%s3795 + $0x4] sm:$0xf]
        %v3798 = vld [vmem:[%s3795 + $0x8] sm:$0xf]
        %v3799 = vld [vmem:[%s3795 + $0xc] sm:$0xf]
        %v3800 = vld [vmem:[%s3795 + $0x10] sm:$0xf]
        %v3801 = vld [vmem:[%s3795 + $0x14] sm:$0xf]
        %v3802 = vld [vmem:[%s3795 + $0x18] sm:$0xf]
        %v3803 = vld [vmem:[%s3795 + $0x1c] sm:$0xf]
        %v3804 = vld [vmem:[%s3795 + $0x20] sm:$0xf]
        %v3805 = vld [vmem:[%s3795 + $0x24] sm:$0xf]
        %v3806 = vld [vmem:[%s3795 + $0x28] sm:$0xf]
        %v3807 = vld [vmem:[%s3795 + $0x2c] sm:$0xf]
        %v3808 = vld [vmem:[%s3795 + $0x30] sm:$0xf]
        %v3809 = vld [vmem:[%s3795 + $0x34] sm:$0xf]
        %v3810 = vld [vmem:[%s3795 + $0x38] sm:$0xf]
        %v3811 = vld [vmem:[%s3795 + $0x3c] sm:$0xf]
        %v3813 = vrot.slane %v3579, 1
        %v3831 = vunpack.c.l.b16 %v3796
        %v3832 = vunpack.c.l.b16 %v3797
        %v3833 = vunpack.c.l.b16 %v3798
        %v3834 = vunpack.c.l.b16 %v3799
        %v3835 = vunpack.c.l.b16 %v3800
        %v3836 = vunpack.c.l.b16 %v3801
        %v3837 = vunpack.c.l.b16 %v3802
        %v3838 = vunpack.c.l.b16 %v3803
        %v3839 = vunpack.c.l.b16 %v3804
        %v3840 = vunpack.c.l.b16 %v3805
        %v3841 = vunpack.c.l.b16 %v3806
        %v3842 = vunpack.c.l.b16 %v3807
        %v3843 = vunpack.c.l.b16 %v3808
        %v3844 = vunpack.c.l.b16 %v3809
        %v3845 = vunpack.c.l.b16 %v3810
        %v3846 = vunpack.c.l.b16 %v3811
        %v3847 = vpack.c.b16 %v3832, %v3831
        %v3848 = vpack.c.b16 %v3834, %v3833
        %v3849 = vpack.c.b16 %v3836, %v3835
        %v3850 = vpack.c.b16 %v3838, %v3837
        %v3851 = vpack.c.b16 %v3840, %v3839
        %v3852 = vpack.c.b16 %v3842, %v3841
        %v3853 = vpack.c.b16 %v3844, %v3843
        %v3854 = vpack.c.b16 %v3846, %v3845
        %3863 = vmatprep.subr.bf16.mxu0 0
        %3864 = vmatpush1.bf16.msra.mxu0 %v3854
        %3865 = vmatprep.subr.bf16.mxu0 0
        %3866 = vmatpush1.bf16.msra.mxu0 %v3853
        %3867 = vmatprep.subr.bf16.mxu0 0
        %3868 = vmatpush1.bf16.msra.mxu0 %v3852
        %3869 = vmatprep.subr.bf16.mxu0 0
        %3870 = vmatpush1.bf16.msra.mxu0 %v3851
        %3871 = vmatprep.subr.bf16.mxu0 0
        %3872 = vmatpush1.bf16.msra.mxu0 %v3850
        %3873 = vmatprep.subr.bf16.mxu0 0
        %3874 = vmatpush1.bf16.msra.mxu0 %v3849
        %3875 = vmatprep.subr.bf16.mxu0 0
        %3876 = vmatpush1.bf16.msra.mxu0 %v3848
        %3877 = vmatprep.subr.bf16.mxu0 0
        %3878 = vmatpush1.bf16.msra.mxu0 %v3847
        %3879 = vmatprep.subr.bf16.mxu0 0
        %3880 = vmatpush2.bf16.msra.mxu0 0
        %3881 = vmatprep.subr.bf16.mxu0 0
        %3882 = vmatpush2.bf16.msra.mxu0 0
        %3883 = vmatprep.subr.bf16.mxu0 0
        %3884 = vmatpush2.bf16.msra.mxu0 0
        %3885 = vmatprep.subr.bf16.mxu0 0
        %3886 = vmatpush2.bf16.msra.mxu0 0
        %3887 = vmatprep.subr.bf16.mxu0 0
        %3888 = vmatpush2.bf16.msra.mxu0 0
        %3889 = vmatprep.subr.bf16.mxu0 0
        %3890 = vmatpush2.bf16.msra.mxu0 0
        %3891 = vmatprep.subr.bf16.mxu0 0
        %3892 = vmatpush2.bf16.msra.mxu0 0
        %3893 = vmatprep.subr.bf16.mxu0 0
        %3894 = vmatpush2.bf16.msra.mxu0 0
        %3895 = vmatprep.mubr.bf16.mxu0 0
        %3896 = vmatmul.mubr.bf16.gmra.mxu0 %v3813
        %v3897 = vpop.f32.mrf.mxu0
        %v3898 = vadd.f32 0.0, %v3897
        %v3899 = vpop.f32.mrf.mxu0
        %v3900 = vpop.f32.mrf.mxu0
        %v3901 = vpop.f32.mrf.mxu0
        %3902 = vdwg.mxu0
        %v3903 = vadd.f32 %v3794, %v3898
        %s3904 = scalar_lea.vmem %s20, 192
        %v3905 = vld [vmem:[%s3904] sm:$0xf]
        %v3906 = vld [vmem:[%s3904 + $0x4] sm:$0xf]
        %v3907 = vld [vmem:[%s3904 + $0x8] sm:$0xf]
        %v3908 = vld [vmem:[%s3904 + $0xc] sm:$0xf]
        %v3909 = vld [vmem:[%s3904 + $0x10] sm:$0xf]
        %v3910 = vld [vmem:[%s3904 + $0x14] sm:$0xf]
        %v3911 = vld [vmem:[%s3904 + $0x18] sm:$0xf]
        %v3912 = vld [vmem:[%s3904 + $0x1c] sm:$0xf]
        %v3913 = vld [vmem:[%s3904 + $0x20] sm:$0xf]
        %v3914 = vld [vmem:[%s3904 + $0x24] sm:$0xf]
        %v3915 = vld [vmem:[%s3904 + $0x28] sm:$0xf]
        %v3916 = vld [vmem:[%s3904 + $0x2c] sm:$0xf]
        %v3917 = vld [vmem:[%s3904 + $0x30] sm:$0xf]
        %v3918 = vld [vmem:[%s3904 + $0x34] sm:$0xf]
        %v3919 = vld [vmem:[%s3904 + $0x38] sm:$0xf]
        %v3920 = vld [vmem:[%s3904 + $0x3c] sm:$0xf]
        %v3921 = vrot.slane %v3703, 1
        %v3939 = vunpack.c.l.b16 %v3905
        %v3940 = vunpack.c.l.b16 %v3906
        %v3941 = vunpack.c.l.b16 %v3907
        %v3942 = vunpack.c.l.b16 %v3908
        %v3943 = vunpack.c.l.b16 %v3909
        %v3944 = vunpack.c.l.b16 %v3910
        %v3945 = vunpack.c.l.b16 %v3911
        %v3946 = vunpack.c.l.b16 %v3912
        %v3947 = vunpack.c.l.b16 %v3913
        %v3948 = vunpack.c.l.b16 %v3914
        %v3949 = vunpack.c.l.b16 %v3915
        %v3950 = vunpack.c.l.b16 %v3916
        %v3951 = vunpack.c.l.b16 %v3917
        %v3952 = vunpack.c.l.b16 %v3918
        %v3953 = vunpack.c.l.b16 %v3919
        %v3954 = vunpack.c.l.b16 %v3920
        %v3955 = vpack.c.b16 %v3940, %v3939
        %v3956 = vpack.c.b16 %v3942, %v3941
        %v3957 = vpack.c.b16 %v3944, %v3943
        %v3958 = vpack.c.b16 %v3946, %v3945
        %v3959 = vpack.c.b16 %v3948, %v3947
        %v3960 = vpack.c.b16 %v3950, %v3949
        %v3961 = vpack.c.b16 %v3952, %v3951
        %v3962 = vpack.c.b16 %v3954, %v3953
        %3971 = vmatprep.subr.bf16.mxu0 0
        %3972 = vmatpush1.bf16.msra.mxu0 %v3962
        %3973 = vmatprep.subr.bf16.mxu0 0
        %3974 = vmatpush1.bf16.msra.mxu0 %v3961
        %3975 = vmatprep.subr.bf16.mxu0 0
        %3976 = vmatpush1.bf16.msra.mxu0 %v3960
        %3977 = vmatprep.subr.bf16.mxu0 0
        %3978 = vmatpush1.bf16.msra.mxu0 %v3959
        %3979 = vmatprep.subr.bf16.mxu0 0
        %3980 = vmatpush1.bf16.msra.mxu0 %v3958
        %3981 = vmatprep.subr.bf16.mxu0 0
        %3982 = vmatpush1.bf16.msra.mxu0 %v3957
        %3983 = vmatprep.subr.bf16.mxu0 0
        %3984 = vmatpush1.bf16.msra.mxu0 %v3956
        %3985 = vmatprep.subr.bf16.mxu0 0
        %3986 = vmatpush1.bf16.msra.mxu0 %v3955
        %3987 = vmatprep.subr.bf16.mxu0 0
        %3988 = vmatpush2.bf16.msra.mxu0 0
        %3989 = vmatprep.subr.bf16.mxu0 0
        %3990 = vmatpush2.bf16.msra.mxu0 0
        %3991 = vmatprep.subr.bf16.mxu0 0
        %3992 = vmatpush2.bf16.msra.mxu0 0
        %3993 = vmatprep.subr.bf16.mxu0 0
        %3994 = vmatpush2.bf16.msra.mxu0 0
        %3995 = vmatprep.subr.bf16.mxu0 0
        %3996 = vmatpush2.bf16.msra.mxu0 0
        %3997 = vmatprep.subr.bf16.mxu0 0
        %3998 = vmatpush2.bf16.msra.mxu0 0
        %3999 = vmatprep.subr.bf16.mxu0 0
        %4000 = vmatpush2.bf16.msra.mxu0 0
        %4001 = vmatprep.subr.bf16.mxu0 0
        %4002 = vmatpush2.bf16.msra.mxu0 0
        %4003 = vmatprep.mubr.bf16.mxu0 0
        %4004 = vmatmul.mubr.bf16.gmra.mxu0 %v3921
        %v4005 = vpop.f32.mrf.mxu0
        %v4006 = vadd.f32 0.0, %v4005
        %v4007 = vpop.f32.mrf.mxu0
        %v4008 = vpop.f32.mrf.mxu0
        %v4009 = vpop.f32.mrf.mxu0
        %4010 = vdwg.mxu0
        %v4011 = vadd.f32 %v3903, %v4006
        %s4012 = scalar_lea.vmem %s20, 256
        %v4013 = vld [vmem:[%s4012] sm:$0xf]
        %v4014 = vld [vmem:[%s4012 + $0x4] sm:$0xf]
        %v4015 = vld [vmem:[%s4012 + $0x8] sm:$0xf]
        %v4016 = vld [vmem:[%s4012 + $0xc] sm:$0xf]
        %v4017 = vld [vmem:[%s4012 + $0x10] sm:$0xf]
        %v4018 = vld [vmem:[%s4012 + $0x14] sm:$0xf]
        %v4019 = vld [vmem:[%s4012 + $0x18] sm:$0xf]
        %v4020 = vld [vmem:[%s4012 + $0x1c] sm:$0xf]
        %v4021 = vld [vmem:[%s4012 + $0x20] sm:$0xf]
        %v4022 = vld [vmem:[%s4012 + $0x24] sm:$0xf]
        %v4023 = vld [vmem:[%s4012 + $0x28] sm:$0xf]
        %v4024 = vld [vmem:[%s4012 + $0x2c] sm:$0xf]
        %v4025 = vld [vmem:[%s4012 + $0x30] sm:$0xf]
        %v4026 = vld [vmem:[%s4012 + $0x34] sm:$0xf]
        %v4027 = vld [vmem:[%s4012 + $0x38] sm:$0xf]
        %v4028 = vld [vmem:[%s4012 + $0x3c] sm:$0xf]
        %v4029 = vrot.slane %v3579, 2
        %v4047 = vunpack.c.l.b16 %v4013
        %v4048 = vunpack.c.l.b16 %v4014
        %v4049 = vunpack.c.l.b16 %v4015
        %v4050 = vunpack.c.l.b16 %v4016
        %v4051 = vunpack.c.l.b16 %v4017
        %v4052 = vunpack.c.l.b16 %v4018
        %v4053 = vunpack.c.l.b16 %v4019
        %v4054 = vunpack.c.l.b16 %v4020
        %v4055 = vunpack.c.l.b16 %v4021
        %v4056 = vunpack.c.l.b16 %v4022
        %v4057 = vunpack.c.l.b16 %v4023
        %v4058 = vunpack.c.l.b16 %v4024
        %v4059 = vunpack.c.l.b16 %v4025
        %v4060 = vunpack.c.l.b16 %v4026
        %v4061 = vunpack.c.l.b16 %v4027
        %v4062 = vunpack.c.l.b16 %v4028
        %v4063 = vpack.c.b16 %v4048, %v4047
        %v4064 = vpack.c.b16 %v4050, %v4049
        %v4065 = vpack.c.b16 %v4052, %v4051
        %v4066 = vpack.c.b16 %v4054, %v4053
        %v4067 = vpack.c.b16 %v4056, %v4055
        %v4068 = vpack.c.b16 %v4058, %v4057
        %v4069 = vpack.c.b16 %v4060, %v4059
        %v4070 = vpack.c.b16 %v4062, %v4061
        %4079 = vmatprep.subr.bf16.mxu0 0
        %4080 = vmatpush1.bf16.msra.mxu0 %v4070
        %4081 = vmatprep.subr.bf16.mxu0 0
        %4082 = vmatpush1.bf16.msra.mxu0 %v4069
        %4083 = vmatprep.subr.bf16.mxu0 0
        %4084 = vmatpush1.bf16.msra.mxu0 %v4068
        %4085 = vmatprep.subr.bf16.mxu0 0
        %4086 = vmatpush1.bf16.msra.mxu0 %v4067
        %4087 = vmatprep.subr.bf16.mxu0 0
        %4088 = vmatpush1.bf16.msra.mxu0 %v4066
        %4089 = vmatprep.subr.bf16.mxu0 0
        %4090 = vmatpush1.bf16.msra.mxu0 %v4065
        %4091 = vmatprep.subr.bf16.mxu0 0
        %4092 = vmatpush1.bf16.msra.mxu0 %v4064
        %4093 = vmatprep.subr.bf16.mxu0 0
        %4094 = vmatpush1.bf16.msra.mxu0 %v4063
        %4095 = vmatprep.subr.bf16.mxu0 0
        %4096 = vmatpush2.bf16.msra.mxu0 0
        %4097 = vmatprep.subr.bf16.mxu0 0
        %4098 = vmatpush2.bf16.msra.mxu0 0
        %4099 = vmatprep.subr.bf16.mxu0 0
        %4100 = vmatpush2.bf16.msra.mxu0 0
        %4101 = vmatprep.subr.bf16.mxu0 0
        %4102 = vmatpush2.bf16.msra.mxu0 0
        %4103 = vmatprep.subr.bf16.mxu0 0
        %4104 = vmatpush2.bf16.msra.mxu0 0
        %4105 = vmatprep.subr.bf16.mxu0 0
        %4106 = vmatpush2.bf16.msra.mxu0 0
        %4107 = vmatprep.subr.bf16.mxu0 0
        %4108 = vmatpush2.bf16.msra.mxu0 0
        %4109 = vmatprep.subr.bf16.mxu0 0
        %4110 = vmatpush2.bf16.msra.mxu0 0
        %4111 = vmatprep.mubr.bf16.mxu0 0
        %4112 = vmatmul.mubr.bf16.gmra.mxu0 %v4029
        %v4113 = vpop.f32.mrf.mxu0
        %v4114 = vadd.f32 0.0, %v4113
        %v4115 = vpop.f32.mrf.mxu0
        %v4116 = vpop.f32.mrf.mxu0
        %v4117 = vpop.f32.mrf.mxu0
        %4118 = vdwg.mxu0
        %v4119 = vadd.f32 %v4011, %v4114
        %s4120 = scalar_lea.vmem %s20, 320
        %v4121 = vld [vmem:[%s4120] sm:$0xf]
        %v4122 = vld [vmem:[%s4120 + $0x4] sm:$0xf]
        %v4123 = vld [vmem:[%s4120 + $0x8] sm:$0xf]
        %v4124 = vld [vmem:[%s4120 + $0xc] sm:$0xf]
        %v4125 = vld [vmem:[%s4120 + $0x10] sm:$0xf]
        %v4126 = vld [vmem:[%s4120 + $0x14] sm:$0xf]
        %v4127 = vld [vmem:[%s4120 + $0x18] sm:$0xf]
        %v4128 = vld [vmem:[%s4120 + $0x1c] sm:$0xf]
        %v4129 = vld [vmem:[%s4120 + $0x20] sm:$0xf]
        %v4130 = vld [vmem:[%s4120 + $0x24] sm:$0xf]
        %v4131 = vld [vmem:[%s4120 + $0x28] sm:$0xf]
        %v4132 = vld [vmem:[%s4120 + $0x2c] sm:$0xf]
        %v4133 = vld [vmem:[%s4120 + $0x30] sm:$0xf]
        %v4134 = vld [vmem:[%s4120 + $0x34] sm:$0xf]
        %v4135 = vld [vmem:[%s4120 + $0x38] sm:$0xf]
        %v4136 = vld [vmem:[%s4120 + $0x3c] sm:$0xf]
        %v4137 = vrot.slane %v3703, 2
        %v4155 = vunpack.c.l.b16 %v4121
        %v4156 = vunpack.c.l.b16 %v4122
        %v4157 = vunpack.c.l.b16 %v4123
        %v4158 = vunpack.c.l.b16 %v4124
        %v4159 = vunpack.c.l.b16 %v4125
        %v4160 = vunpack.c.l.b16 %v4126
        %v4161 = vunpack.c.l.b16 %v4127
        %v4162 = vunpack.c.l.b16 %v4128
        %v4163 = vunpack.c.l.b16 %v4129
        %v4164 = vunpack.c.l.b16 %v4130
        %v4165 = vunpack.c.l.b16 %v4131
        %v4166 = vunpack.c.l.b16 %v4132
        %v4167 = vunpack.c.l.b16 %v4133
        %v4168 = vunpack.c.l.b16 %v4134
        %v4169 = vunpack.c.l.b16 %v4135
        %v4170 = vunpack.c.l.b16 %v4136
        %v4171 = vpack.c.b16 %v4156, %v4155
        %v4172 = vpack.c.b16 %v4158, %v4157
        %v4173 = vpack.c.b16 %v4160, %v4159
        %v4174 = vpack.c.b16 %v4162, %v4161
        %v4175 = vpack.c.b16 %v4164, %v4163
        %v4176 = vpack.c.b16 %v4166, %v4165
        %v4177 = vpack.c.b16 %v4168, %v4167
        %v4178 = vpack.c.b16 %v4170, %v4169
        %4187 = vmatprep.subr.bf16.mxu0 0
        %4188 = vmatpush1.bf16.msra.mxu0 %v4178
        %4189 = vmatprep.subr.bf16.mxu0 0
        %4190 = vmatpush1.bf16.msra.mxu0 %v4177
        %4191 = vmatprep.subr.bf16.mxu0 0
        %4192 = vmatpush1.bf16.msra.mxu0 %v4176
        %4193 = vmatprep.subr.bf16.mxu0 0
        %4194 = vmatpush1.bf16.msra.mxu0 %v4175
        %4195 = vmatprep.subr.bf16.mxu0 0
        %4196 = vmatpush1.bf16.msra.mxu0 %v4174
        %4197 = vmatprep.subr.bf16.mxu0 0
        %4198 = vmatpush1.bf16.msra.mxu0 %v4173
        %4199 = vmatprep.subr.bf16.mxu0 0
        %4200 = vmatpush1.bf16.msra.mxu0 %v4172
        %4201 = vmatprep.subr.bf16.mxu0 0
        %4202 = vmatpush1.bf16.msra.mxu0 %v4171
        %4203 = vmatprep.subr.bf16.mxu0 0
        %4204 = vmatpush2.bf16.msra.mxu0 0
        %4205 = vmatprep.subr.bf16.mxu0 0
        %4206 = vmatpush2.bf16.msra.mxu0 0
        %4207 = vmatprep.subr.bf16.mxu0 0
        %4208 = vmatpush2.bf16.msra.mxu0 0
        %4209 = vmatprep.subr.bf16.mxu0 0
        %4210 = vmatpush2.bf16.msra.mxu0 0
        %4211 = vmatprep.subr.bf16.mxu0 0
        %4212 = vmatpush2.bf16.msra.mxu0 0
        %4213 = vmatprep.subr.bf16.mxu0 0
        %4214 = vmatpush2.bf16.msra.mxu0 0
        %4215 = vmatprep.subr.bf16.mxu0 0
        %4216 = vmatpush2.bf16.msra.mxu0 0
        %4217 = vmatprep.subr.bf16.mxu0 0
        %4218 = vmatpush2.bf16.msra.mxu0 0
        %4219 = vmatprep.mubr.bf16.mxu0 0
        %4220 = vmatmul.mubr.bf16.gmra.mxu0 %v4137
        %v4221 = vpop.f32.mrf.mxu0
        %v4222 = vadd.f32 0.0, %v4221
        %v4223 = vpop.f32.mrf.mxu0
        %v4224 = vpop.f32.mrf.mxu0
        %v4225 = vpop.f32.mrf.mxu0
        %4226 = vdwg.mxu0
        %v4227 = vadd.f32 %v4119, %v4222
        %s4228 = scalar_lea.vmem %s20, 384
        %v4229 = vld [vmem:[%s4228] sm:$0xf]
        %v4230 = vld [vmem:[%s4228 + $0x4] sm:$0xf]
        %v4231 = vld [vmem:[%s4228 + $0x8] sm:$0xf]
        %v4232 = vld [vmem:[%s4228 + $0xc] sm:$0xf]
        %v4233 = vld [vmem:[%s4228 + $0x10] sm:$0xf]
        %v4234 = vld [vmem:[%s4228 + $0x14] sm:$0xf]
        %v4235 = vld [vmem:[%s4228 + $0x18] sm:$0xf]
        %v4236 = vld [vmem:[%s4228 + $0x1c] sm:$0xf]
        %v4237 = vld [vmem:[%s4228 + $0x20] sm:$0xf]
        %v4238 = vld [vmem:[%s4228 + $0x24] sm:$0xf]
        %v4239 = vld [vmem:[%s4228 + $0x28] sm:$0xf]
        %v4240 = vld [vmem:[%s4228 + $0x2c] sm:$0xf]
        %v4241 = vld [vmem:[%s4228 + $0x30] sm:$0xf]
        %v4242 = vld [vmem:[%s4228 + $0x34] sm:$0xf]
        %v4243 = vld [vmem:[%s4228 + $0x38] sm:$0xf]
        %v4244 = vld [vmem:[%s4228 + $0x3c] sm:$0xf]
        %v4245 = vrot.slane %v3579, 3
        %v4263 = vunpack.c.l.b16 %v4229
        %v4264 = vunpack.c.l.b16 %v4230
        %v4265 = vunpack.c.l.b16 %v4231
        %v4266 = vunpack.c.l.b16 %v4232
        %v4267 = vunpack.c.l.b16 %v4233
        %v4268 = vunpack.c.l.b16 %v4234
        %v4269 = vunpack.c.l.b16 %v4235
        %v4270 = vunpack.c.l.b16 %v4236
        %v4271 = vunpack.c.l.b16 %v4237
        %v4272 = vunpack.c.l.b16 %v4238
        %v4273 = vunpack.c.l.b16 %v4239
        %v4274 = vunpack.c.l.b16 %v4240
        %v4275 = vunpack.c.l.b16 %v4241
        %v4276 = vunpack.c.l.b16 %v4242
        %v4277 = vunpack.c.l.b16 %v4243
        %v4278 = vunpack.c.l.b16 %v4244
        %v4279 = vpack.c.b16 %v4264, %v4263
        %v4280 = vpack.c.b16 %v4266, %v4265
        %v4281 = vpack.c.b16 %v4268, %v4267
        %v4282 = vpack.c.b16 %v4270, %v4269
        %v4283 = vpack.c.b16 %v4272, %v4271
        %v4284 = vpack.c.b16 %v4274, %v4273
        %v4285 = vpack.c.b16 %v4276, %v4275
        %v4286 = vpack.c.b16 %v4278, %v4277
        %4295 = vmatprep.subr.bf16.mxu0 0
        %4296 = vmatpush1.bf16.msra.mxu0 %v4286
        %4297 = vmatprep.subr.bf16.mxu0 0
        %4298 = vmatpush1.bf16.msra.mxu0 %v4285
        %4299 = vmatprep.subr.bf16.mxu0 0
        %4300 = vmatpush1.bf16.msra.mxu0 %v4284
        %4301 = vmatprep.subr.bf16.mxu0 0
        %4302 = vmatpush1.bf16.msra.mxu0 %v4283
        %4303 = vmatprep.subr.bf16.mxu0 0
        %4304 = vmatpush1.bf16.msra.mxu0 %v4282
        %4305 = vmatprep.subr.bf16.mxu0 0
        %4306 = vmatpush1.bf16.msra.mxu0 %v4281
        %4307 = vmatprep.subr.bf16.mxu0 0
        %4308 = vmatpush1.bf16.msra.mxu0 %v4280
        %4309 = vmatprep.subr.bf16.mxu0 0
        %4310 = vmatpush1.bf16.msra.mxu0 %v4279
        %4311 = vmatprep.subr.bf16.mxu0 0
        %4312 = vmatpush2.bf16.msra.mxu0 0
        %4313 = vmatprep.subr.bf16.mxu0 0
        %4314 = vmatpush2.bf16.msra.mxu0 0
        %4315 = vmatprep.subr.bf16.mxu0 0
        %4316 = vmatpush2.bf16.msra.mxu0 0
        %4317 = vmatprep.subr.bf16.mxu0 0
        %4318 = vmatpush2.bf16.msra.mxu0 0
        %4319 = vmatprep.subr.bf16.mxu0 0
        %4320 = vmatpush2.bf16.msra.mxu0 0
        %4321 = vmatprep.subr.bf16.mxu0 0
        %4322 = vmatpush2.bf16.msra.mxu0 0
        %4323 = vmatprep.subr.bf16.mxu0 0
        %4324 = vmatpush2.bf16.msra.mxu0 0
        %4325 = vmatprep.subr.bf16.mxu0 0
        %4326 = vmatpush2.bf16.msra.mxu0 0
        %4327 = vmatprep.mubr.bf16.mxu0 0
        %4328 = vmatmul.mubr.bf16.gmra.mxu0 %v4245
        %v4329 = vpop.f32.mrf.mxu0
        %v4330 = vadd.f32 0.0, %v4329
        %v4331 = vpop.f32.mrf.mxu0
        %v4332 = vpop.f32.mrf.mxu0
        %v4333 = vpop.f32.mrf.mxu0
        %4334 = vdwg.mxu0
        %v4335 = vadd.f32 %v4227, %v4330
        %s4336 = scalar_lea.vmem %s20, 448
        %v4337 = vld [vmem:[%s4336] sm:$0xf]
        %v4338 = vld [vmem:[%s4336 + $0x4] sm:$0xf]
        %v4339 = vld [vmem:[%s4336 + $0x8] sm:$0xf]
        %v4340 = vld [vmem:[%s4336 + $0xc] sm:$0xf]
        %v4341 = vld [vmem:[%s4336 + $0x10] sm:$0xf]
        %v4342 = vld [vmem:[%s4336 + $0x14] sm:$0xf]
        %v4343 = vld [vmem:[%s4336 + $0x18] sm:$0xf]
        %v4344 = vld [vmem:[%s4336 + $0x1c] sm:$0xf]
        %v4345 = vld [vmem:[%s4336 + $0x20] sm:$0xf]
        %v4346 = vld [vmem:[%s4336 + $0x24] sm:$0xf]
        %v4347 = vld [vmem:[%s4336 + $0x28] sm:$0xf]
        %v4348 = vld [vmem:[%s4336 + $0x2c] sm:$0xf]
        %v4349 = vld [vmem:[%s4336 + $0x30] sm:$0xf]
        %v4350 = vld [vmem:[%s4336 + $0x34] sm:$0xf]
        %v4351 = vld [vmem:[%s4336 + $0x38] sm:$0xf]
        %v4352 = vld [vmem:[%s4336 + $0x3c] sm:$0xf]
        %v4353 = vrot.slane %v3703, 3
        %v4371 = vunpack.c.l.b16 %v4337
        %v4372 = vunpack.c.l.b16 %v4338
        %v4373 = vunpack.c.l.b16 %v4339
        %v4374 = vunpack.c.l.b16 %v4340
        %v4375 = vunpack.c.l.b16 %v4341
        %v4376 = vunpack.c.l.b16 %v4342
        %v4377 = vunpack.c.l.b16 %v4343
        %v4378 = vunpack.c.l.b16 %v4344
        %v4379 = vunpack.c.l.b16 %v4345
        %v4380 = vunpack.c.l.b16 %v4346
        %v4381 = vunpack.c.l.b16 %v4347
        %v4382 = vunpack.c.l.b16 %v4348
        %v4383 = vunpack.c.l.b16 %v4349
        %v4384 = vunpack.c.l.b16 %v4350
        %v4385 = vunpack.c.l.b16 %v4351
        %v4386 = vunpack.c.l.b16 %v4352
        %v4387 = vpack.c.b16 %v4372, %v4371
        %v4388 = vpack.c.b16 %v4374, %v4373
        %v4389 = vpack.c.b16 %v4376, %v4375
        %v4390 = vpack.c.b16 %v4378, %v4377
        %v4391 = vpack.c.b16 %v4380, %v4379
        %v4392 = vpack.c.b16 %v4382, %v4381
        %v4393 = vpack.c.b16 %v4384, %v4383
        %v4394 = vpack.c.b16 %v4386, %v4385
        %4403 = vmatprep.subr.bf16.mxu0 0
        %4404 = vmatpush1.bf16.msra.mxu0 %v4394
        %4405 = vmatprep.subr.bf16.mxu0 0
        %4406 = vmatpush1.bf16.msra.mxu0 %v4393
        %4407 = vmatprep.subr.bf16.mxu0 0
        %4408 = vmatpush1.bf16.msra.mxu0 %v4392
        %4409 = vmatprep.subr.bf16.mxu0 0
        %4410 = vmatpush1.bf16.msra.mxu0 %v4391
        %4411 = vmatprep.subr.bf16.mxu0 0
        %4412 = vmatpush1.bf16.msra.mxu0 %v4390
        %4413 = vmatprep.subr.bf16.mxu0 0
        %4414 = vmatpush1.bf16.msra.mxu0 %v4389
        %4415 = vmatprep.subr.bf16.mxu0 0
        %4416 = vmatpush1.bf16.msra.mxu0 %v4388
        %4417 = vmatprep.subr.bf16.mxu0 0
        %4418 = vmatpush1.bf16.msra.mxu0 %v4387
        %4419 = vmatprep.subr.bf16.mxu0 0
        %4420 = vmatpush2.bf16.msra.mxu0 0
        %4421 = vmatprep.subr.bf16.mxu0 0
        %4422 = vmatpush2.bf16.msra.mxu0 0
        %4423 = vmatprep.subr.bf16.mxu0 0
        %4424 = vmatpush2.bf16.msra.mxu0 0
        %4425 = vmatprep.subr.bf16.mxu0 0
        %4426 = vmatpush2.bf16.msra.mxu0 0
        %4427 = vmatprep.subr.bf16.mxu0 0
        %4428 = vmatpush2.bf16.msra.mxu0 0
        %4429 = vmatprep.subr.bf16.mxu0 0
        %4430 = vmatpush2.bf16.msra.mxu0 0
        %4431 = vmatprep.subr.bf16.mxu0 0
        %4432 = vmatpush2.bf16.msra.mxu0 0
        %4433 = vmatprep.subr.bf16.mxu0 0
        %4434 = vmatpush2.bf16.msra.mxu0 0
        %4435 = vmatprep.mubr.bf16.mxu0 0
        %4436 = vmatmul.mubr.bf16.gmra.mxu0 %v4353
        %v4437 = vpop.f32.mrf.mxu0
        %v4438 = vadd.f32 0.0, %v4437
        %v4439 = vpop.f32.mrf.mxu0
        %v4440 = vpop.f32.mrf.mxu0
        %v4441 = vpop.f32.mrf.mxu0
        %4442 = vdwg.mxu0
        %v4443 = vadd.f32 %v4335, %v4438
        %4444 = vst [vmem:[%s724] sm:$0x1] %v4443
        %s4445 = sand.u32 %s523, 1
        %s4446 = scalar_lea.sflag [#allocation3], %s4445
        %s4447 = sand.u32 %s523, 1
        %s4448 = scalar_lea.vmem [#allocation7], %s4447
        // Predicated region
        $region117: #{vit_forward.3} parent=107 // pred_check
          %p4449 = pneg %p533
        $region118: #{vit_forward.3} parent=107 // pred_check_branch
          %4451 = sbr.rel (%p4449) target = $region120
        $region119: #{vit_forward.3} parent=107 // pred_region
          %s4453 = ssub.s32 16, 16
          %4454 = vsyncadd %s4446, %s4453
          %s4455 = smul.addr %s38, 16
          %s4456 = scalar_lea.hbm %s22, %s4455
          %s4458 = sshll.u32 %s4448, 4
          %s4459 = int_to_ptr.vmem [resolvable:$true] %s4458
          %4461 = dma.vmem_to_hbm [thread:$0]  %s4459, 16, %s4456, %s4446
        $region120: #{vit_forward.3} parent=107 // pred_fallthru
          _
      $region108: #{vit_forward.3} parent=5 // pred_fallthru
        _
      %p4462 = scmp.le.s32.totalorder 2, %s33
      // Predicated region
      $region121: #{vit_forward.3} parent=5 // pred_check
        %p4463 = pneg %p4462
      $region122: #{vit_forward.3} parent=5 // pred_check_branch
        %4465 = sbr.rel (%p4463) target = $region124
      $region123: #{vit_forward.3} parent=5 // pred_region
        %s4466 = ssub.s32 %s33, 2
        // Predicated region
        $region125: #{vit_forward.3} parent=123 // pred_check
          %p4467 = pneg %p539
        $region126: #{vit_forward.3} parent=123 // pred_check_branch
          %4469 = sbr.rel (%p4467) target = $region128
        $region127: #{vit_forward.3} parent=123 // pred_region
          %s4470 = sand.u32 %s524, 1
          %s4471 = scalar_lea.sflag [#allocation3], %s4470
          %s4472 = sand.u32 %s524, 1
          %s4473 = scalar_lea.vmem [#allocation7], %s4472
          %4474 = dma.done %s4471, 16
        $region128: #{vit_forward.3} parent=123 // pred_fallthru
          _
      $region124: #{vit_forward.3} parent=5 // pred_fallthru
        _
    $region6: #{vit_forward.3} parent=1 // loop_footer
      %s37 = sadd.s32 1, %s33
    $region7: #{vit_forward.3} parent=1 // loop_footer_branch
      %32 = sbr.rel target = $region3
    $region8: #{vit_forward.3} parent=1 // loop_exit
      _
    %4475 = vsyncpa [#allocation3], 1
    %s4476 = scalar_lea.sflag [#allocation3], 1
    %4477 = vsyncpa %s4476, 1
    %4478 = vsyncpa [#allocation4], 1
    %s4479 = scalar_lea.sflag [#allocation4], 1
    %4480 = vsyncpa %s4479, 1
    %4481 = vsyncpa [#allocation6], 1

</llo_original>
